<compile_context>
chip_gen: v7x
topology: tpu7x:2x2x1
jax: 0.10.0
libtpu: 0.0.40
codegen_flags: <defaults>
</compile_context>

<pallas_src>
import numpy as np
import jax
import jax.numpy as jnp
from jax.experimental import pallas as pl
from jax.experimental.pallas import tpu as pltpu

# ---------------- config (synthetic `opt`) ----------------
D_MODEL       = 32                     # opt.d_model
MAX_LENGTH    = 6                      # opt.max_length
T             = MAX_LENGTH + 2         # query / token count = 8
NUM_ATTN      = 3                      # opt.attn
NUM_CLASSES   = 8 + 2                  # len(opt.character) + 2 = 10
CLS_PAD       = 128                    # lane-dense padded class dim (sliced outside)
IMG_H, IMG_W  = 32, 64                 # opt.imgH, opt.imgW
PATCH         = 8                      # combined 4 * pm_stride downsampling
FH, FW        = IMG_H // PATCH, IMG_W // PATCH   # opt.fH=4, opt.fW=8
L             = FH * FW                # 32 spatial positions
C_IN          = 3
PATCH_DIM     = C_IN * PATCH * PATCH   # 192
PATCH_DIM_PAD = 256                    # lane-dense padded patch dim
HIDDEN        = 4 * D_MODEL            # Trans FFN hidden = 128
INV_SQRT_D    = 1.0 / float(np.sqrt(D_MODEL))
B_TILE        = 16                     # batch elements per grid step (fits VMEM on v7x too)


# ---------------- the single fused, batch-blocked Pallas kernel ----------------
def _fused_forward_kernel(patches_ref, w_embed_ref, b_embed_ref, q_ref,
                          w_cls_ref, b_cls_ref, w1_ref, b1_ref, w2_ref, b2_ref,
                          out_ref):
    B = patches_ref.shape[0]                                    # B_TILE (static)
    BL = B * L

    # ---- backbone: linear patch embed as one (B*L, 256) @ (256, 32) slab matmul ----
    patches = patches_ref[...].reshape(BL, PATCH_DIM_PAD)                     # bf16
    feats_flat = (jnp.dot(patches, w_embed_ref[...],
                          preferred_element_type=jnp.float32)
                  + b_embed_ref[...])                                         # (B*L, D) f32

    scores = None                                                             # (B, T, L) f32
    for i in range(NUM_ATTN):                                                 # static unroll
        if i > 0:
            # ---- Trans layer: attention-gated residual FFN (flattened slabs) ----
            feats_bf = feats_flat.astype(jnp.bfloat16)
            h = jnp.maximum(
                jnp.dot(feats_bf, w1_ref[i - 1],
                        preferred_element_type=jnp.float32) + b1_ref[i - 1], 0.0)
            upd = (jnp.dot(h.astype(jnp.bfloat16), w2_ref[i - 1],
                           preferred_element_type=jnp.float32) + b2_ref[i - 1])
            # gate[b, l] = sum_t scores[b, t, l]  (tiny XLU transpose + lane reduce)
            gate = jnp.sum(jnp.swapaxes(scores, 1, 2), axis=2, keepdims=True)  # (B, L, 1)
            feats_flat = feats_flat + gate.reshape(BL, 1) * upd               # (B*L, D)

        # ---- PositionAttention: softmax(q @ feats^T) @ feats   (k == v == feats) ----
        feats_bf = feats_flat.astype(jnp.bfloat16)
        feats_3d = feats_bf.reshape(B, L, D_MODEL)                            # (B, L, D)
        q_b = jnp.broadcast_to(q_ref[i], (B, T, D_MODEL))                     # bf16, 1/sqrt(D) folded in
        s = jnp.einsum('btd,bld->btl', q_b, feats_3d,
                       preferred_element_type=jnp.float32)                    # (B, T, L)
        s = s - jnp.max(s, axis=-1, keepdims=True)
        e = jnp.exp(s)
        p = e * pl.reciprocal(jnp.sum(e, axis=-1, keepdims=True), approx=True)
        scores = p                                                            # (B, T, L)
        attn_vecs = jnp.einsum('btl,bld->btd', p.astype(jnp.bfloat16), feats_3d,
                               preferred_element_type=jnp.float32)            # (B, T, D)

        # ---- cls head, lane-dense (128-padded classes), stored straight to HBM ----
        logit = (jnp.dot(attn_vecs.reshape(B * T, D_MODEL).astype(jnp.bfloat16),
                         w_cls_ref[i], preferred_element_type=jnp.float32)
                 + b_cls_ref[i])                                              # (B*T, 128)
        out_ref[i] = logit.reshape(B, T, CLS_PAD)


def fused_forward(patches, params, *, b_tile=B_TILE):
    """patches: (N, L, PATCH_DIM_PAD) bf16 -> logits (NUM_ATTN, N, T, CLS_PAD) f32."""
    N = patches.shape[0]
    n_pad = pl.cdiv(N, b_tile) * b_tile
    if n_pad != N:
        patches = jnp.pad(patches, ((0, n_pad - N), (0, 0), (0, 0)))
    out = pl.pallas_call(
        _fused_forward_kernel,
        out_shape=jax.ShapeDtypeStruct((NUM_ATTN, n_pad, T, CLS_PAD), jnp.float32),
        grid=(n_pad // b_tile,),
        in_specs=[
            pl.BlockSpec((b_tile, L, PATCH_DIM_PAD), lambda b: (b, 0, 0)),        # patches
            pl.BlockSpec((PATCH_DIM_PAD, D_MODEL), lambda b: (0, 0)),             # w_embed
            pl.BlockSpec((1, D_MODEL), lambda b: (0, 0)),                         # b_embed
            pl.BlockSpec((NUM_ATTN, T, D_MODEL), lambda b: (0, 0, 0)),            # q (precomputed)
            pl.BlockSpec((NUM_ATTN, D_MODEL, CLS_PAD), lambda b: (0, 0, 0)),      # w_cls
            pl.BlockSpec((NUM_ATTN, 1, CLS_PAD), lambda b: (0, 0, 0)),            # b_cls
            pl.BlockSpec((NUM_ATTN - 1, D_MODEL, HIDDEN), lambda b: (0, 0, 0)),   # w1
            pl.BlockSpec((NUM_ATTN - 1, 1, HIDDEN), lambda b: (0, 0, 0)),         # b1
            pl.BlockSpec((NUM_ATTN - 1, HIDDEN, D_MODEL), lambda b: (0, 0, 0)),   # w2
            pl.BlockSpec((NUM_ATTN - 1, 1, D_MODEL), lambda b: (0, 0, 0)),        # b2
        ],
        out_specs=pl.BlockSpec((NUM_ATTN, b_tile, T, CLS_PAD), lambda b: (0, b, 0, 0)),
        compiler_params=pltpu.CompilerParams(dimension_semantics=("parallel",)),
    )(patches,
      params["w_embed"], params["b_embed"], params["q_stages"],
      params["w_cls_all"], params["b_cls_all"],
      params["w1_all"], params["b1_all"], params["w2_all"], params["b2_all"])
    return out[:, :N] if n_pad != N else out


# ---------------- glue (plain JAX) ----------------
def patchify(images):
    """NCHW images -> (N, L, PATCH_DIM_PAD) bf16 patches (row-major over fH, fW)."""
    N = images.shape[0]
    x = images.reshape(N, C_IN, FH, PATCH, FW, PATCH)
    x = x.transpose(0, 2, 4, 1, 3, 5)                       # (N, fH, fW, C, P, P)
    x = x.reshape(N, L, PATCH_DIM)
    x = jnp.pad(x, ((0, 0), (0, 0), (0, PATCH_DIM_PAD - PATCH_DIM)))
    return x.astype(jnp.bfloat16)


def init_params(key):
    ks = jax.random.split(key, 5)
    scale = 0.02
    p = {}
    w_embed = jax.random.normal(ks[0], (PATCH_DIM, D_MODEL), jnp.float32) * scale
    p["w_embed"] = jnp.pad(w_embed, ((0, PATCH_DIM_PAD - PATCH_DIM), (0, 0))).astype(jnp.bfloat16)
    p["b_embed"] = jnp.zeros((1, D_MODEL), jnp.float32)

    # sinusoidal positional encoding -> per-stage learned query projections, precomputed
    # on the host (batch-invariant) with the 1/sqrt(D) attention scale folded in.
    pos = np.arange(T, dtype=np.float32)[:, None]
    div = np.exp(np.arange(0, D_MODEL, 2, dtype=np.float32) * (-np.log(10000.0) / D_MODEL))
    pe = np.zeros((T, D_MODEL), np.float32)
    pe[:, 0::2] = np.sin(pos * div)
    pe[:, 1::2] = np.cos(pos * div)
    q_pos = jnp.asarray(pe)                                                 # (T, D)
    wq = jax.random.normal(ks[1], (NUM_ATTN, D_MODEL, D_MODEL), jnp.float32) * scale
    q_stages = jnp.einsum('td,idk->itk', q_pos, wq) * INV_SQRT_D            # (3, T, D), bq = 0
    p["q_stages"] = q_stages.astype(jnp.bfloat16)

    # per-stage classifier heads, zero-padded to 128 lanes
    w_cls = jax.random.normal(ks[2], (NUM_ATTN, D_MODEL, NUM_CLASSES), jnp.float32) * scale
    p["w_cls_all"] = jnp.pad(w_cls, ((0, 0), (0, 0), (0, CLS_PAD - NUM_CLASSES))).astype(jnp.bfloat16)
    p["b_cls_all"] = jnp.zeros((NUM_ATTN, 1, CLS_PAD), jnp.float32)

    # per-stage Trans FFN weights
    p["w1_all"] = (jax.random.normal(ks[3], (NUM_ATTN - 1, D_MODEL, HIDDEN), jnp.float32)
                   * scale).astype(jnp.bfloat16)
    p["b1_all"] = jnp.zeros((NUM_ATTN - 1, 1, HIDDEN), jnp.float32)
    p["w2_all"] = (jax.random.normal(ks[4], (NUM_ATTN - 1, HIDDEN, D_MODEL), jnp.float32)
                   * scale).astype(jnp.bfloat16)
    p["b2_all"] = jnp.zeros((NUM_ATTN - 1, 1, D_MODEL), jnp.float32)
    return p


def base_model_forward(images, params):
    """Training path of BaseModel.forward (no_debug=False, is_eval=False):
       returns the torch.cat(logits, dim=0) equivalent: (NUM_ATTN * N, T, NUM_CLASSES)."""
    N = images.shape[0]
    patches = patchify(images)                               # (N, L, 256) bf16
    out = fused_forward(patches, params)                     # (3, N, T, 128) f32
    # slice padded classes away immediately; fold (stage, batch) -> torch.cat(dim=0) order
    return out[..., :NUM_CLASSES].reshape(NUM_ATTN * N, T, NUM_CLASSES)


if __name__ == "__main__":
    key = jax.random.PRNGKey(0)
    k_img, k_param = jax.random.split(key)
    N = 32                                                   # 2 grid steps of B_TILE=16
    images = jax.random.normal(k_img, (N, C_IN, IMG_H, IMG_W), jnp.float32)
    params = init_params(k_param)

    out = jax.jit(base_model_forward)(images, params)
    out = jax.block_until_ready(out)

    assert out.shape == (NUM_ATTN * N, T, NUM_CLASSES), out.shape
    assert bool(jnp.all(jnp.isfinite(out)))
    print("KERNEL_OK")
</pallas_src>

<mosaic_0001>
module attributes {stable_mosaic.version = 11 : i64} {
  func.func @_fused_forward_kernel(%arg0: i32, %arg1: memref<16x32x256xbf16, #tpu.memory_space<vmem>>, %arg2: memref<256x32xbf16, #tpu.memory_space<vmem>>, %arg3: memref<1x32xf32, #tpu.memory_space<vmem>>, %arg4: memref<3x8x32xbf16, #tpu.memory_space<vmem>>, %arg5: memref<3x32x128xbf16, #tpu.memory_space<vmem>>, %arg6: memref<3x1x128xf32, #tpu.memory_space<vmem>>, %arg7: memref<2x32x128xbf16, #tpu.memory_space<vmem>>, %arg8: memref<2x1x128xf32, #tpu.memory_space<vmem>>, %arg9: memref<2x128x32xbf16, #tpu.memory_space<vmem>>, %arg10: memref<2x1x32xf32, #tpu.memory_space<vmem>>, %arg11: memref<3x16x8x128xf32, #tpu.memory_space<vmem>>) attributes {dimension_semantics = [#tpu.dimension_semantics<parallel>], iteration_bounds = array<i64: 2>, scalar_prefetch = 0 : i64, scratch_operands = 0 : i64, tpu.core_type = #tpu.core_type<tc>, window_params = [{transform_indices = @transform_0, window_bounds = array<i64: 16, 32, 256>}, {pipeline_mode = #tpu.pipeline_mode<synchronous>, transform_indices = @transform_1, window_bounds = array<i64: 256, 32>}, {pipeline_mode = #tpu.pipeline_mode<synchronous>, transform_indices = @transform_2, window_bounds = array<i64: 1, 32>}, {pipeline_mode = #tpu.pipeline_mode<synchronous>, transform_indices = @transform_3, window_bounds = array<i64: 3, 8, 32>}, {pipeline_mode = #tpu.pipeline_mode<synchronous>, transform_indices = @transform_4, window_bounds = array<i64: 3, 32, 128>}, {pipeline_mode = #tpu.pipeline_mode<synchronous>, transform_indices = @transform_5, window_bounds = array<i64: 3, 1, 128>}, {pipeline_mode = #tpu.pipeline_mode<synchronous>, transform_indices = @transform_6, window_bounds = array<i64: 2, 32, 128>}, {pipeline_mode = #tpu.pipeline_mode<synchronous>, transform_indices = @transform_7, window_bounds = array<i64: 2, 1, 128>}, {pipeline_mode = #tpu.pipeline_mode<synchronous>, transform_indices = @transform_8, window_bounds = array<i64: 2, 128, 32>}, {pipeline_mode = #tpu.pipeline_mode<synchronous>, transform_indices = @transform_9, window_bounds = array<i64: 2, 1, 32>}, {transform_indices = @transform_10, window_bounds = array<i64: 3, 16, 8, 128>}]} {
    %c0 = arith.constant 0 : index
    %c0_0 = arith.constant 0 : index
    %c0_1 = arith.constant 0 : index
    %0 = vector.load %arg1[%c0, %c0_0, %c0_1] : memref<16x32x256xbf16, #tpu.memory_space<vmem>>, vector<16x32x256xbf16>
    %1 = vector.shape_cast %0 : vector<16x32x256xbf16> to vector<512x256xbf16>
    %c0_2 = arith.constant 0 : index
    %c0_3 = arith.constant 0 : index
    %2 = vector.load %arg2[%c0_2, %c0_3] : memref<256x32xbf16, #tpu.memory_space<vmem>>, vector<256x32xbf16>
    %cst = arith.constant dense<0.000000e+00> : vector<512x32xf32>
    %3 = tpu.matmul %1, %2, %cst {dimension_numbers = #tpu.dot_dimension_numbers<[1], [0], [0], [1], [0, 0, 1, 1], [], []>} : vector<512x256xbf16>, vector<256x32xbf16>, vector<512x32xf32> -> vector<512x32xf32>
    %c0_4 = arith.constant 0 : index
    %c0_5 = arith.constant 0 : index
    %4 = vector.load %arg3[%c0_4, %c0_5] : memref<1x32xf32, #tpu.memory_space<vmem>>, vector<1x32xf32>
    %5 = vector.broadcast %4 : vector<1x32xf32> to vector<512x32xf32>
    %6 = arith.addf %3, %5 : vector<512x32xf32>
    %7 = arith.truncf %6 : vector<512x32xf32> to vector<512x32xbf16>
    %8 = vector.shape_cast %7 : vector<512x32xbf16> to vector<16x32x32xbf16>
    %c0_6 = arith.constant 0 : index
    %c0_7 = arith.constant 0 : index
    %c0_8 = arith.constant 0 : index
    %9 = vector.load %arg4[%c0_6, %c0_7, %c0_8] : memref<3x8x32xbf16, #tpu.memory_space<vmem>>, vector<1x8x32xbf16>
    %10 = vector.shape_cast %9 : vector<1x8x32xbf16> to vector<8x32xbf16>
    %11 = vector.shape_cast %10 : vector<8x32xbf16> to vector<1x8x32xbf16>
    %12 = vector.broadcast %11 : vector<1x8x32xbf16> to vector<16x8x32xbf16>
    "tpu.trace_start"() <{level = 10 : i32, message = "btd,bld->btl"}> : () -> ()
    %cst_9 = arith.constant dense<0.000000e+00> : vector<16x8x32xf32>
    %13 = tpu.matmul %12, %8, %cst_9 {dimension_numbers = #tpu.dot_dimension_numbers<[2], [2], [1], [1], [0, 0, 0, 1, 1, 1], [0], [0]>} : vector<16x8x32xbf16>, vector<16x32x32xbf16>, vector<16x8x32xf32> -> vector<16x8x32xf32>
    "tpu.trace_stop"() : () -> ()
    %cst_10 = arith.constant dense<0xFF800000> : vector<16x8xf32>
    %14 = vector.multi_reduction <maximumf>, %13, %cst_10 [2] : vector<16x8x32xf32> to vector<16x8xf32>
    %15 = vector.shape_cast %14 : vector<16x8xf32> to vector<16x8x1xf32>
    %16 = vector.broadcast %15 : vector<16x8x1xf32> to vector<16x8x32xf32>
    %17 = arith.subf %13, %16 : vector<16x8x32xf32>
    %18 = math.exp %17 : vector<16x8x32xf32>
    %cst_11 = arith.constant dense<0.000000e+00> : vector<16x8xf32>
    %19 = vector.multi_reduction <add>, %18, %cst_11 [2] : vector<16x8x32xf32> to vector<16x8xf32>
    %20 = vector.shape_cast %19 : vector<16x8xf32> to vector<16x8x1xf32>
    %21 = tpu.reciprocal %20 {approx = true} : vector<16x8x1xf32> -> vector<16x8x1xf32>
    %22 = vector.broadcast %21 : vector<16x8x1xf32> to vector<16x8x32xf32>
    %23 = arith.mulf %18, %22 : vector<16x8x32xf32>
    %24 = arith.truncf %23 : vector<16x8x32xf32> to vector<16x8x32xbf16>
    "tpu.trace_start"() <{level = 10 : i32, message = "btl,bld->btd"}> : () -> ()
    %cst_12 = arith.constant dense<0.000000e+00> : vector<16x8x32xf32>
    %25 = tpu.matmul %24, %8, %cst_12 {dimension_numbers = #tpu.dot_dimension_numbers<[2], [1], [1], [2], [0, 0, 0, 1, 1, 2], [0], [0]>} : vector<16x8x32xbf16>, vector<16x32x32xbf16>, vector<16x8x32xf32> -> vector<16x8x32xf32>
    "tpu.trace_stop"() : () -> ()
    %26 = vector.shape_cast %25 : vector<16x8x32xf32> to vector<128x32xf32>
    %27 = arith.truncf %26 : vector<128x32xf32> to vector<128x32xbf16>
    %c0_13 = arith.constant 0 : index
    %c0_14 = arith.constant 0 : index
    %c0_15 = arith.constant 0 : index
    %28 = vector.load %arg5[%c0_13, %c0_14, %c0_15] : memref<3x32x128xbf16, #tpu.memory_space<vmem>>, vector<1x32x128xbf16>
    %29 = vector.shape_cast %28 : vector<1x32x128xbf16> to vector<32x128xbf16>
    %cst_16 = arith.constant dense<0.000000e+00> : vector<128x128xf32>
    %30 = tpu.matmul %27, %29, %cst_16 {dimension_numbers = #tpu.dot_dimension_numbers<[1], [0], [0], [1], [0, 0, 1, 1], [], []>} : vector<128x32xbf16>, vector<32x128xbf16>, vector<128x128xf32> -> vector<128x128xf32>
    %c0_17 = arith.constant 0 : index
    %c0_18 = arith.constant 0 : index
    %c0_19 = arith.constant 0 : index
    %31 = vector.load %arg6[%c0_17, %c0_18, %c0_19] : memref<3x1x128xf32, #tpu.memory_space<vmem>>, vector<1x1x128xf32>
    %32 = vector.shape_cast %31 : vector<1x1x128xf32> to vector<1x128xf32>
    %33 = vector.broadcast %32 : vector<1x128xf32> to vector<128x128xf32>
    %34 = arith.addf %30, %33 : vector<128x128xf32>
    %35 = vector.shape_cast %34 : vector<128x128xf32> to vector<16x8x128xf32>
    %c0_20 = arith.constant 0 : index
    %c0_21 = arith.constant 0 : index
    %c0_22 = arith.constant 0 : index
    %c0_23 = arith.constant 0 : index
    %36 = vector.load %arg11[%c0_20, %c0_21, %c0_22, %c0_23] : memref<3x16x8x128xf32, #tpu.memory_space<vmem>>, vector<1x16x8x128xf32>
    %37 = vector.shape_cast %36 : vector<1x16x8x128xf32> to vector<16x8x128xf32>
    %38 = vector.shape_cast %35 : vector<16x8x128xf32> to vector<1x16x8x128xf32>
    tpu.vector_store %arg11[%c0_20, %c0_21, %c0_22, %c0_23], %38 {strides = array<i32>} : memref<3x16x8x128xf32, #tpu.memory_space<vmem>>, vector<1x16x8x128xf32>,
    %39 = arith.truncf %6 : vector<512x32xf32> to vector<512x32xbf16>
    %c0_24 = arith.constant 0 : index
    %c0_25 = arith.constant 0 : index
    %c0_26 = arith.constant 0 : index
    %40 = vector.load %arg7[%c0_24, %c0_25, %c0_26] : memref<2x32x128xbf16, #tpu.memory_space<vmem>>, vector<1x32x128xbf16>
    %41 = vector.shape_cast %40 : vector<1x32x128xbf16> to vector<32x128xbf16>
    %cst_27 = arith.constant dense<0.000000e+00> : vector<512x128xf32>
    %42 = tpu.matmul %39, %41, %cst_27 {dimension_numbers = #tpu.dot_dimension_numbers<[1], [0], [0], [1], [0, 0, 1, 1], [], []>} : vector<512x32xbf16>, vector<32x128xbf16>, vector<512x128xf32> -> vector<512x128xf32>
    %c0_28 = arith.constant 0 : index
    %c0_29 = arith.constant 0 : index
    %c0_30 = arith.constant 0 : index
    %43 = vector.load %arg8[%c0_28, %c0_29, %c0_30] : memref<2x1x128xf32, #tpu.memory_space<vmem>>, vector<1x1x128xf32>
    %44 = vector.shape_cast %43 : vector<1x1x128xf32> to vector<1x128xf32>
    %45 = vector.broadcast %44 : vector<1x128xf32> to vector<512x128xf32>
    %46 = arith.addf %42, %45 : vector<512x128xf32>
    %cst_31 = arith.constant 0.000000e+00 : f32
    %47 = vector.broadcast %cst_31 : f32 to vector<512x128xf32>
    %48 = arith.maximumf %46, %47 : vector<512x128xf32>
    %49 = arith.truncf %48 : vector<512x128xf32> to vector<512x128xbf16>
    %c0_32 = arith.constant 0 : index
    %c0_33 = arith.constant 0 : index
    %c0_34 = arith.constant 0 : index
    %50 = vector.load %arg9[%c0_32, %c0_33, %c0_34] : memref<2x128x32xbf16, #tpu.memory_space<vmem>>, vector<1x128x32xbf16>
    %51 = vector.shape_cast %50 : vector<1x128x32xbf16> to vector<128x32xbf16>
    %cst_35 = arith.constant dense<0.000000e+00> : vector<512x32xf32>
    %52 = tpu.matmul %49, %51, %cst_35 {dimension_numbers = #tpu.dot_dimension_numbers<[1], [0], [0], [1], [0, 0, 1, 1], [], []>} : vector<512x128xbf16>, vector<128x32xbf16>, vector<512x32xf32> -> vector<512x32xf32>
    %c0_36 = arith.constant 0 : index
    %c0_37 = arith.constant 0 : index
    %c0_38 = arith.constant 0 : index
    %53 = vector.load %arg10[%c0_36, %c0_37, %c0_38] : memref<2x1x32xf32, #tpu.memory_space<vmem>>, vector<1x1x32xf32>
    %54 = vector.shape_cast %53 : vector<1x1x32xf32> to vector<1x32xf32>
    %55 = vector.broadcast %54 : vector<1x32xf32> to vector<512x32xf32>
    %56 = arith.addf %52, %55 : vector<512x32xf32>
    %57 = tpu.transpose %23, [0, 2, 1] : vector<16x8x32xf32> -> vector<16x32x8xf32>
    %cst_39 = arith.constant dense<0.000000e+00> : vector<16x32xf32>
    %58 = vector.multi_reduction <add>, %57, %cst_39 [2] : vector<16x32x8xf32> to vector<16x32xf32>
    %59 = vector.shape_cast %58 : vector<16x32xf32> to vector<16x32x1xf32>
    %60 = vector.shape_cast %59 : vector<16x32x1xf32> to vector<512x1xf32>
    %61 = vector.broadcast %60 : vector<512x1xf32> to vector<512x32xf32>
    %62 = arith.mulf %61, %56 : vector<512x32xf32>
    %63 = arith.addf %6, %62 : vector<512x32xf32>
    %64 = arith.truncf %63 : vector<512x32xf32> to vector<512x32xbf16>
    %65 = vector.shape_cast %64 : vector<512x32xbf16> to vector<16x32x32xbf16>
    %c1 = arith.constant 1 : index
    %c0_40 = arith.constant 0 : index
    %c0_41 = arith.constant 0 : index
    %66 = vector.load %arg4[%c1, %c0_40, %c0_41] : memref<3x8x32xbf16, #tpu.memory_space<vmem>>, vector<1x8x32xbf16>
    %67 = vector.shape_cast %66 : vector<1x8x32xbf16> to vector<8x32xbf16>
    %68 = vector.shape_cast %67 : vector<8x32xbf16> to vector<1x8x32xbf16>
    %69 = vector.broadcast %68 : vector<1x8x32xbf16> to vector<16x8x32xbf16>
    "tpu.trace_start"() <{level = 10 : i32, message = "btd,bld->btl"}> : () -> ()
    %cst_42 = arith.constant dense<0.000000e+00> : vector<16x8x32xf32>
    %70 = tpu.matmul %69, %65, %cst_42 {dimension_numbers = #tpu.dot_dimension_numbers<[2], [2], [1], [1], [0, 0, 0, 1, 1, 1], [0], [0]>} : vector<16x8x32xbf16>, vector<16x32x32xbf16>, vector<16x8x32xf32> -> vector<16x8x32xf32>
    "tpu.trace_stop"() : () -> ()
    %cst_43 = arith.constant dense<0xFF800000> : vector<16x8xf32>
    %71 = vector.multi_reduction <maximumf>, %70, %cst_43 [2] : vector<16x8x32xf32> to vector<16x8xf32>
    %72 = vector.shape_cast %71 : vector<16x8xf32> to vector<16x8x1xf32>
    %73 = vector.broadcast %72 : vector<16x8x1xf32> to vector<16x8x32xf32>
    %74 = arith.subf %70, %73 : vector<16x8x32xf32>
    %75 = math.exp %74 : vector<16x8x32xf32>
    %cst_44 = arith.constant dense<0.000000e+00> : vector<16x8xf32>
    %76 = vector.multi_reduction <add>, %75, %cst_44 [2] : vector<16x8x32xf32> to vector<16x8xf32>
    %77 = vector.shape_cast %76 : vector<16x8xf32> to vector<16x8x1xf32>
    %78 = tpu.reciprocal %77 {approx = true} : vector<16x8x1xf32> -> vector<16x8x1xf32>
    %79 = vector.broadcast %78 : vector<16x8x1xf32> to vector<16x8x32xf32>
    %80 = arith.mulf %75, %79 : vector<16x8x32xf32>
    %81 = arith.truncf %80 : vector<16x8x32xf32> to vector<16x8x32xbf16>
    "tpu.trace_start"() <{level = 10 : i32, message = "btl,bld->btd"}> : () -> ()
    %cst_45 = arith.constant dense<0.000000e+00> : vector<16x8x32xf32>
    %82 = tpu.matmul %81, %65, %cst_45 {dimension_numbers = #tpu.dot_dimension_numbers<[2], [1], [1], [2], [0, 0, 0, 1, 1, 2], [0], [0]>} : vector<16x8x32xbf16>, vector<16x32x32xbf16>, vector<16x8x32xf32> -> vector<16x8x32xf32>
    "tpu.trace_stop"() : () -> ()
    %83 = vector.shape_cast %82 : vector<16x8x32xf32> to vector<128x32xf32>
    %84 = arith.truncf %83 : vector<128x32xf32> to vector<128x32xbf16>
    %c1_46 = arith.constant 1 : index
    %c0_47 = arith.constant 0 : index
    %c0_48 = arith.constant 0 : index
    %85 = vector.load %arg5[%c1_46, %c0_47, %c0_48] : memref<3x32x128xbf16, #tpu.memory_space<vmem>>, vector<1x32x128xbf16>
    %86 = vector.shape_cast %85 : vector<1x32x128xbf16> to vector<32x128xbf16>
    %cst_49 = arith.constant dense<0.000000e+00> : vector<128x128xf32>
    %87 = tpu.matmul %84, %86, %cst_49 {dimension_numbers = #tpu.dot_dimension_numbers<[1], [0], [0], [1], [0, 0, 1, 1], [], []>} : vector<128x32xbf16>, vector<32x128xbf16>, vector<128x128xf32> -> vector<128x128xf32>
    %c1_50 = arith.constant 1 : index
    %c0_51 = arith.constant 0 : index
    %c0_52 = arith.constant 0 : index
    %88 = vector.load %arg6[%c1_50, %c0_51, %c0_52] : memref<3x1x128xf32, #tpu.memory_space<vmem>>, vector<1x1x128xf32>
    %89 = vector.shape_cast %88 : vector<1x1x128xf32> to vector<1x128xf32>
    %90 = vector.broadcast %89 : vector<1x128xf32> to vector<128x128xf32>
    %91 = arith.addf %87, %90 : vector<128x128xf32>
    %92 = vector.shape_cast %91 : vector<128x128xf32> to vector<16x8x128xf32>
    %c1_53 = arith.constant 1 : index
    %c0_54 = arith.constant 0 : index
    %c0_55 = arith.constant 0 : index
    %c0_56 = arith.constant 0 : index
    %93 = vector.load %arg11[%c1_53, %c0_54, %c0_55, %c0_56] : memref<3x16x8x128xf32, #tpu.memory_space<vmem>>, vector<1x16x8x128xf32>
    %94 = vector.shape_cast %93 : vector<1x16x8x128xf32> to vector<16x8x128xf32>
    %95 = vector.shape_cast %92 : vector<16x8x128xf32> to vector<1x16x8x128xf32>
    tpu.vector_store %arg11[%c1_53, %c0_54, %c0_55, %c0_56], %95 {strides = array<i32>} : memref<3x16x8x128xf32, #tpu.memory_space<vmem>>, vector<1x16x8x128xf32>,
    %96 = arith.truncf %63 : vector<512x32xf32> to vector<512x32xbf16>
    %c1_57 = arith.constant 1 : index
    %c0_58 = arith.constant 0 : index
    %c0_59 = arith.constant 0 : index
    %97 = vector.load %arg7[%c1_57, %c0_58, %c0_59] : memref<2x32x128xbf16, #tpu.memory_space<vmem>>, vector<1x32x128xbf16>
    %98 = vector.shape_cast %97 : vector<1x32x128xbf16> to vector<32x128xbf16>
    %cst_60 = arith.constant dense<0.000000e+00> : vector<512x128xf32>
    %99 = tpu.matmul %96, %98, %cst_60 {dimension_numbers = #tpu.dot_dimension_numbers<[1], [0], [0], [1], [0, 0, 1, 1], [], []>} : vector<512x32xbf16>, vector<32x128xbf16>, vector<512x128xf32> -> vector<512x128xf32>
    %c1_61 = arith.constant 1 : index
    %c0_62 = arith.constant 0 : index
    %c0_63 = arith.constant 0 : index
    %100 = vector.load %arg8[%c1_61, %c0_62, %c0_63] : memref<2x1x128xf32, #tpu.memory_space<vmem>>, vector<1x1x128xf32>
    %101 = vector.shape_cast %100 : vector<1x1x128xf32> to vector<1x128xf32>
    %102 = vector.broadcast %101 : vector<1x128xf32> to vector<512x128xf32>
    %103 = arith.addf %99, %102 : vector<512x128xf32>
    %cst_64 = arith.constant 0.000000e+00 : f32
    %104 = vector.broadcast %cst_64 : f32 to vector<512x128xf32>
    %105 = arith.maximumf %103, %104 : vector<512x128xf32>
    %106 = arith.truncf %105 : vector<512x128xf32> to vector<512x128xbf16>
    %c1_65 = arith.constant 1 : index
    %c0_66 = arith.constant 0 : index
    %c0_67 = arith.constant 0 : index
    %107 = vector.load %arg9[%c1_65, %c0_66, %c0_67] : memref<2x128x32xbf16, #tpu.memory_space<vmem>>, vector<1x128x32xbf16>
    %108 = vector.shape_cast %107 : vector<1x128x32xbf16> to vector<128x32xbf16>
    %cst_68 = arith.constant dense<0.000000e+00> : vector<512x32xf32>
    %109 = tpu.matmul %106, %108, %cst_68 {dimension_numbers = #tpu.dot_dimension_numbers<[1], [0], [0], [1], [0, 0, 1, 1], [], []>} : vector<512x128xbf16>, vector<128x32xbf16>, vector<512x32xf32> -> vector<512x32xf32>
    %c1_69 = arith.constant 1 : index
    %c0_70 = arith.constant 0 : index
    %c0_71 = arith.constant 0 : index
    %110 = vector.load %arg10[%c1_69, %c0_70, %c0_71] : memref<2x1x32xf32, #tpu.memory_space<vmem>>, vector<1x1x32xf32>
    %111 = vector.shape_cast %110 : vector<1x1x32xf32> to vector<1x32xf32>
    %112 = vector.broadcast %111 : vector<1x32xf32> to vector<512x32xf32>
    %113 = arith.addf %109, %112 : vector<512x32xf32>
    %114 = tpu.transpose %80, [0, 2, 1] : vector<16x8x32xf32> -> vector<16x32x8xf32>
    %cst_72 = arith.constant dense<0.000000e+00> : vector<16x32xf32>
    %115 = vector.multi_reduction <add>, %114, %cst_72 [2] : vector<16x32x8xf32> to vector<16x32xf32>
    %116 = vector.shape_cast %115 : vector<16x32xf32> to vector<16x32x1xf32>
    %117 = vector.shape_cast %116 : vector<16x32x1xf32> to vector<512x1xf32>
    %118 = vector.broadcast %117 : vector<512x1xf32> to vector<512x32xf32>
    %119 = arith.mulf %118, %113 : vector<512x32xf32>
    %120 = arith.addf %63, %119 : vector<512x32xf32>
    %121 = arith.truncf %120 : vector<512x32xf32> to vector<512x32xbf16>
    %122 = vector.shape_cast %121 : vector<512x32xbf16> to vector<16x32x32xbf16>
    %c2 = arith.constant 2 : index
    %c0_73 = arith.constant 0 : index
    %c0_74 = arith.constant 0 : index
    %123 = vector.load %arg4[%c2, %c0_73, %c0_74] : memref<3x8x32xbf16, #tpu.memory_space<vmem>>, vector<1x8x32xbf16>
    %124 = vector.shape_cast %123 : vector<1x8x32xbf16> to vector<8x32xbf16>
    %125 = vector.shape_cast %124 : vector<8x32xbf16> to vector<1x8x32xbf16>
    %126 = vector.broadcast %125 : vector<1x8x32xbf16> to vector<16x8x32xbf16>
    "tpu.trace_start"() <{level = 10 : i32, message = "btd,bld->btl"}> : () -> ()
    %cst_75 = arith.constant dense<0.000000e+00> : vector<16x8x32xf32>
    %127 = tpu.matmul %126, %122, %cst_75 {dimension_numbers = #tpu.dot_dimension_numbers<[2], [2], [1], [1], [0, 0, 0, 1, 1, 1], [0], [0]>} : vector<16x8x32xbf16>, vector<16x32x32xbf16>, vector<16x8x32xf32> -> vector<16x8x32xf32>
    "tpu.trace_stop"() : () -> ()
    %cst_76 = arith.constant dense<0xFF800000> : vector<16x8xf32>
    %128 = vector.multi_reduction <maximumf>, %127, %cst_76 [2] : vector<16x8x32xf32> to vector<16x8xf32>
    %129 = vector.shape_cast %128 : vector<16x8xf32> to vector<16x8x1xf32>
    %130 = vector.broadcast %129 : vector<16x8x1xf32> to vector<16x8x32xf32>
    %131 = arith.subf %127, %130 : vector<16x8x32xf32>
    %132 = math.exp %131 : vector<16x8x32xf32>
    %cst_77 = arith.constant dense<0.000000e+00> : vector<16x8xf32>
    %133 = vector.multi_reduction <add>, %132, %cst_77 [2] : vector<16x8x32xf32> to vector<16x8xf32>
    %134 = vector.shape_cast %133 : vector<16x8xf32> to vector<16x8x1xf32>
    %135 = tpu.reciprocal %134 {approx = true} : vector<16x8x1xf32> -> vector<16x8x1xf32>
    %136 = vector.broadcast %135 : vector<16x8x1xf32> to vector<16x8x32xf32>
    %137 = arith.mulf %132, %136 : vector<16x8x32xf32>
    %138 = arith.truncf %137 : vector<16x8x32xf32> to vector<16x8x32xbf16>
    "tpu.trace_start"() <{level = 10 : i32, message = "btl,bld->btd"}> : () -> ()
    %cst_78 = arith.constant dense<0.000000e+00> : vector<16x8x32xf32>
    %139 = tpu.matmul %138, %122, %cst_78 {dimension_numbers = #tpu.dot_dimension_numbers<[2], [1], [1], [2], [0, 0, 0, 1, 1, 2], [0], [0]>} : vector<16x8x32xbf16>, vector<16x32x32xbf16>, vector<16x8x32xf32> -> vector<16x8x32xf32>
    "tpu.trace_stop"() : () -> ()
    %140 = vector.shape_cast %139 : vector<16x8x32xf32> to vector<128x32xf32>
    %141 = arith.truncf %140 : vector<128x32xf32> to vector<128x32xbf16>
    %c2_79 = arith.constant 2 : index
    %c0_80 = arith.constant 0 : index
    %c0_81 = arith.constant 0 : index
    %142 = vector.load %arg5[%c2_79, %c0_80, %c0_81] : memref<3x32x128xbf16, #tpu.memory_space<vmem>>, vector<1x32x128xbf16>
    %143 = vector.shape_cast %142 : vector<1x32x128xbf16> to vector<32x128xbf16>
    %cst_82 = arith.constant dense<0.000000e+00> : vector<128x128xf32>
    %144 = tpu.matmul %141, %143, %cst_82 {dimension_numbers = #tpu.dot_dimension_numbers<[1], [0], [0], [1], [0, 0, 1, 1], [], []>} : vector<128x32xbf16>, vector<32x128xbf16>, vector<128x128xf32> -> vector<128x128xf32>
    %c2_83 = arith.constant 2 : index
    %c0_84 = arith.constant 0 : index
    %c0_85 = arith.constant 0 : index
    %145 = vector.load %arg6[%c2_83, %c0_84, %c0_85] : memref<3x1x128xf32, #tpu.memory_space<vmem>>, vector<1x1x128xf32>
    %146 = vector.shape_cast %145 : vector<1x1x128xf32> to vector<1x128xf32>
    %147 = vector.broadcast %146 : vector<1x128xf32> to vector<128x128xf32>
    %148 = arith.addf %144, %147 : vector<128x128xf32>
    %149 = vector.shape_cast %148 : vector<128x128xf32> to vector<16x8x128xf32>
    %c2_86 = arith.constant 2 : index
    %c0_87 = arith.constant 0 : index
    %c0_88 = arith.constant 0 : index
    %c0_89 = arith.constant 0 : index
    %150 = vector.load %arg11[%c2_86, %c0_87, %c0_88, %c0_89] : memref<3x16x8x128xf32, #tpu.memory_space<vmem>>, vector<1x16x8x128xf32>
    %151 = vector.shape_cast %150 : vector<1x16x8x128xf32> to vector<16x8x128xf32>
    %152 = vector.shape_cast %149 : vector<16x8x128xf32> to vector<1x16x8x128xf32>
    tpu.vector_store %arg11[%c2_86, %c0_87, %c0_88, %c0_89], %152 {strides = array<i32>} : memref<3x16x8x128xf32, #tpu.memory_space<vmem>>, vector<1x16x8x128xf32>,
    return
  }
  func.func @transform_0(%arg0: i32) -> (i32, i32, i32) {
    %c0_i32 = arith.constant 0 : i32
    %c0_i32_0 = arith.constant 0 : i32
    %c0_i32_1 = arith.constant 0 : i32
    return %arg0, %c0_i32, %c0_i32_0 : i32, i32, i32
  }
  func.func @transform_1(%arg0: i32) -> (i32, i32) {
    %c0_i32 = arith.constant 0 : i32
    %c0_i32_0 = arith.constant 0 : i32
    %c0_i32_1 = arith.constant 0 : i32
    return %c0_i32, %c0_i32_0 : i32, i32
  }
  func.func @transform_2(%arg0: i32) -> (i32, i32) {
    %c0_i32 = arith.constant 0 : i32
    %c0_i32_0 = arith.constant 0 : i32
    %c0_i32_1 = arith.constant 0 : i32
    return %c0_i32, %c0_i32_0 : i32, i32
  }
  func.func @transform_3(%arg0: i32) -> (i32, i32, i32) {
    %c0_i32 = arith.constant 0 : i32
    %c0_i32_0 = arith.constant 0 : i32
    %c0_i32_1 = arith.constant 0 : i32
    %c0_i32_2 = arith.constant 0 : i32
    return %c0_i32, %c0_i32_0, %c0_i32_1 : i32, i32, i32
  }
  func.func @transform_4(%arg0: i32) -> (i32, i32, i32) {
    %c0_i32 = arith.constant 0 : i32
    %c0_i32_0 = arith.constant 0 : i32
    %c0_i32_1 = arith.constant 0 : i32
    %c0_i32_2 = arith.constant 0 : i32
    return %c0_i32, %c0_i32_0, %c0_i32_1 : i32, i32, i32
  }
  func.func @transform_5(%arg0: i32) -> (i32, i32, i32) {
    %c0_i32 = arith.constant 0 : i32
    %c0_i32_0 = arith.constant 0 : i32
    %c0_i32_1 = arith.constant 0 : i32
    %c0_i32_2 = arith.constant 0 : i32
    return %c0_i32, %c0_i32_0, %c0_i32_1 : i32, i32, i32
  }
  func.func @transform_6(%arg0: i32) -> (i32, i32, i32) {
    %c0_i32 = arith.constant 0 : i32
    %c0_i32_0 = arith.constant 0 : i32
    %c0_i32_1 = arith.constant 0 : i32
    %c0_i32_2 = arith.constant 0 : i32
    return %c0_i32, %c0_i32_0, %c0_i32_1 : i32, i32, i32
  }
  func.func @transform_7(%arg0: i32) -> (i32, i32, i32) {
    %c0_i32 = arith.constant 0 : i32
    %c0_i32_0 = arith.constant 0 : i32
    %c0_i32_1 = arith.constant 0 : i32
    %c0_i32_2 = arith.constant 0 : i32
    return %c0_i32, %c0_i32_0, %c0_i32_1 : i32, i32, i32
  }
  func.func @transform_8(%arg0: i32) -> (i32, i32, i32) {
    %c0_i32 = arith.constant 0 : i32
    %c0_i32_0 = arith.constant 0 : i32
    %c0_i32_1 = arith.constant 0 : i32
    %c0_i32_2 = arith.constant 0 : i32
    return %c0_i32, %c0_i32_0, %c0_i32_1 : i32, i32, i32
  }
  func.func @transform_9(%arg0: i32) -> (i32, i32, i32) {
    %c0_i32 = arith.constant 0 : i32
    %c0_i32_0 = arith.constant 0 : i32
    %c0_i32_1 = arith.constant 0 : i32
    %c0_i32_2 = arith.constant 0 : i32
    return %c0_i32, %c0_i32_0, %c0_i32_1 : i32, i32, i32
  }
  func.func @transform_10(%arg0: i32) -> (i32, i32, i32, i32) {
    %c0_i32 = arith.constant 0 : i32
    %c0_i32_0 = arith.constant 0 : i32
    %c0_i32_1 = arith.constant 0 : i32
    %c0_i32_2 = arith.constant 0 : i32
    return %c0_i32, %arg0, %c0_i32_0, %c0_i32_1 : i32, i32, i32, i32
  }
}

</mosaic_0001>

<llo_original>
// kernel: base_model_forward.1
$region0: #{base_model_forward.1}
  #allocation0 [shape = 'u32[]', space=smem, size = 0x4, offset = 0x4, fixed_abs, tag = 'smem constant byte address 0x4 - core index']
  #allocation1 [shape = 'u32[144,128]{1,0:T(1,128)}', space=vmem, size = 0x12000, scoped, tag = 'internal scratch']
  %s0 = inlined_call_operand.vmem [shape: bf16[32,32,256], index: 0, kind: input, shape index: {}]
  %s1 = inlined_call_operand.vmem [shape: bf16[256,32], index: 1, kind: input, shape index: {}]
  %s2 = inlined_call_operand.vmem [shape: f32[1,32], index: 2, kind: input, shape index: {}]
  %s3 = inlined_call_operand.vmem [shape: bf16[3,8,32], index: 3, kind: input, shape index: {}]
  %s4 = inlined_call_operand.vmem [shape: bf16[3,32,128], index: 4, kind: input, shape index: {}]
  %s5 = inlined_call_operand.vmem [shape: f32[3,1,128], index: 5, kind: input, shape index: {}]
  %s6 = inlined_call_operand.vmem [shape: bf16[2,32,128], index: 6, kind: input, shape index: {}]
  %s7 = inlined_call_operand.vmem [shape: f32[2,1,128], index: 7, kind: input, shape index: {}]
  %s8 = inlined_call_operand.vmem [shape: bf16[2,128,32], index: 8, kind: input, shape index: {}]
  %s9 = inlined_call_operand.vmem [shape: f32[2,1,32], index: 9, kind: input, shape index: {}]
  %s10 = inlined_call_operand.vmem [shape: f32[3,32,8,128], index: 10, kind: output, shape index: {}]
  %s11 = sld [smem:[#allocation0]]
  $region107: #{base_model_forward.1} parent=0
    _
  %s13 = ssub.s32 1, %s11
  %s14 = scalar_select 0, %s13, %s11
  $region1: #{base_model_forward.1} parent=0
    #allocation2 [shape = 'u8[393216]{0}', space=vmem, size = 0x60000, scoped, tag = 'output window, operand 0']
    loop: start=0, step=1, limit=4
    $region2: #{base_model_forward.1} parent=1 // loop_pre_header
      _
    $region3: #{base_model_forward.1} parent=1 // loop_header
      %s16 = sphi 0, %s20
      %p17 = scmp.ge.s32.totalorder %s16, 4
      %s26 = sphi 0, %s28
      %s29 = sphi 0, %s26
      %s30 = sphi 0, %s29
      %s46 = sphi 0, %s30
      %s50 = sphi 0, %s50
      %s52 = sphi 0, %s50
      %s53 = sphi 0, %s52
      %s67 = sphi 0, %s53
      %s71 = sphi 0, %s71
      %s73 = sphi 0, %s71
      %s74 = sphi 0, %s73
      %s88 = sphi 0, %s74
      %s92 = sphi 0, %s92
      %s94 = sphi 0, %s92
      %s95 = sphi 0, %s94
      %s109 = sphi 0, %s95
      %s113 = sphi 0, %s113
      %s115 = sphi 0, %s113
      %s116 = sphi 0, %s115
      %s130 = sphi 0, %s116
      %s134 = sphi 0, %s134
      %s136 = sphi 0, %s134
      %s137 = sphi 0, %s136
      %s151 = sphi 0, %s137
      %s155 = sphi 0, %s155
      %s157 = sphi 0, %s155
      %s158 = sphi 0, %s157
      %s172 = sphi 0, %s158
      %s176 = sphi 0, %s176
      %s178 = sphi 0, %s176
      %s179 = sphi 0, %s178
      %s193 = sphi 0, %s179
      %s197 = sphi 0, %s197
      %s199 = sphi 0, %s197
      %s200 = sphi 0, %s199
      %s214 = sphi 0, %s200
      %s218 = sphi 0, %s218
      %s220 = sphi 0, %s218
      %s221 = sphi 0, %s220
      %s235 = sphi 0, %s221
      %s241 = sphi 0, %s243
      %s244 = sphi 0, %s241
      %s245 = sphi 0, %s244
      %s261 = sphi 0, %s245
    $region4: #{base_model_forward.1} parent=1 // loop_header_branch
      %19 = sbr.rel (%p17) target = $region8
    $region5: #{base_model_forward.1} parent=1 // loop_body
      %s21 = ssub.s32 %s16, 1
      %s22 = ssub.s32 %s16, 2
      %s23 = sadd.s32 %s16, 1
      %s24 = ssub.s32 %s16, %s23
      %p25 = scmp.eq.s32.totalorder %s24, 0
      %s27 = sadd.s32 %s26, 1
      %s28 = scalar_select %p25, %s26, %s27
      %p31 = pneg %p25
      %p32 = scmp.eq.s32.totalorder %s16, 1
      %p33 = por %p31, %p32
      %p34 = scmp.ne.s32.totalorder %s26, %s29
      %p35 = scmp.eq.s32.totalorder %s16, 0
      %p36 = por %p34, %p35
      %p37 = scmp.ne.s32.totalorder %s26, %s29
      %p38 = scmp.eq.s32.totalorder %s21, 1
      %p39 = por %p37, %p38
      %p40 = scmp.ne.s32.totalorder %s29, %s30
      %p41 = scmp.eq.s32.totalorder %s21, 0
      %p42 = por %p40, %p41
      %p43 = scmp.ne.s32.totalorder %s29, %s30
      %p44 = scmp.eq.s32.totalorder %s22, 1
      %p45 = por %p43, %p44
      %p47 = scmp.ne.s32.totalorder %s30, %s46
      %p48 = scmp.eq.s32.totalorder %s22, 0
      %p49 = por %p47, %p48
      %s51 = sadd.s32 %s50, 1
      %p54 = scmp.eq.s32.totalorder %s16, 1
      %p55 = scmp.ne.s32.totalorder %s50, %s52
      %p56 = scmp.eq.s32.totalorder %s16, 0
      %p57 = por %p55, %p56
      %p58 = scmp.ne.s32.totalorder %s50, %s52
      %p59 = scmp.eq.s32.totalorder %s21, 1
      %p60 = por %p58, %p59
      %p61 = scmp.ne.s32.totalorder %s52, %s53
      %p62 = scmp.eq.s32.totalorder %s21, 0
      %p63 = por %p61, %p62
      %p64 = scmp.ne.s32.totalorder %s52, %s53
      %p65 = scmp.eq.s32.totalorder %s22, 1
      %p66 = por %p64, %p65
      %p68 = scmp.ne.s32.totalorder %s53, %s67
      %p69 = scmp.eq.s32.totalorder %s22, 0
      %p70 = por %p68, %p69
      %s72 = sadd.s32 %s71, 1
      %p75 = scmp.eq.s32.totalorder %s16, 1
      %p76 = scmp.ne.s32.totalorder %s71, %s73
      %p77 = scmp.eq.s32.totalorder %s16, 0
      %p78 = por %p76, %p77
      %p79 = scmp.ne.s32.totalorder %s71, %s73
      %p80 = scmp.eq.s32.totalorder %s21, 1
      %p81 = por %p79, %p80
      %p82 = scmp.ne.s32.totalorder %s73, %s74
      %p83 = scmp.eq.s32.totalorder %s21, 0
      %p84 = por %p82, %p83
      %p85 = scmp.ne.s32.totalorder %s73, %s74
      %p86 = scmp.eq.s32.totalorder %s22, 1
      %p87 = por %p85, %p86
      %p89 = scmp.ne.s32.totalorder %s74, %s88
      %p90 = scmp.eq.s32.totalorder %s22, 0
      %p91 = por %p89, %p90
      %s93 = sadd.s32 %s92, 1
      %p96 = scmp.eq.s32.totalorder %s16, 1
      %p97 = scmp.ne.s32.totalorder %s92, %s94
      %p98 = scmp.eq.s32.totalorder %s16, 0
      %p99 = por %p97, %p98
      %p100 = scmp.ne.s32.totalorder %s92, %s94
      %p101 = scmp.eq.s32.totalorder %s21, 1
      %p102 = por %p100, %p101
      %p103 = scmp.ne.s32.totalorder %s94, %s95
      %p104 = scmp.eq.s32.totalorder %s21, 0
      %p105 = por %p103, %p104
      %p106 = scmp.ne.s32.totalorder %s94, %s95
      %p107 = scmp.eq.s32.totalorder %s22, 1
      %p108 = por %p106, %p107
      %p110 = scmp.ne.s32.totalorder %s95, %s109
      %p111 = scmp.eq.s32.totalorder %s22, 0
      %p112 = por %p110, %p111
      %s114 = sadd.s32 %s113, 1
      %p117 = scmp.eq.s32.totalorder %s16, 1
      %p118 = scmp.ne.s32.totalorder %s113, %s115
      %p119 = scmp.eq.s32.totalorder %s16, 0
      %p120 = por %p118, %p119
      %p121 = scmp.ne.s32.totalorder %s113, %s115
      %p122 = scmp.eq.s32.totalorder %s21, 1
      %p123 = por %p121, %p122
      %p124 = scmp.ne.s32.totalorder %s115, %s116
      %p125 = scmp.eq.s32.totalorder %s21, 0
      %p126 = por %p124, %p125
      %p127 = scmp.ne.s32.totalorder %s115, %s116
      %p128 = scmp.eq.s32.totalorder %s22, 1
      %p129 = por %p127, %p128
      %p131 = scmp.ne.s32.totalorder %s116, %s130
      %p132 = scmp.eq.s32.totalorder %s22, 0
      %p133 = por %p131, %p132
      %s135 = sadd.s32 %s134, 1
      %p138 = scmp.eq.s32.totalorder %s16, 1
      %p139 = scmp.ne.s32.totalorder %s134, %s136
      %p140 = scmp.eq.s32.totalorder %s16, 0
      %p141 = por %p139, %p140
      %p142 = scmp.ne.s32.totalorder %s134, %s136
      %p143 = scmp.eq.s32.totalorder %s21, 1
      %p144 = por %p142, %p143
      %p145 = scmp.ne.s32.totalorder %s136, %s137
      %p146 = scmp.eq.s32.totalorder %s21, 0
      %p147 = por %p145, %p146
      %p148 = scmp.ne.s32.totalorder %s136, %s137
      %p149 = scmp.eq.s32.totalorder %s22, 1
      %p150 = por %p148, %p149
      %p152 = scmp.ne.s32.totalorder %s137, %s151
      %p153 = scmp.eq.s32.totalorder %s22, 0
      %p154 = por %p152, %p153
      %s156 = sadd.s32 %s155, 1
      %p159 = scmp.eq.s32.totalorder %s16, 1
      %p160 = scmp.ne.s32.totalorder %s155, %s157
      %p161 = scmp.eq.s32.totalorder %s16, 0
      %p162 = por %p160, %p161
      %p163 = scmp.ne.s32.totalorder %s155, %s157
      %p164 = scmp.eq.s32.totalorder %s21, 1
      %p165 = por %p163, %p164
      %p166 = scmp.ne.s32.totalorder %s157, %s158
      %p167 = scmp.eq.s32.totalorder %s21, 0
      %p168 = por %p166, %p167
      %p169 = scmp.ne.s32.totalorder %s157, %s158
      %p170 = scmp.eq.s32.totalorder %s22, 1
      %p171 = por %p169, %p170
      %p173 = scmp.ne.s32.totalorder %s158, %s172
      %p174 = scmp.eq.s32.totalorder %s22, 0
      %p175 = por %p173, %p174
      %s177 = sadd.s32 %s176, 1
      %p180 = scmp.eq.s32.totalorder %s16, 1
      %p181 = scmp.ne.s32.totalorder %s176, %s178
      %p182 = scmp.eq.s32.totalorder %s16, 0
      %p183 = por %p181, %p182
      %p184 = scmp.ne.s32.totalorder %s176, %s178
      %p185 = scmp.eq.s32.totalorder %s21, 1
      %p186 = por %p184, %p185
      %p187 = scmp.ne.s32.totalorder %s178, %s179
      %p188 = scmp.eq.s32.totalorder %s21, 0
      %p189 = por %p187, %p188
      %p190 = scmp.ne.s32.totalorder %s178, %s179
      %p191 = scmp.eq.s32.totalorder %s22, 1
      %p192 = por %p190, %p191
      %p194 = scmp.ne.s32.totalorder %s179, %s193
      %p195 = scmp.eq.s32.totalorder %s22, 0
      %p196 = por %p194, %p195
      %s198 = sadd.s32 %s197, 1
      %p201 = scmp.eq.s32.totalorder %s16, 1
      %p202 = scmp.ne.s32.totalorder %s197, %s199
      %p203 = scmp.eq.s32.totalorder %s16, 0
      %p204 = por %p202, %p203
      %p205 = scmp.ne.s32.totalorder %s197, %s199
      %p206 = scmp.eq.s32.totalorder %s21, 1
      %p207 = por %p205, %p206
      %p208 = scmp.ne.s32.totalorder %s199, %s200
      %p209 = scmp.eq.s32.totalorder %s21, 0
      %p210 = por %p208, %p209
      %p211 = scmp.ne.s32.totalorder %s199, %s200
      %p212 = scmp.eq.s32.totalorder %s22, 1
      %p213 = por %p211, %p212
      %p215 = scmp.ne.s32.totalorder %s200, %s214
      %p216 = scmp.eq.s32.totalorder %s22, 0
      %p217 = por %p215, %p216
      %s219 = sadd.s32 %s218, 1
      %p222 = scmp.eq.s32.totalorder %s16, 1
      %p223 = scmp.ne.s32.totalorder %s218, %s220
      %p224 = scmp.eq.s32.totalorder %s16, 0
      %p225 = por %p223, %p224
      %p226 = scmp.ne.s32.totalorder %s218, %s220
      %p227 = scmp.eq.s32.totalorder %s21, 1
      %p228 = por %p226, %p227
      %p229 = scmp.ne.s32.totalorder %s220, %s221
      %p230 = scmp.eq.s32.totalorder %s21, 0
      %p231 = por %p229, %p230
      %p232 = scmp.ne.s32.totalorder %s220, %s221
      %p233 = scmp.eq.s32.totalorder %s22, 1
      %p234 = por %p232, %p233
      %p236 = scmp.ne.s32.totalorder %s221, %s235
      %p237 = scmp.eq.s32.totalorder %s22, 0
      %p238 = por %p236, %p237
      %s239 = ssub.s32 %s16, %s23
      %p240 = scmp.eq.s32.totalorder %s239, 0
      %s242 = sadd.s32 %s241, 1
      %s243 = scalar_select %p240, %s241, %s242
      %p246 = pneg %p240
      %p247 = scmp.eq.s32.totalorder %s16, 1
      %p248 = por %p246, %p247
      %p249 = scmp.ne.s32.totalorder %s241, %s244
      %p250 = scmp.eq.s32.totalorder %s16, 0
      %p251 = por %p249, %p250
      %p252 = scmp.ne.s32.totalorder %s241, %s244
      %p253 = scmp.eq.s32.totalorder %s21, 1
      %p254 = por %p252, %p253
      %p255 = scmp.ne.s32.totalorder %s244, %s245
      %p256 = scmp.eq.s32.totalorder %s21, 0
      %p257 = por %p255, %p256
      %p258 = scmp.ne.s32.totalorder %s244, %s245
      %p259 = scmp.eq.s32.totalorder %s22, 1
      %p260 = por %p258, %p259
      %p262 = scmp.ne.s32.totalorder %s245, %s261
      %p263 = scmp.eq.s32.totalorder %s22, 0
      %p264 = por %p262, %p263
      %p265 = scmp.le.s32.totalorder 1, %s16
      %p266 = scmp.lt.s32.totalorder %s16, 3
      %p267 = pnand %p265, %p266
      %p268 = pneg %p267
      // Predicated region
      $region9: #{base_model_forward.1} parent=5 // pred_check
        _
      $region10: #{base_model_forward.1} parent=5 // pred_check_branch
        %270 = sbr.rel (%p267) target = $region12
      $region11: #{base_model_forward.1} parent=5 // pred_region
        %s271 = ssub.s32 %s16, 1
        // Predicated region
        $region13: #{base_model_forward.1} parent=11 // pred_check
          %p272 = pneg %p63
        $region14: #{base_model_forward.1} parent=11 // pred_check_branch
          %274 = sbr.rel (%p272) target = $region16
        $region15: #{base_model_forward.1} parent=11 // pred_region
          _
        $region16: #{base_model_forward.1} parent=11 // pred_fallthru
          _
        // Predicated region
        $region17: #{base_model_forward.1} parent=11 // pred_check
          %p275 = pneg %p84
        $region18: #{base_model_forward.1} parent=11 // pred_check_branch
          %277 = sbr.rel (%p275) target = $region20
        $region19: #{base_model_forward.1} parent=11 // pred_region
          _
        $region20: #{base_model_forward.1} parent=11 // pred_fallthru
          _
        // Predicated region
        $region21: #{base_model_forward.1} parent=11 // pred_check
          %p278 = pneg %p105
        $region22: #{base_model_forward.1} parent=11 // pred_check_branch
          %280 = sbr.rel (%p278) target = $region24
        $region23: #{base_model_forward.1} parent=11 // pred_region
          _
        $region24: #{base_model_forward.1} parent=11 // pred_fallthru
          _
        // Predicated region
        $region25: #{base_model_forward.1} parent=11 // pred_check
          %p281 = pneg %p126
        $region26: #{base_model_forward.1} parent=11 // pred_check_branch
          %283 = sbr.rel (%p281) target = $region28
        $region27: #{base_model_forward.1} parent=11 // pred_region
          _
        $region28: #{base_model_forward.1} parent=11 // pred_fallthru
          _
        // Predicated region
        $region29: #{base_model_forward.1} parent=11 // pred_check
          %p284 = pneg %p147
        $region30: #{base_model_forward.1} parent=11 // pred_check_branch
          %286 = sbr.rel (%p284) target = $region32
        $region31: #{base_model_forward.1} parent=11 // pred_region
          _
        $region32: #{base_model_forward.1} parent=11 // pred_fallthru
          _
        // Predicated region
        $region33: #{base_model_forward.1} parent=11 // pred_check
          %p287 = pneg %p168
        $region34: #{base_model_forward.1} parent=11 // pred_check_branch
          %289 = sbr.rel (%p287) target = $region36
        $region35: #{base_model_forward.1} parent=11 // pred_region
          _
        $region36: #{base_model_forward.1} parent=11 // pred_fallthru
          _
        // Predicated region
        $region37: #{base_model_forward.1} parent=11 // pred_check
          %p290 = pneg %p189
        $region38: #{base_model_forward.1} parent=11 // pred_check_branch
          %292 = sbr.rel (%p290) target = $region40
        $region39: #{base_model_forward.1} parent=11 // pred_region
          _
        $region40: #{base_model_forward.1} parent=11 // pred_fallthru
          _
        // Predicated region
        $region41: #{base_model_forward.1} parent=11 // pred_check
          %p293 = pneg %p210
        $region42: #{base_model_forward.1} parent=11 // pred_check_branch
          %295 = sbr.rel (%p293) target = $region44
        $region43: #{base_model_forward.1} parent=11 // pred_region
          _
        $region44: #{base_model_forward.1} parent=11 // pred_fallthru
          _
        // Predicated region
        $region45: #{base_model_forward.1} parent=11 // pred_check
          %p296 = pneg %p231
        $region46: #{base_model_forward.1} parent=11 // pred_check_branch
          %298 = sbr.rel (%p296) target = $region48
        $region47: #{base_model_forward.1} parent=11 // pred_region
          _
        $region48: #{base_model_forward.1} parent=11 // pred_fallthru
          _
      $region12: #{base_model_forward.1} parent=5 // pred_fallthru
        _
      %p299 = scmp.lt.s32.totalorder %s16, 2
      // Predicated region
      $region49: #{base_model_forward.1} parent=5 // pred_check
        %p300 = pneg %p299
      $region50: #{base_model_forward.1} parent=5 // pred_check_branch
        %302 = sbr.rel (%p300) target = $region52
      $region51: #{base_model_forward.1} parent=5 // pred_region
        // Predicated region
        $region53: #{base_model_forward.1} parent=51 // pred_check
          %p303 = pneg %p36
        $region54: #{base_model_forward.1} parent=51 // pred_check_branch
          %305 = sbr.rel (%p303) target = $region56
        $region55: #{base_model_forward.1} parent=51 // pred_region
          %s306 = smul.u32 16, %s16
          %p307 = scmp.lt.s32.totalorder %s306, 31
          %s308 = scalar_select %p307, %s306, 31
          %s309 = smul.addr %s308, 8
          %s310 = smul.addr %s309, 4
          %s311 = scalar_lea.vmem %s0, %s310
          %s312 = smul.u32 16, %s16
        $region56: #{base_model_forward.1} parent=51 // pred_fallthru
          _
      $region52: #{base_model_forward.1} parent=5 // pred_fallthru
        _
      %p313 = scmp.le.s32.totalorder 1, %s16
      %p314 = scmp.lt.s32.totalorder %s16, 3
      %p315 = pnand %p313, %p314
      %p316 = pneg %p315
      // Predicated region
      $region57: #{base_model_forward.1} parent=5 // pred_check
        _
      $region58: #{base_model_forward.1} parent=5 // pred_check_branch
        %318 = sbr.rel (%p315) target = $region60
      $region59: #{base_model_forward.1} parent=5 // pred_region
        %s319 = ssub.s32 %s16, 1
        %s320 = smul.u32 16, %s21
        %p321 = scmp.lt.s32.totalorder %s320, 31
        %s322 = scalar_select %p321, %s320, 31
        %s323 = smul.addr %s322, 8
        %s324 = smul.addr %s323, 4
        %s325 = scalar_lea.vmem %s0, %s324
        %p326 = pneg %p42
        %p327 = pneg %p39
        %p328 = pneg %p63
        %p329 = pneg %p60
        %p330 = pneg %p84
        %p331 = pneg %p81
        %p332 = pneg %p105
        %p333 = pneg %p102
        %p334 = pneg %p126
        %p335 = pneg %p123
        %p336 = pneg %p147
        %p337 = pneg %p144
        %p338 = pneg %p168
        %p339 = pneg %p165
        %p340 = pneg %p189
        %p341 = pneg %p186
        %p342 = pneg %p210
        %p343 = pneg %p207
        %p344 = pneg %p231
        %p345 = pneg %p228
        %p346 = pneg %p257
        %p347 = pneg %p254
        %s348 = sand.u32 %s244, 1
        %s349 = sand.u32 %s244, 1
        %s350 = smul.addr %s349, 384
        %s351 = scalar_lea.vmem [#allocation2], %s350
        %s352 = smul.u32 16, %s21
        %p353 = scmp.lt.s32.totalorder %s352, 31
        %s354 = scalar_select %p353, %s352, 31
        %s355 = smul.addr %s354, 8
        %s356 = smul.addr %s355, 4
        %s357 = scalar_lea.vmem %s0, %s356
        %s358 = smul.u32 16, %s21
        %s359 = smul.u32 16, %s21
        %v361 = vld [vmem:[%s357] sm:$0xff]
        %v362 = vld [vmem:[%s357 + $0x8] sm:$0xff]
        %v363 = vld [vmem:[%s357 + $0x10] sm:$0xff]
        %v364 = vld [vmem:[%s357 + $0x18] sm:$0xff]
        %v365 = vld [vmem:[%s357 + $0x20] sm:$0xff]
        %v366 = vld [vmem:[%s357 + $0x28] sm:$0xff]
        %v367 = vld [vmem:[%s357 + $0x30] sm:$0xff]
        %v368 = vld [vmem:[%s357 + $0x38] sm:$0xff]
        %v369 = vld [vmem:[%s357 + $0x40] sm:$0xff]
        %v370 = vld [vmem:[%s357 + $0x48] sm:$0xff]
        %v371 = vld [vmem:[%s357 + $0x50] sm:$0xff]
        %v372 = vld [vmem:[%s357 + $0x58] sm:$0xff]
        %v373 = vld [vmem:[%s357 + $0x60] sm:$0xff]
        %v374 = vld [vmem:[%s357 + $0x68] sm:$0xff]
        %v375 = vld [vmem:[%s357 + $0x70] sm:$0xff]
        %v376 = vld [vmem:[%s357 + $0x78] sm:$0xff]
        %v377 = vld [vmem:[%s357 + $0x80] sm:$0xff]
        %v378 = vld [vmem:[%s357 + $0x88] sm:$0xff]
        %v379 = vld [vmem:[%s357 + $0x90] sm:$0xff]
        %v380 = vld [vmem:[%s357 + $0x98] sm:$0xff]
        %v381 = vld [vmem:[%s357 + $0xa0] sm:$0xff]
        %v382 = vld [vmem:[%s357 + $0xa8] sm:$0xff]
        %v383 = vld [vmem:[%s357 + $0xb0] sm:$0xff]
        %v384 = vld [vmem:[%s357 + $0xb8] sm:$0xff]
        %v385 = vld [vmem:[%s357 + $0xc0] sm:$0xff]
        %v386 = vld [vmem:[%s357 + $0xc8] sm:$0xff]
        %v387 = vld [vmem:[%s357 + $0xd0] sm:$0xff]
        %v388 = vld [vmem:[%s357 + $0xd8] sm:$0xff]
        %v389 = vld [vmem:[%s357 + $0xe0] sm:$0xff]
        %v390 = vld [vmem:[%s357 + $0xe8] sm:$0xff]
        %v391 = vld [vmem:[%s357 + $0xf0] sm:$0xff]
        %v392 = vld [vmem:[%s357 + $0xf8] sm:$0xff]
        %v393 = vld [vmem:[%s357 + $0x100] sm:$0xff]
        %v394 = vld [vmem:[%s357 + $0x108] sm:$0xff]
        %v395 = vld [vmem:[%s357 + $0x110] sm:$0xff]
        %v396 = vld [vmem:[%s357 + $0x118] sm:$0xff]
        %v397 = vld [vmem:[%s357 + $0x120] sm:$0xff]
        %v398 = vld [vmem:[%s357 + $0x128] sm:$0xff]
        %v399 = vld [vmem:[%s357 + $0x130] sm:$0xff]
        %v400 = vld [vmem:[%s357 + $0x138] sm:$0xff]
        %v401 = vld [vmem:[%s357 + $0x140] sm:$0xff]
        %v402 = vld [vmem:[%s357 + $0x148] sm:$0xff]
        %v403 = vld [vmem:[%s357 + $0x150] sm:$0xff]
        %v404 = vld [vmem:[%s357 + $0x158] sm:$0xff]
        %v405 = vld [vmem:[%s357 + $0x160] sm:$0xff]
        %v406 = vld [vmem:[%s357 + $0x168] sm:$0xff]
        %v407 = vld [vmem:[%s357 + $0x170] sm:$0xff]
        %v408 = vld [vmem:[%s357 + $0x178] sm:$0xff]
        %v409 = vld [vmem:[%s357 + $0x180] sm:$0xff]
        %v410 = vld [vmem:[%s357 + $0x188] sm:$0xff]
        %v411 = vld [vmem:[%s357 + $0x190] sm:$0xff]
        %v412 = vld [vmem:[%s357 + $0x198] sm:$0xff]
        %v413 = vld [vmem:[%s357 + $0x1a0] sm:$0xff]
        %v414 = vld [vmem:[%s357 + $0x1a8] sm:$0xff]
        %v415 = vld [vmem:[%s357 + $0x1b0] sm:$0xff]
        %v416 = vld [vmem:[%s357 + $0x1b8] sm:$0xff]
        %v417 = vld [vmem:[%s357 + $0x1c0] sm:$0xff]
        %v418 = vld [vmem:[%s357 + $0x1c8] sm:$0xff]
        %v419 = vld [vmem:[%s357 + $0x1d0] sm:$0xff]
        %v420 = vld [vmem:[%s357 + $0x1d8] sm:$0xff]
        %v421 = vld [vmem:[%s357 + $0x1e0] sm:$0xff]
        %v422 = vld [vmem:[%s357 + $0x1e8] sm:$0xff]
        %v423 = vld [vmem:[%s357 + $0x1f0] sm:$0xff]
        %v424 = vld [vmem:[%s357 + $0x1f8] sm:$0xff]
        %v425 = vld [vmem:[%s1] sm:$0xf]
        %v426 = vld [vmem:[%s1 + $0x4] sm:$0xf]
        %v427 = vld [vmem:[%s1 + $0x8] sm:$0xf]
        %v428 = vld [vmem:[%s1 + $0xc] sm:$0xf]
        %v429 = vld [vmem:[%s1 + $0x10] sm:$0xf]
        %v430 = vld [vmem:[%s1 + $0x14] sm:$0xf]
        %v431 = vld [vmem:[%s1 + $0x18] sm:$0xf]
        %v432 = vld [vmem:[%s1 + $0x1c] sm:$0xf]
        %v433 = vld [vmem:[%s1 + $0x20] sm:$0xf]
        %v434 = vld [vmem:[%s1 + $0x24] sm:$0xf]
        %v435 = vld [vmem:[%s1 + $0x28] sm:$0xf]
        %v436 = vld [vmem:[%s1 + $0x2c] sm:$0xf]
        %v437 = vld [vmem:[%s1 + $0x30] sm:$0xf]
        %v438 = vld [vmem:[%s1 + $0x34] sm:$0xf]
        %v439 = vld [vmem:[%s1 + $0x38] sm:$0xf]
        %v440 = vld [vmem:[%s1 + $0x3c] sm:$0xf]
        %v441 = vld [vmem:[%s1 + $0x40] sm:$0xf]
        %v442 = vld [vmem:[%s1 + $0x44] sm:$0xf]
        %v443 = vld [vmem:[%s1 + $0x48] sm:$0xf]
        %v444 = vld [vmem:[%s1 + $0x4c] sm:$0xf]
        %v445 = vld [vmem:[%s1 + $0x50] sm:$0xf]
        %v446 = vld [vmem:[%s1 + $0x54] sm:$0xf]
        %v447 = vld [vmem:[%s1 + $0x58] sm:$0xf]
        %v448 = vld [vmem:[%s1 + $0x5c] sm:$0xf]
        %v449 = vld [vmem:[%s1 + $0x60] sm:$0xf]
        %v450 = vld [vmem:[%s1 + $0x64] sm:$0xf]
        %v451 = vld [vmem:[%s1 + $0x68] sm:$0xf]
        %v452 = vld [vmem:[%s1 + $0x6c] sm:$0xf]
        %v453 = vld [vmem:[%s1 + $0x70] sm:$0xf]
        %v454 = vld [vmem:[%s1 + $0x74] sm:$0xf]
        %v455 = vld [vmem:[%s1 + $0x78] sm:$0xf]
        %v456 = vld [vmem:[%s1 + $0x7c] sm:$0xf]
        %v457 = vld [vmem:[%s2] sm:$0x1]
        %v459 = vlaneseq
        %v460 = vshrl.u32 %v459, 7
        %v461 = vsub.s32 0, %v460
        %v462 = vrot.slane %v457, %v461
        %v528 = vunpack.c.l.b16 %v361
        %v529 = vunpack.c.h.b16 %v361
        %v530 = vunpack.c.l.b16 %v362
        %v531 = vunpack.c.h.b16 %v362
        %v532 = vunpack.c.l.b16 %v363
        %v533 = vunpack.c.h.b16 %v363
        %v534 = vunpack.c.l.b16 %v364
        %v535 = vunpack.c.h.b16 %v364
        %v536 = vunpack.c.l.b16 %v365
        %v537 = vunpack.c.h.b16 %v365
        %v538 = vunpack.c.l.b16 %v366
        %v539 = vunpack.c.h.b16 %v366
        %v540 = vunpack.c.l.b16 %v367
        %v541 = vunpack.c.h.b16 %v367
        %v542 = vunpack.c.l.b16 %v368
        %v543 = vunpack.c.h.b16 %v368
        %v544 = vunpack.c.l.b16 %v369
        %v545 = vunpack.c.h.b16 %v369
        %v546 = vunpack.c.l.b16 %v370
        %v547 = vunpack.c.h.b16 %v370
        %v548 = vunpack.c.l.b16 %v371
        %v549 = vunpack.c.h.b16 %v371
        %v550 = vunpack.c.l.b16 %v372
        %v551 = vunpack.c.h.b16 %v372
        %v552 = vunpack.c.l.b16 %v373
        %v553 = vunpack.c.h.b16 %v373
        %v554 = vunpack.c.l.b16 %v374
        %v555 = vunpack.c.h.b16 %v374
        %v556 = vunpack.c.l.b16 %v375
        %v557 = vunpack.c.h.b16 %v375
        %v558 = vunpack.c.l.b16 %v376
        %v559 = vunpack.c.h.b16 %v376
        %v560 = vunpack.c.l.b16 %v377
        %v561 = vunpack.c.h.b16 %v377
        %v562 = vunpack.c.l.b16 %v378
        %v563 = vunpack.c.h.b16 %v378
        %v564 = vunpack.c.l.b16 %v379
        %v565 = vunpack.c.h.b16 %v379
        %v566 = vunpack.c.l.b16 %v380
        %v567 = vunpack.c.h.b16 %v380
        %v568 = vunpack.c.l.b16 %v381
        %v569 = vunpack.c.h.b16 %v381
        %v570 = vunpack.c.l.b16 %v382
        %v571 = vunpack.c.h.b16 %v382
        %v572 = vunpack.c.l.b16 %v383
        %v573 = vunpack.c.h.b16 %v383
        %v574 = vunpack.c.l.b16 %v384
        %v575 = vunpack.c.h.b16 %v384
        %v576 = vunpack.c.l.b16 %v385
        %v577 = vunpack.c.h.b16 %v385
        %v578 = vunpack.c.l.b16 %v386
        %v579 = vunpack.c.h.b16 %v386
        %v580 = vunpack.c.l.b16 %v387
        %v581 = vunpack.c.h.b16 %v387
        %v582 = vunpack.c.l.b16 %v388
        %v583 = vunpack.c.h.b16 %v388
        %v584 = vunpack.c.l.b16 %v389
        %v585 = vunpack.c.h.b16 %v389
        %v586 = vunpack.c.l.b16 %v390
        %v587 = vunpack.c.h.b16 %v390
        %v588 = vunpack.c.l.b16 %v391
        %v589 = vunpack.c.h.b16 %v391
        %v590 = vunpack.c.l.b16 %v392
        %v591 = vunpack.c.h.b16 %v392
        %v592 = vunpack.c.l.b16 %v393
        %v593 = vunpack.c.h.b16 %v393
        %v594 = vunpack.c.l.b16 %v394
        %v595 = vunpack.c.h.b16 %v394
        %v596 = vunpack.c.l.b16 %v395
        %v597 = vunpack.c.h.b16 %v395
        %v598 = vunpack.c.l.b16 %v396
        %v599 = vunpack.c.h.b16 %v396
        %v600 = vunpack.c.l.b16 %v397
        %v601 = vunpack.c.h.b16 %v397
        %v602 = vunpack.c.l.b16 %v398
        %v603 = vunpack.c.h.b16 %v398
        %v604 = vunpack.c.l.b16 %v399
        %v605 = vunpack.c.h.b16 %v399
        %v606 = vunpack.c.l.b16 %v400
        %v607 = vunpack.c.h.b16 %v400
        %v608 = vunpack.c.l.b16 %v401
        %v609 = vunpack.c.h.b16 %v401
        %v610 = vunpack.c.l.b16 %v402
        %v611 = vunpack.c.h.b16 %v402
        %v612 = vunpack.c.l.b16 %v403
        %v613 = vunpack.c.h.b16 %v403
        %v614 = vunpack.c.l.b16 %v404
        %v615 = vunpack.c.h.b16 %v404
        %v616 = vunpack.c.l.b16 %v405
        %v617 = vunpack.c.h.b16 %v405
        %v618 = vunpack.c.l.b16 %v406
        %v619 = vunpack.c.h.b16 %v406
        %v620 = vunpack.c.l.b16 %v407
        %v621 = vunpack.c.h.b16 %v407
        %v622 = vunpack.c.l.b16 %v408
        %v623 = vunpack.c.h.b16 %v408
        %v624 = vunpack.c.l.b16 %v409
        %v625 = vunpack.c.h.b16 %v409
        %v626 = vunpack.c.l.b16 %v410
        %v627 = vunpack.c.h.b16 %v410
        %v628 = vunpack.c.l.b16 %v411
        %v629 = vunpack.c.h.b16 %v411
        %v630 = vunpack.c.l.b16 %v412
        %v631 = vunpack.c.h.b16 %v412
        %v632 = vunpack.c.l.b16 %v413
        %v633 = vunpack.c.h.b16 %v413
        %v634 = vunpack.c.l.b16 %v414
        %v635 = vunpack.c.h.b16 %v414
        %v636 = vunpack.c.l.b16 %v415
        %v637 = vunpack.c.h.b16 %v415
        %v638 = vunpack.c.l.b16 %v416
        %v639 = vunpack.c.h.b16 %v416
        %v640 = vunpack.c.l.b16 %v417
        %v641 = vunpack.c.h.b16 %v417
        %v642 = vunpack.c.l.b16 %v418
        %v643 = vunpack.c.h.b16 %v418
        %v644 = vunpack.c.l.b16 %v419
        %v645 = vunpack.c.h.b16 %v419
        %v646 = vunpack.c.l.b16 %v420
        %v647 = vunpack.c.h.b16 %v420
        %v648 = vunpack.c.l.b16 %v421
        %v649 = vunpack.c.h.b16 %v421
        %v650 = vunpack.c.l.b16 %v422
        %v651 = vunpack.c.h.b16 %v422
        %v652 = vunpack.c.l.b16 %v423
        %v653 = vunpack.c.h.b16 %v423
        %v654 = vunpack.c.l.b16 %v424
        %v655 = vunpack.c.h.b16 %v424
        %v656 = vpack.c.b16 %v530, %v528
        %v657 = vpack.c.b16 %v531, %v529
        %v658 = vpack.c.b16 %v534, %v532
        %v659 = vpack.c.b16 %v535, %v533
        %v660 = vpack.c.b16 %v538, %v536
        %v661 = vpack.c.b16 %v539, %v537
        %v662 = vpack.c.b16 %v542, %v540
        %v663 = vpack.c.b16 %v543, %v541
        %v664 = vpack.c.b16 %v546, %v544
        %v665 = vpack.c.b16 %v547, %v545
        %v666 = vpack.c.b16 %v550, %v548
        %v667 = vpack.c.b16 %v551, %v549
        %v668 = vpack.c.b16 %v554, %v552
        %v669 = vpack.c.b16 %v555, %v553
        %v670 = vpack.c.b16 %v558, %v556
        %v671 = vpack.c.b16 %v559, %v557
        %v672 = vpack.c.b16 %v562, %v560
        %v673 = vpack.c.b16 %v563, %v561
        %v674 = vpack.c.b16 %v566, %v564
        %v675 = vpack.c.b16 %v567, %v565
        %v676 = vpack.c.b16 %v570, %v568
        %v677 = vpack.c.b16 %v571, %v569
        %v678 = vpack.c.b16 %v574, %v572
        %v679 = vpack.c.b16 %v575, %v573
        %v680 = vpack.c.b16 %v578, %v576
        %v681 = vpack.c.b16 %v579, %v577
        %v682 = vpack.c.b16 %v582, %v580
        %v683 = vpack.c.b16 %v583, %v581
        %v684 = vpack.c.b16 %v586, %v584
        %v685 = vpack.c.b16 %v587, %v585
        %v686 = vpack.c.b16 %v590, %v588
        %v687 = vpack.c.b16 %v591, %v589
        %v688 = vpack.c.b16 %v594, %v592
        %v689 = vpack.c.b16 %v595, %v593
        %v690 = vpack.c.b16 %v598, %v596
        %v691 = vpack.c.b16 %v599, %v597
        %v692 = vpack.c.b16 %v602, %v600
        %v693 = vpack.c.b16 %v603, %v601
        %v694 = vpack.c.b16 %v606, %v604
        %v695 = vpack.c.b16 %v607, %v605
        %v696 = vpack.c.b16 %v610, %v608
        %v697 = vpack.c.b16 %v611, %v609
        %v698 = vpack.c.b16 %v614, %v612
        %v699 = vpack.c.b16 %v615, %v613
        %v700 = vpack.c.b16 %v618, %v616
        %v701 = vpack.c.b16 %v619, %v617
        %v702 = vpack.c.b16 %v622, %v620
        %v703 = vpack.c.b16 %v623, %v621
        %v704 = vpack.c.b16 %v626, %v624
        %v705 = vpack.c.b16 %v627, %v625
        %v706 = vpack.c.b16 %v630, %v628
        %v707 = vpack.c.b16 %v631, %v629
        %v708 = vpack.c.b16 %v634, %v632
        %v709 = vpack.c.b16 %v635, %v633
        %v710 = vpack.c.b16 %v638, %v636
        %v711 = vpack.c.b16 %v639, %v637
        %v712 = vpack.c.b16 %v642, %v640
        %v713 = vpack.c.b16 %v643, %v641
        %v714 = vpack.c.b16 %v646, %v644
        %v715 = vpack.c.b16 %v647, %v645
        %v716 = vpack.c.b16 %v650, %v648
        %v717 = vpack.c.b16 %v651, %v649
        %v718 = vpack.c.b16 %v654, %v652
        %v719 = vpack.c.b16 %v655, %v653
        %v816 = vunpack.c.l.b16 %v425
        %v817 = vunpack.c.l.b16 %v426
        %v818 = vunpack.c.l.b16 %v427
        %v819 = vunpack.c.l.b16 %v428
        %v820 = vunpack.c.l.b16 %v429
        %v821 = vunpack.c.l.b16 %v430
        %v822 = vunpack.c.l.b16 %v431
        %v823 = vunpack.c.l.b16 %v432
        %v824 = vunpack.c.l.b16 %v433
        %v825 = vunpack.c.l.b16 %v434
        %v826 = vunpack.c.l.b16 %v435
        %v827 = vunpack.c.l.b16 %v436
        %v828 = vunpack.c.l.b16 %v437
        %v829 = vunpack.c.l.b16 %v438
        %v830 = vunpack.c.l.b16 %v439
        %v831 = vunpack.c.l.b16 %v440
        %v832 = vunpack.c.l.b16 %v441
        %v833 = vunpack.c.l.b16 %v442
        %v834 = vunpack.c.l.b16 %v443
        %v835 = vunpack.c.l.b16 %v444
        %v836 = vunpack.c.l.b16 %v445
        %v837 = vunpack.c.l.b16 %v446
        %v838 = vunpack.c.l.b16 %v447
        %v839 = vunpack.c.l.b16 %v448
        %v840 = vunpack.c.l.b16 %v449
        %v841 = vunpack.c.l.b16 %v450
        %v842 = vunpack.c.l.b16 %v451
        %v843 = vunpack.c.l.b16 %v452
        %v844 = vunpack.c.l.b16 %v453
        %v845 = vunpack.c.l.b16 %v454
        %v846 = vunpack.c.l.b16 %v455
        %v847 = vunpack.c.l.b16 %v456
        %v848 = vpack.c.b16 %v817, %v816
        %v849 = vpack.c.b16 %v819, %v818
        %v850 = vpack.c.b16 %v821, %v820
        %v851 = vpack.c.b16 %v823, %v822
        %v852 = vpack.c.b16 %v825, %v824
        %v853 = vpack.c.b16 %v827, %v826
        %v854 = vpack.c.b16 %v829, %v828
        %v855 = vpack.c.b16 %v831, %v830
        %v856 = vpack.c.b16 %v833, %v832
        %v857 = vpack.c.b16 %v835, %v834
        %v858 = vpack.c.b16 %v837, %v836
        %v859 = vpack.c.b16 %v839, %v838
        %v860 = vpack.c.b16 %v841, %v840
        %v861 = vpack.c.b16 %v843, %v842
        %v862 = vpack.c.b16 %v845, %v844
        %v863 = vpack.c.b16 %v847, %v846
        %880 = vmatprep.subr.bf16.mxu0 0
        %881 = vmatpush1.bf16.msra.mxu0 %v848
        %882 = vmatprep.subr.bf16.mxu0 0
        %883 = vmatpush1.bf16.msra.mxu0 %v849
        %884 = vmatprep.subr.bf16.mxu0 0
        %885 = vmatpush1.bf16.msra.mxu0 %v850
        %886 = vmatprep.subr.bf16.mxu0 0
        %887 = vmatpush1.bf16.msra.mxu0 %v851
        %888 = vmatprep.subr.bf16.mxu0 0
        %889 = vmatpush1.bf16.msra.mxu0 %v852
        %890 = vmatprep.subr.bf16.mxu0 0
        %891 = vmatpush1.bf16.msra.mxu0 %v853
        %892 = vmatprep.subr.bf16.mxu0 0
        %893 = vmatpush1.bf16.msra.mxu0 %v854
        %894 = vmatprep.subr.bf16.mxu0 0
        %895 = vmatpush1.bf16.msra.mxu0 %v855
        %896 = vmatprep.subr.bf16.mxu0 0
        %897 = vmatpush1.bf16.msra.mxu0 %v856
        %898 = vmatprep.subr.bf16.mxu0 0
        %899 = vmatpush1.bf16.msra.mxu0 %v857
        %900 = vmatprep.subr.bf16.mxu0 0
        %901 = vmatpush1.bf16.msra.mxu0 %v858
        %902 = vmatprep.subr.bf16.mxu0 0
        %903 = vmatpush1.bf16.msra.mxu0 %v859
        %904 = vmatprep.subr.bf16.mxu0 0
        %905 = vmatpush1.bf16.msra.mxu0 %v860
        %906 = vmatprep.subr.bf16.mxu0 0
        %907 = vmatpush1.bf16.msra.mxu0 %v861
        %908 = vmatprep.subr.bf16.mxu0 0
        %909 = vmatpush1.bf16.msra.mxu0 %v862
        %910 = vmatprep.subr.bf16.mxu0 0
        %911 = vmatpush1.bf16.msra.mxu0 %v863
        %912 = vmatprep.mubr.bf16.mxu0 %v657
        %913 = vmatmul.mubr.bf16.gmra.mrb[0].mxu0 %v656
        %v914 = vpop.f32.mrb[0].mxu0
        %v915 = vadd.f32 %v462, %v914
        %v916 = vpop.f32.mrb[0].mxu0
        %v917 = vpop.f32.mrb[0].mxu0
        %v918 = vadd.f32 %v462, %v917
        %v919 = vpop.f32.mrb[0].mxu0
        %920 = vmatprep.mubr.bf16.mxu0 %v659
        %921 = vmatmul.mubr.bf16.gmra.mrb[0].mxu0 %v658
        %v922 = vpop.f32.mrb[0].mxu0
        %v923 = vadd.f32 %v462, %v922
        %v924 = vpop.f32.mrb[0].mxu0
        %v925 = vpop.f32.mrb[0].mxu0
        %v926 = vadd.f32 %v462, %v925
        %v927 = vpop.f32.mrb[0].mxu0
        %928 = vmatprep.mubr.bf16.mxu0 %v661
        %929 = vmatmul.mubr.bf16.gmra.mrb[0].mxu0 %v660
        %v930 = vpop.f32.mrb[0].mxu0
        %v931 = vadd.f32 %v462, %v930
        %v932 = vpop.f32.mrb[0].mxu0
        %v933 = vpop.f32.mrb[0].mxu0
        %v934 = vadd.f32 %v462, %v933
        %v935 = vpop.f32.mrb[0].mxu0
        %936 = vmatprep.mubr.bf16.mxu0 %v663
        %937 = vmatmul.mubr.bf16.gmra.mrb[0].mxu0 %v662
        %v938 = vpop.f32.mrb[0].mxu0
        %v939 = vadd.f32 %v462, %v938
        %v940 = vpop.f32.mrb[0].mxu0
        %v941 = vpop.f32.mrb[0].mxu0
        %v942 = vadd.f32 %v462, %v941
        %v943 = vpop.f32.mrb[0].mxu0
        %944 = vmatprep.mubr.bf16.mxu0 %v665
        %945 = vmatmul.mubr.bf16.gmra.mrb[0].mxu0 %v664
        %v946 = vpop.f32.mrb[0].mxu0
        %v947 = vadd.f32 %v462, %v946
        %v948 = vpop.f32.mrb[0].mxu0
        %v949 = vpop.f32.mrb[0].mxu0
        %v950 = vadd.f32 %v462, %v949
        %v951 = vpop.f32.mrb[0].mxu0
        %952 = vmatprep.mubr.bf16.mxu0 %v667
        %953 = vmatmul.mubr.bf16.gmra.mrb[0].mxu0 %v666
        %v954 = vpop.f32.mrb[0].mxu0
        %v955 = vadd.f32 %v462, %v954
        %v956 = vpop.f32.mrb[0].mxu0
        %v957 = vpop.f32.mrb[0].mxu0
        %v958 = vadd.f32 %v462, %v957
        %v959 = vpop.f32.mrb[0].mxu0
        %960 = vmatprep.mubr.bf16.mxu0 %v669
        %961 = vmatmul.mubr.bf16.gmra.mrb[0].mxu0 %v668
        %v962 = vpop.f32.mrb[0].mxu0
        %v963 = vadd.f32 %v462, %v962
        %v964 = vpop.f32.mrb[0].mxu0
        %v965 = vpop.f32.mrb[0].mxu0
        %v966 = vadd.f32 %v462, %v965
        %v967 = vpop.f32.mrb[0].mxu0
        %968 = vmatprep.mubr.bf16.mxu0 %v671
        %969 = vmatmul.mubr.bf16.gmra.mrb[0].mxu0 %v670
        %v970 = vpop.f32.mrb[0].mxu0
        %v971 = vadd.f32 %v462, %v970
        %v972 = vpop.f32.mrb[0].mxu0
        %v973 = vpop.f32.mrb[0].mxu0
        %v974 = vadd.f32 %v462, %v973
        %v975 = vpop.f32.mrb[0].mxu0
        %976 = vmatprep.mubr.bf16.mxu0 %v673
        %977 = vmatmul.mubr.bf16.gmra.mrb[0].mxu0 %v672
        %v978 = vpop.f32.mrb[0].mxu0
        %v979 = vadd.f32 %v462, %v978
        %v980 = vpop.f32.mrb[0].mxu0
        %v981 = vpop.f32.mrb[0].mxu0
        %v982 = vadd.f32 %v462, %v981
        %v983 = vpop.f32.mrb[0].mxu0
        %984 = vmatprep.mubr.bf16.mxu0 %v675
        %985 = vmatmul.mubr.bf16.gmra.mrb[0].mxu0 %v674
        %v986 = vpop.f32.mrb[0].mxu0
        %v987 = vadd.f32 %v462, %v986
        %v988 = vpop.f32.mrb[0].mxu0
        %v989 = vpop.f32.mrb[0].mxu0
        %v990 = vadd.f32 %v462, %v989
        %v991 = vpop.f32.mrb[0].mxu0
        %992 = vmatprep.mubr.bf16.mxu0 %v677
        %993 = vmatmul.mubr.bf16.gmra.mrb[0].mxu0 %v676
        %v994 = vpop.f32.mrb[0].mxu0
        %v995 = vadd.f32 %v462, %v994
        %v996 = vpop.f32.mrb[0].mxu0
        %v997 = vpop.f32.mrb[0].mxu0
        %v998 = vadd.f32 %v462, %v997
        %v999 = vpop.f32.mrb[0].mxu0
        %1000 = vmatprep.mubr.bf16.mxu0 %v679
        %1001 = vmatmul.mubr.bf16.gmra.mrb[0].mxu0 %v678
        %v1002 = vpop.f32.mrb[0].mxu0
        %v1003 = vadd.f32 %v462, %v1002
        %v1004 = vpop.f32.mrb[0].mxu0
        %v1005 = vpop.f32.mrb[0].mxu0
        %v1006 = vadd.f32 %v462, %v1005
        %v1007 = vpop.f32.mrb[0].mxu0
        %1008 = vmatprep.mubr.bf16.mxu0 %v681
        %1009 = vmatmul.mubr.bf16.gmra.mrb[0].mxu0 %v680
        %v1010 = vpop.f32.mrb[0].mxu0
        %v1011 = vadd.f32 %v462, %v1010
        %v1012 = vpop.f32.mrb[0].mxu0
        %v1013 = vpop.f32.mrb[0].mxu0
        %v1014 = vadd.f32 %v462, %v1013
        %v1015 = vpop.f32.mrb[0].mxu0
        %1016 = vmatprep.mubr.bf16.mxu0 %v683
        %1017 = vmatmul.mubr.bf16.gmra.mrb[0].mxu0 %v682
        %v1018 = vpop.f32.mrb[0].mxu0
        %v1019 = vadd.f32 %v462, %v1018
        %v1020 = vpop.f32.mrb[0].mxu0
        %v1021 = vpop.f32.mrb[0].mxu0
        %v1022 = vadd.f32 %v462, %v1021
        %v1023 = vpop.f32.mrb[0].mxu0
        %1024 = vmatprep.mubr.bf16.mxu0 %v685
        %1025 = vmatmul.mubr.bf16.gmra.mrb[0].mxu0 %v684
        %v1026 = vpop.f32.mrb[0].mxu0
        %v1027 = vadd.f32 %v462, %v1026
        %v1028 = vpop.f32.mrb[0].mxu0
        %v1029 = vpop.f32.mrb[0].mxu0
        %v1030 = vadd.f32 %v462, %v1029
        %v1031 = vpop.f32.mrb[0].mxu0
        %1032 = vmatprep.mubr.bf16.mxu0 %v687
        %1033 = vmatmul.mubr.bf16.gmra.mrb[0].mxu0 %v686
        %v1034 = vpop.f32.mrb[0].mxu0
        %v1035 = vadd.f32 %v462, %v1034
        %v1036 = vpop.f32.mrb[0].mxu0
        %v1037 = vpop.f32.mrb[0].mxu0
        %v1038 = vadd.f32 %v462, %v1037
        %v1039 = vpop.f32.mrb[0].mxu0
        %1040 = vmatprep.mubr.bf16.mxu0 %v689
        %1041 = vmatmul.mubr.bf16.gmra.mrb[0].mxu0 %v688
        %v1042 = vpop.f32.mrb[0].mxu0
        %v1043 = vadd.f32 %v462, %v1042
        %v1044 = vpop.f32.mrb[0].mxu0
        %v1045 = vpop.f32.mrb[0].mxu0
        %v1046 = vadd.f32 %v462, %v1045
        %v1047 = vpop.f32.mrb[0].mxu0
        %1048 = vmatprep.mubr.bf16.mxu0 %v691
        %1049 = vmatmul.mubr.bf16.gmra.mrb[0].mxu0 %v690
        %v1050 = vpop.f32.mrb[0].mxu0
        %v1051 = vadd.f32 %v462, %v1050
        %v1052 = vpop.f32.mrb[0].mxu0
        %v1053 = vpop.f32.mrb[0].mxu0
        %v1054 = vadd.f32 %v462, %v1053
        %v1055 = vpop.f32.mrb[0].mxu0
        %1056 = vmatprep.mubr.bf16.mxu0 %v693
        %1057 = vmatmul.mubr.bf16.gmra.mrb[0].mxu0 %v692
        %v1058 = vpop.f32.mrb[0].mxu0
        %v1059 = vadd.f32 %v462, %v1058
        %v1060 = vpop.f32.mrb[0].mxu0
        %v1061 = vpop.f32.mrb[0].mxu0
        %v1062 = vadd.f32 %v462, %v1061
        %v1063 = vpop.f32.mrb[0].mxu0
        %1064 = vmatprep.mubr.bf16.mxu0 %v695
        %1065 = vmatmul.mubr.bf16.gmra.mrb[0].mxu0 %v694
        %v1066 = vpop.f32.mrb[0].mxu0
        %v1067 = vadd.f32 %v462, %v1066
        %v1068 = vpop.f32.mrb[0].mxu0
        %v1069 = vpop.f32.mrb[0].mxu0
        %v1070 = vadd.f32 %v462, %v1069
        %v1071 = vpop.f32.mrb[0].mxu0
        %1072 = vmatprep.mubr.bf16.mxu0 %v697
        %1073 = vmatmul.mubr.bf16.gmra.mrb[0].mxu0 %v696
        %v1074 = vpop.f32.mrb[0].mxu0
        %v1075 = vadd.f32 %v462, %v1074
        %v1076 = vpop.f32.mrb[0].mxu0
        %v1077 = vpop.f32.mrb[0].mxu0
        %v1078 = vadd.f32 %v462, %v1077
        %v1079 = vpop.f32.mrb[0].mxu0
        %1080 = vmatprep.mubr.bf16.mxu0 %v699
        %1081 = vmatmul.mubr.bf16.gmra.mrb[0].mxu0 %v698
        %v1082 = vpop.f32.mrb[0].mxu0
        %v1083 = vadd.f32 %v462, %v1082
        %v1084 = vpop.f32.mrb[0].mxu0
        %v1085 = vpop.f32.mrb[0].mxu0
        %v1086 = vadd.f32 %v462, %v1085
        %v1087 = vpop.f32.mrb[0].mxu0
        %1088 = vmatprep.mubr.bf16.mxu0 %v701
        %1089 = vmatmul.mubr.bf16.gmra.mrb[0].mxu0 %v700
        %v1090 = vpop.f32.mrb[0].mxu0
        %v1091 = vadd.f32 %v462, %v1090
        %v1092 = vpop.f32.mrb[0].mxu0
        %v1093 = vpop.f32.mrb[0].mxu0
        %v1094 = vadd.f32 %v462, %v1093
        %v1095 = vpop.f32.mrb[0].mxu0
        %1096 = vmatprep.mubr.bf16.mxu0 %v703
        %1097 = vmatmul.mubr.bf16.gmra.mrb[0].mxu0 %v702
        %v1098 = vpop.f32.mrb[0].mxu0
        %v1099 = vadd.f32 %v462, %v1098
        %v1100 = vpop.f32.mrb[0].mxu0
        %v1101 = vpop.f32.mrb[0].mxu0
        %v1102 = vadd.f32 %v462, %v1101
        %v1103 = vpop.f32.mrb[0].mxu0
        %1104 = vmatprep.mubr.bf16.mxu0 %v705
        %1105 = vmatmul.mubr.bf16.gmra.mrb[0].mxu0 %v704
        %v1106 = vpop.f32.mrb[0].mxu0
        %v1107 = vadd.f32 %v462, %v1106
        %v1108 = vpop.f32.mrb[0].mxu0
        %v1109 = vpop.f32.mrb[0].mxu0
        %v1110 = vadd.f32 %v462, %v1109
        %v1111 = vpop.f32.mrb[0].mxu0
        %1112 = vmatprep.mubr.bf16.mxu0 %v707
        %1113 = vmatmul.mubr.bf16.gmra.mrb[0].mxu0 %v706
        %v1114 = vpop.f32.mrb[0].mxu0
        %v1115 = vadd.f32 %v462, %v1114
        %v1116 = vpop.f32.mrb[0].mxu0
        %v1117 = vpop.f32.mrb[0].mxu0
        %v1118 = vadd.f32 %v462, %v1117
        %v1119 = vpop.f32.mrb[0].mxu0
        %1120 = vmatprep.mubr.bf16.mxu0 %v709
        %1121 = vmatmul.mubr.bf16.gmra.mrb[0].mxu0 %v708
        %v1122 = vpop.f32.mrb[0].mxu0
        %v1123 = vadd.f32 %v462, %v1122
        %v1124 = vpop.f32.mrb[0].mxu0
        %v1125 = vpop.f32.mrb[0].mxu0
        %v1126 = vadd.f32 %v462, %v1125
        %v1127 = vpop.f32.mrb[0].mxu0
        %1128 = vmatprep.mubr.bf16.mxu0 %v711
        %1129 = vmatmul.mubr.bf16.gmra.mrb[0].mxu0 %v710
        %v1130 = vpop.f32.mrb[0].mxu0
        %v1131 = vadd.f32 %v462, %v1130
        %v1132 = vpop.f32.mrb[0].mxu0
        %v1133 = vpop.f32.mrb[0].mxu0
        %v1134 = vadd.f32 %v462, %v1133
        %v1135 = vpop.f32.mrb[0].mxu0
        %1136 = vmatprep.mubr.bf16.mxu0 %v713
        %1137 = vmatmul.mubr.bf16.gmra.mrb[0].mxu0 %v712
        %v1138 = vpop.f32.mrb[0].mxu0
        %v1139 = vadd.f32 %v462, %v1138
        %v1140 = vpop.f32.mrb[0].mxu0
        %v1141 = vpop.f32.mrb[0].mxu0
        %v1142 = vadd.f32 %v462, %v1141
        %v1143 = vpop.f32.mrb[0].mxu0
        %1144 = vmatprep.mubr.bf16.mxu0 %v715
        %1145 = vmatmul.mubr.bf16.gmra.mrb[0].mxu0 %v714
        %v1146 = vpop.f32.mrb[0].mxu0
        %v1147 = vadd.f32 %v462, %v1146
        %v1148 = vpop.f32.mrb[0].mxu0
        %v1149 = vpop.f32.mrb[0].mxu0
        %v1150 = vadd.f32 %v462, %v1149
        %v1151 = vpop.f32.mrb[0].mxu0
        %1152 = vmatprep.mubr.bf16.mxu0 %v717
        %1153 = vmatmul.mubr.bf16.gmra.mrb[0].mxu0 %v716
        %v1154 = vpop.f32.mrb[0].mxu0
        %v1155 = vadd.f32 %v462, %v1154
        %v1156 = vpop.f32.mrb[0].mxu0
        %v1157 = vpop.f32.mrb[0].mxu0
        %v1158 = vadd.f32 %v462, %v1157
        %v1159 = vpop.f32.mrb[0].mxu0
        %1160 = vmatprep.mubr.bf16.mxu0 %v719
        %1161 = vmatmul.mubr.bf16.gmra.mrb[0].mxu0 %v718
        %v1162 = vpop.f32.mrb[0].mxu0
        %v1163 = vadd.f32 %v462, %v1162
        %v1164 = vpop.f32.mrb[0].mxu0
        %v1165 = vpop.f32.mrb[0].mxu0
        %v1166 = vadd.f32 %v462, %v1165
        %v1167 = vpop.f32.mrb[0].mxu0
        %1168 = vdwg.mxu0
        %v1169 = vpack.c.bf16 %v918, %v915
        %v1170 = vpack.c.bf16 %v926, %v923
        %v1171 = vpack.c.bf16 %v934, %v931
        %v1172 = vpack.c.bf16 %v942, %v939
        %v1173 = vpack.c.bf16 %v950, %v947
        %v1174 = vpack.c.bf16 %v958, %v955
        %v1175 = vpack.c.bf16 %v966, %v963
        %v1176 = vpack.c.bf16 %v974, %v971
        %v1177 = vpack.c.bf16 %v982, %v979
        %v1178 = vpack.c.bf16 %v990, %v987
        %v1179 = vpack.c.bf16 %v998, %v995
        %v1180 = vpack.c.bf16 %v1006, %v1003
        %v1181 = vpack.c.bf16 %v1014, %v1011
        %v1182 = vpack.c.bf16 %v1022, %v1019
        %v1183 = vpack.c.bf16 %v1030, %v1027
        %v1184 = vpack.c.bf16 %v1038, %v1035
        %v1185 = vpack.c.bf16 %v1046, %v1043
        %v1186 = vpack.c.bf16 %v1054, %v1051
        %v1187 = vpack.c.bf16 %v1062, %v1059
        %v1188 = vpack.c.bf16 %v1070, %v1067
        %v1189 = vpack.c.bf16 %v1078, %v1075
        %v1190 = vpack.c.bf16 %v1086, %v1083
        %v1191 = vpack.c.bf16 %v1094, %v1091
        %v1192 = vpack.c.bf16 %v1102, %v1099
        %v1193 = vpack.c.bf16 %v1110, %v1107
        %v1194 = vpack.c.bf16 %v1118, %v1115
        %v1195 = vpack.c.bf16 %v1126, %v1123
        %v1196 = vpack.c.bf16 %v1134, %v1131
        %v1197 = vpack.c.bf16 %v1142, %v1139
        %v1198 = vpack.c.bf16 %v1150, %v1147
        %v1199 = vpack.c.bf16 %v1158, %v1155
        %v1200 = vpack.c.bf16 %v1166, %v1163
        %v1201 = vld [vmem:[%s3] sm:$0xf]
        %vm1202 = vcmask 261120
        %v1204 = vsel %vm1202, %v1201, 0
        %v1207 = vsel %vm1202, %v1169, 0
        %v1210 = vsel %vm1202, %v1170, 0
        %1212 = vmatprep.subr.bf16.mxu0 0
        %1213 = vmatpush1.bf16.xpose.msra.mxu0 %v1207
        %1214 = vmatprep.subr.bf16.mxu0 0
        %1215 = vmatpush1.bf16.xpose.msra.mxu0 %v1210
        %1216 = vmatprep.subr.bf16.mxu0 0
        %1217 = vmatpush1.bf16.xpose.msra.mxu0 0
        %1218 = vmatprep.subr.bf16.mxu0 0
        %1219 = vmatpush1.bf16.xpose.msra.mxu0 0
        %1220 = vmatprep.subr.bf16.mxu0 0
        %1221 = vmatpush1.bf16.xpose.msra.mxu0 0
        %1222 = vmatprep.subr.bf16.mxu0 0
        %1223 = vmatpush1.bf16.xpose.msra.mxu0 0
        %1224 = vmatprep.subr.bf16.mxu0 0
        %1225 = vmatpush1.bf16.xpose.msra.mxu0 0
        %1226 = vmatprep.subr.bf16.mxu0 0
        %1227 = vmatpush1.bf16.xpose.msra.mxu0 0
        %1228 = vmatprep.subr.bf16.mxu0 0
        %1229 = vmatpush1.bf16.xpose.msra.mxu0 0
        %1230 = vmatprep.subr.bf16.mxu0 0
        %1231 = vmatpush1.bf16.xpose.msra.mxu0 0
        %1232 = vmatprep.subr.bf16.mxu0 0
        %1233 = vmatpush1.bf16.xpose.msra.mxu0 0
        %1234 = vmatprep.subr.bf16.mxu0 0
        %1235 = vmatpush1.bf16.xpose.msra.mxu0 0
        %1236 = vmatprep.subr.bf16.mxu0 0
        %1237 = vmatpush1.bf16.xpose.msra.mxu0 0
        %1238 = vmatprep.subr.bf16.mxu0 0
        %1239 = vmatpush1.bf16.xpose.msra.mxu0 0
        %1240 = vmatprep.subr.bf16.mxu0 0
        %1241 = vmatpush1.bf16.xpose.msra.mxu0 0
        %1242 = vmatprep.subr.bf16.mxu0 0
        %1243 = vmatpush1.bf16.xpose.msra.mxu0 0
        %1244 = vmatprep.mubr.bf16.mxu0 0
        %1245 = vmatmul.mubr.bf16.gmra.mrb[0].mxu0 %v1204
        %v1246 = vpop.f32.mrb[0].mxu0
        %v1247 = vadd.f32 0.0, %v1246
        %v1248 = vpop.f32.mrb[0].mxu0
        %v1249 = vpop.f32.mrb[0].mxu0
        %v1250 = vpop.f32.mrb[0].mxu0
        %1251 = vdwg.mxu0
        %v1253 = vsel %vm1202, %v1171, 0
        %v1256 = vsel %vm1202, %v1172, 0
        %1258 = vmatprep.subr.bf16.mxu0 0
        %1259 = vmatpush1.bf16.xpose.msra.mxu0 %v1253
        %1260 = vmatprep.subr.bf16.mxu0 0
        %1261 = vmatpush1.bf16.xpose.msra.mxu0 %v1256
        %1262 = vmatprep.subr.bf16.mxu0 0
        %1263 = vmatpush1.bf16.xpose.msra.mxu0 0
        %1264 = vmatprep.subr.bf16.mxu0 0
        %1265 = vmatpush1.bf16.xpose.msra.mxu0 0
        %1266 = vmatprep.subr.bf16.mxu0 0
        %1267 = vmatpush1.bf16.xpose.msra.mxu0 0
        %1268 = vmatprep.subr.bf16.mxu0 0
        %1269 = vmatpush1.bf16.xpose.msra.mxu0 0
        %1270 = vmatprep.subr.bf16.mxu0 0
        %1271 = vmatpush1.bf16.xpose.msra.mxu0 0
        %1272 = vmatprep.subr.bf16.mxu0 0
        %1273 = vmatpush1.bf16.xpose.msra.mxu0 0
        %1274 = vmatprep.subr.bf16.mxu0 0
        %1275 = vmatpush1.bf16.xpose.msra.mxu0 0
        %1276 = vmatprep.subr.bf16.mxu0 0
        %1277 = vmatpush1.bf16.xpose.msra.mxu0 0
        %1278 = vmatprep.subr.bf16.mxu0 0
        %1279 = vmatpush1.bf16.xpose.msra.mxu0 0
        %1280 = vmatprep.subr.bf16.mxu0 0
        %1281 = vmatpush1.bf16.xpose.msra.mxu0 0
        %1282 = vmatprep.subr.bf16.mxu0 0
        %1283 = vmatpush1.bf16.xpose.msra.mxu0 0
        %1284 = vmatprep.subr.bf16.mxu0 0
        %1285 = vmatpush1.bf16.xpose.msra.mxu0 0
        %1286 = vmatprep.subr.bf16.mxu0 0
        %1287 = vmatpush1.bf16.xpose.msra.mxu0 0
        %1288 = vmatprep.subr.bf16.mxu0 0
        %1289 = vmatpush1.bf16.xpose.msra.mxu0 0
        %1290 = vmatprep.mubr.bf16.mxu0 0
        %1291 = vmatmul.mubr.bf16.gmra.mrb[0].mxu0 %v1204
        %v1292 = vpop.f32.mrb[0].mxu0
        %v1293 = vadd.f32 0.0, %v1292
        %v1294 = vpop.f32.mrb[0].mxu0
        %v1295 = vpop.f32.mrb[0].mxu0
        %v1296 = vpop.f32.mrb[0].mxu0
        %1297 = vdwg.mxu0
        %v1299 = vsel %vm1202, %v1173, 0
        %v1302 = vsel %vm1202, %v1174, 0
        %1304 = vmatprep.subr.bf16.mxu0 0
        %1305 = vmatpush1.bf16.xpose.msra.mxu0 %v1299
        %1306 = vmatprep.subr.bf16.mxu0 0
        %1307 = vmatpush1.bf16.xpose.msra.mxu0 %v1302
        %1308 = vmatprep.subr.bf16.mxu0 0
        %1309 = vmatpush1.bf16.xpose.msra.mxu0 0
        %1310 = vmatprep.subr.bf16.mxu0 0
        %1311 = vmatpush1.bf16.xpose.msra.mxu0 0
        %1312 = vmatprep.subr.bf16.mxu0 0
        %1313 = vmatpush1.bf16.xpose.msra.mxu0 0
        %1314 = vmatprep.subr.bf16.mxu0 0
        %1315 = vmatpush1.bf16.xpose.msra.mxu0 0
        %1316 = vmatprep.subr.bf16.mxu0 0
        %1317 = vmatpush1.bf16.xpose.msra.mxu0 0
        %1318 = vmatprep.subr.bf16.mxu0 0
        %1319 = vmatpush1.bf16.xpose.msra.mxu0 0
        %1320 = vmatprep.subr.bf16.mxu0 0
        %1321 = vmatpush1.bf16.xpose.msra.mxu0 0
        %1322 = vmatprep.subr.bf16.mxu0 0
        %1323 = vmatpush1.bf16.xpose.msra.mxu0 0
        %1324 = vmatprep.subr.bf16.mxu0 0
        %1325 = vmatpush1.bf16.xpose.msra.mxu0 0
        %1326 = vmatprep.subr.bf16.mxu0 0
        %1327 = vmatpush1.bf16.xpose.msra.mxu0 0
        %1328 = vmatprep.subr.bf16.mxu0 0
        %1329 = vmatpush1.bf16.xpose.msra.mxu0 0
        %1330 = vmatprep.subr.bf16.mxu0 0
        %1331 = vmatpush1.bf16.xpose.msra.mxu0 0
        %1332 = vmatprep.subr.bf16.mxu0 0
        %1333 = vmatpush1.bf16.xpose.msra.mxu0 0
        %1334 = vmatprep.subr.bf16.mxu0 0
        %1335 = vmatpush1.bf16.xpose.msra.mxu0 0
        %1336 = vmatprep.mubr.bf16.mxu0 0
        %1337 = vmatmul.mubr.bf16.gmra.mrb[0].mxu0 %v1204
        %v1338 = vpop.f32.mrb[0].mxu0
        %v1339 = vadd.f32 0.0, %v1338
        %v1340 = vpop.f32.mrb[0].mxu0
        %v1341 = vpop.f32.mrb[0].mxu0
        %v1342 = vpop.f32.mrb[0].mxu0
        %1343 = vdwg.mxu0
        %v1345 = vsel %vm1202, %v1175, 0
        %v1348 = vsel %vm1202, %v1176, 0
        %1350 = vmatprep.subr.bf16.mxu0 0
        %1351 = vmatpush1.bf16.xpose.msra.mxu0 %v1345
        %1352 = vmatprep.subr.bf16.mxu0 0
        %1353 = vmatpush1.bf16.xpose.msra.mxu0 %v1348
        %1354 = vmatprep.subr.bf16.mxu0 0
        %1355 = vmatpush1.bf16.xpose.msra.mxu0 0
        %1356 = vmatprep.subr.bf16.mxu0 0
        %1357 = vmatpush1.bf16.xpose.msra.mxu0 0
        %1358 = vmatprep.subr.bf16.mxu0 0
        %1359 = vmatpush1.bf16.xpose.msra.mxu0 0
        %1360 = vmatprep.subr.bf16.mxu0 0
        %1361 = vmatpush1.bf16.xpose.msra.mxu0 0
        %1362 = vmatprep.subr.bf16.mxu0 0
        %1363 = vmatpush1.bf16.xpose.msra.mxu0 0
        %1364 = vmatprep.subr.bf16.mxu0 0
        %1365 = vmatpush1.bf16.xpose.msra.mxu0 0
        %1366 = vmatprep.subr.bf16.mxu0 0
        %1367 = vmatpush1.bf16.xpose.msra.mxu0 0
        %1368 = vmatprep.subr.bf16.mxu0 0
        %1369 = vmatpush1.bf16.xpose.msra.mxu0 0
        %1370 = vmatprep.subr.bf16.mxu0 0
        %1371 = vmatpush1.bf16.xpose.msra.mxu0 0
        %1372 = vmatprep.subr.bf16.mxu0 0
        %1373 = vmatpush1.bf16.xpose.msra.mxu0 0
        %1374 = vmatprep.subr.bf16.mxu0 0
        %1375 = vmatpush1.bf16.xpose.msra.mxu0 0
        %1376 = vmatprep.subr.bf16.mxu0 0
        %1377 = vmatpush1.bf16.xpose.msra.mxu0 0
        %1378 = vmatprep.subr.bf16.mxu0 0
        %1379 = vmatpush1.bf16.xpose.msra.mxu0 0
        %1380 = vmatprep.subr.bf16.mxu0 0
        %1381 = vmatpush1.bf16.xpose.msra.mxu0 0
        %1382 = vmatprep.mubr.bf16.mxu0 0
        %1383 = vmatmul.mubr.bf16.gmra.mrb[0].mxu0 %v1204
        %v1384 = vpop.f32.mrb[0].mxu0
        %v1385 = vadd.f32 0.0, %v1384
        %v1386 = vpop.f32.mrb[0].mxu0
        %v1387 = vpop.f32.mrb[0].mxu0
        %v1388 = vpop.f32.mrb[0].mxu0
        %1389 = vdwg.mxu0
        %v1391 = vsel %vm1202, %v1177, 0
        %v1394 = vsel %vm1202, %v1178, 0
        %1396 = vmatprep.subr.bf16.mxu0 0
        %1397 = vmatpush1.bf16.xpose.msra.mxu0 %v1391
        %1398 = vmatprep.subr.bf16.mxu0 0
        %1399 = vmatpush1.bf16.xpose.msra.mxu0 %v1394
        %1400 = vmatprep.subr.bf16.mxu0 0
        %1401 = vmatpush1.bf16.xpose.msra.mxu0 0
        %1402 = vmatprep.subr.bf16.mxu0 0
        %1403 = vmatpush1.bf16.xpose.msra.mxu0 0
        %1404 = vmatprep.subr.bf16.mxu0 0
        %1405 = vmatpush1.bf16.xpose.msra.mxu0 0
        %1406 = vmatprep.subr.bf16.mxu0 0
        %1407 = vmatpush1.bf16.xpose.msra.mxu0 0
        %1408 = vmatprep.subr.bf16.mxu0 0
        %1409 = vmatpush1.bf16.xpose.msra.mxu0 0
        %1410 = vmatprep.subr.bf16.mxu0 0
        %1411 = vmatpush1.bf16.xpose.msra.mxu0 0
        %1412 = vmatprep.subr.bf16.mxu0 0
        %1413 = vmatpush1.bf16.xpose.msra.mxu0 0
        %1414 = vmatprep.subr.bf16.mxu0 0
        %1415 = vmatpush1.bf16.xpose.msra.mxu0 0
        %1416 = vmatprep.subr.bf16.mxu0 0
        %1417 = vmatpush1.bf16.xpose.msra.mxu0 0
        %1418 = vmatprep.subr.bf16.mxu0 0
        %1419 = vmatpush1.bf16.xpose.msra.mxu0 0
        %1420 = vmatprep.subr.bf16.mxu0 0
        %1421 = vmatpush1.bf16.xpose.msra.mxu0 0
        %1422 = vmatprep.subr.bf16.mxu0 0
        %1423 = vmatpush1.bf16.xpose.msra.mxu0 0
        %1424 = vmatprep.subr.bf16.mxu0 0
        %1425 = vmatpush1.bf16.xpose.msra.mxu0 0
        %1426 = vmatprep.subr.bf16.mxu0 0
        %1427 = vmatpush1.bf16.xpose.msra.mxu0 0
        %1428 = vmatprep.mubr.bf16.mxu0 0
        %1429 = vmatmul.mubr.bf16.gmra.mrb[0].mxu0 %v1204
        %v1430 = vpop.f32.mrb[0].mxu0
        %v1431 = vadd.f32 0.0, %v1430
        %v1432 = vpop.f32.mrb[0].mxu0
        %v1433 = vpop.f32.mrb[0].mxu0
        %v1434 = vpop.f32.mrb[0].mxu0
        %1435 = vdwg.mxu0
        %v1437 = vsel %vm1202, %v1179, 0
        %v1440 = vsel %vm1202, %v1180, 0
        %1442 = vmatprep.subr.bf16.mxu0 0
        %1443 = vmatpush1.bf16.xpose.msra.mxu0 %v1437
        %1444 = vmatprep.subr.bf16.mxu0 0
        %1445 = vmatpush1.bf16.xpose.msra.mxu0 %v1440
        %1446 = vmatprep.subr.bf16.mxu0 0
        %1447 = vmatpush1.bf16.xpose.msra.mxu0 0
        %1448 = vmatprep.subr.bf16.mxu0 0
        %1449 = vmatpush1.bf16.xpose.msra.mxu0 0
        %1450 = vmatprep.subr.bf16.mxu0 0
        %1451 = vmatpush1.bf16.xpose.msra.mxu0 0
        %1452 = vmatprep.subr.bf16.mxu0 0
        %1453 = vmatpush1.bf16.xpose.msra.mxu0 0
        %1454 = vmatprep.subr.bf16.mxu0 0
        %1455 = vmatpush1.bf16.xpose.msra.mxu0 0
        %1456 = vmatprep.subr.bf16.mxu0 0
        %1457 = vmatpush1.bf16.xpose.msra.mxu0 0
        %1458 = vmatprep.subr.bf16.mxu0 0
        %1459 = vmatpush1.bf16.xpose.msra.mxu0 0
        %1460 = vmatprep.subr.bf16.mxu0 0
        %1461 = vmatpush1.bf16.xpose.msra.mxu0 0
        %1462 = vmatprep.subr.bf16.mxu0 0
        %1463 = vmatpush1.bf16.xpose.msra.mxu0 0
        %1464 = vmatprep.subr.bf16.mxu0 0
        %1465 = vmatpush1.bf16.xpose.msra.mxu0 0
        %1466 = vmatprep.subr.bf16.mxu0 0
        %1467 = vmatpush1.bf16.xpose.msra.mxu0 0
        %1468 = vmatprep.subr.bf16.mxu0 0
        %1469 = vmatpush1.bf16.xpose.msra.mxu0 0
        %1470 = vmatprep.subr.bf16.mxu0 0
        %1471 = vmatpush1.bf16.xpose.msra.mxu0 0
        %1472 = vmatprep.subr.bf16.mxu0 0
        %1473 = vmatpush1.bf16.xpose.msra.mxu0 0
        %1474 = vmatprep.mubr.bf16.mxu0 0
        %1475 = vmatmul.mubr.bf16.gmra.mrb[0].mxu0 %v1204
        %v1476 = vpop.f32.mrb[0].mxu0
        %v1477 = vadd.f32 0.0, %v1476
        %v1478 = vpop.f32.mrb[0].mxu0
        %v1479 = vpop.f32.mrb[0].mxu0
        %v1480 = vpop.f32.mrb[0].mxu0
        %1481 = vdwg.mxu0
        %v1483 = vsel %vm1202, %v1181, 0
        %v1486 = vsel %vm1202, %v1182, 0
        %1488 = vmatprep.subr.bf16.mxu0 0
        %1489 = vmatpush1.bf16.xpose.msra.mxu0 %v1483
        %1490 = vmatprep.subr.bf16.mxu0 0
        %1491 = vmatpush1.bf16.xpose.msra.mxu0 %v1486
        %1492 = vmatprep.subr.bf16.mxu0 0
        %1493 = vmatpush1.bf16.xpose.msra.mxu0 0
        %1494 = vmatprep.subr.bf16.mxu0 0
        %1495 = vmatpush1.bf16.xpose.msra.mxu0 0
        %1496 = vmatprep.subr.bf16.mxu0 0
        %1497 = vmatpush1.bf16.xpose.msra.mxu0 0
        %1498 = vmatprep.subr.bf16.mxu0 0
        %1499 = vmatpush1.bf16.xpose.msra.mxu0 0
        %1500 = vmatprep.subr.bf16.mxu0 0
        %1501 = vmatpush1.bf16.xpose.msra.mxu0 0
        %1502 = vmatprep.subr.bf16.mxu0 0
        %1503 = vmatpush1.bf16.xpose.msra.mxu0 0
        %1504 = vmatprep.subr.bf16.mxu0 0
        %1505 = vmatpush1.bf16.xpose.msra.mxu0 0
        %1506 = vmatprep.subr.bf16.mxu0 0
        %1507 = vmatpush1.bf16.xpose.msra.mxu0 0
        %1508 = vmatprep.subr.bf16.mxu0 0
        %1509 = vmatpush1.bf16.xpose.msra.mxu0 0
        %1510 = vmatprep.subr.bf16.mxu0 0
        %1511 = vmatpush1.bf16.xpose.msra.mxu0 0
        %1512 = vmatprep.subr.bf16.mxu0 0
        %1513 = vmatpush1.bf16.xpose.msra.mxu0 0
        %1514 = vmatprep.subr.bf16.mxu0 0
        %1515 = vmatpush1.bf16.xpose.msra.mxu0 0
        %1516 = vmatprep.subr.bf16.mxu0 0
        %1517 = vmatpush1.bf16.xpose.msra.mxu0 0
        %1518 = vmatprep.subr.bf16.mxu0 0
        %1519 = vmatpush1.bf16.xpose.msra.mxu0 0
        %1520 = vmatprep.mubr.bf16.mxu0 0
        %1521 = vmatmul.mubr.bf16.gmra.mrb[0].mxu0 %v1204
        %v1522 = vpop.f32.mrb[0].mxu0
        %v1523 = vadd.f32 0.0, %v1522
        %v1524 = vpop.f32.mrb[0].mxu0
        %v1525 = vpop.f32.mrb[0].mxu0
        %v1526 = vpop.f32.mrb[0].mxu0
        %1527 = vdwg.mxu0
        %v1529 = vsel %vm1202, %v1183, 0
        %v1532 = vsel %vm1202, %v1184, 0
        %1534 = vmatprep.subr.bf16.mxu0 0
        %1535 = vmatpush1.bf16.xpose.msra.mxu0 %v1529
        %1536 = vmatprep.subr.bf16.mxu0 0
        %1537 = vmatpush1.bf16.xpose.msra.mxu0 %v1532
        %1538 = vmatprep.subr.bf16.mxu0 0
        %1539 = vmatpush1.bf16.xpose.msra.mxu0 0
        %1540 = vmatprep.subr.bf16.mxu0 0
        %1541 = vmatpush1.bf16.xpose.msra.mxu0 0
        %1542 = vmatprep.subr.bf16.mxu0 0
        %1543 = vmatpush1.bf16.xpose.msra.mxu0 0
        %1544 = vmatprep.subr.bf16.mxu0 0
        %1545 = vmatpush1.bf16.xpose.msra.mxu0 0
        %1546 = vmatprep.subr.bf16.mxu0 0
        %1547 = vmatpush1.bf16.xpose.msra.mxu0 0
        %1548 = vmatprep.subr.bf16.mxu0 0
        %1549 = vmatpush1.bf16.xpose.msra.mxu0 0
        %1550 = vmatprep.subr.bf16.mxu0 0
        %1551 = vmatpush1.bf16.xpose.msra.mxu0 0
        %1552 = vmatprep.subr.bf16.mxu0 0
        %1553 = vmatpush1.bf16.xpose.msra.mxu0 0
        %1554 = vmatprep.subr.bf16.mxu0 0
        %1555 = vmatpush1.bf16.xpose.msra.mxu0 0
        %1556 = vmatprep.subr.bf16.mxu0 0
        %1557 = vmatpush1.bf16.xpose.msra.mxu0 0
        %1558 = vmatprep.subr.bf16.mxu0 0
        %1559 = vmatpush1.bf16.xpose.msra.mxu0 0
        %1560 = vmatprep.subr.bf16.mxu0 0
        %1561 = vmatpush1.bf16.xpose.msra.mxu0 0
        %1562 = vmatprep.subr.bf16.mxu0 0
        %1563 = vmatpush1.bf16.xpose.msra.mxu0 0
        %1564 = vmatprep.subr.bf16.mxu0 0
        %1565 = vmatpush1.bf16.xpose.msra.mxu0 0
        %1566 = vmatprep.mubr.bf16.mxu0 0
        %1567 = vmatmul.mubr.bf16.gmra.mrb[0].mxu0 %v1204
        %v1568 = vpop.f32.mrb[0].mxu0
        %v1569 = vadd.f32 0.0, %v1568
        %v1570 = vpop.f32.mrb[0].mxu0
        %v1571 = vpop.f32.mrb[0].mxu0
        %v1572 = vpop.f32.mrb[0].mxu0
        %1573 = vdwg.mxu0
        %v1575 = vsel %vm1202, %v1185, 0
        %v1578 = vsel %vm1202, %v1186, 0
        %1580 = vmatprep.subr.bf16.mxu0 0
        %1581 = vmatpush1.bf16.xpose.msra.mxu0 %v1575
        %1582 = vmatprep.subr.bf16.mxu0 0
        %1583 = vmatpush1.bf16.xpose.msra.mxu0 %v1578
        %1584 = vmatprep.subr.bf16.mxu0 0
        %1585 = vmatpush1.bf16.xpose.msra.mxu0 0
        %1586 = vmatprep.subr.bf16.mxu0 0
        %1587 = vmatpush1.bf16.xpose.msra.mxu0 0
        %1588 = vmatprep.subr.bf16.mxu0 0
        %1589 = vmatpush1.bf16.xpose.msra.mxu0 0
        %1590 = vmatprep.subr.bf16.mxu0 0
        %1591 = vmatpush1.bf16.xpose.msra.mxu0 0
        %1592 = vmatprep.subr.bf16.mxu0 0
        %1593 = vmatpush1.bf16.xpose.msra.mxu0 0
        %1594 = vmatprep.subr.bf16.mxu0 0
        %1595 = vmatpush1.bf16.xpose.msra.mxu0 0
        %1596 = vmatprep.subr.bf16.mxu0 0
        %1597 = vmatpush1.bf16.xpose.msra.mxu0 0
        %1598 = vmatprep.subr.bf16.mxu0 0
        %1599 = vmatpush1.bf16.xpose.msra.mxu0 0
        %1600 = vmatprep.subr.bf16.mxu0 0
        %1601 = vmatpush1.bf16.xpose.msra.mxu0 0
        %1602 = vmatprep.subr.bf16.mxu0 0
        %1603 = vmatpush1.bf16.xpose.msra.mxu0 0
        %1604 = vmatprep.subr.bf16.mxu0 0
        %1605 = vmatpush1.bf16.xpose.msra.mxu0 0
        %1606 = vmatprep.subr.bf16.mxu0 0
        %1607 = vmatpush1.bf16.xpose.msra.mxu0 0
        %1608 = vmatprep.subr.bf16.mxu0 0
        %1609 = vmatpush1.bf16.xpose.msra.mxu0 0
        %1610 = vmatprep.subr.bf16.mxu0 0
        %1611 = vmatpush1.bf16.xpose.msra.mxu0 0
        %1612 = vmatprep.mubr.bf16.mxu0 0
        %1613 = vmatmul.mubr.bf16.gmra.mrb[0].mxu0 %v1204
        %v1614 = vpop.f32.mrb[0].mxu0
        %v1615 = vadd.f32 0.0, %v1614
        %v1616 = vpop.f32.mrb[0].mxu0
        %v1617 = vpop.f32.mrb[0].mxu0
        %v1618 = vpop.f32.mrb[0].mxu0
        %1619 = vdwg.mxu0
        %v1621 = vsel %vm1202, %v1187, 0
        %v1624 = vsel %vm1202, %v1188, 0
        %1626 = vmatprep.subr.bf16.mxu0 0
        %1627 = vmatpush1.bf16.xpose.msra.mxu0 %v1621
        %1628 = vmatprep.subr.bf16.mxu0 0
        %1629 = vmatpush1.bf16.xpose.msra.mxu0 %v1624
        %1630 = vmatprep.subr.bf16.mxu0 0
        %1631 = vmatpush1.bf16.xpose.msra.mxu0 0
        %1632 = vmatprep.subr.bf16.mxu0 0
        %1633 = vmatpush1.bf16.xpose.msra.mxu0 0
        %1634 = vmatprep.subr.bf16.mxu0 0
        %1635 = vmatpush1.bf16.xpose.msra.mxu0 0
        %1636 = vmatprep.subr.bf16.mxu0 0
        %1637 = vmatpush1.bf16.xpose.msra.mxu0 0
        %1638 = vmatprep.subr.bf16.mxu0 0
        %1639 = vmatpush1.bf16.xpose.msra.mxu0 0
        %1640 = vmatprep.subr.bf16.mxu0 0
        %1641 = vmatpush1.bf16.xpose.msra.mxu0 0
        %1642 = vmatprep.subr.bf16.mxu0 0
        %1643 = vmatpush1.bf16.xpose.msra.mxu0 0
        %1644 = vmatprep.subr.bf16.mxu0 0
        %1645 = vmatpush1.bf16.xpose.msra.mxu0 0
        %1646 = vmatprep.subr.bf16.mxu0 0
        %1647 = vmatpush1.bf16.xpose.msra.mxu0 0
        %1648 = vmatprep.subr.bf16.mxu0 0
        %1649 = vmatpush1.bf16.xpose.msra.mxu0 0
        %1650 = vmatprep.subr.bf16.mxu0 0
        %1651 = vmatpush1.bf16.xpose.msra.mxu0 0
        %1652 = vmatprep.subr.bf16.mxu0 0
        %1653 = vmatpush1.bf16.xpose.msra.mxu0 0
        %1654 = vmatprep.subr.bf16.mxu0 0
        %1655 = vmatpush1.bf16.xpose.msra.mxu0 0
        %1656 = vmatprep.subr.bf16.mxu0 0
        %1657 = vmatpush1.bf16.xpose.msra.mxu0 0
        %1658 = vmatprep.mubr.bf16.mxu0 0
        %1659 = vmatmul.mubr.bf16.gmra.mrb[0].mxu0 %v1204
        %v1660 = vpop.f32.mrb[0].mxu0
        %v1661 = vadd.f32 0.0, %v1660
        %v1662 = vpop.f32.mrb[0].mxu0
        %v1663 = vpop.f32.mrb[0].mxu0
        %v1664 = vpop.f32.mrb[0].mxu0
        %1665 = vdwg.mxu0
        %v1667 = vsel %vm1202, %v1189, 0
        %v1670 = vsel %vm1202, %v1190, 0
        %1672 = vmatprep.subr.bf16.mxu0 0
        %1673 = vmatpush1.bf16.xpose.msra.mxu0 %v1667
        %1674 = vmatprep.subr.bf16.mxu0 0
        %1675 = vmatpush1.bf16.xpose.msra.mxu0 %v1670
        %1676 = vmatprep.subr.bf16.mxu0 0
        %1677 = vmatpush1.bf16.xpose.msra.mxu0 0
        %1678 = vmatprep.subr.bf16.mxu0 0
        %1679 = vmatpush1.bf16.xpose.msra.mxu0 0
        %1680 = vmatprep.subr.bf16.mxu0 0
        %1681 = vmatpush1.bf16.xpose.msra.mxu0 0
        %1682 = vmatprep.subr.bf16.mxu0 0
        %1683 = vmatpush1.bf16.xpose.msra.mxu0 0
        %1684 = vmatprep.subr.bf16.mxu0 0
        %1685 = vmatpush1.bf16.xpose.msra.mxu0 0
        %1686 = vmatprep.subr.bf16.mxu0 0
        %1687 = vmatpush1.bf16.xpose.msra.mxu0 0
        %1688 = vmatprep.subr.bf16.mxu0 0
        %1689 = vmatpush1.bf16.xpose.msra.mxu0 0
        %1690 = vmatprep.subr.bf16.mxu0 0
        %1691 = vmatpush1.bf16.xpose.msra.mxu0 0
        %1692 = vmatprep.subr.bf16.mxu0 0
        %1693 = vmatpush1.bf16.xpose.msra.mxu0 0
        %1694 = vmatprep.subr.bf16.mxu0 0
        %1695 = vmatpush1.bf16.xpose.msra.mxu0 0
        %1696 = vmatprep.subr.bf16.mxu0 0
        %1697 = vmatpush1.bf16.xpose.msra.mxu0 0
        %1698 = vmatprep.subr.bf16.mxu0 0
        %1699 = vmatpush1.bf16.xpose.msra.mxu0 0
        %1700 = vmatprep.subr.bf16.mxu0 0
        %1701 = vmatpush1.bf16.xpose.msra.mxu0 0
        %1702 = vmatprep.subr.bf16.mxu0 0
        %1703 = vmatpush1.bf16.xpose.msra.mxu0 0
        %1704 = vmatprep.mubr.bf16.mxu0 0
        %1705 = vmatmul.mubr.bf16.gmra.mrb[0].mxu0 %v1204
        %v1706 = vpop.f32.mrb[0].mxu0
        %v1707 = vadd.f32 0.0, %v1706
        %v1708 = vpop.f32.mrb[0].mxu0
        %v1709 = vpop.f32.mrb[0].mxu0
        %v1710 = vpop.f32.mrb[0].mxu0
        %1711 = vdwg.mxu0
        %v1713 = vsel %vm1202, %v1191, 0
        %v1716 = vsel %vm1202, %v1192, 0
        %1718 = vmatprep.subr.bf16.mxu0 0
        %1719 = vmatpush1.bf16.xpose.msra.mxu0 %v1713
        %1720 = vmatprep.subr.bf16.mxu0 0
        %1721 = vmatpush1.bf16.xpose.msra.mxu0 %v1716
        %1722 = vmatprep.subr.bf16.mxu0 0
        %1723 = vmatpush1.bf16.xpose.msra.mxu0 0
        %1724 = vmatprep.subr.bf16.mxu0 0
        %1725 = vmatpush1.bf16.xpose.msra.mxu0 0
        %1726 = vmatprep.subr.bf16.mxu0 0
        %1727 = vmatpush1.bf16.xpose.msra.mxu0 0
        %1728 = vmatprep.subr.bf16.mxu0 0
        %1729 = vmatpush1.bf16.xpose.msra.mxu0 0
        %1730 = vmatprep.subr.bf16.mxu0 0
        %1731 = vmatpush1.bf16.xpose.msra.mxu0 0
        %1732 = vmatprep.subr.bf16.mxu0 0
        %1733 = vmatpush1.bf16.xpose.msra.mxu0 0
        %1734 = vmatprep.subr.bf16.mxu0 0
        %1735 = vmatpush1.bf16.xpose.msra.mxu0 0
        %1736 = vmatprep.subr.bf16.mxu0 0
        %1737 = vmatpush1.bf16.xpose.msra.mxu0 0
        %1738 = vmatprep.subr.bf16.mxu0 0
        %1739 = vmatpush1.bf16.xpose.msra.mxu0 0
        %1740 = vmatprep.subr.bf16.mxu0 0
        %1741 = vmatpush1.bf16.xpose.msra.mxu0 0
        %1742 = vmatprep.subr.bf16.mxu0 0
        %1743 = vmatpush1.bf16.xpose.msra.mxu0 0
        %1744 = vmatprep.subr.bf16.mxu0 0
        %1745 = vmatpush1.bf16.xpose.msra.mxu0 0
        %1746 = vmatprep.subr.bf16.mxu0 0
        %1747 = vmatpush1.bf16.xpose.msra.mxu0 0
        %1748 = vmatprep.subr.bf16.mxu0 0
        %1749 = vmatpush1.bf16.xpose.msra.mxu0 0
        %1750 = vmatprep.mubr.bf16.mxu0 0
        %1751 = vmatmul.mubr.bf16.gmra.mrb[0].mxu0 %v1204
        %v1752 = vpop.f32.mrb[0].mxu0
        %v1753 = vadd.f32 0.0, %v1752
        %v1754 = vpop.f32.mrb[0].mxu0
        %v1755 = vpop.f32.mrb[0].mxu0
        %v1756 = vpop.f32.mrb[0].mxu0
        %1757 = vdwg.mxu0
        %v1759 = vsel %vm1202, %v1193, 0
        %v1762 = vsel %vm1202, %v1194, 0
        %1764 = vmatprep.subr.bf16.mxu0 0
        %1765 = vmatpush1.bf16.xpose.msra.mxu0 %v1759
        %1766 = vmatprep.subr.bf16.mxu0 0
        %1767 = vmatpush1.bf16.xpose.msra.mxu0 %v1762
        %1768 = vmatprep.subr.bf16.mxu0 0
        %1769 = vmatpush1.bf16.xpose.msra.mxu0 0
        %1770 = vmatprep.subr.bf16.mxu0 0
        %1771 = vmatpush1.bf16.xpose.msra.mxu0 0
        %1772 = vmatprep.subr.bf16.mxu0 0
        %1773 = vmatpush1.bf16.xpose.msra.mxu0 0
        %1774 = vmatprep.subr.bf16.mxu0 0
        %1775 = vmatpush1.bf16.xpose.msra.mxu0 0
        %1776 = vmatprep.subr.bf16.mxu0 0
        %1777 = vmatpush1.bf16.xpose.msra.mxu0 0
        %1778 = vmatprep.subr.bf16.mxu0 0
        %1779 = vmatpush1.bf16.xpose.msra.mxu0 0
        %1780 = vmatprep.subr.bf16.mxu0 0
        %1781 = vmatpush1.bf16.xpose.msra.mxu0 0
        %1782 = vmatprep.subr.bf16.mxu0 0
        %1783 = vmatpush1.bf16.xpose.msra.mxu0 0
        %1784 = vmatprep.subr.bf16.mxu0 0
        %1785 = vmatpush1.bf16.xpose.msra.mxu0 0
        %1786 = vmatprep.subr.bf16.mxu0 0
        %1787 = vmatpush1.bf16.xpose.msra.mxu0 0
        %1788 = vmatprep.subr.bf16.mxu0 0
        %1789 = vmatpush1.bf16.xpose.msra.mxu0 0
        %1790 = vmatprep.subr.bf16.mxu0 0
        %1791 = vmatpush1.bf16.xpose.msra.mxu0 0
        %1792 = vmatprep.subr.bf16.mxu0 0
        %1793 = vmatpush1.bf16.xpose.msra.mxu0 0
        %1794 = vmatprep.subr.bf16.mxu0 0
        %1795 = vmatpush1.bf16.xpose.msra.mxu0 0
        %1796 = vmatprep.mubr.bf16.mxu0 0
        %1797 = vmatmul.mubr.bf16.gmra.mrb[0].mxu0 %v1204
        %v1798 = vpop.f32.mrb[0].mxu0
        %v1799 = vadd.f32 0.0, %v1798
        %v1800 = vpop.f32.mrb[0].mxu0
        %v1801 = vpop.f32.mrb[0].mxu0
        %v1802 = vpop.f32.mrb[0].mxu0
        %1803 = vdwg.mxu0
        %v1805 = vsel %vm1202, %v1195, 0
        %v1808 = vsel %vm1202, %v1196, 0
        %1810 = vmatprep.subr.bf16.mxu0 0
        %1811 = vmatpush1.bf16.xpose.msra.mxu0 %v1805
        %1812 = vmatprep.subr.bf16.mxu0 0
        %1813 = vmatpush1.bf16.xpose.msra.mxu0 %v1808
        %1814 = vmatprep.subr.bf16.mxu0 0
        %1815 = vmatpush1.bf16.xpose.msra.mxu0 0
        %1816 = vmatprep.subr.bf16.mxu0 0
        %1817 = vmatpush1.bf16.xpose.msra.mxu0 0
        %1818 = vmatprep.subr.bf16.mxu0 0
        %1819 = vmatpush1.bf16.xpose.msra.mxu0 0
        %1820 = vmatprep.subr.bf16.mxu0 0
        %1821 = vmatpush1.bf16.xpose.msra.mxu0 0
        %1822 = vmatprep.subr.bf16.mxu0 0
        %1823 = vmatpush1.bf16.xpose.msra.mxu0 0
        %1824 = vmatprep.subr.bf16.mxu0 0
        %1825 = vmatpush1.bf16.xpose.msra.mxu0 0
        %1826 = vmatprep.subr.bf16.mxu0 0
        %1827 = vmatpush1.bf16.xpose.msra.mxu0 0
        %1828 = vmatprep.subr.bf16.mxu0 0
        %1829 = vmatpush1.bf16.xpose.msra.mxu0 0
        %1830 = vmatprep.subr.bf16.mxu0 0
        %1831 = vmatpush1.bf16.xpose.msra.mxu0 0
        %1832 = vmatprep.subr.bf16.mxu0 0
        %1833 = vmatpush1.bf16.xpose.msra.mxu0 0
        %1834 = vmatprep.subr.bf16.mxu0 0
        %1835 = vmatpush1.bf16.xpose.msra.mxu0 0
        %1836 = vmatprep.subr.bf16.mxu0 0
        %1837 = vmatpush1.bf16.xpose.msra.mxu0 0
        %1838 = vmatprep.subr.bf16.mxu0 0
        %1839 = vmatpush1.bf16.xpose.msra.mxu0 0
        %1840 = vmatprep.subr.bf16.mxu0 0
        %1841 = vmatpush1.bf16.xpose.msra.mxu0 0
        %1842 = vmatprep.mubr.bf16.mxu0 0
        %1843 = vmatmul.mubr.bf16.gmra.mrb[0].mxu0 %v1204
        %v1844 = vpop.f32.mrb[0].mxu0
        %v1845 = vadd.f32 0.0, %v1844
        %v1846 = vpop.f32.mrb[0].mxu0
        %v1847 = vpop.f32.mrb[0].mxu0
        %v1848 = vpop.f32.mrb[0].mxu0
        %1849 = vdwg.mxu0
        %v1851 = vsel %vm1202, %v1197, 0
        %v1854 = vsel %vm1202, %v1198, 0
        %1856 = vmatprep.subr.bf16.mxu0 0
        %1857 = vmatpush1.bf16.xpose.msra.mxu0 %v1851
        %1858 = vmatprep.subr.bf16.mxu0 0
        %1859 = vmatpush1.bf16.xpose.msra.mxu0 %v1854
        %1860 = vmatprep.subr.bf16.mxu0 0
        %1861 = vmatpush1.bf16.xpose.msra.mxu0 0
        %1862 = vmatprep.subr.bf16.mxu0 0
        %1863 = vmatpush1.bf16.xpose.msra.mxu0 0
        %1864 = vmatprep.subr.bf16.mxu0 0
        %1865 = vmatpush1.bf16.xpose.msra.mxu0 0
        %1866 = vmatprep.subr.bf16.mxu0 0
        %1867 = vmatpush1.bf16.xpose.msra.mxu0 0
        %1868 = vmatprep.subr.bf16.mxu0 0
        %1869 = vmatpush1.bf16.xpose.msra.mxu0 0
        %1870 = vmatprep.subr.bf16.mxu0 0
        %1871 = vmatpush1.bf16.xpose.msra.mxu0 0
        %1872 = vmatprep.subr.bf16.mxu0 0
        %1873 = vmatpush1.bf16.xpose.msra.mxu0 0
        %1874 = vmatprep.subr.bf16.mxu0 0
        %1875 = vmatpush1.bf16.xpose.msra.mxu0 0
        %1876 = vmatprep.subr.bf16.mxu0 0
        %1877 = vmatpush1.bf16.xpose.msra.mxu0 0
        %1878 = vmatprep.subr.bf16.mxu0 0
        %1879 = vmatpush1.bf16.xpose.msra.mxu0 0
        %1880 = vmatprep.subr.bf16.mxu0 0
        %1881 = vmatpush1.bf16.xpose.msra.mxu0 0
        %1882 = vmatprep.subr.bf16.mxu0 0
        %1883 = vmatpush1.bf16.xpose.msra.mxu0 0
        %1884 = vmatprep.subr.bf16.mxu0 0
        %1885 = vmatpush1.bf16.xpose.msra.mxu0 0
        %1886 = vmatprep.subr.bf16.mxu0 0
        %1887 = vmatpush1.bf16.xpose.msra.mxu0 0
        %1888 = vmatprep.mubr.bf16.mxu0 0
        %1889 = vmatmul.mubr.bf16.gmra.mrb[0].mxu0 %v1204
        %v1890 = vpop.f32.mrb[0].mxu0
        %v1891 = vadd.f32 0.0, %v1890
        %v1892 = vpop.f32.mrb[0].mxu0
        %v1893 = vpop.f32.mrb[0].mxu0
        %v1894 = vpop.f32.mrb[0].mxu0
        %1895 = vdwg.mxu0
        %v1897 = vsel %vm1202, %v1199, 0
        %v1900 = vsel %vm1202, %v1200, 0
        %1902 = vmatprep.subr.bf16.mxu0 0
        %1903 = vmatpush1.bf16.xpose.msra.mxu0 %v1897
        %1904 = vmatprep.subr.bf16.mxu0 0
        %1905 = vmatpush1.bf16.xpose.msra.mxu0 %v1900
        %1906 = vmatprep.subr.bf16.mxu0 0
        %1907 = vmatpush1.bf16.xpose.msra.mxu0 0
        %1908 = vmatprep.subr.bf16.mxu0 0
        %1909 = vmatpush1.bf16.xpose.msra.mxu0 0
        %1910 = vmatprep.subr.bf16.mxu0 0
        %1911 = vmatpush1.bf16.xpose.msra.mxu0 0
        %1912 = vmatprep.subr.bf16.mxu0 0
        %1913 = vmatpush1.bf16.xpose.msra.mxu0 0
        %1914 = vmatprep.subr.bf16.mxu0 0
        %1915 = vmatpush1.bf16.xpose.msra.mxu0 0
        %1916 = vmatprep.subr.bf16.mxu0 0
        %1917 = vmatpush1.bf16.xpose.msra.mxu0 0
        %1918 = vmatprep.subr.bf16.mxu0 0
        %1919 = vmatpush1.bf16.xpose.msra.mxu0 0
        %1920 = vmatprep.subr.bf16.mxu0 0
        %1921 = vmatpush1.bf16.xpose.msra.mxu0 0
        %1922 = vmatprep.subr.bf16.mxu0 0
        %1923 = vmatpush1.bf16.xpose.msra.mxu0 0
        %1924 = vmatprep.subr.bf16.mxu0 0
        %1925 = vmatpush1.bf16.xpose.msra.mxu0 0
        %1926 = vmatprep.subr.bf16.mxu0 0
        %1927 = vmatpush1.bf16.xpose.msra.mxu0 0
        %1928 = vmatprep.subr.bf16.mxu0 0
        %1929 = vmatpush1.bf16.xpose.msra.mxu0 0
        %1930 = vmatprep.subr.bf16.mxu0 0
        %1931 = vmatpush1.bf16.xpose.msra.mxu0 0
        %1932 = vmatprep.subr.bf16.mxu0 0
        %1933 = vmatpush1.bf16.xpose.msra.mxu0 0
        %1934 = vmatprep.mubr.bf16.mxu0 0
        %1935 = vmatmul.mubr.bf16.gmra.mrb[0].mxu0 %v1204
        %v1936 = vpop.f32.mrb[0].mxu0
        %v1937 = vadd.f32 0.0, %v1936
        %v1938 = vpop.f32.mrb[0].mxu0
        %v1939 = vpop.f32.mrb[0].mxu0
        %v1940 = vpop.f32.mrb[0].mxu0
        %1941 = vdwg.mxu0
        %v1942 = vsel %vm1202, %v1247, -inf
        %1943 = vmax.xlane.f32.xlu0 %v1942
        %v1944 = vpop.xlane.xlu0 %1943
        %v1945 = vsel %vm1202, %v1293, -inf
        %1946 = vmax.xlane.f32.xlu0 %v1945
        %v1947 = vpop.xlane.xlu0 %1946
        %v1948 = vsel %vm1202, %v1339, -inf
        %1949 = vmax.xlane.f32.xlu0 %v1948
        %v1950 = vpop.xlane.xlu0 %1949
        %v1951 = vsel %vm1202, %v1385, -inf
        %1952 = vmax.xlane.f32.xlu0 %v1951
        %v1953 = vpop.xlane.xlu0 %1952
        %v1954 = vsel %vm1202, %v1431, -inf
        %1955 = vmax.xlane.f32.xlu0 %v1954
        %v1956 = vpop.xlane.xlu0 %1955
        %v1957 = vsel %vm1202, %v1477, -inf
        %1958 = vmax.xlane.f32.xlu0 %v1957
        %v1959 = vpop.xlane.xlu0 %1958
        %v1960 = vsel %vm1202, %v1523, -inf
        %1961 = vmax.xlane.f32.xlu0 %v1960
        %v1962 = vpop.xlane.xlu0 %1961
        %v1963 = vsel %vm1202, %v1569, -inf
        %1964 = vmax.xlane.f32.xlu0 %v1963
        %v1965 = vpop.xlane.xlu0 %1964
        %v1966 = vsel %vm1202, %v1615, -inf
        %1967 = vmax.xlane.f32.xlu0 %v1966
        %v1968 = vpop.xlane.xlu0 %1967
        %v1969 = vsel %vm1202, %v1661, -inf
        %1970 = vmax.xlane.f32.xlu0 %v1969
        %v1971 = vpop.xlane.xlu0 %1970
        %v1972 = vsel %vm1202, %v1707, -inf
        %1973 = vmax.xlane.f32.xlu0 %v1972
        %v1974 = vpop.xlane.xlu0 %1973
        %v1975 = vsel %vm1202, %v1753, -inf
        %1976 = vmax.xlane.f32.xlu0 %v1975
        %v1977 = vpop.xlane.xlu0 %1976
        %v1978 = vsel %vm1202, %v1799, -inf
        %1979 = vmax.xlane.f32.xlu0 %v1978
        %v1980 = vpop.xlane.xlu0 %1979
        %v1981 = vsel %vm1202, %v1845, -inf
        %1982 = vmax.xlane.f32.xlu0 %v1981
        %v1983 = vpop.xlane.xlu0 %1982
        %v1984 = vsel %vm1202, %v1891, -inf
        %1985 = vmax.xlane.f32.xlu0 %v1984
        %v1986 = vpop.xlane.xlu0 %1985
        %v1987 = vsel %vm1202, %v1937, -inf
        %1988 = vmax.xlane.f32.xlu0 %v1987
        %v1989 = vpop.xlane.xlu0 %1988
        %v1990 = vsub.f32 %v1247, %v1944
        %v1991 = vsub.f32 %v1293, %v1947
        %v1992 = vsub.f32 %v1339, %v1950
        %v1993 = vsub.f32 %v1385, %v1953
        %v1994 = vsub.f32 %v1431, %v1956
        %v1995 = vsub.f32 %v1477, %v1959
        %v1996 = vsub.f32 %v1523, %v1962
        %v1997 = vsub.f32 %v1569, %v1965
        %v1998 = vsub.f32 %v1615, %v1968
        %v1999 = vsub.f32 %v1661, %v1971
        %v2000 = vsub.f32 %v1707, %v1974
        %v2001 = vsub.f32 %v1753, %v1977
        %v2002 = vsub.f32 %v1799, %v1980
        %v2003 = vsub.f32 %v1845, %v1983
        %v2004 = vsub.f32 %v1891, %v1986
        %v2005 = vsub.f32 %v1937, %v1989
        %v2006 = vmul.f32 %v1990, 1.442695
        %v2007 = vpow.pop %v2006
        %v2008 = vmul.f32 %v1991, 1.442695
        %v2009 = vpow.pop %v2008
        %v2010 = vmul.f32 %v1992, 1.442695
        %v2011 = vpow.pop %v2010
        %v2012 = vmul.f32 %v1993, 1.442695
        %v2013 = vpow.pop %v2012
        %v2014 = vmul.f32 %v1994, 1.442695
        %v2015 = vpow.pop %v2014
        %v2016 = vmul.f32 %v1995, 1.442695
        %v2017 = vpow.pop %v2016
        %v2018 = vmul.f32 %v1996, 1.442695
        %v2019 = vpow.pop %v2018
        %v2020 = vmul.f32 %v1997, 1.442695
        %v2021 = vpow.pop %v2020
        %v2022 = vmul.f32 %v1998, 1.442695
        %v2023 = vpow.pop %v2022
        %v2024 = vmul.f32 %v1999, 1.442695
        %v2025 = vpow.pop %v2024
        %v2026 = vmul.f32 %v2000, 1.442695
        %v2027 = vpow.pop %v2026
        %v2028 = vmul.f32 %v2001, 1.442695
        %v2029 = vpow.pop %v2028
        %v2030 = vmul.f32 %v2002, 1.442695
        %v2031 = vpow.pop %v2030
        %v2032 = vmul.f32 %v2003, 1.442695
        %v2033 = vpow.pop %v2032
        %v2034 = vmul.f32 %v2004, 1.442695
        %v2035 = vpow.pop %v2034
        %v2036 = vmul.f32 %v2005, 1.442695
        %v2037 = vpow.pop %v2036
        %v2038 = vsel %vm1202, %v2007, 0.0
        %2039 = vadd.xlane.f32.xlu0 %v2038
        %v2040 = vpop.xlane.xlu0 %2039
        %v2041 = vsel %vm1202, %v2009, 0.0
        %2042 = vadd.xlane.f32.xlu0 %v2041
        %v2043 = vpop.xlane.xlu0 %2042
        %v2044 = vsel %vm1202, %v2011, 0.0
        %2045 = vadd.xlane.f32.xlu0 %v2044
        %v2046 = vpop.xlane.xlu0 %2045
        %v2047 = vsel %vm1202, %v2013, 0.0
        %2048 = vadd.xlane.f32.xlu0 %v2047
        %v2049 = vpop.xlane.xlu0 %2048
        %v2050 = vsel %vm1202, %v2015, 0.0
        %2051 = vadd.xlane.f32.xlu0 %v2050
        %v2052 = vpop.xlane.xlu0 %2051
        %v2053 = vsel %vm1202, %v2017, 0.0
        %2054 = vadd.xlane.f32.xlu0 %v2053
        %v2055 = vpop.xlane.xlu0 %2054
        %v2056 = vsel %vm1202, %v2019, 0.0
        %2057 = vadd.xlane.f32.xlu0 %v2056
        %v2058 = vpop.xlane.xlu0 %2057
        %v2059 = vsel %vm1202, %v2021, 0.0
        %2060 = vadd.xlane.f32.xlu0 %v2059
        %v2061 = vpop.xlane.xlu0 %2060
        %v2062 = vsel %vm1202, %v2023, 0.0
        %2063 = vadd.xlane.f32.xlu0 %v2062
        %v2064 = vpop.xlane.xlu0 %2063
        %v2065 = vsel %vm1202, %v2025, 0.0
        %2066 = vadd.xlane.f32.xlu0 %v2065
        %v2067 = vpop.xlane.xlu0 %2066
        %v2068 = vsel %vm1202, %v2027, 0.0
        %2069 = vadd.xlane.f32.xlu0 %v2068
        %v2070 = vpop.xlane.xlu0 %2069
        %v2071 = vsel %vm1202, %v2029, 0.0
        %2072 = vadd.xlane.f32.xlu0 %v2071
        %v2073 = vpop.xlane.xlu0 %2072
        %v2074 = vsel %vm1202, %v2031, 0.0
        %2075 = vadd.xlane.f32.xlu0 %v2074
        %v2076 = vpop.xlane.xlu0 %2075
        %v2077 = vsel %vm1202, %v2033, 0.0
        %2078 = vadd.xlane.f32.xlu0 %v2077
        %v2079 = vpop.xlane.xlu0 %2078
        %v2080 = vsel %vm1202, %v2035, 0.0
        %2081 = vadd.xlane.f32.xlu0 %v2080
        %v2082 = vpop.xlane.xlu0 %2081
        %v2083 = vsel %vm1202, %v2037, 0.0
        %2084 = vadd.xlane.f32.xlu0 %v2083
        %v2085 = vpop.xlane.xlu0 %2084
        %v2086 = vrcp.pop %v2040
        %v2087 = vrcp.pop %v2043
        %v2088 = vrcp.pop %v2046
        %v2089 = vrcp.pop %v2049
        %v2090 = vrcp.pop %v2052
        %v2091 = vrcp.pop %v2055
        %v2092 = vrcp.pop %v2058
        %v2093 = vrcp.pop %v2061
        %v2094 = vrcp.pop %v2064
        %v2095 = vrcp.pop %v2067
        %v2096 = vrcp.pop %v2070
        %v2097 = vrcp.pop %v2073
        %v2098 = vrcp.pop %v2076
        %v2099 = vrcp.pop %v2079
        %v2100 = vrcp.pop %v2082
        %v2101 = vrcp.pop %v2085
        %v2102 = vmul.f32 %v2007, %v2086
        %v2103 = vmul.f32 %v2009, %v2087
        %v2104 = vmul.f32 %v2011, %v2088
        %v2105 = vmul.f32 %v2013, %v2089
        %v2106 = vmul.f32 %v2015, %v2090
        %v2107 = vmul.f32 %v2017, %v2091
        %v2108 = vmul.f32 %v2019, %v2092
        %v2109 = vmul.f32 %v2021, %v2093
        %v2110 = vmul.f32 %v2023, %v2094
        %v2111 = vmul.f32 %v2025, %v2095
        %v2112 = vmul.f32 %v2027, %v2096
        %v2113 = vmul.f32 %v2029, %v2097
        %v2114 = vmul.f32 %v2031, %v2098
        %v2115 = vmul.f32 %v2033, %v2099
        %v2116 = vmul.f32 %v2035, %v2100
        %v2117 = vmul.f32 %v2037, %v2101
        %v2118 = vpack.c.bf16 %v2102, %v2102
        %v2119 = vpack.c.bf16 %v2103, %v2103
        %v2120 = vpack.c.bf16 %v2104, %v2104
        %v2121 = vpack.c.bf16 %v2105, %v2105
        %v2122 = vpack.c.bf16 %v2106, %v2106
        %v2123 = vpack.c.bf16 %v2107, %v2107
        %v2124 = vpack.c.bf16 %v2108, %v2108
        %v2125 = vpack.c.bf16 %v2109, %v2109
        %v2126 = vpack.c.bf16 %v2110, %v2110
        %v2127 = vpack.c.bf16 %v2111, %v2111
        %v2128 = vpack.c.bf16 %v2112, %v2112
        %v2129 = vpack.c.bf16 %v2113, %v2113
        %v2130 = vpack.c.bf16 %v2114, %v2114
        %v2131 = vpack.c.bf16 %v2115, %v2115
        %v2132 = vpack.c.bf16 %v2116, %v2116
        %v2133 = vpack.c.bf16 %v2117, %v2117
        %v2135 = vsel %vm1202, %v2118, 0
        %2137 = vmatprep.subr.bf16.mxu0 0
        %2138 = vmatpush1.bf16.msra.mxu0 %v1169
        %2139 = vmatprep.subr.bf16.mxu0 0
        %2140 = vmatpush1.bf16.msra.mxu0 %v1170
        %2141 = vmatprep.subr.bf16.mxu0 0
        %2142 = vmatpush1.bf16.msra.mxu0 0
        %2143 = vmatprep.subr.bf16.mxu0 0
        %2144 = vmatpush1.bf16.msra.mxu0 0
        %2145 = vmatprep.subr.bf16.mxu0 0
        %2146 = vmatpush1.bf16.msra.mxu0 0
        %2147 = vmatprep.subr.bf16.mxu0 0
        %2148 = vmatpush1.bf16.msra.mxu0 0
        %2149 = vmatprep.subr.bf16.mxu0 0
        %2150 = vmatpush1.bf16.msra.mxu0 0
        %2151 = vmatprep.subr.bf16.mxu0 0
        %2152 = vmatpush1.bf16.msra.mxu0 0
        %2153 = vmatprep.subr.bf16.mxu0 0
        %2154 = vmatpush1.bf16.msra.mxu0 0
        %2155 = vmatprep.subr.bf16.mxu0 0
        %2156 = vmatpush1.bf16.msra.mxu0 0
        %2157 = vmatprep.subr.bf16.mxu0 0
        %2158 = vmatpush1.bf16.msra.mxu0 0
        %2159 = vmatprep.subr.bf16.mxu0 0
        %2160 = vmatpush1.bf16.msra.mxu0 0
        %2161 = vmatprep.subr.bf16.mxu0 0
        %2162 = vmatpush1.bf16.msra.mxu0 0
        %2163 = vmatprep.subr.bf16.mxu0 0
        %2164 = vmatpush1.bf16.msra.mxu0 0
        %2165 = vmatprep.subr.bf16.mxu0 0
        %2166 = vmatpush1.bf16.msra.mxu0 0
        %2167 = vmatprep.subr.bf16.mxu0 0
        %2168 = vmatpush1.bf16.msra.mxu0 0
        %2169 = vmatprep.mubr.bf16.mxu0 0
        %2170 = vmatmul.mubr.bf16.gmra.mrb[0].mxu0 %v2135
        %v2171 = vpop.f32.mrb[0].mxu0
        %v2172 = vadd.f32 0.0, %v2171
        %v2173 = vpop.f32.mrb[0].mxu0
        %v2174 = vpop.f32.mrb[0].mxu0
        %v2175 = vpop.f32.mrb[0].mxu0
        %2176 = vdwg.mxu0
        %v2178 = vsel %vm1202, %v2119, 0
        %2180 = vmatprep.subr.bf16.mxu0 0
        %2181 = vmatpush1.bf16.msra.mxu0 %v1171
        %2182 = vmatprep.subr.bf16.mxu0 0
        %2183 = vmatpush1.bf16.msra.mxu0 %v1172
        %2184 = vmatprep.subr.bf16.mxu0 0
        %2185 = vmatpush1.bf16.msra.mxu0 0
        %2186 = vmatprep.subr.bf16.mxu0 0
        %2187 = vmatpush1.bf16.msra.mxu0 0
        %2188 = vmatprep.subr.bf16.mxu0 0
        %2189 = vmatpush1.bf16.msra.mxu0 0
        %2190 = vmatprep.subr.bf16.mxu0 0
        %2191 = vmatpush1.bf16.msra.mxu0 0
        %2192 = vmatprep.subr.bf16.mxu0 0
        %2193 = vmatpush1.bf16.msra.mxu0 0
        %2194 = vmatprep.subr.bf16.mxu0 0
        %2195 = vmatpush1.bf16.msra.mxu0 0
        %2196 = vmatprep.subr.bf16.mxu0 0
        %2197 = vmatpush1.bf16.msra.mxu0 0
        %2198 = vmatprep.subr.bf16.mxu0 0
        %2199 = vmatpush1.bf16.msra.mxu0 0
        %2200 = vmatprep.subr.bf16.mxu0 0
        %2201 = vmatpush1.bf16.msra.mxu0 0
        %2202 = vmatprep.subr.bf16.mxu0 0
        %2203 = vmatpush1.bf16.msra.mxu0 0
        %2204 = vmatprep.subr.bf16.mxu0 0
        %2205 = vmatpush1.bf16.msra.mxu0 0
        %2206 = vmatprep.subr.bf16.mxu0 0
        %2207 = vmatpush1.bf16.msra.mxu0 0
        %2208 = vmatprep.subr.bf16.mxu0 0
        %2209 = vmatpush1.bf16.msra.mxu0 0
        %2210 = vmatprep.subr.bf16.mxu0 0
        %2211 = vmatpush1.bf16.msra.mxu0 0
        %2212 = vmatprep.mubr.bf16.mxu0 0
        %2213 = vmatmul.mubr.bf16.gmra.mrb[0].mxu0 %v2178
        %v2214 = vpop.f32.mrb[0].mxu0
        %v2215 = vadd.f32 0.0, %v2214
        %v2216 = vpop.f32.mrb[0].mxu0
        %v2217 = vpop.f32.mrb[0].mxu0
        %v2218 = vpop.f32.mrb[0].mxu0
        %2219 = vdwg.mxu0
        %v2221 = vsel %vm1202, %v2120, 0
        %2223 = vmatprep.subr.bf16.mxu0 0
        %2224 = vmatpush1.bf16.msra.mxu0 %v1173
        %2225 = vmatprep.subr.bf16.mxu0 0
        %2226 = vmatpush1.bf16.msra.mxu0 %v1174
        %2227 = vmatprep.subr.bf16.mxu0 0
        %2228 = vmatpush1.bf16.msra.mxu0 0
        %2229 = vmatprep.subr.bf16.mxu0 0
        %2230 = vmatpush1.bf16.msra.mxu0 0
        %2231 = vmatprep.subr.bf16.mxu0 0
        %2232 = vmatpush1.bf16.msra.mxu0 0
        %2233 = vmatprep.subr.bf16.mxu0 0
        %2234 = vmatpush1.bf16.msra.mxu0 0
        %2235 = vmatprep.subr.bf16.mxu0 0
        %2236 = vmatpush1.bf16.msra.mxu0 0
        %2237 = vmatprep.subr.bf16.mxu0 0
        %2238 = vmatpush1.bf16.msra.mxu0 0
        %2239 = vmatprep.subr.bf16.mxu0 0
        %2240 = vmatpush1.bf16.msra.mxu0 0
        %2241 = vmatprep.subr.bf16.mxu0 0
        %2242 = vmatpush1.bf16.msra.mxu0 0
        %2243 = vmatprep.subr.bf16.mxu0 0
        %2244 = vmatpush1.bf16.msra.mxu0 0
        %2245 = vmatprep.subr.bf16.mxu0 0
        %2246 = vmatpush1.bf16.msra.mxu0 0
        %2247 = vmatprep.subr.bf16.mxu0 0
        %2248 = vmatpush1.bf16.msra.mxu0 0
        %2249 = vmatprep.subr.bf16.mxu0 0
        %2250 = vmatpush1.bf16.msra.mxu0 0
        %2251 = vmatprep.subr.bf16.mxu0 0
        %2252 = vmatpush1.bf16.msra.mxu0 0
        %2253 = vmatprep.subr.bf16.mxu0 0
        %2254 = vmatpush1.bf16.msra.mxu0 0
        %2255 = vmatprep.mubr.bf16.mxu0 0
        %2256 = vmatmul.mubr.bf16.gmra.mrb[0].mxu0 %v2221
        %v2257 = vpop.f32.mrb[0].mxu0
        %v2258 = vadd.f32 0.0, %v2257
        %v2259 = vpop.f32.mrb[0].mxu0
        %v2260 = vpop.f32.mrb[0].mxu0
        %v2261 = vpop.f32.mrb[0].mxu0
        %2262 = vdwg.mxu0
        %v2264 = vsel %vm1202, %v2121, 0
        %2266 = vmatprep.subr.bf16.mxu0 0
        %2267 = vmatpush1.bf16.msra.mxu0 %v1175
        %2268 = vmatprep.subr.bf16.mxu0 0
        %2269 = vmatpush1.bf16.msra.mxu0 %v1176
        %2270 = vmatprep.subr.bf16.mxu0 0
        %2271 = vmatpush1.bf16.msra.mxu0 0
        %2272 = vmatprep.subr.bf16.mxu0 0
        %2273 = vmatpush1.bf16.msra.mxu0 0
        %2274 = vmatprep.subr.bf16.mxu0 0
        %2275 = vmatpush1.bf16.msra.mxu0 0
        %2276 = vmatprep.subr.bf16.mxu0 0
        %2277 = vmatpush1.bf16.msra.mxu0 0
        %2278 = vmatprep.subr.bf16.mxu0 0
        %2279 = vmatpush1.bf16.msra.mxu0 0
        %2280 = vmatprep.subr.bf16.mxu0 0
        %2281 = vmatpush1.bf16.msra.mxu0 0
        %2282 = vmatprep.subr.bf16.mxu0 0
        %2283 = vmatpush1.bf16.msra.mxu0 0
        %2284 = vmatprep.subr.bf16.mxu0 0
        %2285 = vmatpush1.bf16.msra.mxu0 0
        %2286 = vmatprep.subr.bf16.mxu0 0
        %2287 = vmatpush1.bf16.msra.mxu0 0
        %2288 = vmatprep.subr.bf16.mxu0 0
        %2289 = vmatpush1.bf16.msra.mxu0 0
        %2290 = vmatprep.subr.bf16.mxu0 0
        %2291 = vmatpush1.bf16.msra.mxu0 0
        %2292 = vmatprep.subr.bf16.mxu0 0
        %2293 = vmatpush1.bf16.msra.mxu0 0
        %2294 = vmatprep.subr.bf16.mxu0 0
        %2295 = vmatpush1.bf16.msra.mxu0 0
        %2296 = vmatprep.subr.bf16.mxu0 0
        %2297 = vmatpush1.bf16.msra.mxu0 0
        %2298 = vmatprep.mubr.bf16.mxu0 0
        %2299 = vmatmul.mubr.bf16.gmra.mrb[0].mxu0 %v2264
        %v2300 = vpop.f32.mrb[0].mxu0
        %v2301 = vadd.f32 0.0, %v2300
        %v2302 = vpop.f32.mrb[0].mxu0
        %v2303 = vpop.f32.mrb[0].mxu0
        %v2304 = vpop.f32.mrb[0].mxu0
        %2305 = vdwg.mxu0
        %v2307 = vsel %vm1202, %v2122, 0
        %2309 = vmatprep.subr.bf16.mxu0 0
        %2310 = vmatpush1.bf16.msra.mxu0 %v1177
        %2311 = vmatprep.subr.bf16.mxu0 0
        %2312 = vmatpush1.bf16.msra.mxu0 %v1178
        %2313 = vmatprep.subr.bf16.mxu0 0
        %2314 = vmatpush1.bf16.msra.mxu0 0
        %2315 = vmatprep.subr.bf16.mxu0 0
        %2316 = vmatpush1.bf16.msra.mxu0 0
        %2317 = vmatprep.subr.bf16.mxu0 0
        %2318 = vmatpush1.bf16.msra.mxu0 0
        %2319 = vmatprep.subr.bf16.mxu0 0
        %2320 = vmatpush1.bf16.msra.mxu0 0
        %2321 = vmatprep.subr.bf16.mxu0 0
        %2322 = vmatpush1.bf16.msra.mxu0 0
        %2323 = vmatprep.subr.bf16.mxu0 0
        %2324 = vmatpush1.bf16.msra.mxu0 0
        %2325 = vmatprep.subr.bf16.mxu0 0
        %2326 = vmatpush1.bf16.msra.mxu0 0
        %2327 = vmatprep.subr.bf16.mxu0 0
        %2328 = vmatpush1.bf16.msra.mxu0 0
        %2329 = vmatprep.subr.bf16.mxu0 0
        %2330 = vmatpush1.bf16.msra.mxu0 0
        %2331 = vmatprep.subr.bf16.mxu0 0
        %2332 = vmatpush1.bf16.msra.mxu0 0
        %2333 = vmatprep.subr.bf16.mxu0 0
        %2334 = vmatpush1.bf16.msra.mxu0 0
        %2335 = vmatprep.subr.bf16.mxu0 0
        %2336 = vmatpush1.bf16.msra.mxu0 0
        %2337 = vmatprep.subr.bf16.mxu0 0
        %2338 = vmatpush1.bf16.msra.mxu0 0
        %2339 = vmatprep.subr.bf16.mxu0 0
        %2340 = vmatpush1.bf16.msra.mxu0 0
        %2341 = vmatprep.mubr.bf16.mxu0 0
        %2342 = vmatmul.mubr.bf16.gmra.mrb[0].mxu0 %v2307
        %v2343 = vpop.f32.mrb[0].mxu0
        %v2344 = vadd.f32 0.0, %v2343
        %v2345 = vpop.f32.mrb[0].mxu0
        %v2346 = vpop.f32.mrb[0].mxu0
        %v2347 = vpop.f32.mrb[0].mxu0
        %2348 = vdwg.mxu0
        %v2350 = vsel %vm1202, %v2123, 0
        %2352 = vmatprep.subr.bf16.mxu0 0
        %2353 = vmatpush1.bf16.msra.mxu0 %v1179
        %2354 = vmatprep.subr.bf16.mxu0 0
        %2355 = vmatpush1.bf16.msra.mxu0 %v1180
        %2356 = vmatprep.subr.bf16.mxu0 0
        %2357 = vmatpush1.bf16.msra.mxu0 0
        %2358 = vmatprep.subr.bf16.mxu0 0
        %2359 = vmatpush1.bf16.msra.mxu0 0
        %2360 = vmatprep.subr.bf16.mxu0 0
        %2361 = vmatpush1.bf16.msra.mxu0 0
        %2362 = vmatprep.subr.bf16.mxu0 0
        %2363 = vmatpush1.bf16.msra.mxu0 0
        %2364 = vmatprep.subr.bf16.mxu0 0
        %2365 = vmatpush1.bf16.msra.mxu0 0
        %2366 = vmatprep.subr.bf16.mxu0 0
        %2367 = vmatpush1.bf16.msra.mxu0 0
        %2368 = vmatprep.subr.bf16.mxu0 0
        %2369 = vmatpush1.bf16.msra.mxu0 0
        %2370 = vmatprep.subr.bf16.mxu0 0
        %2371 = vmatpush1.bf16.msra.mxu0 0
        %2372 = vmatprep.subr.bf16.mxu0 0
        %2373 = vmatpush1.bf16.msra.mxu0 0
        %2374 = vmatprep.subr.bf16.mxu0 0
        %2375 = vmatpush1.bf16.msra.mxu0 0
        %2376 = vmatprep.subr.bf16.mxu0 0
        %2377 = vmatpush1.bf16.msra.mxu0 0
        %2378 = vmatprep.subr.bf16.mxu0 0
        %2379 = vmatpush1.bf16.msra.mxu0 0
        %2380 = vmatprep.subr.bf16.mxu0 0
        %2381 = vmatpush1.bf16.msra.mxu0 0
        %2382 = vmatprep.subr.bf16.mxu0 0
        %2383 = vmatpush1.bf16.msra.mxu0 0
        %2384 = vmatprep.mubr.bf16.mxu0 0
        %2385 = vmatmul.mubr.bf16.gmra.mrb[0].mxu0 %v2350
        %v2386 = vpop.f32.mrb[0].mxu0
        %v2387 = vadd.f32 0.0, %v2386
        %v2388 = vpop.f32.mrb[0].mxu0
        %v2389 = vpop.f32.mrb[0].mxu0
        %v2390 = vpop.f32.mrb[0].mxu0
        %2391 = vdwg.mxu0
        %v2393 = vsel %vm1202, %v2124, 0
        %2395 = vmatprep.subr.bf16.mxu0 0
        %2396 = vmatpush1.bf16.msra.mxu0 %v1181
        %2397 = vmatprep.subr.bf16.mxu0 0
        %2398 = vmatpush1.bf16.msra.mxu0 %v1182
        %2399 = vmatprep.subr.bf16.mxu0 0
        %2400 = vmatpush1.bf16.msra.mxu0 0
        %2401 = vmatprep.subr.bf16.mxu0 0
        %2402 = vmatpush1.bf16.msra.mxu0 0
        %2403 = vmatprep.subr.bf16.mxu0 0
        %2404 = vmatpush1.bf16.msra.mxu0 0
        %2405 = vmatprep.subr.bf16.mxu0 0
        %2406 = vmatpush1.bf16.msra.mxu0 0
        %2407 = vmatprep.subr.bf16.mxu0 0
        %2408 = vmatpush1.bf16.msra.mxu0 0
        %2409 = vmatprep.subr.bf16.mxu0 0
        %2410 = vmatpush1.bf16.msra.mxu0 0
        %2411 = vmatprep.subr.bf16.mxu0 0
        %2412 = vmatpush1.bf16.msra.mxu0 0
        %2413 = vmatprep.subr.bf16.mxu0 0
        %2414 = vmatpush1.bf16.msra.mxu0 0
        %2415 = vmatprep.subr.bf16.mxu0 0
        %2416 = vmatpush1.bf16.msra.mxu0 0
        %2417 = vmatprep.subr.bf16.mxu0 0
        %2418 = vmatpush1.bf16.msra.mxu0 0
        %2419 = vmatprep.subr.bf16.mxu0 0
        %2420 = vmatpush1.bf16.msra.mxu0 0
        %2421 = vmatprep.subr.bf16.mxu0 0
        %2422 = vmatpush1.bf16.msra.mxu0 0
        %2423 = vmatprep.subr.bf16.mxu0 0
        %2424 = vmatpush1.bf16.msra.mxu0 0
        %2425 = vmatprep.subr.bf16.mxu0 0
        %2426 = vmatpush1.bf16.msra.mxu0 0
        %2427 = vmatprep.mubr.bf16.mxu0 0
        %2428 = vmatmul.mubr.bf16.gmra.mrb[0].mxu0 %v2393
        %v2429 = vpop.f32.mrb[0].mxu0
        %v2430 = vadd.f32 0.0, %v2429
        %v2431 = vpop.f32.mrb[0].mxu0
        %v2432 = vpop.f32.mrb[0].mxu0
        %v2433 = vpop.f32.mrb[0].mxu0
        %2434 = vdwg.mxu0
        %v2436 = vsel %vm1202, %v2125, 0
        %2438 = vmatprep.subr.bf16.mxu0 0
        %2439 = vmatpush1.bf16.msra.mxu0 %v1183
        %2440 = vmatprep.subr.bf16.mxu0 0
        %2441 = vmatpush1.bf16.msra.mxu0 %v1184
        %2442 = vmatprep.subr.bf16.mxu0 0
        %2443 = vmatpush1.bf16.msra.mxu0 0
        %2444 = vmatprep.subr.bf16.mxu0 0
        %2445 = vmatpush1.bf16.msra.mxu0 0
        %2446 = vmatprep.subr.bf16.mxu0 0
        %2447 = vmatpush1.bf16.msra.mxu0 0
        %2448 = vmatprep.subr.bf16.mxu0 0
        %2449 = vmatpush1.bf16.msra.mxu0 0
        %2450 = vmatprep.subr.bf16.mxu0 0
        %2451 = vmatpush1.bf16.msra.mxu0 0
        %2452 = vmatprep.subr.bf16.mxu0 0
        %2453 = vmatpush1.bf16.msra.mxu0 0
        %2454 = vmatprep.subr.bf16.mxu0 0
        %2455 = vmatpush1.bf16.msra.mxu0 0
        %2456 = vmatprep.subr.bf16.mxu0 0
        %2457 = vmatpush1.bf16.msra.mxu0 0
        %2458 = vmatprep.subr.bf16.mxu0 0
        %2459 = vmatpush1.bf16.msra.mxu0 0
        %2460 = vmatprep.subr.bf16.mxu0 0
        %2461 = vmatpush1.bf16.msra.mxu0 0
        %2462 = vmatprep.subr.bf16.mxu0 0
        %2463 = vmatpush1.bf16.msra.mxu0 0
        %2464 = vmatprep.subr.bf16.mxu0 0
        %2465 = vmatpush1.bf16.msra.mxu0 0
        %2466 = vmatprep.subr.bf16.mxu0 0
        %2467 = vmatpush1.bf16.msra.mxu0 0
        %2468 = vmatprep.subr.bf16.mxu0 0
        %2469 = vmatpush1.bf16.msra.mxu0 0
        %2470 = vmatprep.mubr.bf16.mxu0 0
        %2471 = vmatmul.mubr.bf16.gmra.mrb[0].mxu0 %v2436
        %v2472 = vpop.f32.mrb[0].mxu0
        %v2473 = vadd.f32 0.0, %v2472
        %v2474 = vpop.f32.mrb[0].mxu0
        %v2475 = vpop.f32.mrb[0].mxu0
        %v2476 = vpop.f32.mrb[0].mxu0
        %2477 = vdwg.mxu0
        %v2479 = vsel %vm1202, %v2126, 0
        %2481 = vmatprep.subr.bf16.mxu0 0
        %2482 = vmatpush1.bf16.msra.mxu0 %v1185
        %2483 = vmatprep.subr.bf16.mxu0 0
        %2484 = vmatpush1.bf16.msra.mxu0 %v1186
        %2485 = vmatprep.subr.bf16.mxu0 0
        %2486 = vmatpush1.bf16.msra.mxu0 0
        %2487 = vmatprep.subr.bf16.mxu0 0
        %2488 = vmatpush1.bf16.msra.mxu0 0
        %2489 = vmatprep.subr.bf16.mxu0 0
        %2490 = vmatpush1.bf16.msra.mxu0 0
        %2491 = vmatprep.subr.bf16.mxu0 0
        %2492 = vmatpush1.bf16.msra.mxu0 0
        %2493 = vmatprep.subr.bf16.mxu0 0
        %2494 = vmatpush1.bf16.msra.mxu0 0
        %2495 = vmatprep.subr.bf16.mxu0 0
        %2496 = vmatpush1.bf16.msra.mxu0 0
        %2497 = vmatprep.subr.bf16.mxu0 0
        %2498 = vmatpush1.bf16.msra.mxu0 0
        %2499 = vmatprep.subr.bf16.mxu0 0
        %2500 = vmatpush1.bf16.msra.mxu0 0
        %2501 = vmatprep.subr.bf16.mxu0 0
        %2502 = vmatpush1.bf16.msra.mxu0 0
        %2503 = vmatprep.subr.bf16.mxu0 0
        %2504 = vmatpush1.bf16.msra.mxu0 0
        %2505 = vmatprep.subr.bf16.mxu0 0
        %2506 = vmatpush1.bf16.msra.mxu0 0
        %2507 = vmatprep.subr.bf16.mxu0 0
        %2508 = vmatpush1.bf16.msra.mxu0 0
        %2509 = vmatprep.subr.bf16.mxu0 0
        %2510 = vmatpush1.bf16.msra.mxu0 0
        %2511 = vmatprep.subr.bf16.mxu0 0
        %2512 = vmatpush1.bf16.msra.mxu0 0
        %2513 = vmatprep.mubr.bf16.mxu0 0
        %2514 = vmatmul.mubr.bf16.gmra.mrb[0].mxu0 %v2479
        %v2515 = vpop.f32.mrb[0].mxu0
        %v2516 = vadd.f32 0.0, %v2515
        %v2517 = vpop.f32.mrb[0].mxu0
        %v2518 = vpop.f32.mrb[0].mxu0
        %v2519 = vpop.f32.mrb[0].mxu0
        %2520 = vdwg.mxu0
        %v2522 = vsel %vm1202, %v2127, 0
        %2524 = vmatprep.subr.bf16.mxu0 0
        %2525 = vmatpush1.bf16.msra.mxu0 %v1187
        %2526 = vmatprep.subr.bf16.mxu0 0
        %2527 = vmatpush1.bf16.msra.mxu0 %v1188
        %2528 = vmatprep.subr.bf16.mxu0 0
        %2529 = vmatpush1.bf16.msra.mxu0 0
        %2530 = vmatprep.subr.bf16.mxu0 0
        %2531 = vmatpush1.bf16.msra.mxu0 0
        %2532 = vmatprep.subr.bf16.mxu0 0
        %2533 = vmatpush1.bf16.msra.mxu0 0
        %2534 = vmatprep.subr.bf16.mxu0 0
        %2535 = vmatpush1.bf16.msra.mxu0 0
        %2536 = vmatprep.subr.bf16.mxu0 0
        %2537 = vmatpush1.bf16.msra.mxu0 0
        %2538 = vmatprep.subr.bf16.mxu0 0
        %2539 = vmatpush1.bf16.msra.mxu0 0
        %2540 = vmatprep.subr.bf16.mxu0 0
        %2541 = vmatpush1.bf16.msra.mxu0 0
        %2542 = vmatprep.subr.bf16.mxu0 0
        %2543 = vmatpush1.bf16.msra.mxu0 0
        %2544 = vmatprep.subr.bf16.mxu0 0
        %2545 = vmatpush1.bf16.msra.mxu0 0
        %2546 = vmatprep.subr.bf16.mxu0 0
        %2547 = vmatpush1.bf16.msra.mxu0 0
        %2548 = vmatprep.subr.bf16.mxu0 0
        %2549 = vmatpush1.bf16.msra.mxu0 0
        %2550 = vmatprep.subr.bf16.mxu0 0
        %2551 = vmatpush1.bf16.msra.mxu0 0
        %2552 = vmatprep.subr.bf16.mxu0 0
        %2553 = vmatpush1.bf16.msra.mxu0 0
        %2554 = vmatprep.subr.bf16.mxu0 0
        %2555 = vmatpush1.bf16.msra.mxu0 0
        %2556 = vmatprep.mubr.bf16.mxu0 0
        %2557 = vmatmul.mubr.bf16.gmra.mrb[0].mxu0 %v2522
        %v2558 = vpop.f32.mrb[0].mxu0
        %v2559 = vadd.f32 0.0, %v2558
        %v2560 = vpop.f32.mrb[0].mxu0
        %v2561 = vpop.f32.mrb[0].mxu0
        %v2562 = vpop.f32.mrb[0].mxu0
        %2563 = vdwg.mxu0
        %v2565 = vsel %vm1202, %v2128, 0
        %2567 = vmatprep.subr.bf16.mxu0 0
        %2568 = vmatpush1.bf16.msra.mxu0 %v1189
        %2569 = vmatprep.subr.bf16.mxu0 0
        %2570 = vmatpush1.bf16.msra.mxu0 %v1190
        %2571 = vmatprep.subr.bf16.mxu0 0
        %2572 = vmatpush1.bf16.msra.mxu0 0
        %2573 = vmatprep.subr.bf16.mxu0 0
        %2574 = vmatpush1.bf16.msra.mxu0 0
        %2575 = vmatprep.subr.bf16.mxu0 0
        %2576 = vmatpush1.bf16.msra.mxu0 0
        %2577 = vmatprep.subr.bf16.mxu0 0
        %2578 = vmatpush1.bf16.msra.mxu0 0
        %2579 = vmatprep.subr.bf16.mxu0 0
        %2580 = vmatpush1.bf16.msra.mxu0 0
        %2581 = vmatprep.subr.bf16.mxu0 0
        %2582 = vmatpush1.bf16.msra.mxu0 0
        %2583 = vmatprep.subr.bf16.mxu0 0
        %2584 = vmatpush1.bf16.msra.mxu0 0
        %2585 = vmatprep.subr.bf16.mxu0 0
        %2586 = vmatpush1.bf16.msra.mxu0 0
        %2587 = vmatprep.subr.bf16.mxu0 0
        %2588 = vmatpush1.bf16.msra.mxu0 0
        %2589 = vmatprep.subr.bf16.mxu0 0
        %2590 = vmatpush1.bf16.msra.mxu0 0
        %2591 = vmatprep.subr.bf16.mxu0 0
        %2592 = vmatpush1.bf16.msra.mxu0 0
        %2593 = vmatprep.subr.bf16.mxu0 0
        %2594 = vmatpush1.bf16.msra.mxu0 0
        %2595 = vmatprep.subr.bf16.mxu0 0
        %2596 = vmatpush1.bf16.msra.mxu0 0
        %2597 = vmatprep.subr.bf16.mxu0 0
        %2598 = vmatpush1.bf16.msra.mxu0 0
        %2599 = vmatprep.mubr.bf16.mxu0 0
        %2600 = vmatmul.mubr.bf16.gmra.mrb[0].mxu0 %v2565
        %v2601 = vpop.f32.mrb[0].mxu0
        %v2602 = vadd.f32 0.0, %v2601
        %v2603 = vpop.f32.mrb[0].mxu0
        %v2604 = vpop.f32.mrb[0].mxu0
        %v2605 = vpop.f32.mrb[0].mxu0
        %2606 = vdwg.mxu0
        %v2608 = vsel %vm1202, %v2129, 0
        %2610 = vmatprep.subr.bf16.mxu0 0
        %2611 = vmatpush1.bf16.msra.mxu0 %v1191
        %2612 = vmatprep.subr.bf16.mxu0 0
        %2613 = vmatpush1.bf16.msra.mxu0 %v1192
        %2614 = vmatprep.subr.bf16.mxu0 0
        %2615 = vmatpush1.bf16.msra.mxu0 0
        %2616 = vmatprep.subr.bf16.mxu0 0
        %2617 = vmatpush1.bf16.msra.mxu0 0
        %2618 = vmatprep.subr.bf16.mxu0 0
        %2619 = vmatpush1.bf16.msra.mxu0 0
        %2620 = vmatprep.subr.bf16.mxu0 0
        %2621 = vmatpush1.bf16.msra.mxu0 0
        %2622 = vmatprep.subr.bf16.mxu0 0
        %2623 = vmatpush1.bf16.msra.mxu0 0
        %2624 = vmatprep.subr.bf16.mxu0 0
        %2625 = vmatpush1.bf16.msra.mxu0 0
        %2626 = vmatprep.subr.bf16.mxu0 0
        %2627 = vmatpush1.bf16.msra.mxu0 0
        %2628 = vmatprep.subr.bf16.mxu0 0
        %2629 = vmatpush1.bf16.msra.mxu0 0
        %2630 = vmatprep.subr.bf16.mxu0 0
        %2631 = vmatpush1.bf16.msra.mxu0 0
        %2632 = vmatprep.subr.bf16.mxu0 0
        %2633 = vmatpush1.bf16.msra.mxu0 0
        %2634 = vmatprep.subr.bf16.mxu0 0
        %2635 = vmatpush1.bf16.msra.mxu0 0
        %2636 = vmatprep.subr.bf16.mxu0 0
        %2637 = vmatpush1.bf16.msra.mxu0 0
        %2638 = vmatprep.subr.bf16.mxu0 0
        %2639 = vmatpush1.bf16.msra.mxu0 0
        %2640 = vmatprep.subr.bf16.mxu0 0
        %2641 = vmatpush1.bf16.msra.mxu0 0
        %2642 = vmatprep.mubr.bf16.mxu0 0
        %2643 = vmatmul.mubr.bf16.gmra.mrb[0].mxu0 %v2608
        %v2644 = vpop.f32.mrb[0].mxu0
        %v2645 = vadd.f32 0.0, %v2644
        %v2646 = vpop.f32.mrb[0].mxu0
        %v2647 = vpop.f32.mrb[0].mxu0
        %v2648 = vpop.f32.mrb[0].mxu0
        %2649 = vdwg.mxu0
        %v2651 = vsel %vm1202, %v2130, 0
        %2653 = vmatprep.subr.bf16.mxu0 0
        %2654 = vmatpush1.bf16.msra.mxu0 %v1193
        %2655 = vmatprep.subr.bf16.mxu0 0
        %2656 = vmatpush1.bf16.msra.mxu0 %v1194
        %2657 = vmatprep.subr.bf16.mxu0 0
        %2658 = vmatpush1.bf16.msra.mxu0 0
        %2659 = vmatprep.subr.bf16.mxu0 0
        %2660 = vmatpush1.bf16.msra.mxu0 0
        %2661 = vmatprep.subr.bf16.mxu0 0
        %2662 = vmatpush1.bf16.msra.mxu0 0
        %2663 = vmatprep.subr.bf16.mxu0 0
        %2664 = vmatpush1.bf16.msra.mxu0 0
        %2665 = vmatprep.subr.bf16.mxu0 0
        %2666 = vmatpush1.bf16.msra.mxu0 0
        %2667 = vmatprep.subr.bf16.mxu0 0
        %2668 = vmatpush1.bf16.msra.mxu0 0
        %2669 = vmatprep.subr.bf16.mxu0 0
        %2670 = vmatpush1.bf16.msra.mxu0 0
        %2671 = vmatprep.subr.bf16.mxu0 0
        %2672 = vmatpush1.bf16.msra.mxu0 0
        %2673 = vmatprep.subr.bf16.mxu0 0
        %2674 = vmatpush1.bf16.msra.mxu0 0
        %2675 = vmatprep.subr.bf16.mxu0 0
        %2676 = vmatpush1.bf16.msra.mxu0 0
        %2677 = vmatprep.subr.bf16.mxu0 0
        %2678 = vmatpush1.bf16.msra.mxu0 0
        %2679 = vmatprep.subr.bf16.mxu0 0
        %2680 = vmatpush1.bf16.msra.mxu0 0
        %2681 = vmatprep.subr.bf16.mxu0 0
        %2682 = vmatpush1.bf16.msra.mxu0 0
        %2683 = vmatprep.subr.bf16.mxu0 0
        %2684 = vmatpush1.bf16.msra.mxu0 0
        %2685 = vmatprep.mubr.bf16.mxu0 0
        %2686 = vmatmul.mubr.bf16.gmra.mrb[0].mxu0 %v2651
        %v2687 = vpop.f32.mrb[0].mxu0
        %v2688 = vadd.f32 0.0, %v2687
        %v2689 = vpop.f32.mrb[0].mxu0
        %v2690 = vpop.f32.mrb[0].mxu0
        %v2691 = vpop.f32.mrb[0].mxu0
        %2692 = vdwg.mxu0
        %v2694 = vsel %vm1202, %v2131, 0
        %2696 = vmatprep.subr.bf16.mxu0 0
        %2697 = vmatpush1.bf16.msra.mxu0 %v1195
        %2698 = vmatprep.subr.bf16.mxu0 0
        %2699 = vmatpush1.bf16.msra.mxu0 %v1196
        %2700 = vmatprep.subr.bf16.mxu0 0
        %2701 = vmatpush1.bf16.msra.mxu0 0
        %2702 = vmatprep.subr.bf16.mxu0 0
        %2703 = vmatpush1.bf16.msra.mxu0 0
        %2704 = vmatprep.subr.bf16.mxu0 0
        %2705 = vmatpush1.bf16.msra.mxu0 0
        %2706 = vmatprep.subr.bf16.mxu0 0
        %2707 = vmatpush1.bf16.msra.mxu0 0
        %2708 = vmatprep.subr.bf16.mxu0 0
        %2709 = vmatpush1.bf16.msra.mxu0 0
        %2710 = vmatprep.subr.bf16.mxu0 0
        %2711 = vmatpush1.bf16.msra.mxu0 0
        %2712 = vmatprep.subr.bf16.mxu0 0
        %2713 = vmatpush1.bf16.msra.mxu0 0
        %2714 = vmatprep.subr.bf16.mxu0 0
        %2715 = vmatpush1.bf16.msra.mxu0 0
        %2716 = vmatprep.subr.bf16.mxu0 0
        %2717 = vmatpush1.bf16.msra.mxu0 0
        %2718 = vmatprep.subr.bf16.mxu0 0
        %2719 = vmatpush1.bf16.msra.mxu0 0
        %2720 = vmatprep.subr.bf16.mxu0 0
        %2721 = vmatpush1.bf16.msra.mxu0 0
        %2722 = vmatprep.subr.bf16.mxu0 0
        %2723 = vmatpush1.bf16.msra.mxu0 0
        %2724 = vmatprep.subr.bf16.mxu0 0
        %2725 = vmatpush1.bf16.msra.mxu0 0
        %2726 = vmatprep.subr.bf16.mxu0 0
        %2727 = vmatpush1.bf16.msra.mxu0 0
        %2728 = vmatprep.mubr.bf16.mxu0 0
        %2729 = vmatmul.mubr.bf16.gmra.mrb[0].mxu0 %v2694
        %v2730 = vpop.f32.mrb[0].mxu0
        %v2731 = vadd.f32 0.0, %v2730
        %v2732 = vpop.f32.mrb[0].mxu0
        %v2733 = vpop.f32.mrb[0].mxu0
        %v2734 = vpop.f32.mrb[0].mxu0
        %2735 = vdwg.mxu0
        %v2737 = vsel %vm1202, %v2132, 0
        %2739 = vmatprep.subr.bf16.mxu0 0
        %2740 = vmatpush1.bf16.msra.mxu0 %v1197
        %2741 = vmatprep.subr.bf16.mxu0 0
        %2742 = vmatpush1.bf16.msra.mxu0 %v1198
        %2743 = vmatprep.subr.bf16.mxu0 0
        %2744 = vmatpush1.bf16.msra.mxu0 0
        %2745 = vmatprep.subr.bf16.mxu0 0
        %2746 = vmatpush1.bf16.msra.mxu0 0
        %2747 = vmatprep.subr.bf16.mxu0 0
        %2748 = vmatpush1.bf16.msra.mxu0 0
        %2749 = vmatprep.subr.bf16.mxu0 0
        %2750 = vmatpush1.bf16.msra.mxu0 0
        %2751 = vmatprep.subr.bf16.mxu0 0
        %2752 = vmatpush1.bf16.msra.mxu0 0
        %2753 = vmatprep.subr.bf16.mxu0 0
        %2754 = vmatpush1.bf16.msra.mxu0 0
        %2755 = vmatprep.subr.bf16.mxu0 0
        %2756 = vmatpush1.bf16.msra.mxu0 0
        %2757 = vmatprep.subr.bf16.mxu0 0
        %2758 = vmatpush1.bf16.msra.mxu0 0
        %2759 = vmatprep.subr.bf16.mxu0 0
        %2760 = vmatpush1.bf16.msra.mxu0 0
        %2761 = vmatprep.subr.bf16.mxu0 0
        %2762 = vmatpush1.bf16.msra.mxu0 0
        %2763 = vmatprep.subr.bf16.mxu0 0
        %2764 = vmatpush1.bf16.msra.mxu0 0
        %2765 = vmatprep.subr.bf16.mxu0 0
        %2766 = vmatpush1.bf16.msra.mxu0 0
        %2767 = vmatprep.subr.bf16.mxu0 0
        %2768 = vmatpush1.bf16.msra.mxu0 0
        %2769 = vmatprep.subr.bf16.mxu0 0
        %2770 = vmatpush1.bf16.msra.mxu0 0
        %2771 = vmatprep.mubr.bf16.mxu0 0
        %2772 = vmatmul.mubr.bf16.gmra.mrb[0].mxu0 %v2737
        %v2773 = vpop.f32.mrb[0].mxu0
        %v2774 = vadd.f32 0.0, %v2773
        %v2775 = vpop.f32.mrb[0].mxu0
        %v2776 = vpop.f32.mrb[0].mxu0
        %v2777 = vpop.f32.mrb[0].mxu0
        %2778 = vdwg.mxu0
        %v2780 = vsel %vm1202, %v2133, 0
        %2782 = vmatprep.subr.bf16.mxu0 0
        %2783 = vmatpush1.bf16.msra.mxu0 %v1199
        %2784 = vmatprep.subr.bf16.mxu0 0
        %2785 = vmatpush1.bf16.msra.mxu0 %v1200
        %2786 = vmatprep.subr.bf16.mxu0 0
        %2787 = vmatpush1.bf16.msra.mxu0 0
        %2788 = vmatprep.subr.bf16.mxu0 0
        %2789 = vmatpush1.bf16.msra.mxu0 0
        %2790 = vmatprep.subr.bf16.mxu0 0
        %2791 = vmatpush1.bf16.msra.mxu0 0
        %2792 = vmatprep.subr.bf16.mxu0 0
        %2793 = vmatpush1.bf16.msra.mxu0 0
        %2794 = vmatprep.subr.bf16.mxu0 0
        %2795 = vmatpush1.bf16.msra.mxu0 0
        %2796 = vmatprep.subr.bf16.mxu0 0
        %2797 = vmatpush1.bf16.msra.mxu0 0
        %2798 = vmatprep.subr.bf16.mxu0 0
        %2799 = vmatpush1.bf16.msra.mxu0 0
        %2800 = vmatprep.subr.bf16.mxu0 0
        %2801 = vmatpush1.bf16.msra.mxu0 0
        %2802 = vmatprep.subr.bf16.mxu0 0
        %2803 = vmatpush1.bf16.msra.mxu0 0
        %2804 = vmatprep.subr.bf16.mxu0 0
        %2805 = vmatpush1.bf16.msra.mxu0 0
        %2806 = vmatprep.subr.bf16.mxu0 0
        %2807 = vmatpush1.bf16.msra.mxu0 0
        %2808 = vmatprep.subr.bf16.mxu0 0
        %2809 = vmatpush1.bf16.msra.mxu0 0
        %2810 = vmatprep.subr.bf16.mxu0 0
        %2811 = vmatpush1.bf16.msra.mxu0 0
        %2812 = vmatprep.subr.bf16.mxu0 0
        %2813 = vmatpush1.bf16.msra.mxu0 0
        %2814 = vmatprep.mubr.bf16.mxu0 0
        %2815 = vmatmul.mubr.bf16.gmra.mrb[0].mxu0 %v2780
        %v2816 = vpop.f32.mrb[0].mxu0
        %v2817 = vadd.f32 0.0, %v2816
        %v2818 = vpop.f32.mrb[0].mxu0
        %v2819 = vpop.f32.mrb[0].mxu0
        %v2820 = vpop.f32.mrb[0].mxu0
        %2821 = vdwg.mxu0
        %v2822 = vpack.c.bf16 %v2215, %v2172
        %v2823 = vpack.c.bf16 %v2301, %v2258
        %v2824 = vpack.c.bf16 %v2387, %v2344
        %v2825 = vpack.c.bf16 %v2473, %v2430
        %v2826 = vpack.c.bf16 %v2559, %v2516
        %v2827 = vpack.c.bf16 %v2645, %v2602
        %v2828 = vpack.c.bf16 %v2731, %v2688
        %v2829 = vpack.c.bf16 %v2817, %v2774
        %v2830 = vld [vmem:[%s4] sm:$0xf]
        %v2831 = vld [vmem:[%s4 + $0x4] sm:$0xf]
        %v2832 = vld [vmem:[%s4 + $0x8] sm:$0xf]
        %v2833 = vld [vmem:[%s4 + $0xc] sm:$0xf]
        %v2834 = vld [vmem:[%s5] sm:$0x1]
        %v2836 = vlaneseq
        %v2837 = vshrl.u32 %v2836, 7
        %v2838 = vsub.s32 0, %v2837
        %v2839 = vrot.slane %v2834, %v2838
        %v2845 = vunpack.c.l.b16 %v2830
        %v2846 = vunpack.c.l.b16 %v2831
        %v2847 = vunpack.c.l.b16 %v2832
        %v2848 = vunpack.c.l.b16 %v2833
        %v2849 = vpack.c.b16 %v2846, %v2845
        %v2850 = vpack.c.b16 %v2848, %v2847
        %v2854 = vsel %vm1202, %v2822, 0
        %v2857 = vsel %vm1202, %v2823, 0
        %v2860 = vsel %vm1202, %v2824, 0
        %v2863 = vsel %vm1202, %v2825, 0
        %v2866 = vsel %vm1202, %v2826, 0
        %v2869 = vsel %vm1202, %v2827, 0
        %v2872 = vsel %vm1202, %v2828, 0
        %v2875 = vsel %vm1202, %v2829, 0
        %2877 = vmatprep.subr.bf16.mxu0 0
        %2878 = vmatpush1.bf16.msra.mxu0 %v2849
        %2879 = vmatprep.subr.bf16.mxu0 0
        %2880 = vmatpush1.bf16.msra.mxu0 %v2850
        %2881 = vmatprep.subr.bf16.mxu0 0
        %2882 = vmatpush1.bf16.msra.mxu0 0
        %2883 = vmatprep.subr.bf16.mxu0 0
        %2884 = vmatpush1.bf16.msra.mxu0 0
        %2885 = vmatprep.subr.bf16.mxu0 0
        %2886 = vmatpush1.bf16.msra.mxu0 0
        %2887 = vmatprep.subr.bf16.mxu0 0
        %2888 = vmatpush1.bf16.msra.mxu0 0
        %2889 = vmatprep.subr.bf16.mxu0 0
        %2890 = vmatpush1.bf16.msra.mxu0 0
        %2891 = vmatprep.subr.bf16.mxu0 0
        %2892 = vmatpush1.bf16.msra.mxu0 0
        %2893 = vmatprep.subr.bf16.mxu0 0
        %2894 = vmatpush1.bf16.msra.mxu0 0
        %2895 = vmatprep.subr.bf16.mxu0 0
        %2896 = vmatpush1.bf16.msra.mxu0 0
        %2897 = vmatprep.subr.bf16.mxu0 0
        %2898 = vmatpush1.bf16.msra.mxu0 0
        %2899 = vmatprep.subr.bf16.mxu0 0
        %2900 = vmatpush1.bf16.msra.mxu0 0
        %2901 = vmatprep.subr.bf16.mxu0 0
        %2902 = vmatpush1.bf16.msra.mxu0 0
        %2903 = vmatprep.subr.bf16.mxu0 0
        %2904 = vmatpush1.bf16.msra.mxu0 0
        %2905 = vmatprep.subr.bf16.mxu0 0
        %2906 = vmatpush1.bf16.msra.mxu0 0
        %2907 = vmatprep.subr.bf16.mxu0 0
        %2908 = vmatpush1.bf16.msra.mxu0 0
        %2909 = vmatprep.mubr.bf16.mxu0 0
        %2910 = vmatmul.mubr.bf16.gmra.mrb[0].mxu0 %v2854
        %v2911 = vpop.f32.mrb[0].mxu0
        %v2912 = vadd.f32 %v2839, %v2911
        %v2913 = vpop.f32.mrb[0].mxu0
        %v2914 = vpop.f32.mrb[0].mxu0
        %v2915 = vadd.f32 %v2839, %v2914
        %v2916 = vpop.f32.mrb[0].mxu0
        %2917 = vmatprep.mubr.bf16.mxu0 0
        %2918 = vmatmul.mubr.bf16.gmra.mrb[0].mxu0 %v2857
        %v2919 = vpop.f32.mrb[0].mxu0
        %v2920 = vadd.f32 %v2839, %v2919
        %v2921 = vpop.f32.mrb[0].mxu0
        %v2922 = vpop.f32.mrb[0].mxu0
        %v2923 = vadd.f32 %v2839, %v2922
        %v2924 = vpop.f32.mrb[0].mxu0
        %2925 = vmatprep.mubr.bf16.mxu0 0
        %2926 = vmatmul.mubr.bf16.gmra.mrb[0].mxu0 %v2860
        %v2927 = vpop.f32.mrb[0].mxu0
        %v2928 = vadd.f32 %v2839, %v2927
        %v2929 = vpop.f32.mrb[0].mxu0
        %v2930 = vpop.f32.mrb[0].mxu0
        %v2931 = vadd.f32 %v2839, %v2930
        %v2932 = vpop.f32.mrb[0].mxu0
        %2933 = vmatprep.mubr.bf16.mxu0 0
        %2934 = vmatmul.mubr.bf16.gmra.mrb[0].mxu0 %v2863
        %v2935 = vpop.f32.mrb[0].mxu0
        %v2936 = vadd.f32 %v2839, %v2935
        %v2937 = vpop.f32.mrb[0].mxu0
        %v2938 = vpop.f32.mrb[0].mxu0
        %v2939 = vadd.f32 %v2839, %v2938
        %v2940 = vpop.f32.mrb[0].mxu0
        %2941 = vmatprep.mubr.bf16.mxu0 0
        %2942 = vmatmul.mubr.bf16.gmra.mrb[0].mxu0 %v2866
        %v2943 = vpop.f32.mrb[0].mxu0
        %v2944 = vadd.f32 %v2839, %v2943
        %v2945 = vpop.f32.mrb[0].mxu0
        %v2946 = vpop.f32.mrb[0].mxu0
        %v2947 = vadd.f32 %v2839, %v2946
        %v2948 = vpop.f32.mrb[0].mxu0
        %2949 = vmatprep.mubr.bf16.mxu0 0
        %2950 = vmatmul.mubr.bf16.gmra.mrb[0].mxu0 %v2869
        %v2951 = vpop.f32.mrb[0].mxu0
        %v2952 = vadd.f32 %v2839, %v2951
        %v2953 = vpop.f32.mrb[0].mxu0
        %v2954 = vpop.f32.mrb[0].mxu0
        %v2955 = vadd.f32 %v2839, %v2954
        %v2956 = vpop.f32.mrb[0].mxu0
        %2957 = vmatprep.mubr.bf16.mxu0 0
        %2958 = vmatmul.mubr.bf16.gmra.mrb[0].mxu0 %v2872
        %v2959 = vpop.f32.mrb[0].mxu0
        %v2960 = vadd.f32 %v2839, %v2959
        %v2961 = vpop.f32.mrb[0].mxu0
        %v2962 = vpop.f32.mrb[0].mxu0
        %v2963 = vadd.f32 %v2839, %v2962
        %v2964 = vpop.f32.mrb[0].mxu0
        %2965 = vmatprep.mubr.bf16.mxu0 0
        %2966 = vmatmul.mubr.bf16.gmra.mrb[0].mxu0 %v2875
        %v2967 = vpop.f32.mrb[0].mxu0
        %v2968 = vadd.f32 %v2839, %v2967
        %v2969 = vpop.f32.mrb[0].mxu0
        %v2970 = vpop.f32.mrb[0].mxu0
        %v2971 = vadd.f32 %v2839, %v2970
        %v2972 = vpop.f32.mrb[0].mxu0
        %2973 = vdwg.mxu0
        %2974 = vst [vmem:[%s351] sm:$0xff] %v2912
        %2975 = vst [vmem:[%s351 + $0x8] sm:$0xff] %v2915
        %2976 = vst [vmem:[%s351 + $0x10] sm:$0xff] %v2920
        %2977 = vst [vmem:[%s351 + $0x18] sm:$0xff] %v2923
        %2978 = vst [vmem:[%s351 + $0x20] sm:$0xff] %v2928
        %2979 = vst [vmem:[%s351 + $0x28] sm:$0xff] %v2931
        %2980 = vst [vmem:[%s351 + $0x30] sm:$0xff] %v2936
        %2981 = vst [vmem:[%s351 + $0x38] sm:$0xff] %v2939
        %2982 = vst [vmem:[%s351 + $0x40] sm:$0xff] %v2944
        %2983 = vst [vmem:[%s351 + $0x48] sm:$0xff] %v2947
        %2984 = vst [vmem:[%s351 + $0x50] sm:$0xff] %v2952
        %2985 = vst [vmem:[%s351 + $0x58] sm:$0xff] %v2955
        %2986 = vst [vmem:[%s351 + $0x60] sm:$0xff] %v2960
        %2987 = vst [vmem:[%s351 + $0x68] sm:$0xff] %v2963
        %2988 = vst [vmem:[%s351 + $0x70] sm:$0xff] %v2968
        %2989 = vst [vmem:[%s351 + $0x78] sm:$0xff] %v2971
        %v2990 = vld [vmem:[%s6] sm:$0xf]
        %v2991 = vld [vmem:[%s6 + $0x4] sm:$0xf]
        %v2992 = vld [vmem:[%s6 + $0x8] sm:$0xf]
        %v2993 = vld [vmem:[%s6 + $0xc] sm:$0xf]
        %v2994 = vld [vmem:[%s7] sm:$0x1]
        %v2996 = vlaneseq
        %v2997 = vshrl.u32 %v2996, 7
        %v2998 = vsub.s32 0, %v2997
        %v2999 = vrot.slane %v2994, %v2998
        %v3005 = vunpack.c.l.b16 %v2990
        %v3006 = vunpack.c.l.b16 %v2991
        %v3007 = vunpack.c.l.b16 %v2992
        %v3008 = vunpack.c.l.b16 %v2993
        %v3009 = vpack.c.b16 %v3006, %v3005
        %v3010 = vpack.c.b16 %v3008, %v3007
        %3013 = vmatprep.subr.bf16.mxu0 0
        %3014 = vmatpush1.bf16.msra.mxu0 %v3009
        %3015 = vmatprep.subr.bf16.mxu0 0
        %3016 = vmatpush1.bf16.msra.mxu0 %v3010
        %3017 = vmatprep.subr.bf16.mxu0 0
        %3018 = vmatpush1.bf16.msra.mxu0 0
        %3019 = vmatprep.subr.bf16.mxu0 0
        %3020 = vmatpush1.bf16.msra.mxu0 0
        %3021 = vmatprep.subr.bf16.mxu0 0
        %3022 = vmatpush1.bf16.msra.mxu0 0
        %3023 = vmatprep.subr.bf16.mxu0 0
        %3024 = vmatpush1.bf16.msra.mxu0 0
        %3025 = vmatprep.subr.bf16.mxu0 0
        %3026 = vmatpush1.bf16.msra.mxu0 0
        %3027 = vmatprep.subr.bf16.mxu0 0
        %3028 = vmatpush1.bf16.msra.mxu0 0
        %3029 = vmatprep.subr.bf16.mxu0 0
        %3030 = vmatpush1.bf16.msra.mxu0 0
        %3031 = vmatprep.subr.bf16.mxu0 0
        %3032 = vmatpush1.bf16.msra.mxu0 0
        %3033 = vmatprep.subr.bf16.mxu0 0
        %3034 = vmatpush1.bf16.msra.mxu0 0
        %3035 = vmatprep.subr.bf16.mxu0 0
        %3036 = vmatpush1.bf16.msra.mxu0 0
        %3037 = vmatprep.subr.bf16.mxu0 0
        %3038 = vmatpush1.bf16.msra.mxu0 0
        %3039 = vmatprep.subr.bf16.mxu0 0
        %3040 = vmatpush1.bf16.msra.mxu0 0
        %3041 = vmatprep.subr.bf16.mxu0 0
        %3042 = vmatpush1.bf16.msra.mxu0 0
        %3043 = vmatprep.subr.bf16.mxu0 0
        %3044 = vmatpush1.bf16.msra.mxu0 0
        %3045 = vmatprep.mubr.bf16.mxu0 0
        %3046 = vmatmul.mubr.bf16.gmra.mrb[0].mxu0 %v1207
        %v3047 = vpop.f32.mrb[0].mxu0
        %v3048 = vadd.f32 %v2999, %v3047
        %v3049 = vpop.f32.mrb[0].mxu0
        %v3050 = vpop.f32.mrb[0].mxu0
        %v3051 = vadd.f32 %v2999, %v3050
        %v3052 = vpop.f32.mrb[0].mxu0
        %3053 = vmatprep.mubr.bf16.mxu0 0
        %3054 = vmatmul.mubr.bf16.gmra.mrb[0].mxu0 %v1210
        %v3055 = vpop.f32.mrb[0].mxu0
        %v3056 = vadd.f32 %v2999, %v3055
        %v3057 = vpop.f32.mrb[0].mxu0
        %v3058 = vpop.f32.mrb[0].mxu0
        %v3059 = vadd.f32 %v2999, %v3058
        %v3060 = vpop.f32.mrb[0].mxu0
        %3061 = vmatprep.mubr.bf16.mxu0 0
        %3062 = vmatmul.mubr.bf16.gmra.mrb[0].mxu0 %v1253
        %v3063 = vpop.f32.mrb[0].mxu0
        %v3064 = vadd.f32 %v2999, %v3063
        %v3065 = vpop.f32.mrb[0].mxu0
        %v3066 = vpop.f32.mrb[0].mxu0
        %v3067 = vadd.f32 %v2999, %v3066
        %v3068 = vpop.f32.mrb[0].mxu0
        %3069 = vmatprep.mubr.bf16.mxu0 0
        %3070 = vmatmul.mubr.bf16.gmra.mrb[0].mxu0 %v1256
        %v3071 = vpop.f32.mrb[0].mxu0
        %v3072 = vadd.f32 %v2999, %v3071
        %v3073 = vpop.f32.mrb[0].mxu0
        %v3074 = vpop.f32.mrb[0].mxu0
        %v3075 = vadd.f32 %v2999, %v3074
        %v3076 = vpop.f32.mrb[0].mxu0
        %3077 = vmatprep.mubr.bf16.mxu0 0
        %3078 = vmatmul.mubr.bf16.gmra.mrb[0].mxu0 %v1299
        %v3079 = vpop.f32.mrb[0].mxu0
        %v3080 = vadd.f32 %v2999, %v3079
        %v3081 = vpop.f32.mrb[0].mxu0
        %v3082 = vpop.f32.mrb[0].mxu0
        %v3083 = vadd.f32 %v2999, %v3082
        %v3084 = vpop.f32.mrb[0].mxu0
        %3085 = vmatprep.mubr.bf16.mxu0 0
        %3086 = vmatmul.mubr.bf16.gmra.mrb[0].mxu0 %v1302
        %v3087 = vpop.f32.mrb[0].mxu0
        %v3088 = vadd.f32 %v2999, %v3087
        %v3089 = vpop.f32.mrb[0].mxu0
        %v3090 = vpop.f32.mrb[0].mxu0
        %v3091 = vadd.f32 %v2999, %v3090
        %v3092 = vpop.f32.mrb[0].mxu0
        %3093 = vmatprep.mubr.bf16.mxu0 0
        %3094 = vmatmul.mubr.bf16.gmra.mrb[0].mxu0 %v1345
        %v3095 = vpop.f32.mrb[0].mxu0
        %v3096 = vadd.f32 %v2999, %v3095
        %v3097 = vpop.f32.mrb[0].mxu0
        %v3098 = vpop.f32.mrb[0].mxu0
        %v3099 = vadd.f32 %v2999, %v3098
        %v3100 = vpop.f32.mrb[0].mxu0
        %3101 = vmatprep.mubr.bf16.mxu0 0
        %3102 = vmatmul.mubr.bf16.gmra.mrb[0].mxu0 %v1348
        %v3103 = vpop.f32.mrb[0].mxu0
        %v3104 = vadd.f32 %v2999, %v3103
        %v3105 = vpop.f32.mrb[0].mxu0
        %v3106 = vpop.f32.mrb[0].mxu0
        %v3107 = vadd.f32 %v2999, %v3106
        %v3108 = vpop.f32.mrb[0].mxu0
        %3109 = vmatprep.mubr.bf16.mxu0 0
        %3110 = vmatmul.mubr.bf16.gmra.mrb[0].mxu0 %v1391
        %v3111 = vpop.f32.mrb[0].mxu0
        %v3112 = vadd.f32 %v2999, %v3111
        %v3113 = vpop.f32.mrb[0].mxu0
        %v3114 = vpop.f32.mrb[0].mxu0
        %v3115 = vadd.f32 %v2999, %v3114
        %v3116 = vpop.f32.mrb[0].mxu0
        %3117 = vmatprep.mubr.bf16.mxu0 0
        %3118 = vmatmul.mubr.bf16.gmra.mrb[0].mxu0 %v1394
        %v3119 = vpop.f32.mrb[0].mxu0
        %v3120 = vadd.f32 %v2999, %v3119
        %v3121 = vpop.f32.mrb[0].mxu0
        %v3122 = vpop.f32.mrb[0].mxu0
        %v3123 = vadd.f32 %v2999, %v3122
        %v3124 = vpop.f32.mrb[0].mxu0
        %3125 = vmatprep.mubr.bf16.mxu0 0
        %3126 = vmatmul.mubr.bf16.gmra.mrb[0].mxu0 %v1437
        %v3127 = vpop.f32.mrb[0].mxu0
        %v3128 = vadd.f32 %v2999, %v3127
        %v3129 = vpop.f32.mrb[0].mxu0
        %v3130 = vpop.f32.mrb[0].mxu0
        %v3131 = vadd.f32 %v2999, %v3130
        %v3132 = vpop.f32.mrb[0].mxu0
        %3133 = vmatprep.mubr.bf16.mxu0 0
        %3134 = vmatmul.mubr.bf16.gmra.mrb[0].mxu0 %v1440
        %v3135 = vpop.f32.mrb[0].mxu0
        %v3136 = vadd.f32 %v2999, %v3135
        %v3137 = vpop.f32.mrb[0].mxu0
        %v3138 = vpop.f32.mrb[0].mxu0
        %v3139 = vadd.f32 %v2999, %v3138
        %v3140 = vpop.f32.mrb[0].mxu0
        %3141 = vmatprep.mubr.bf16.mxu0 0
        %3142 = vmatmul.mubr.bf16.gmra.mrb[0].mxu0 %v1483
        %v3143 = vpop.f32.mrb[0].mxu0
        %v3144 = vadd.f32 %v2999, %v3143
        %v3145 = vpop.f32.mrb[0].mxu0
        %v3146 = vpop.f32.mrb[0].mxu0
        %v3147 = vadd.f32 %v2999, %v3146
        %v3148 = vpop.f32.mrb[0].mxu0
        %3149 = vmatprep.mubr.bf16.mxu0 0
        %3150 = vmatmul.mubr.bf16.gmra.mrb[0].mxu0 %v1486
        %v3151 = vpop.f32.mrb[0].mxu0
        %v3152 = vadd.f32 %v2999, %v3151
        %v3153 = vpop.f32.mrb[0].mxu0
        %v3154 = vpop.f32.mrb[0].mxu0
        %v3155 = vadd.f32 %v2999, %v3154
        %v3156 = vpop.f32.mrb[0].mxu0
        %3157 = vmatprep.mubr.bf16.mxu0 0
        %3158 = vmatmul.mubr.bf16.gmra.mrb[0].mxu0 %v1529
        %v3159 = vpop.f32.mrb[0].mxu0
        %v3160 = vadd.f32 %v2999, %v3159
        %v3161 = vpop.f32.mrb[0].mxu0
        %v3162 = vpop.f32.mrb[0].mxu0
        %v3163 = vadd.f32 %v2999, %v3162
        %v3164 = vpop.f32.mrb[0].mxu0
        %3165 = vmatprep.mubr.bf16.mxu0 0
        %3166 = vmatmul.mubr.bf16.gmra.mrb[0].mxu0 %v1532
        %v3167 = vpop.f32.mrb[0].mxu0
        %v3168 = vadd.f32 %v2999, %v3167
        %v3169 = vpop.f32.mrb[0].mxu0
        %v3170 = vpop.f32.mrb[0].mxu0
        %v3171 = vadd.f32 %v2999, %v3170
        %v3172 = vpop.f32.mrb[0].mxu0
        %3173 = vmatprep.mubr.bf16.mxu0 0
        %3174 = vmatmul.mubr.bf16.gmra.mrb[0].mxu0 %v1575
        %v3175 = vpop.f32.mrb[0].mxu0
        %v3176 = vadd.f32 %v2999, %v3175
        %v3177 = vpop.f32.mrb[0].mxu0
        %v3178 = vpop.f32.mrb[0].mxu0
        %v3179 = vadd.f32 %v2999, %v3178
        %v3180 = vpop.f32.mrb[0].mxu0
        %3181 = vmatprep.mubr.bf16.mxu0 0
        %3182 = vmatmul.mubr.bf16.gmra.mrb[0].mxu0 %v1578
        %v3183 = vpop.f32.mrb[0].mxu0
        %v3184 = vadd.f32 %v2999, %v3183
        %v3185 = vpop.f32.mrb[0].mxu0
        %v3186 = vpop.f32.mrb[0].mxu0
        %v3187 = vadd.f32 %v2999, %v3186
        %v3188 = vpop.f32.mrb[0].mxu0
        %3189 = vmatprep.mubr.bf16.mxu0 0
        %3190 = vmatmul.mubr.bf16.gmra.mrb[0].mxu0 %v1621
        %v3191 = vpop.f32.mrb[0].mxu0
        %v3192 = vadd.f32 %v2999, %v3191
        %v3193 = vpop.f32.mrb[0].mxu0
        %v3194 = vpop.f32.mrb[0].mxu0
        %v3195 = vadd.f32 %v2999, %v3194
        %v3196 = vpop.f32.mrb[0].mxu0
        %3197 = vmatprep.mubr.bf16.mxu0 0
        %3198 = vmatmul.mubr.bf16.gmra.mrb[0].mxu0 %v1624
        %v3199 = vpop.f32.mrb[0].mxu0
        %v3200 = vadd.f32 %v2999, %v3199
        %v3201 = vpop.f32.mrb[0].mxu0
        %v3202 = vpop.f32.mrb[0].mxu0
        %v3203 = vadd.f32 %v2999, %v3202
        %v3204 = vpop.f32.mrb[0].mxu0
        %3205 = vmatprep.mubr.bf16.mxu0 0
        %3206 = vmatmul.mubr.bf16.gmra.mrb[0].mxu0 %v1667
        %v3207 = vpop.f32.mrb[0].mxu0
        %v3208 = vadd.f32 %v2999, %v3207
        %v3209 = vpop.f32.mrb[0].mxu0
        %v3210 = vpop.f32.mrb[0].mxu0
        %v3211 = vadd.f32 %v2999, %v3210
        %v3212 = vpop.f32.mrb[0].mxu0
        %3213 = vmatprep.mubr.bf16.mxu0 0
        %3214 = vmatmul.mubr.bf16.gmra.mrb[0].mxu0 %v1670
        %v3215 = vpop.f32.mrb[0].mxu0
        %v3216 = vadd.f32 %v2999, %v3215
        %v3217 = vpop.f32.mrb[0].mxu0
        %v3218 = vpop.f32.mrb[0].mxu0
        %v3219 = vadd.f32 %v2999, %v3218
        %v3220 = vpop.f32.mrb[0].mxu0
        %3221 = vmatprep.mubr.bf16.mxu0 0
        %3222 = vmatmul.mubr.bf16.gmra.mrb[0].mxu0 %v1713
        %v3223 = vpop.f32.mrb[0].mxu0
        %v3224 = vadd.f32 %v2999, %v3223
        %v3225 = vpop.f32.mrb[0].mxu0
        %v3226 = vpop.f32.mrb[0].mxu0
        %v3227 = vadd.f32 %v2999, %v3226
        %v3228 = vpop.f32.mrb[0].mxu0
        %3229 = vmatprep.mubr.bf16.mxu0 0
        %3230 = vmatmul.mubr.bf16.gmra.mrb[0].mxu0 %v1716
        %v3231 = vpop.f32.mrb[0].mxu0
        %v3232 = vadd.f32 %v2999, %v3231
        %v3233 = vpop.f32.mrb[0].mxu0
        %v3234 = vpop.f32.mrb[0].mxu0
        %v3235 = vadd.f32 %v2999, %v3234
        %v3236 = vpop.f32.mrb[0].mxu0
        %3237 = vmatprep.mubr.bf16.mxu0 0
        %3238 = vmatmul.mubr.bf16.gmra.mrb[0].mxu0 %v1759
        %v3239 = vpop.f32.mrb[0].mxu0
        %v3240 = vadd.f32 %v2999, %v3239
        %v3241 = vpop.f32.mrb[0].mxu0
        %v3242 = vpop.f32.mrb[0].mxu0
        %v3243 = vadd.f32 %v2999, %v3242
        %v3244 = vpop.f32.mrb[0].mxu0
        %3245 = vmatprep.mubr.bf16.mxu0 0
        %3246 = vmatmul.mubr.bf16.gmra.mrb[0].mxu0 %v1762
        %v3247 = vpop.f32.mrb[0].mxu0
        %v3248 = vadd.f32 %v2999, %v3247
        %v3249 = vpop.f32.mrb[0].mxu0
        %v3250 = vpop.f32.mrb[0].mxu0
        %v3251 = vadd.f32 %v2999, %v3250
        %v3252 = vpop.f32.mrb[0].mxu0
        %3253 = vmatprep.mubr.bf16.mxu0 0
        %3254 = vmatmul.mubr.bf16.gmra.mrb[0].mxu0 %v1805
        %v3255 = vpop.f32.mrb[0].mxu0
        %v3256 = vadd.f32 %v2999, %v3255
        %v3257 = vpop.f32.mrb[0].mxu0
        %v3258 = vpop.f32.mrb[0].mxu0
        %v3259 = vadd.f32 %v2999, %v3258
        %v3260 = vpop.f32.mrb[0].mxu0
        %3261 = vmatprep.mubr.bf16.mxu0 0
        %3262 = vmatmul.mubr.bf16.gmra.mrb[0].mxu0 %v1808
        %v3263 = vpop.f32.mrb[0].mxu0
        %v3264 = vadd.f32 %v2999, %v3263
        %v3265 = vpop.f32.mrb[0].mxu0
        %v3266 = vpop.f32.mrb[0].mxu0
        %v3267 = vadd.f32 %v2999, %v3266
        %v3268 = vpop.f32.mrb[0].mxu0
        %3269 = vmatprep.mubr.bf16.mxu0 0
        %3270 = vmatmul.mubr.bf16.gmra.mrb[0].mxu0 %v1851
        %v3271 = vpop.f32.mrb[0].mxu0
        %v3272 = vadd.f32 %v2999, %v3271
        %v3273 = vpop.f32.mrb[0].mxu0
        %v3274 = vpop.f32.mrb[0].mxu0
        %v3275 = vadd.f32 %v2999, %v3274
        %v3276 = vpop.f32.mrb[0].mxu0
        %3277 = vmatprep.mubr.bf16.mxu0 0
        %3278 = vmatmul.mubr.bf16.gmra.mrb[0].mxu0 %v1854
        %v3279 = vpop.f32.mrb[0].mxu0
        %v3280 = vadd.f32 %v2999, %v3279
        %v3281 = vpop.f32.mrb[0].mxu0
        %v3282 = vpop.f32.mrb[0].mxu0
        %v3283 = vadd.f32 %v2999, %v3282
        %v3284 = vpop.f32.mrb[0].mxu0
        %3285 = vmatprep.mubr.bf16.mxu0 0
        %3286 = vmatmul.mubr.bf16.gmra.mrb[0].mxu0 %v1897
        %v3287 = vpop.f32.mrb[0].mxu0
        %v3288 = vadd.f32 %v2999, %v3287
        %v3289 = vpop.f32.mrb[0].mxu0
        %v3290 = vpop.f32.mrb[0].mxu0
        %v3291 = vadd.f32 %v2999, %v3290
        %v3292 = vpop.f32.mrb[0].mxu0
        %3293 = vmatprep.mubr.bf16.mxu0 0
        %3294 = vmatmul.mubr.bf16.gmra.mrb[0].mxu0 %v1900
        %v3295 = vpop.f32.mrb[0].mxu0
        %v3296 = vadd.f32 %v2999, %v3295
        %v3297 = vpop.f32.mrb[0].mxu0
        %v3298 = vpop.f32.mrb[0].mxu0
        %v3299 = vadd.f32 %v2999, %v3298
        %v3300 = vpop.f32.mrb[0].mxu0
        %3301 = vdwg.mxu0
        %v3302 = vmax.f32 %v3048, 0.0
        %v3303 = vmax.f32 %v3051, 0.0
        %v3304 = vmax.f32 %v3056, 0.0
        %v3305 = vmax.f32 %v3059, 0.0
        %v3306 = vmax.f32 %v3064, 0.0
        %v3307 = vmax.f32 %v3067, 0.0
        %v3308 = vmax.f32 %v3072, 0.0
        %v3309 = vmax.f32 %v3075, 0.0
        %v3310 = vmax.f32 %v3080, 0.0
        %v3311 = vmax.f32 %v3083, 0.0
        %v3312 = vmax.f32 %v3088, 0.0
        %v3313 = vmax.f32 %v3091, 0.0
        %v3314 = vmax.f32 %v3096, 0.0
        %v3315 = vmax.f32 %v3099, 0.0
        %v3316 = vmax.f32 %v3104, 0.0
        %v3317 = vmax.f32 %v3107, 0.0
        %v3318 = vmax.f32 %v3112, 0.0
        %v3319 = vmax.f32 %v3115, 0.0
        %v3320 = vmax.f32 %v3120, 0.0
        %v3321 = vmax.f32 %v3123, 0.0
        %v3322 = vmax.f32 %v3128, 0.0
        %v3323 = vmax.f32 %v3131, 0.0
        %v3324 = vmax.f32 %v3136, 0.0
        %v3325 = vmax.f32 %v3139, 0.0
        %v3326 = vmax.f32 %v3144, 0.0
        %v3327 = vmax.f32 %v3147, 0.0
        %v3328 = vmax.f32 %v3152, 0.0
        %v3329 = vmax.f32 %v3155, 0.0
        %v3330 = vmax.f32 %v3160, 0.0
        %v3331 = vmax.f32 %v3163, 0.0
        %v3332 = vmax.f32 %v3168, 0.0
        %v3333 = vmax.f32 %v3171, 0.0
        %v3334 = vmax.f32 %v3176, 0.0
        %v3335 = vmax.f32 %v3179, 0.0
        %v3336 = vmax.f32 %v3184, 0.0
        %v3337 = vmax.f32 %v3187, 0.0
        %v3338 = vmax.f32 %v3192, 0.0
        %v3339 = vmax.f32 %v3195, 0.0
        %v3340 = vmax.f32 %v3200, 0.0
        %v3341 = vmax.f32 %v3203, 0.0
        %v3342 = vmax.f32 %v3208, 0.0
        %v3343 = vmax.f32 %v3211, 0.0
        %v3344 = vmax.f32 %v3216, 0.0
        %v3345 = vmax.f32 %v3219, 0.0
        %v3346 = vmax.f32 %v3224, 0.0
        %v3347 = vmax.f32 %v3227, 0.0
        %v3348 = vmax.f32 %v3232, 0.0
        %v3349 = vmax.f32 %v3235, 0.0
        %v3350 = vmax.f32 %v3240, 0.0
        %v3351 = vmax.f32 %v3243, 0.0
        %v3352 = vmax.f32 %v3248, 0.0
        %v3353 = vmax.f32 %v3251, 0.0
        %v3354 = vmax.f32 %v3256, 0.0
        %v3355 = vmax.f32 %v3259, 0.0
        %v3356 = vmax.f32 %v3264, 0.0
        %v3357 = vmax.f32 %v3267, 0.0
        %v3358 = vmax.f32 %v3272, 0.0
        %v3359 = vmax.f32 %v3275, 0.0
        %v3360 = vmax.f32 %v3280, 0.0
        %v3361 = vmax.f32 %v3283, 0.0
        %v3362 = vmax.f32 %v3288, 0.0
        %v3363 = vmax.f32 %v3291, 0.0
        %v3364 = vmax.f32 %v3296, 0.0
        %v3365 = vmax.f32 %v3299, 0.0
        %v3366 = vpack.c.bf16 %v3303, %v3302
        %v3367 = vpack.c.bf16 %v3305, %v3304
        %v3368 = vpack.c.bf16 %v3307, %v3306
        %v3369 = vpack.c.bf16 %v3309, %v3308
        %v3370 = vpack.c.bf16 %v3311, %v3310
        %v3371 = vpack.c.bf16 %v3313, %v3312
        %v3372 = vpack.c.bf16 %v3315, %v3314
        %v3373 = vpack.c.bf16 %v3317, %v3316
        %v3374 = vpack.c.bf16 %v3319, %v3318
        %v3375 = vpack.c.bf16 %v3321, %v3320
        %v3376 = vpack.c.bf16 %v3323, %v3322
        %v3377 = vpack.c.bf16 %v3325, %v3324
        %v3378 = vpack.c.bf16 %v3327, %v3326
        %v3379 = vpack.c.bf16 %v3329, %v3328
        %v3380 = vpack.c.bf16 %v3331, %v3330
        %v3381 = vpack.c.bf16 %v3333, %v3332
        %v3382 = vpack.c.bf16 %v3335, %v3334
        %v3383 = vpack.c.bf16 %v3337, %v3336
        %v3384 = vpack.c.bf16 %v3339, %v3338
        %v3385 = vpack.c.bf16 %v3341, %v3340
        %v3386 = vpack.c.bf16 %v3343, %v3342
        %v3387 = vpack.c.bf16 %v3345, %v3344
        %v3388 = vpack.c.bf16 %v3347, %v3346
        %v3389 = vpack.c.bf16 %v3349, %v3348
        %v3390 = vpack.c.bf16 %v3351, %v3350
        %v3391 = vpack.c.bf16 %v3353, %v3352
        %v3392 = vpack.c.bf16 %v3355, %v3354
        %v3393 = vpack.c.bf16 %v3357, %v3356
        %v3394 = vpack.c.bf16 %v3359, %v3358
        %v3395 = vpack.c.bf16 %v3361, %v3360
        %v3396 = vpack.c.bf16 %v3363, %v3362
        %v3397 = vpack.c.bf16 %v3365, %v3364
        %v3398 = vld [vmem:[%s8] sm:$0xf]
        %v3399 = vld [vmem:[%s8 + $0x4] sm:$0xf]
        %v3400 = vld [vmem:[%s8 + $0x8] sm:$0xf]
        %v3401 = vld [vmem:[%s8 + $0xc] sm:$0xf]
        %v3402 = vld [vmem:[%s8 + $0x10] sm:$0xf]
        %v3403 = vld [vmem:[%s8 + $0x14] sm:$0xf]
        %v3404 = vld [vmem:[%s8 + $0x18] sm:$0xf]
        %v3405 = vld [vmem:[%s8 + $0x1c] sm:$0xf]
        %v3406 = vld [vmem:[%s8 + $0x20] sm:$0xf]
        %v3407 = vld [vmem:[%s8 + $0x24] sm:$0xf]
        %v3408 = vld [vmem:[%s8 + $0x28] sm:$0xf]
        %v3409 = vld [vmem:[%s8 + $0x2c] sm:$0xf]
        %v3410 = vld [vmem:[%s8 + $0x30] sm:$0xf]
        %v3411 = vld [vmem:[%s8 + $0x34] sm:$0xf]
        %v3412 = vld [vmem:[%s8 + $0x38] sm:$0xf]
        %v3413 = vld [vmem:[%s8 + $0x3c] sm:$0xf]
        %v3414 = vld [vmem:[%s9] sm:$0x1]
        %v3416 = vlaneseq
        %v3417 = vshrl.u32 %v3416, 7
        %v3418 = vsub.s32 0, %v3417
        %v3419 = vrot.slane %v3414, %v3418
        %v3437 = vunpack.c.l.b16 %v3398
        %v3438 = vunpack.c.l.b16 %v3399
        %v3439 = vunpack.c.l.b16 %v3400
        %v3440 = vunpack.c.l.b16 %v3401
        %v3441 = vunpack.c.l.b16 %v3402
        %v3442 = vunpack.c.l.b16 %v3403
        %v3443 = vunpack.c.l.b16 %v3404
        %v3444 = vunpack.c.l.b16 %v3405
        %v3445 = vunpack.c.l.b16 %v3406
        %v3446 = vunpack.c.l.b16 %v3407
        %v3447 = vunpack.c.l.b16 %v3408
        %v3448 = vunpack.c.l.b16 %v3409
        %v3449 = vunpack.c.l.b16 %v3410
        %v3450 = vunpack.c.l.b16 %v3411
        %v3451 = vunpack.c.l.b16 %v3412
        %v3452 = vunpack.c.l.b16 %v3413
        %v3453 = vpack.c.b16 %v3438, %v3437
        %v3454 = vpack.c.b16 %v3440, %v3439
        %v3455 = vpack.c.b16 %v3442, %v3441
        %v3456 = vpack.c.b16 %v3444, %v3443
        %v3457 = vpack.c.b16 %v3446, %v3445
        %v3458 = vpack.c.b16 %v3448, %v3447
        %v3459 = vpack.c.b16 %v3450, %v3449
        %v3460 = vpack.c.b16 %v3452, %v3451
        %3469 = vmatprep.subr.bf16.mxu0 0
        %3470 = vmatpush1.bf16.msra.mxu0 %v3453
        %3471 = vmatprep.subr.bf16.mxu0 0
        %3472 = vmatpush1.bf16.msra.mxu0 %v3454
        %3473 = vmatprep.subr.bf16.mxu0 0
        %3474 = vmatpush1.bf16.msra.mxu0 %v3455
        %3475 = vmatprep.subr.bf16.mxu0 0
        %3476 = vmatpush1.bf16.msra.mxu0 %v3456
        %3477 = vmatprep.subr.bf16.mxu0 0
        %3478 = vmatpush1.bf16.msra.mxu0 %v3457
        %3479 = vmatprep.subr.bf16.mxu0 0
        %3480 = vmatpush1.bf16.msra.mxu0 %v3458
        %3481 = vmatprep.subr.bf16.mxu0 0
        %3482 = vmatpush1.bf16.msra.mxu0 %v3459
        %3483 = vmatprep.subr.bf16.mxu0 0
        %3484 = vmatpush1.bf16.msra.mxu0 %v3460
        %3485 = vmatprep.subr.bf16.mxu0 0
        %3486 = vmatpush1.bf16.msra.mxu0 0
        %3487 = vmatprep.subr.bf16.mxu0 0
        %3488 = vmatpush1.bf16.msra.mxu0 0
        %3489 = vmatprep.subr.bf16.mxu0 0
        %3490 = vmatpush1.bf16.msra.mxu0 0
        %3491 = vmatprep.subr.bf16.mxu0 0
        %3492 = vmatpush1.bf16.msra.mxu0 0
        %3493 = vmatprep.subr.bf16.mxu0 0
        %3494 = vmatpush1.bf16.msra.mxu0 0
        %3495 = vmatprep.subr.bf16.mxu0 0
        %3496 = vmatpush1.bf16.msra.mxu0 0
        %3497 = vmatprep.subr.bf16.mxu0 0
        %3498 = vmatpush1.bf16.msra.mxu0 0
        %3499 = vmatprep.subr.bf16.mxu0 0
        %3500 = vmatpush1.bf16.msra.mxu0 0
        %3501 = vmatprep.mubr.bf16.mxu0 0
        %3502 = vmatmul.mubr.bf16.gmra.mrb[0].mxu0 %v3366
        %v3503 = vpop.f32.mrb[0].mxu0
        %v3504 = vadd.f32 %v3419, %v3503
        %v3505 = vpop.f32.mrb[0].mxu0
        %v3506 = vpop.f32.mrb[0].mxu0
        %v3507 = vadd.f32 %v3419, %v3506
        %v3508 = vpop.f32.mrb[0].mxu0
        %3509 = vmatprep.mubr.bf16.mxu0 0
        %3510 = vmatmul.mubr.bf16.gmra.mrb[0].mxu0 %v3367
        %v3511 = vpop.f32.mrb[0].mxu0
        %v3512 = vadd.f32 %v3419, %v3511
        %v3513 = vpop.f32.mrb[0].mxu0
        %v3514 = vpop.f32.mrb[0].mxu0
        %v3515 = vadd.f32 %v3419, %v3514
        %v3516 = vpop.f32.mrb[0].mxu0
        %3517 = vmatprep.mubr.bf16.mxu0 0
        %3518 = vmatmul.mubr.bf16.gmra.mrb[0].mxu0 %v3368
        %v3519 = vpop.f32.mrb[0].mxu0
        %v3520 = vadd.f32 %v3419, %v3519
        %v3521 = vpop.f32.mrb[0].mxu0
        %v3522 = vpop.f32.mrb[0].mxu0
        %v3523 = vadd.f32 %v3419, %v3522
        %v3524 = vpop.f32.mrb[0].mxu0
        %3525 = vmatprep.mubr.bf16.mxu0 0
        %3526 = vmatmul.mubr.bf16.gmra.mrb[0].mxu0 %v3369
        %v3527 = vpop.f32.mrb[0].mxu0
        %v3528 = vadd.f32 %v3419, %v3527
        %v3529 = vpop.f32.mrb[0].mxu0
        %v3530 = vpop.f32.mrb[0].mxu0
        %v3531 = vadd.f32 %v3419, %v3530
        %v3532 = vpop.f32.mrb[0].mxu0
        %3533 = vmatprep.mubr.bf16.mxu0 0
        %3534 = vmatmul.mubr.bf16.gmra.mrb[0].mxu0 %v3370
        %v3535 = vpop.f32.mrb[0].mxu0
        %v3536 = vadd.f32 %v3419, %v3535
        %v3537 = vpop.f32.mrb[0].mxu0
        %v3538 = vpop.f32.mrb[0].mxu0
        %v3539 = vadd.f32 %v3419, %v3538
        %v3540 = vpop.f32.mrb[0].mxu0
        %3541 = vmatprep.mubr.bf16.mxu0 0
        %3542 = vmatmul.mubr.bf16.gmra.mrb[0].mxu0 %v3371
        %v3543 = vpop.f32.mrb[0].mxu0
        %v3544 = vadd.f32 %v3419, %v3543
        %v3545 = vpop.f32.mrb[0].mxu0
        %v3546 = vpop.f32.mrb[0].mxu0
        %v3547 = vadd.f32 %v3419, %v3546
        %v3548 = vpop.f32.mrb[0].mxu0
        %3549 = vmatprep.mubr.bf16.mxu0 0
        %3550 = vmatmul.mubr.bf16.gmra.mrb[0].mxu0 %v3372
        %v3551 = vpop.f32.mrb[0].mxu0
        %v3552 = vadd.f32 %v3419, %v3551
        %v3553 = vpop.f32.mrb[0].mxu0
        %v3554 = vpop.f32.mrb[0].mxu0
        %v3555 = vadd.f32 %v3419, %v3554
        %v3556 = vpop.f32.mrb[0].mxu0
        %3557 = vmatprep.mubr.bf16.mxu0 0
        %3558 = vmatmul.mubr.bf16.gmra.mrb[0].mxu0 %v3373
        %v3559 = vpop.f32.mrb[0].mxu0
        %v3560 = vadd.f32 %v3419, %v3559
        %v3561 = vpop.f32.mrb[0].mxu0
        %v3562 = vpop.f32.mrb[0].mxu0
        %v3563 = vadd.f32 %v3419, %v3562
        %v3564 = vpop.f32.mrb[0].mxu0
        %3565 = vmatprep.mubr.bf16.mxu0 0
        %3566 = vmatmul.mubr.bf16.gmra.mrb[0].mxu0 %v3374
        %v3567 = vpop.f32.mrb[0].mxu0
        %v3568 = vadd.f32 %v3419, %v3567
        %v3569 = vpop.f32.mrb[0].mxu0
        %v3570 = vpop.f32.mrb[0].mxu0
        %v3571 = vadd.f32 %v3419, %v3570
        %v3572 = vpop.f32.mrb[0].mxu0
        %3573 = vmatprep.mubr.bf16.mxu0 0
        %3574 = vmatmul.mubr.bf16.gmra.mrb[0].mxu0 %v3375
        %v3575 = vpop.f32.mrb[0].mxu0
        %v3576 = vadd.f32 %v3419, %v3575
        %v3577 = vpop.f32.mrb[0].mxu0
        %v3578 = vpop.f32.mrb[0].mxu0
        %v3579 = vadd.f32 %v3419, %v3578
        %v3580 = vpop.f32.mrb[0].mxu0
        %3581 = vmatprep.mubr.bf16.mxu0 0
        %3582 = vmatmul.mubr.bf16.gmra.mrb[0].mxu0 %v3376
        %v3583 = vpop.f32.mrb[0].mxu0
        %v3584 = vadd.f32 %v3419, %v3583
        %v3585 = vpop.f32.mrb[0].mxu0
        %v3586 = vpop.f32.mrb[0].mxu0
        %v3587 = vadd.f32 %v3419, %v3586
        %v3588 = vpop.f32.mrb[0].mxu0
        %3589 = vmatprep.mubr.bf16.mxu0 0
        %3590 = vmatmul.mubr.bf16.gmra.mrb[0].mxu0 %v3377
        %v3591 = vpop.f32.mrb[0].mxu0
        %v3592 = vadd.f32 %v3419, %v3591
        %v3593 = vpop.f32.mrb[0].mxu0
        %v3594 = vpop.f32.mrb[0].mxu0
        %v3595 = vadd.f32 %v3419, %v3594
        %v3596 = vpop.f32.mrb[0].mxu0
        %3597 = vmatprep.mubr.bf16.mxu0 0
        %3598 = vmatmul.mubr.bf16.gmra.mrb[0].mxu0 %v3378
        %v3599 = vpop.f32.mrb[0].mxu0
        %v3600 = vadd.f32 %v3419, %v3599
        %v3601 = vpop.f32.mrb[0].mxu0
        %v3602 = vpop.f32.mrb[0].mxu0
        %v3603 = vadd.f32 %v3419, %v3602
        %v3604 = vpop.f32.mrb[0].mxu0
        %3605 = vmatprep.mubr.bf16.mxu0 0
        %3606 = vmatmul.mubr.bf16.gmra.mrb[0].mxu0 %v3379
        %v3607 = vpop.f32.mrb[0].mxu0
        %v3608 = vadd.f32 %v3419, %v3607
        %v3609 = vpop.f32.mrb[0].mxu0
        %v3610 = vpop.f32.mrb[0].mxu0
        %v3611 = vadd.f32 %v3419, %v3610
        %v3612 = vpop.f32.mrb[0].mxu0
        %3613 = vmatprep.mubr.bf16.mxu0 0
        %3614 = vmatmul.mubr.bf16.gmra.mrb[0].mxu0 %v3380
        %v3615 = vpop.f32.mrb[0].mxu0
        %v3616 = vadd.f32 %v3419, %v3615
        %v3617 = vpop.f32.mrb[0].mxu0
        %v3618 = vpop.f32.mrb[0].mxu0
        %v3619 = vadd.f32 %v3419, %v3618
        %v3620 = vpop.f32.mrb[0].mxu0
        %3621 = vmatprep.mubr.bf16.mxu0 0
        %3622 = vmatmul.mubr.bf16.gmra.mrb[0].mxu0 %v3381
        %v3623 = vpop.f32.mrb[0].mxu0
        %v3624 = vadd.f32 %v3419, %v3623
        %v3625 = vpop.f32.mrb[0].mxu0
        %v3626 = vpop.f32.mrb[0].mxu0
        %v3627 = vadd.f32 %v3419, %v3626
        %v3628 = vpop.f32.mrb[0].mxu0
        %3629 = vmatprep.mubr.bf16.mxu0 0
        %3630 = vmatmul.mubr.bf16.gmra.mrb[0].mxu0 %v3382
        %v3631 = vpop.f32.mrb[0].mxu0
        %v3632 = vadd.f32 %v3419, %v3631
        %v3633 = vpop.f32.mrb[0].mxu0
        %v3634 = vpop.f32.mrb[0].mxu0
        %v3635 = vadd.f32 %v3419, %v3634
        %v3636 = vpop.f32.mrb[0].mxu0
        %3637 = vmatprep.mubr.bf16.mxu0 0
        %3638 = vmatmul.mubr.bf16.gmra.mrb[0].mxu0 %v3383
        %v3639 = vpop.f32.mrb[0].mxu0
        %v3640 = vadd.f32 %v3419, %v3639
        %v3641 = vpop.f32.mrb[0].mxu0
        %v3642 = vpop.f32.mrb[0].mxu0
        %v3643 = vadd.f32 %v3419, %v3642
        %v3644 = vpop.f32.mrb[0].mxu0
        %3645 = vmatprep.mubr.bf16.mxu0 0
        %3646 = vmatmul.mubr.bf16.gmra.mrb[0].mxu0 %v3384
        %v3647 = vpop.f32.mrb[0].mxu0
        %v3648 = vadd.f32 %v3419, %v3647
        %v3649 = vpop.f32.mrb[0].mxu0
        %v3650 = vpop.f32.mrb[0].mxu0
        %v3651 = vadd.f32 %v3419, %v3650
        %v3652 = vpop.f32.mrb[0].mxu0
        %3653 = vmatprep.mubr.bf16.mxu0 0
        %3654 = vmatmul.mubr.bf16.gmra.mrb[0].mxu0 %v3385
        %v3655 = vpop.f32.mrb[0].mxu0
        %v3656 = vadd.f32 %v3419, %v3655
        %v3657 = vpop.f32.mrb[0].mxu0
        %v3658 = vpop.f32.mrb[0].mxu0
        %v3659 = vadd.f32 %v3419, %v3658
        %v3660 = vpop.f32.mrb[0].mxu0
        %3661 = vmatprep.mubr.bf16.mxu0 0
        %3662 = vmatmul.mubr.bf16.gmra.mrb[0].mxu0 %v3386
        %v3663 = vpop.f32.mrb[0].mxu0
        %v3664 = vadd.f32 %v3419, %v3663
        %v3665 = vpop.f32.mrb[0].mxu0
        %v3666 = vpop.f32.mrb[0].mxu0
        %v3667 = vadd.f32 %v3419, %v3666
        %v3668 = vpop.f32.mrb[0].mxu0
        %3669 = vmatprep.mubr.bf16.mxu0 0
        %3670 = vmatmul.mubr.bf16.gmra.mrb[0].mxu0 %v3387
        %v3671 = vpop.f32.mrb[0].mxu0
        %v3672 = vadd.f32 %v3419, %v3671
        %v3673 = vpop.f32.mrb[0].mxu0
        %v3674 = vpop.f32.mrb[0].mxu0
        %v3675 = vadd.f32 %v3419, %v3674
        %v3676 = vpop.f32.mrb[0].mxu0
        %3677 = vmatprep.mubr.bf16.mxu0 0
        %3678 = vmatmul.mubr.bf16.gmra.mrb[0].mxu0 %v3388
        %v3679 = vpop.f32.mrb[0].mxu0
        %v3680 = vadd.f32 %v3419, %v3679
        %v3681 = vpop.f32.mrb[0].mxu0
        %v3682 = vpop.f32.mrb[0].mxu0
        %v3683 = vadd.f32 %v3419, %v3682
        %v3684 = vpop.f32.mrb[0].mxu0
        %3685 = vmatprep.mubr.bf16.mxu0 0
        %3686 = vmatmul.mubr.bf16.gmra.mrb[0].mxu0 %v3389
        %v3687 = vpop.f32.mrb[0].mxu0
        %v3688 = vadd.f32 %v3419, %v3687
        %v3689 = vpop.f32.mrb[0].mxu0
        %v3690 = vpop.f32.mrb[0].mxu0
        %v3691 = vadd.f32 %v3419, %v3690
        %v3692 = vpop.f32.mrb[0].mxu0
        %3693 = vmatprep.mubr.bf16.mxu0 0
        %3694 = vmatmul.mubr.bf16.gmra.mrb[0].mxu0 %v3390
        %v3695 = vpop.f32.mrb[0].mxu0
        %v3696 = vadd.f32 %v3419, %v3695
        %v3697 = vpop.f32.mrb[0].mxu0
        %v3698 = vpop.f32.mrb[0].mxu0
        %v3699 = vadd.f32 %v3419, %v3698
        %v3700 = vpop.f32.mrb[0].mxu0
        %3701 = vmatprep.mubr.bf16.mxu0 0
        %3702 = vmatmul.mubr.bf16.gmra.mrb[0].mxu0 %v3391
        %v3703 = vpop.f32.mrb[0].mxu0
        %v3704 = vadd.f32 %v3419, %v3703
        %v3705 = vpop.f32.mrb[0].mxu0
        %v3706 = vpop.f32.mrb[0].mxu0
        %v3707 = vadd.f32 %v3419, %v3706
        %v3708 = vpop.f32.mrb[0].mxu0
        %3709 = vmatprep.mubr.bf16.mxu0 0
        %3710 = vmatmul.mubr.bf16.gmra.mrb[0].mxu0 %v3392
        %v3711 = vpop.f32.mrb[0].mxu0
        %v3712 = vadd.f32 %v3419, %v3711
        %v3713 = vpop.f32.mrb[0].mxu0
        %v3714 = vpop.f32.mrb[0].mxu0
        %v3715 = vadd.f32 %v3419, %v3714
        %v3716 = vpop.f32.mrb[0].mxu0
        %3717 = vmatprep.mubr.bf16.mxu0 0
        %3718 = vmatmul.mubr.bf16.gmra.mrb[0].mxu0 %v3393
        %v3719 = vpop.f32.mrb[0].mxu0
        %v3720 = vadd.f32 %v3419, %v3719
        %v3721 = vpop.f32.mrb[0].mxu0
        %v3722 = vpop.f32.mrb[0].mxu0
        %v3723 = vadd.f32 %v3419, %v3722
        %v3724 = vpop.f32.mrb[0].mxu0
        %3725 = vmatprep.mubr.bf16.mxu0 0
        %3726 = vmatmul.mubr.bf16.gmra.mrb[0].mxu0 %v3394
        %v3727 = vpop.f32.mrb[0].mxu0
        %v3728 = vadd.f32 %v3419, %v3727
        %v3729 = vpop.f32.mrb[0].mxu0
        %v3730 = vpop.f32.mrb[0].mxu0
        %v3731 = vadd.f32 %v3419, %v3730
        %v3732 = vpop.f32.mrb[0].mxu0
        %3733 = vmatprep.mubr.bf16.mxu0 0
        %3734 = vmatmul.mubr.bf16.gmra.mrb[0].mxu0 %v3395
        %v3735 = vpop.f32.mrb[0].mxu0
        %v3736 = vadd.f32 %v3419, %v3735
        %v3737 = vpop.f32.mrb[0].mxu0
        %v3738 = vpop.f32.mrb[0].mxu0
        %v3739 = vadd.f32 %v3419, %v3738
        %v3740 = vpop.f32.mrb[0].mxu0
        %3741 = vmatprep.mubr.bf16.mxu0 0
        %3742 = vmatmul.mubr.bf16.gmra.mrb[0].mxu0 %v3396
        %v3743 = vpop.f32.mrb[0].mxu0
        %v3744 = vadd.f32 %v3419, %v3743
        %v3745 = vpop.f32.mrb[0].mxu0
        %v3746 = vpop.f32.mrb[0].mxu0
        %v3747 = vadd.f32 %v3419, %v3746
        %v3748 = vpop.f32.mrb[0].mxu0
        %3749 = vmatprep.mubr.bf16.mxu0 0
        %3750 = vmatmul.mubr.bf16.gmra.mrb[0].mxu0 %v3397
        %v3751 = vpop.f32.mrb[0].mxu0
        %v3752 = vadd.f32 %v3419, %v3751
        %v3753 = vpop.f32.mrb[0].mxu0
        %v3754 = vpop.f32.mrb[0].mxu0
        %v3755 = vadd.f32 %v3419, %v3754
        %v3756 = vpop.f32.mrb[0].mxu0
        %3757 = vdwg.mxu0
        %3758 = vxpose.xlu0.b32.start [1/16] %v2102, 128
        %3759 = vxpose.xlu0.b32.cont [2/16] 0.0, 128
        %3760 = vxpose.xlu0.b32.cont [3/16] 0.0, 128
        %3761 = vxpose.xlu0.b32.cont [4/16] 0.0, 128
        %3762 = vxpose.xlu0.b32.cont [5/16] 0.0, 128
        %3763 = vxpose.xlu0.b32.cont [6/16] 0.0, 128
        %3764 = vxpose.xlu0.b32.cont [7/16] 0.0, 128
        %3765 = vxpose.xlu0.b32.cont [8/16] 0.0, 128
        %3766 = vxpose.xlu0.b32.cont [9/16] 0.0, 128
        %3767 = vxpose.xlu0.b32.cont [10/16] 0.0, 128
        %3768 = vxpose.xlu0.b32.cont [11/16] 0.0, 128
        %3769 = vxpose.xlu0.b32.cont [12/16] 0.0, 128
        %3770 = vxpose.xlu0.b32.cont [13/16] 0.0, 128
        %3771 = vxpose.xlu0.b32.cont [14/16] 0.0, 128
        %3772 = vxpose.xlu0.b32.cont [15/16] 0.0, 128
        %3773 = vxpose.xlu0.b32.end [16/16] 0.0, 128
        %v3774 = vpop.trf.xlu0
        %v3775 = vpop.trf.xlu0
        %v3776 = vpop.trf.xlu0
        %v3777 = vpop.trf.xlu0
        %v3778 = vpop.trf.xlu0
        %v3779 = vpop.trf.xlu0
        %v3780 = vpop.trf.xlu0
        %v3781 = vpop.trf.xlu0
        %v3782 = vpop.trf.xlu0
        %v3783 = vpop.trf.xlu0
        %v3784 = vpop.trf.xlu0
        %v3785 = vpop.trf.xlu0
        %v3786 = vpop.trf.xlu0
        %v3787 = vpop.trf.xlu0
        %v3788 = vpop.trf.xlu0
        %v3789 = vpop.trf.xlu0
        %3790 = vxpose.xlu0.b32.start [1/16] %v2103, 128
        %3791 = vxpose.xlu0.b32.cont [2/16] 0.0, 128
        %3792 = vxpose.xlu0.b32.cont [3/16] 0.0, 128
        %3793 = vxpose.xlu0.b32.cont [4/16] 0.0, 128
        %3794 = vxpose.xlu0.b32.cont [5/16] 0.0, 128
        %3795 = vxpose.xlu0.b32.cont [6/16] 0.0, 128
        %3796 = vxpose.xlu0.b32.cont [7/16] 0.0, 128
        %3797 = vxpose.xlu0.b32.cont [8/16] 0.0, 128
        %3798 = vxpose.xlu0.b32.cont [9/16] 0.0, 128
        %3799 = vxpose.xlu0.b32.cont [10/16] 0.0, 128
        %3800 = vxpose.xlu0.b32.cont [11/16] 0.0, 128
        %3801 = vxpose.xlu0.b32.cont [12/16] 0.0, 128
        %3802 = vxpose.xlu0.b32.cont [13/16] 0.0, 128
        %3803 = vxpose.xlu0.b32.cont [14/16] 0.0, 128
        %3804 = vxpose.xlu0.b32.cont [15/16] 0.0, 128
        %3805 = vxpose.xlu0.b32.end [16/16] 0.0, 128
        %v3806 = vpop.trf.xlu0
        %v3807 = vpop.trf.xlu0
        %v3808 = vpop.trf.xlu0
        %v3809 = vpop.trf.xlu0
        %v3810 = vpop.trf.xlu0
        %v3811 = vpop.trf.xlu0
        %v3812 = vpop.trf.xlu0
        %v3813 = vpop.trf.xlu0
        %v3814 = vpop.trf.xlu0
        %v3815 = vpop.trf.xlu0
        %v3816 = vpop.trf.xlu0
        %v3817 = vpop.trf.xlu0
        %v3818 = vpop.trf.xlu0
        %v3819 = vpop.trf.xlu0
        %v3820 = vpop.trf.xlu0
        %v3821 = vpop.trf.xlu0
        %3822 = vxpose.xlu0.b32.start [1/16] %v2104, 128
        %3823 = vxpose.xlu0.b32.cont [2/16] 0.0, 128
        %3824 = vxpose.xlu0.b32.cont [3/16] 0.0, 128
        %3825 = vxpose.xlu0.b32.cont [4/16] 0.0, 128
        %3826 = vxpose.xlu0.b32.cont [5/16] 0.0, 128
        %3827 = vxpose.xlu0.b32.cont [6/16] 0.0, 128
        %3828 = vxpose.xlu0.b32.cont [7/16] 0.0, 128
        %3829 = vxpose.xlu0.b32.cont [8/16] 0.0, 128
        %3830 = vxpose.xlu0.b32.cont [9/16] 0.0, 128
        %3831 = vxpose.xlu0.b32.cont [10/16] 0.0, 128
        %3832 = vxpose.xlu0.b32.cont [11/16] 0.0, 128
        %3833 = vxpose.xlu0.b32.cont [12/16] 0.0, 128
        %3834 = vxpose.xlu0.b32.cont [13/16] 0.0, 128
        %3835 = vxpose.xlu0.b32.cont [14/16] 0.0, 128
        %3836 = vxpose.xlu0.b32.cont [15/16] 0.0, 128
        %3837 = vxpose.xlu0.b32.end [16/16] 0.0, 128
        %v3838 = vpop.trf.xlu0
        %v3839 = vpop.trf.xlu0
        %v3840 = vpop.trf.xlu0
        %v3841 = vpop.trf.xlu0
        %v3842 = vpop.trf.xlu0
        %v3843 = vpop.trf.xlu0
        %v3844 = vpop.trf.xlu0
        %v3845 = vpop.trf.xlu0
        %v3846 = vpop.trf.xlu0
        %v3847 = vpop.trf.xlu0
        %v3848 = vpop.trf.xlu0
        %v3849 = vpop.trf.xlu0
        %v3850 = vpop.trf.xlu0
        %v3851 = vpop.trf.xlu0
        %v3852 = vpop.trf.xlu0
        %v3853 = vpop.trf.xlu0
        %3854 = vxpose.xlu0.b32.start [1/16] %v2105, 128
        %3855 = vxpose.xlu0.b32.cont [2/16] 0.0, 128
        %3856 = vxpose.xlu0.b32.cont [3/16] 0.0, 128
        %3857 = vxpose.xlu0.b32.cont [4/16] 0.0, 128
        %3858 = vxpose.xlu0.b32.cont [5/16] 0.0, 128
        %3859 = vxpose.xlu0.b32.cont [6/16] 0.0, 128
        %3860 = vxpose.xlu0.b32.cont [7/16] 0.0, 128
        %3861 = vxpose.xlu0.b32.cont [8/16] 0.0, 128
        %3862 = vxpose.xlu0.b32.cont [9/16] 0.0, 128
        %3863 = vxpose.xlu0.b32.cont [10/16] 0.0, 128
        %3864 = vxpose.xlu0.b32.cont [11/16] 0.0, 128
        %3865 = vxpose.xlu0.b32.cont [12/16] 0.0, 128
        %3866 = vxpose.xlu0.b32.cont [13/16] 0.0, 128
        %3867 = vxpose.xlu0.b32.cont [14/16] 0.0, 128
        %3868 = vxpose.xlu0.b32.cont [15/16] 0.0, 128
        %3869 = vxpose.xlu0.b32.end [16/16] 0.0, 128
        %v3870 = vpop.trf.xlu0
        %v3871 = vpop.trf.xlu0
        %v3872 = vpop.trf.xlu0
        %v3873 = vpop.trf.xlu0
        %v3874 = vpop.trf.xlu0
        %v3875 = vpop.trf.xlu0
        %v3876 = vpop.trf.xlu0
        %v3877 = vpop.trf.xlu0
        %v3878 = vpop.trf.xlu0
        %v3879 = vpop.trf.xlu0
        %v3880 = vpop.trf.xlu0
        %v3881 = vpop.trf.xlu0
        %v3882 = vpop.trf.xlu0
        %v3883 = vpop.trf.xlu0
        %v3884 = vpop.trf.xlu0
        %v3885 = vpop.trf.xlu0
        %3886 = vxpose.xlu0.b32.start [1/16] %v2106, 128
        %3887 = vxpose.xlu0.b32.cont [2/16] 0.0, 128
        %3888 = vxpose.xlu0.b32.cont [3/16] 0.0, 128
        %3889 = vxpose.xlu0.b32.cont [4/16] 0.0, 128
        %3890 = vxpose.xlu0.b32.cont [5/16] 0.0, 128
        %3891 = vxpose.xlu0.b32.cont [6/16] 0.0, 128
        %3892 = vxpose.xlu0.b32.cont [7/16] 0.0, 128
        %3893 = vxpose.xlu0.b32.cont [8/16] 0.0, 128
        %3894 = vxpose.xlu0.b32.cont [9/16] 0.0, 128
        %3895 = vxpose.xlu0.b32.cont [10/16] 0.0, 128
        %3896 = vxpose.xlu0.b32.cont [11/16] 0.0, 128
        %3897 = vxpose.xlu0.b32.cont [12/16] 0.0, 128
        %3898 = vxpose.xlu0.b32.cont [13/16] 0.0, 128
        %3899 = vxpose.xlu0.b32.cont [14/16] 0.0, 128
        %3900 = vxpose.xlu0.b32.cont [15/16] 0.0, 128
        %3901 = vxpose.xlu0.b32.end [16/16] 0.0, 128
        %v3902 = vpop.trf.xlu0
        %v3903 = vpop.trf.xlu0
        %v3904 = vpop.trf.xlu0
        %v3905 = vpop.trf.xlu0
        %v3906 = vpop.trf.xlu0
        %v3907 = vpop.trf.xlu0
        %v3908 = vpop.trf.xlu0
        %v3909 = vpop.trf.xlu0
        %v3910 = vpop.trf.xlu0
        %v3911 = vpop.trf.xlu0
        %v3912 = vpop.trf.xlu0
        %v3913 = vpop.trf.xlu0
        %v3914 = vpop.trf.xlu0
        %v3915 = vpop.trf.xlu0
        %v3916 = vpop.trf.xlu0
        %v3917 = vpop.trf.xlu0
        %3918 = vxpose.xlu0.b32.start [1/16] %v2107, 128
        %3919 = vxpose.xlu0.b32.cont [2/16] 0.0, 128
        %3920 = vxpose.xlu0.b32.cont [3/16] 0.0, 128
        %3921 = vxpose.xlu0.b32.cont [4/16] 0.0, 128
        %3922 = vxpose.xlu0.b32.cont [5/16] 0.0, 128
        %3923 = vxpose.xlu0.b32.cont [6/16] 0.0, 128
        %3924 = vxpose.xlu0.b32.cont [7/16] 0.0, 128
        %3925 = vxpose.xlu0.b32.cont [8/16] 0.0, 128
        %3926 = vxpose.xlu0.b32.cont [9/16] 0.0, 128
        %3927 = vxpose.xlu0.b32.cont [10/16] 0.0, 128
        %3928 = vxpose.xlu0.b32.cont [11/16] 0.0, 128
        %3929 = vxpose.xlu0.b32.cont [12/16] 0.0, 128
        %3930 = vxpose.xlu0.b32.cont [13/16] 0.0, 128
        %3931 = vxpose.xlu0.b32.cont [14/16] 0.0, 128
        %3932 = vxpose.xlu0.b32.cont [15/16] 0.0, 128
        %3933 = vxpose.xlu0.b32.end [16/16] 0.0, 128
        %v3934 = vpop.trf.xlu0
        %v3935 = vpop.trf.xlu0
        %v3936 = vpop.trf.xlu0
        %v3937 = vpop.trf.xlu0
        %v3938 = vpop.trf.xlu0
        %v3939 = vpop.trf.xlu0
        %v3940 = vpop.trf.xlu0
        %v3941 = vpop.trf.xlu0
        %v3942 = vpop.trf.xlu0
        %v3943 = vpop.trf.xlu0
        %v3944 = vpop.trf.xlu0
        %v3945 = vpop.trf.xlu0
        %v3946 = vpop.trf.xlu0
        %v3947 = vpop.trf.xlu0
        %v3948 = vpop.trf.xlu0
        %v3949 = vpop.trf.xlu0
        %3950 = vxpose.xlu0.b32.start [1/16] %v2108, 128
        %3951 = vxpose.xlu0.b32.cont [2/16] 0.0, 128
        %3952 = vxpose.xlu0.b32.cont [3/16] 0.0, 128
        %3953 = vxpose.xlu0.b32.cont [4/16] 0.0, 128
        %3954 = vxpose.xlu0.b32.cont [5/16] 0.0, 128
        %3955 = vxpose.xlu0.b32.cont [6/16] 0.0, 128
        %3956 = vxpose.xlu0.b32.cont [7/16] 0.0, 128
        %3957 = vxpose.xlu0.b32.cont [8/16] 0.0, 128
        %3958 = vxpose.xlu0.b32.cont [9/16] 0.0, 128
        %3959 = vxpose.xlu0.b32.cont [10/16] 0.0, 128
        %3960 = vxpose.xlu0.b32.cont [11/16] 0.0, 128
        %3961 = vxpose.xlu0.b32.cont [12/16] 0.0, 128
        %3962 = vxpose.xlu0.b32.cont [13/16] 0.0, 128
        %3963 = vxpose.xlu0.b32.cont [14/16] 0.0, 128
        %3964 = vxpose.xlu0.b32.cont [15/16] 0.0, 128
        %3965 = vxpose.xlu0.b32.end [16/16] 0.0, 128
        %v3966 = vpop.trf.xlu0
        %v3967 = vpop.trf.xlu0
        %v3968 = vpop.trf.xlu0
        %v3969 = vpop.trf.xlu0
        %v3970 = vpop.trf.xlu0
        %v3971 = vpop.trf.xlu0
        %v3972 = vpop.trf.xlu0
        %v3973 = vpop.trf.xlu0
        %v3974 = vpop.trf.xlu0
        %v3975 = vpop.trf.xlu0
        %v3976 = vpop.trf.xlu0
        %v3977 = vpop.trf.xlu0
        %v3978 = vpop.trf.xlu0
        %v3979 = vpop.trf.xlu0
        %v3980 = vpop.trf.xlu0
        %v3981 = vpop.trf.xlu0
        %3982 = vxpose.xlu0.b32.start [1/16] %v2109, 128
        %3983 = vxpose.xlu0.b32.cont [2/16] 0.0, 128
        %3984 = vxpose.xlu0.b32.cont [3/16] 0.0, 128
        %3985 = vxpose.xlu0.b32.cont [4/16] 0.0, 128
        %3986 = vxpose.xlu0.b32.cont [5/16] 0.0, 128
        %3987 = vxpose.xlu0.b32.cont [6/16] 0.0, 128
        %3988 = vxpose.xlu0.b32.cont [7/16] 0.0, 128
        %3989 = vxpose.xlu0.b32.cont [8/16] 0.0, 128
        %3990 = vxpose.xlu0.b32.cont [9/16] 0.0, 128
        %3991 = vxpose.xlu0.b32.cont [10/16] 0.0, 128
        %3992 = vxpose.xlu0.b32.cont [11/16] 0.0, 128
        %3993 = vxpose.xlu0.b32.cont [12/16] 0.0, 128
        %3994 = vxpose.xlu0.b32.cont [13/16] 0.0, 128
        %3995 = vxpose.xlu0.b32.cont [14/16] 0.0, 128
        %3996 = vxpose.xlu0.b32.cont [15/16] 0.0, 128
        %3997 = vxpose.xlu0.b32.end [16/16] 0.0, 128
        %v3998 = vpop.trf.xlu0
        %v3999 = vpop.trf.xlu0
        %v4000 = vpop.trf.xlu0
        %v4001 = vpop.trf.xlu0
        %v4002 = vpop.trf.xlu0
        %v4003 = vpop.trf.xlu0
        %v4004 = vpop.trf.xlu0
        %v4005 = vpop.trf.xlu0
        %v4006 = vpop.trf.xlu0
        %v4007 = vpop.trf.xlu0
        %v4008 = vpop.trf.xlu0
        %v4009 = vpop.trf.xlu0
        %v4010 = vpop.trf.xlu0
        %v4011 = vpop.trf.xlu0
        %v4012 = vpop.trf.xlu0
        %v4013 = vpop.trf.xlu0
        %4014 = vxpose.xlu0.b32.start [1/16] %v2110, 128
        %4015 = vxpose.xlu0.b32.cont [2/16] 0.0, 128
        %4016 = vxpose.xlu0.b32.cont [3/16] 0.0, 128
        %4017 = vxpose.xlu0.b32.cont [4/16] 0.0, 128
        %4018 = vxpose.xlu0.b32.cont [5/16] 0.0, 128
        %4019 = vxpose.xlu0.b32.cont [6/16] 0.0, 128
        %4020 = vxpose.xlu0.b32.cont [7/16] 0.0, 128
        %4021 = vxpose.xlu0.b32.cont [8/16] 0.0, 128
        %4022 = vxpose.xlu0.b32.cont [9/16] 0.0, 128
        %4023 = vxpose.xlu0.b32.cont [10/16] 0.0, 128
        %4024 = vxpose.xlu0.b32.cont [11/16] 0.0, 128
        %4025 = vxpose.xlu0.b32.cont [12/16] 0.0, 128
        %4026 = vxpose.xlu0.b32.cont [13/16] 0.0, 128
        %4027 = vxpose.xlu0.b32.cont [14/16] 0.0, 128
        %4028 = vxpose.xlu0.b32.cont [15/16] 0.0, 128
        %4029 = vxpose.xlu0.b32.end [16/16] 0.0, 128
        %v4030 = vpop.trf.xlu0
        %v4031 = vpop.trf.xlu0
        %v4032 = vpop.trf.xlu0
        %v4033 = vpop.trf.xlu0
        %v4034 = vpop.trf.xlu0
        %v4035 = vpop.trf.xlu0
        %v4036 = vpop.trf.xlu0
        %v4037 = vpop.trf.xlu0
        %v4038 = vpop.trf.xlu0
        %v4039 = vpop.trf.xlu0
        %v4040 = vpop.trf.xlu0
        %v4041 = vpop.trf.xlu0
        %v4042 = vpop.trf.xlu0
        %v4043 = vpop.trf.xlu0
        %v4044 = vpop.trf.xlu0
        %v4045 = vpop.trf.xlu0
        %4046 = vxpose.xlu0.b32.start [1/16] %v2111, 128
        %4047 = vxpose.xlu0.b32.cont [2/16] 0.0, 128
        %4048 = vxpose.xlu0.b32.cont [3/16] 0.0, 128
        %4049 = vxpose.xlu0.b32.cont [4/16] 0.0, 128
        %4050 = vxpose.xlu0.b32.cont [5/16] 0.0, 128
        %4051 = vxpose.xlu0.b32.cont [6/16] 0.0, 128
        %4052 = vxpose.xlu0.b32.cont [7/16] 0.0, 128
        %4053 = vxpose.xlu0.b32.cont [8/16] 0.0, 128
        %4054 = vxpose.xlu0.b32.cont [9/16] 0.0, 128
        %4055 = vxpose.xlu0.b32.cont [10/16] 0.0, 128
        %4056 = vxpose.xlu0.b32.cont [11/16] 0.0, 128
        %4057 = vxpose.xlu0.b32.cont [12/16] 0.0, 128
        %4058 = vxpose.xlu0.b32.cont [13/16] 0.0, 128
        %4059 = vxpose.xlu0.b32.cont [14/16] 0.0, 128
        %4060 = vxpose.xlu0.b32.cont [15/16] 0.0, 128
        %4061 = vxpose.xlu0.b32.end [16/16] 0.0, 128
        %v4062 = vpop.trf.xlu0
        %v4063 = vpop.trf.xlu0
        %v4064 = vpop.trf.xlu0
        %v4065 = vpop.trf.xlu0
        %v4066 = vpop.trf.xlu0
        %v4067 = vpop.trf.xlu0
        %v4068 = vpop.trf.xlu0
        %v4069 = vpop.trf.xlu0
        %v4070 = vpop.trf.xlu0
        %v4071 = vpop.trf.xlu0
        %v4072 = vpop.trf.xlu0
        %v4073 = vpop.trf.xlu0
        %v4074 = vpop.trf.xlu0
        %v4075 = vpop.trf.xlu0
        %v4076 = vpop.trf.xlu0
        %v4077 = vpop.trf.xlu0
        %4078 = vxpose.xlu0.b32.start [1/16] %v2112, 128
        %4079 = vxpose.xlu0.b32.cont [2/16] 0.0, 128
        %4080 = vxpose.xlu0.b32.cont [3/16] 0.0, 128
        %4081 = vxpose.xlu0.b32.cont [4/16] 0.0, 128
        %4082 = vxpose.xlu0.b32.cont [5/16] 0.0, 128
        %4083 = vxpose.xlu0.b32.cont [6/16] 0.0, 128
        %4084 = vxpose.xlu0.b32.cont [7/16] 0.0, 128
        %4085 = vxpose.xlu0.b32.cont [8/16] 0.0, 128
        %4086 = vxpose.xlu0.b32.cont [9/16] 0.0, 128
        %4087 = vxpose.xlu0.b32.cont [10/16] 0.0, 128
        %4088 = vxpose.xlu0.b32.cont [11/16] 0.0, 128
        %4089 = vxpose.xlu0.b32.cont [12/16] 0.0, 128
        %4090 = vxpose.xlu0.b32.cont [13/16] 0.0, 128
        %4091 = vxpose.xlu0.b32.cont [14/16] 0.0, 128
        %4092 = vxpose.xlu0.b32.cont [15/16] 0.0, 128
        %4093 = vxpose.xlu0.b32.end [16/16] 0.0, 128
        %v4094 = vpop.trf.xlu0
        %v4095 = vpop.trf.xlu0
        %v4096 = vpop.trf.xlu0
        %v4097 = vpop.trf.xlu0
        %v4098 = vpop.trf.xlu0
        %v4099 = vpop.trf.xlu0
        %v4100 = vpop.trf.xlu0
        %v4101 = vpop.trf.xlu0
        %v4102 = vpop.trf.xlu0
        %v4103 = vpop.trf.xlu0
        %v4104 = vpop.trf.xlu0
        %v4105 = vpop.trf.xlu0
        %v4106 = vpop.trf.xlu0
        %v4107 = vpop.trf.xlu0
        %v4108 = vpop.trf.xlu0
        %v4109 = vpop.trf.xlu0
        %4110 = vxpose.xlu0.b32.start [1/16] %v2113, 128
        %4111 = vxpose.xlu0.b32.cont [2/16] 0.0, 128
        %4112 = vxpose.xlu0.b32.cont [3/16] 0.0, 128
        %4113 = vxpose.xlu0.b32.cont [4/16] 0.0, 128
        %4114 = vxpose.xlu0.b32.cont [5/16] 0.0, 128
        %4115 = vxpose.xlu0.b32.cont [6/16] 0.0, 128
        %4116 = vxpose.xlu0.b32.cont [7/16] 0.0, 128
        %4117 = vxpose.xlu0.b32.cont [8/16] 0.0, 128
        %4118 = vxpose.xlu0.b32.cont [9/16] 0.0, 128
        %4119 = vxpose.xlu0.b32.cont [10/16] 0.0, 128
        %4120 = vxpose.xlu0.b32.cont [11/16] 0.0, 128
        %4121 = vxpose.xlu0.b32.cont [12/16] 0.0, 128
        %4122 = vxpose.xlu0.b32.cont [13/16] 0.0, 128
        %4123 = vxpose.xlu0.b32.cont [14/16] 0.0, 128
        %4124 = vxpose.xlu0.b32.cont [15/16] 0.0, 128
        %4125 = vxpose.xlu0.b32.end [16/16] 0.0, 128
        %v4126 = vpop.trf.xlu0
        %v4127 = vpop.trf.xlu0
        %v4128 = vpop.trf.xlu0
        %v4129 = vpop.trf.xlu0
        %v4130 = vpop.trf.xlu0
        %v4131 = vpop.trf.xlu0
        %v4132 = vpop.trf.xlu0
        %v4133 = vpop.trf.xlu0
        %v4134 = vpop.trf.xlu0
        %v4135 = vpop.trf.xlu0
        %v4136 = vpop.trf.xlu0
        %v4137 = vpop.trf.xlu0
        %v4138 = vpop.trf.xlu0
        %v4139 = vpop.trf.xlu0
        %v4140 = vpop.trf.xlu0
        %v4141 = vpop.trf.xlu0
        %4142 = vxpose.xlu0.b32.start [1/16] %v2114, 128
        %4143 = vxpose.xlu0.b32.cont [2/16] 0.0, 128
        %4144 = vxpose.xlu0.b32.cont [3/16] 0.0, 128
        %4145 = vxpose.xlu0.b32.cont [4/16] 0.0, 128
        %4146 = vxpose.xlu0.b32.cont [5/16] 0.0, 128
        %4147 = vxpose.xlu0.b32.cont [6/16] 0.0, 128
        %4148 = vxpose.xlu0.b32.cont [7/16] 0.0, 128
        %4149 = vxpose.xlu0.b32.cont [8/16] 0.0, 128
        %4150 = vxpose.xlu0.b32.cont [9/16] 0.0, 128
        %4151 = vxpose.xlu0.b32.cont [10/16] 0.0, 128
        %4152 = vxpose.xlu0.b32.cont [11/16] 0.0, 128
        %4153 = vxpose.xlu0.b32.cont [12/16] 0.0, 128
        %4154 = vxpose.xlu0.b32.cont [13/16] 0.0, 128
        %4155 = vxpose.xlu0.b32.cont [14/16] 0.0, 128
        %4156 = vxpose.xlu0.b32.cont [15/16] 0.0, 128
        %4157 = vxpose.xlu0.b32.end [16/16] 0.0, 128
        %v4158 = vpop.trf.xlu0
        %v4159 = vpop.trf.xlu0
        %v4160 = vpop.trf.xlu0
        %v4161 = vpop.trf.xlu0
        %v4162 = vpop.trf.xlu0
        %v4163 = vpop.trf.xlu0
        %v4164 = vpop.trf.xlu0
        %v4165 = vpop.trf.xlu0
        %v4166 = vpop.trf.xlu0
        %v4167 = vpop.trf.xlu0
        %v4168 = vpop.trf.xlu0
        %v4169 = vpop.trf.xlu0
        %v4170 = vpop.trf.xlu0
        %v4171 = vpop.trf.xlu0
        %v4172 = vpop.trf.xlu0
        %v4173 = vpop.trf.xlu0
        %4174 = vxpose.xlu0.b32.start [1/16] %v2115, 128
        %4175 = vxpose.xlu0.b32.cont [2/16] 0.0, 128
        %4176 = vxpose.xlu0.b32.cont [3/16] 0.0, 128
        %4177 = vxpose.xlu0.b32.cont [4/16] 0.0, 128
        %4178 = vxpose.xlu0.b32.cont [5/16] 0.0, 128
        %4179 = vxpose.xlu0.b32.cont [6/16] 0.0, 128
        %4180 = vxpose.xlu0.b32.cont [7/16] 0.0, 128
        %4181 = vxpose.xlu0.b32.cont [8/16] 0.0, 128
        %4182 = vxpose.xlu0.b32.cont [9/16] 0.0, 128
        %4183 = vxpose.xlu0.b32.cont [10/16] 0.0, 128
        %4184 = vxpose.xlu0.b32.cont [11/16] 0.0, 128
        %4185 = vxpose.xlu0.b32.cont [12/16] 0.0, 128
        %4186 = vxpose.xlu0.b32.cont [13/16] 0.0, 128
        %4187 = vxpose.xlu0.b32.cont [14/16] 0.0, 128
        %4188 = vxpose.xlu0.b32.cont [15/16] 0.0, 128
        %4189 = vxpose.xlu0.b32.end [16/16] 0.0, 128
        %v4190 = vpop.trf.xlu0
        %v4191 = vpop.trf.xlu0
        %v4192 = vpop.trf.xlu0
        %v4193 = vpop.trf.xlu0
        %v4194 = vpop.trf.xlu0
        %v4195 = vpop.trf.xlu0
        %v4196 = vpop.trf.xlu0
        %v4197 = vpop.trf.xlu0
        %v4198 = vpop.trf.xlu0
        %v4199 = vpop.trf.xlu0
        %v4200 = vpop.trf.xlu0
        %v4201 = vpop.trf.xlu0
        %v4202 = vpop.trf.xlu0
        %v4203 = vpop.trf.xlu0
        %v4204 = vpop.trf.xlu0
        %v4205 = vpop.trf.xlu0
        %4206 = vxpose.xlu0.b32.start [1/16] %v2116, 128
        %4207 = vxpose.xlu0.b32.cont [2/16] 0.0, 128
        %4208 = vxpose.xlu0.b32.cont [3/16] 0.0, 128
        %4209 = vxpose.xlu0.b32.cont [4/16] 0.0, 128
        %4210 = vxpose.xlu0.b32.cont [5/16] 0.0, 128
        %4211 = vxpose.xlu0.b32.cont [6/16] 0.0, 128
        %4212 = vxpose.xlu0.b32.cont [7/16] 0.0, 128
        %4213 = vxpose.xlu0.b32.cont [8/16] 0.0, 128
        %4214 = vxpose.xlu0.b32.cont [9/16] 0.0, 128
        %4215 = vxpose.xlu0.b32.cont [10/16] 0.0, 128
        %4216 = vxpose.xlu0.b32.cont [11/16] 0.0, 128
        %4217 = vxpose.xlu0.b32.cont [12/16] 0.0, 128
        %4218 = vxpose.xlu0.b32.cont [13/16] 0.0, 128
        %4219 = vxpose.xlu0.b32.cont [14/16] 0.0, 128
        %4220 = vxpose.xlu0.b32.cont [15/16] 0.0, 128
        %4221 = vxpose.xlu0.b32.end [16/16] 0.0, 128
        %v4222 = vpop.trf.xlu0
        %v4223 = vpop.trf.xlu0
        %v4224 = vpop.trf.xlu0
        %v4225 = vpop.trf.xlu0
        %v4226 = vpop.trf.xlu0
        %v4227 = vpop.trf.xlu0
        %v4228 = vpop.trf.xlu0
        %v4229 = vpop.trf.xlu0
        %v4230 = vpop.trf.xlu0
        %v4231 = vpop.trf.xlu0
        %v4232 = vpop.trf.xlu0
        %v4233 = vpop.trf.xlu0
        %v4234 = vpop.trf.xlu0
        %v4235 = vpop.trf.xlu0
        %v4236 = vpop.trf.xlu0
        %v4237 = vpop.trf.xlu0
        %4238 = vxpose.xlu0.b32.start [1/16] %v2117, 128
        %4239 = vxpose.xlu0.b32.cont [2/16] 0.0, 128
        %4240 = vxpose.xlu0.b32.cont [3/16] 0.0, 128
        %4241 = vxpose.xlu0.b32.cont [4/16] 0.0, 128
        %4242 = vxpose.xlu0.b32.cont [5/16] 0.0, 128
        %4243 = vxpose.xlu0.b32.cont [6/16] 0.0, 128
        %4244 = vxpose.xlu0.b32.cont [7/16] 0.0, 128
        %4245 = vxpose.xlu0.b32.cont [8/16] 0.0, 128
        %4246 = vxpose.xlu0.b32.cont [9/16] 0.0, 128
        %4247 = vxpose.xlu0.b32.cont [10/16] 0.0, 128
        %4248 = vxpose.xlu0.b32.cont [11/16] 0.0, 128
        %4249 = vxpose.xlu0.b32.cont [12/16] 0.0, 128
        %4250 = vxpose.xlu0.b32.cont [13/16] 0.0, 128
        %4251 = vxpose.xlu0.b32.cont [14/16] 0.0, 128
        %4252 = vxpose.xlu0.b32.cont [15/16] 0.0, 128
        %4253 = vxpose.xlu0.b32.end [16/16] 0.0, 128
        %v4254 = vpop.trf.xlu0
        %v4255 = vpop.trf.xlu0
        %v4256 = vpop.trf.xlu0
        %v4257 = vpop.trf.xlu0
        %v4258 = vpop.trf.xlu0
        %v4259 = vpop.trf.xlu0
        %v4260 = vpop.trf.xlu0
        %v4261 = vpop.trf.xlu0
        %v4262 = vpop.trf.xlu0
        %v4263 = vpop.trf.xlu0
        %v4264 = vpop.trf.xlu0
        %v4265 = vpop.trf.xlu0
        %v4266 = vpop.trf.xlu0
        %v4267 = vpop.trf.xlu0
        %v4268 = vpop.trf.xlu0
        %v4269 = vpop.trf.xlu0
        %vm4270 = vcmask 64512
        %v4271 = vsel %vm4270, %v3774, 0.0
        %4272 = vadd.xlane.f32.xlu0 %v4271
        %v4273 = vpop.xlane.xlu0 %4272
        %v4274 = vsel %vm4270, %v3775, 0.0
        %4275 = vadd.xlane.f32.xlu0 %v4274
        %v4276 = vpop.xlane.xlu0 %4275
        %v4277 = vsel %vm4270, %v3776, 0.0
        %4278 = vadd.xlane.f32.xlu0 %v4277
        %v4279 = vpop.xlane.xlu0 %4278
        %v4280 = vsel %vm4270, %v3777, 0.0
        %4281 = vadd.xlane.f32.xlu0 %v4280
        %v4282 = vpop.xlane.xlu0 %4281
        %v4283 = vsel %vm4270, %v3806, 0.0
        %4284 = vadd.xlane.f32.xlu0 %v4283
        %v4285 = vpop.xlane.xlu0 %4284
        %v4286 = vsel %vm4270, %v3807, 0.0
        %4287 = vadd.xlane.f32.xlu0 %v4286
        %v4288 = vpop.xlane.xlu0 %4287
        %v4289 = vsel %vm4270, %v3808, 0.0
        %4290 = vadd.xlane.f32.xlu0 %v4289
        %v4291 = vpop.xlane.xlu0 %4290
        %v4292 = vsel %vm4270, %v3809, 0.0
        %4293 = vadd.xlane.f32.xlu0 %v4292
        %v4294 = vpop.xlane.xlu0 %4293
        %v4295 = vsel %vm4270, %v3838, 0.0
        %4296 = vadd.xlane.f32.xlu0 %v4295
        %v4297 = vpop.xlane.xlu0 %4296
        %v4298 = vsel %vm4270, %v3839, 0.0
        %4299 = vadd.xlane.f32.xlu0 %v4298
        %v4300 = vpop.xlane.xlu0 %4299
        %v4301 = vsel %vm4270, %v3840, 0.0
        %4302 = vadd.xlane.f32.xlu0 %v4301
        %v4303 = vpop.xlane.xlu0 %4302
        %v4304 = vsel %vm4270, %v3841, 0.0
        %4305 = vadd.xlane.f32.xlu0 %v4304
        %v4306 = vpop.xlane.xlu0 %4305
        %v4307 = vsel %vm4270, %v3870, 0.0
        %4308 = vadd.xlane.f32.xlu0 %v4307
        %v4309 = vpop.xlane.xlu0 %4308
        %v4310 = vsel %vm4270, %v3871, 0.0
        %4311 = vadd.xlane.f32.xlu0 %v4310
        %v4312 = vpop.xlane.xlu0 %4311
        %v4313 = vsel %vm4270, %v3872, 0.0
        %4314 = vadd.xlane.f32.xlu0 %v4313
        %v4315 = vpop.xlane.xlu0 %4314
        %v4316 = vsel %vm4270, %v3873, 0.0
        %4317 = vadd.xlane.f32.xlu0 %v4316
        %v4318 = vpop.xlane.xlu0 %4317
        %v4319 = vsel %vm4270, %v3902, 0.0
        %4320 = vadd.xlane.f32.xlu0 %v4319
        %v4321 = vpop.xlane.xlu0 %4320
        %v4322 = vsel %vm4270, %v3903, 0.0
        %4323 = vadd.xlane.f32.xlu0 %v4322
        %v4324 = vpop.xlane.xlu0 %4323
        %v4325 = vsel %vm4270, %v3904, 0.0
        %4326 = vadd.xlane.f32.xlu0 %v4325
        %v4327 = vpop.xlane.xlu0 %4326
        %v4328 = vsel %vm4270, %v3905, 0.0
        %4329 = vadd.xlane.f32.xlu0 %v4328
        %v4330 = vpop.xlane.xlu0 %4329
        %v4331 = vsel %vm4270, %v3934, 0.0
        %4332 = vadd.xlane.f32.xlu0 %v4331
        %v4333 = vpop.xlane.xlu0 %4332
        %v4334 = vsel %vm4270, %v3935, 0.0
        %4335 = vadd.xlane.f32.xlu0 %v4334
        %v4336 = vpop.xlane.xlu0 %4335
        %v4337 = vsel %vm4270, %v3936, 0.0
        %4338 = vadd.xlane.f32.xlu0 %v4337
        %v4339 = vpop.xlane.xlu0 %4338
        %v4340 = vsel %vm4270, %v3937, 0.0
        %4341 = vadd.xlane.f32.xlu0 %v4340
        %v4342 = vpop.xlane.xlu0 %4341
        %v4343 = vsel %vm4270, %v3966, 0.0
        %4344 = vadd.xlane.f32.xlu0 %v4343
        %v4345 = vpop.xlane.xlu0 %4344
        %v4346 = vsel %vm4270, %v3967, 0.0
        %4347 = vadd.xlane.f32.xlu0 %v4346
        %v4348 = vpop.xlane.xlu0 %4347
        %v4349 = vsel %vm4270, %v3968, 0.0
        %4350 = vadd.xlane.f32.xlu0 %v4349
        %v4351 = vpop.xlane.xlu0 %4350
        %v4352 = vsel %vm4270, %v3969, 0.0
        %4353 = vadd.xlane.f32.xlu0 %v4352
        %v4354 = vpop.xlane.xlu0 %4353
        %v4355 = vsel %vm4270, %v3998, 0.0
        %4356 = vadd.xlane.f32.xlu0 %v4355
        %v4357 = vpop.xlane.xlu0 %4356
        %v4358 = vsel %vm4270, %v3999, 0.0
        %4359 = vadd.xlane.f32.xlu0 %v4358
        %v4360 = vpop.xlane.xlu0 %4359
        %v4361 = vsel %vm4270, %v4000, 0.0
        %4362 = vadd.xlane.f32.xlu0 %v4361
        %v4363 = vpop.xlane.xlu0 %4362
        %v4364 = vsel %vm4270, %v4001, 0.0
        %4365 = vadd.xlane.f32.xlu0 %v4364
        %v4366 = vpop.xlane.xlu0 %4365
        %v4367 = vsel %vm4270, %v4030, 0.0
        %4368 = vadd.xlane.f32.xlu0 %v4367
        %v4369 = vpop.xlane.xlu0 %4368
        %v4370 = vsel %vm4270, %v4031, 0.0
        %4371 = vadd.xlane.f32.xlu0 %v4370
        %v4372 = vpop.xlane.xlu0 %4371
        %v4373 = vsel %vm4270, %v4032, 0.0
        %4374 = vadd.xlane.f32.xlu0 %v4373
        %v4375 = vpop.xlane.xlu0 %4374
        %v4376 = vsel %vm4270, %v4033, 0.0
        %4377 = vadd.xlane.f32.xlu0 %v4376
        %v4378 = vpop.xlane.xlu0 %4377
        %v4379 = vsel %vm4270, %v4062, 0.0
        %4380 = vadd.xlane.f32.xlu0 %v4379
        %v4381 = vpop.xlane.xlu0 %4380
        %v4382 = vsel %vm4270, %v4063, 0.0
        %4383 = vadd.xlane.f32.xlu0 %v4382
        %v4384 = vpop.xlane.xlu0 %4383
        %v4385 = vsel %vm4270, %v4064, 0.0
        %4386 = vadd.xlane.f32.xlu0 %v4385
        %v4387 = vpop.xlane.xlu0 %4386
        %v4388 = vsel %vm4270, %v4065, 0.0
        %4389 = vadd.xlane.f32.xlu0 %v4388
        %v4390 = vpop.xlane.xlu0 %4389
        %v4391 = vsel %vm4270, %v4094, 0.0
        %4392 = vadd.xlane.f32.xlu0 %v4391
        %v4393 = vpop.xlane.xlu0 %4392
        %v4394 = vsel %vm4270, %v4095, 0.0
        %4395 = vadd.xlane.f32.xlu0 %v4394
        %v4396 = vpop.xlane.xlu0 %4395
        %v4397 = vsel %vm4270, %v4096, 0.0
        %4398 = vadd.xlane.f32.xlu0 %v4397
        %v4399 = vpop.xlane.xlu0 %4398
        %v4400 = vsel %vm4270, %v4097, 0.0
        %4401 = vadd.xlane.f32.xlu0 %v4400
        %v4402 = vpop.xlane.xlu0 %4401
        %v4403 = vsel %vm4270, %v4126, 0.0
        %4404 = vadd.xlane.f32.xlu0 %v4403
        %v4405 = vpop.xlane.xlu0 %4404
        %v4406 = vsel %vm4270, %v4127, 0.0
        %4407 = vadd.xlane.f32.xlu0 %v4406
        %v4408 = vpop.xlane.xlu0 %4407
        %v4409 = vsel %vm4270, %v4128, 0.0
        %4410 = vadd.xlane.f32.xlu0 %v4409
        %v4411 = vpop.xlane.xlu0 %4410
        %v4412 = vsel %vm4270, %v4129, 0.0
        %4413 = vadd.xlane.f32.xlu0 %v4412
        %v4414 = vpop.xlane.xlu0 %4413
        %v4415 = vsel %vm4270, %v4158, 0.0
        %4416 = vadd.xlane.f32.xlu0 %v4415
        %v4417 = vpop.xlane.xlu0 %4416
        %v4418 = vsel %vm4270, %v4159, 0.0
        %4419 = vadd.xlane.f32.xlu0 %v4418
        %v4420 = vpop.xlane.xlu0 %4419
        %v4421 = vsel %vm4270, %v4160, 0.0
        %4422 = vadd.xlane.f32.xlu0 %v4421
        %v4423 = vpop.xlane.xlu0 %4422
        %v4424 = vsel %vm4270, %v4161, 0.0
        %4425 = vadd.xlane.f32.xlu0 %v4424
        %v4426 = vpop.xlane.xlu0 %4425
        %v4427 = vsel %vm4270, %v4190, 0.0
        %4428 = vadd.xlane.f32.xlu0 %v4427
        %v4429 = vpop.xlane.xlu0 %4428
        %v4430 = vsel %vm4270, %v4191, 0.0
        %4431 = vadd.xlane.f32.xlu0 %v4430
        %v4432 = vpop.xlane.xlu0 %4431
        %v4433 = vsel %vm4270, %v4192, 0.0
        %4434 = vadd.xlane.f32.xlu0 %v4433
        %v4435 = vpop.xlane.xlu0 %4434
        %v4436 = vsel %vm4270, %v4193, 0.0
        %4437 = vadd.xlane.f32.xlu0 %v4436
        %v4438 = vpop.xlane.xlu0 %4437
        %v4439 = vsel %vm4270, %v4222, 0.0
        %4440 = vadd.xlane.f32.xlu0 %v4439
        %v4441 = vpop.xlane.xlu0 %4440
        %v4442 = vsel %vm4270, %v4223, 0.0
        %4443 = vadd.xlane.f32.xlu0 %v4442
        %v4444 = vpop.xlane.xlu0 %4443
        %v4445 = vsel %vm4270, %v4224, 0.0
        %4446 = vadd.xlane.f32.xlu0 %v4445
        %v4447 = vpop.xlane.xlu0 %4446
        %v4448 = vsel %vm4270, %v4225, 0.0
        %4449 = vadd.xlane.f32.xlu0 %v4448
        %v4450 = vpop.xlane.xlu0 %4449
        %v4451 = vsel %vm4270, %v4254, 0.0
        %4452 = vadd.xlane.f32.xlu0 %v4451
        %v4453 = vpop.xlane.xlu0 %4452
        %v4454 = vsel %vm4270, %v4255, 0.0
        %4455 = vadd.xlane.f32.xlu0 %v4454
        %v4456 = vpop.xlane.xlu0 %4455
        %v4457 = vsel %vm4270, %v4256, 0.0
        %4458 = vadd.xlane.f32.xlu0 %v4457
        %v4459 = vpop.xlane.xlu0 %4458
        %v4460 = vsel %vm4270, %v4257, 0.0
        %4461 = vadd.xlane.f32.xlu0 %v4460
        %v4462 = vpop.xlane.xlu0 %4461
        %v4463 = vmul.f32 %v4273, %v3504
        %v4464 = vmul.f32 %v4276, %v3507
        %v4465 = vmul.f32 %v4279, %v3512
        %v4466 = vmul.f32 %v4282, %v3515
        %v4467 = vmul.f32 %v4285, %v3520
        %v4468 = vmul.f32 %v4288, %v3523
        %v4469 = vmul.f32 %v4291, %v3528
        %v4470 = vmul.f32 %v4294, %v3531
        %v4471 = vmul.f32 %v4297, %v3536
        %v4472 = vmul.f32 %v4300, %v3539
        %v4473 = vmul.f32 %v4303, %v3544
        %v4474 = vmul.f32 %v4306, %v3547
        %v4475 = vmul.f32 %v4309, %v3552
        %v4476 = vmul.f32 %v4312, %v3555
        %v4477 = vmul.f32 %v4315, %v3560
        %v4478 = vmul.f32 %v4318, %v3563
        %v4479 = vmul.f32 %v4321, %v3568
        %v4480 = vmul.f32 %v4324, %v3571
        %v4481 = vmul.f32 %v4327, %v3576
        %v4482 = vmul.f32 %v4330, %v3579
        %v4483 = vmul.f32 %v4333, %v3584
        %v4484 = vmul.f32 %v4336, %v3587
        %v4485 = vmul.f32 %v4339, %v3592
        %v4486 = vmul.f32 %v4342, %v3595
        %v4487 = vmul.f32 %v4345, %v3600
        %v4488 = vmul.f32 %v4348, %v3603
        %v4489 = vmul.f32 %v4351, %v3608
        %v4490 = vmul.f32 %v4354, %v3611
        %v4491 = vmul.f32 %v4357, %v3616
        %v4492 = vmul.f32 %v4360, %v3619
        %v4493 = vmul.f32 %v4363, %v3624
        %v4494 = vmul.f32 %v4366, %v3627
        %v4495 = vmul.f32 %v4369, %v3632
        %v4496 = vmul.f32 %v4372, %v3635
        %v4497 = vmul.f32 %v4375, %v3640
        %v4498 = vmul.f32 %v4378, %v3643
        %v4499 = vmul.f32 %v4381, %v3648
        %v4500 = vmul.f32 %v4384, %v3651
        %v4501 = vmul.f32 %v4387, %v3656
        %v4502 = vmul.f32 %v4390, %v3659
        %v4503 = vmul.f32 %v4393, %v3664
        %v4504 = vmul.f32 %v4396, %v3667
        %v4505 = vmul.f32 %v4399, %v3672
        %v4506 = vmul.f32 %v4402, %v3675
        %v4507 = vmul.f32 %v4405, %v3680
        %v4508 = vmul.f32 %v4408, %v3683
        %v4509 = vmul.f32 %v4411, %v3688
        %v4510 = vmul.f32 %v4414, %v3691
        %v4511 = vmul.f32 %v4417, %v3696
        %v4512 = vmul.f32 %v4420, %v3699
        %v4513 = vmul.f32 %v4423, %v3704
        %v4514 = vmul.f32 %v4426, %v3707
        %v4515 = vmul.f32 %v4429, %v3712
        %v4516 = vmul.f32 %v4432, %v3715
        %v4517 = vmul.f32 %v4435, %v3720
        %v4518 = vmul.f32 %v4438, %v3723
        %v4519 = vmul.f32 %v4441, %v3728
        %v4520 = vmul.f32 %v4444, %v3731
        %v4521 = vmul.f32 %v4447, %v3736
        %v4522 = vmul.f32 %v4450, %v3739
        %v4523 = vmul.f32 %v4453, %v3744
        %v4524 = vmul.f32 %v4456, %v3747
        %v4525 = vmul.f32 %v4459, %v3752
        %v4526 = vmul.f32 %v4462, %v3755
        %v4527 = vadd.f32 %v915, %v4463
        %v4528 = vadd.f32 %v918, %v4464
        %v4529 = vadd.f32 %v923, %v4465
        %v4530 = vadd.f32 %v926, %v4466
        %v4531 = vadd.f32 %v931, %v4467
        %v4532 = vadd.f32 %v934, %v4468
        %v4533 = vadd.f32 %v939, %v4469
        %v4534 = vadd.f32 %v942, %v4470
        %v4535 = vadd.f32 %v947, %v4471
        %v4536 = vadd.f32 %v950, %v4472
        %v4537 = vadd.f32 %v955, %v4473
        %v4538 = vadd.f32 %v958, %v4474
        %v4539 = vadd.f32 %v963, %v4475
        %v4540 = vadd.f32 %v966, %v4476
        %v4541 = vadd.f32 %v971, %v4477
        %v4542 = vadd.f32 %v974, %v4478
        %v4543 = vadd.f32 %v979, %v4479
        %v4544 = vadd.f32 %v982, %v4480
        %v4545 = vadd.f32 %v987, %v4481
        %v4546 = vadd.f32 %v990, %v4482
        %v4547 = vadd.f32 %v995, %v4483
        %v4548 = vadd.f32 %v998, %v4484
        %v4549 = vadd.f32 %v1003, %v4485
        %v4550 = vadd.f32 %v1006, %v4486
        %v4551 = vadd.f32 %v1011, %v4487
        %v4552 = vadd.f32 %v1014, %v4488
        %v4553 = vadd.f32 %v1019, %v4489
        %v4554 = vadd.f32 %v1022, %v4490
        %v4555 = vadd.f32 %v1027, %v4491
        %v4556 = vadd.f32 %v1030, %v4492
        %v4557 = vadd.f32 %v1035, %v4493
        %v4558 = vadd.f32 %v1038, %v4494
        %v4559 = vadd.f32 %v1043, %v4495
        %v4560 = vadd.f32 %v1046, %v4496
        %v4561 = vadd.f32 %v1051, %v4497
        %v4562 = vadd.f32 %v1054, %v4498
        %v4563 = vadd.f32 %v1059, %v4499
        %v4564 = vadd.f32 %v1062, %v4500
        %v4565 = vadd.f32 %v1067, %v4501
        %v4566 = vadd.f32 %v1070, %v4502
        %v4567 = vadd.f32 %v1075, %v4503
        %v4568 = vadd.f32 %v1078, %v4504
        %v4569 = vadd.f32 %v1083, %v4505
        %v4570 = vadd.f32 %v1086, %v4506
        %v4571 = vadd.f32 %v1091, %v4507
        %v4572 = vadd.f32 %v1094, %v4508
        %v4573 = vadd.f32 %v1099, %v4509
        %v4574 = vadd.f32 %v1102, %v4510
        %v4575 = vadd.f32 %v1107, %v4511
        %v4576 = vadd.f32 %v1110, %v4512
        %v4577 = vadd.f32 %v1115, %v4513
        %v4578 = vadd.f32 %v1118, %v4514
        %v4579 = vadd.f32 %v1123, %v4515
        %v4580 = vadd.f32 %v1126, %v4516
        %v4581 = vadd.f32 %v1131, %v4517
        %v4582 = vadd.f32 %v1134, %v4518
        %v4583 = vadd.f32 %v1139, %v4519
        %v4584 = vadd.f32 %v1142, %v4520
        %v4585 = vadd.f32 %v1147, %v4521
        %v4586 = vadd.f32 %v1150, %v4522
        %v4587 = vadd.f32 %v1155, %v4523
        %v4588 = vadd.f32 %v1158, %v4524
        %v4589 = vadd.f32 %v1163, %v4525
        %v4590 = vadd.f32 %v1166, %v4526
        %v4591 = vpack.c.bf16 %v4528, %v4527
        %v4592 = vpack.c.bf16 %v4530, %v4529
        %v4593 = vpack.c.bf16 %v4532, %v4531
        %v4594 = vpack.c.bf16 %v4534, %v4533
        %v4595 = vpack.c.bf16 %v4536, %v4535
        %v4596 = vpack.c.bf16 %v4538, %v4537
        %v4597 = vpack.c.bf16 %v4540, %v4539
        %v4598 = vpack.c.bf16 %v4542, %v4541
        %v4599 = vpack.c.bf16 %v4544, %v4543
        %v4600 = vpack.c.bf16 %v4546, %v4545
        %v4601 = vpack.c.bf16 %v4548, %v4547
        %v4602 = vpack.c.bf16 %v4550, %v4549
        %v4603 = vpack.c.bf16 %v4552, %v4551
        %v4604 = vpack.c.bf16 %v4554, %v4553
        %v4605 = vpack.c.bf16 %v4556, %v4555
        %v4606 = vpack.c.bf16 %v4558, %v4557
        %v4607 = vpack.c.bf16 %v4560, %v4559
        %v4608 = vpack.c.bf16 %v4562, %v4561
        %v4609 = vpack.c.bf16 %v4564, %v4563
        %v4610 = vpack.c.bf16 %v4566, %v4565
        %v4611 = vpack.c.bf16 %v4568, %v4567
        %v4612 = vpack.c.bf16 %v4570, %v4569
        %v4613 = vpack.c.bf16 %v4572, %v4571
        %v4614 = vpack.c.bf16 %v4574, %v4573
        %v4615 = vpack.c.bf16 %v4576, %v4575
        %v4616 = vpack.c.bf16 %v4578, %v4577
        %v4617 = vpack.c.bf16 %v4580, %v4579
        %v4618 = vpack.c.bf16 %v4582, %v4581
        %v4619 = vpack.c.bf16 %v4584, %v4583
        %v4620 = vpack.c.bf16 %v4586, %v4585
        %v4621 = vpack.c.bf16 %v4588, %v4587
        %v4622 = vpack.c.bf16 %v4590, %v4589
        %s4623 = scalar_lea.vmem %s3, 4
        %v4624 = vld [vmem:[%s4623] sm:$0xf]
        %v4626 = vsel %vm1202, %v4624, 0
        %v4629 = vsel %vm1202, %v4591, 0
        %v4632 = vsel %vm1202, %v4592, 0
        %4634 = vmatprep.subr.bf16.mxu0 0
        %4635 = vmatpush1.bf16.xpose.msra.mxu0 %v4629
        %4636 = vmatprep.subr.bf16.mxu0 0
        %4637 = vmatpush1.bf16.xpose.msra.mxu0 %v4632
        %4638 = vmatprep.subr.bf16.mxu0 0
        %4639 = vmatpush1.bf16.xpose.msra.mxu0 0
        %4640 = vmatprep.subr.bf16.mxu0 0
        %4641 = vmatpush1.bf16.xpose.msra.mxu0 0
        %4642 = vmatprep.subr.bf16.mxu0 0
        %4643 = vmatpush1.bf16.xpose.msra.mxu0 0
        %4644 = vmatprep.subr.bf16.mxu0 0
        %4645 = vmatpush1.bf16.xpose.msra.mxu0 0
        %4646 = vmatprep.subr.bf16.mxu0 0
        %4647 = vmatpush1.bf16.xpose.msra.mxu0 0
        %4648 = vmatprep.subr.bf16.mxu0 0
        %4649 = vmatpush1.bf16.xpose.msra.mxu0 0
        %4650 = vmatprep.subr.bf16.mxu0 0
        %4651 = vmatpush1.bf16.xpose.msra.mxu0 0
        %4652 = vmatprep.subr.bf16.mxu0 0
        %4653 = vmatpush1.bf16.xpose.msra.mxu0 0
        %4654 = vmatprep.subr.bf16.mxu0 0
        %4655 = vmatpush1.bf16.xpose.msra.mxu0 0
        %4656 = vmatprep.subr.bf16.mxu0 0
        %4657 = vmatpush1.bf16.xpose.msra.mxu0 0
        %4658 = vmatprep.subr.bf16.mxu0 0
        %4659 = vmatpush1.bf16.xpose.msra.mxu0 0
        %4660 = vmatprep.subr.bf16.mxu0 0
        %4661 = vmatpush1.bf16.xpose.msra.mxu0 0
        %4662 = vmatprep.subr.bf16.mxu0 0
        %4663 = vmatpush1.bf16.xpose.msra.mxu0 0
        %4664 = vmatprep.subr.bf16.mxu0 0
        %4665 = vmatpush1.bf16.xpose.msra.mxu0 0
        %4666 = vmatprep.mubr.bf16.mxu0 0
        %4667 = vmatmul.mubr.bf16.gmra.mrb[0].mxu0 %v4626
        %v4668 = vpop.f32.mrb[0].mxu0
        %v4669 = vadd.f32 0.0, %v4668
        %v4670 = vpop.f32.mrb[0].mxu0
        %v4671 = vpop.f32.mrb[0].mxu0
        %v4672 = vpop.f32.mrb[0].mxu0
        %4673 = vdwg.mxu0
        %v4675 = vsel %vm1202, %v4593, 0
        %v4678 = vsel %vm1202, %v4594, 0
        %4680 = vmatprep.subr.bf16.mxu0 0
        %4681 = vmatpush1.bf16.xpose.msra.mxu0 %v4675
        %4682 = vmatprep.subr.bf16.mxu0 0
        %4683 = vmatpush1.bf16.xpose.msra.mxu0 %v4678
        %4684 = vmatprep.subr.bf16.mxu0 0
        %4685 = vmatpush1.bf16.xpose.msra.mxu0 0
        %4686 = vmatprep.subr.bf16.mxu0 0
        %4687 = vmatpush1.bf16.xpose.msra.mxu0 0
        %4688 = vmatprep.subr.bf16.mxu0 0
        %4689 = vmatpush1.bf16.xpose.msra.mxu0 0
        %4690 = vmatprep.subr.bf16.mxu0 0
        %4691 = vmatpush1.bf16.xpose.msra.mxu0 0
        %4692 = vmatprep.subr.bf16.mxu0 0
        %4693 = vmatpush1.bf16.xpose.msra.mxu0 0
        %4694 = vmatprep.subr.bf16.mxu0 0
        %4695 = vmatpush1.bf16.xpose.msra.mxu0 0
        %4696 = vmatprep.subr.bf16.mxu0 0
        %4697 = vmatpush1.bf16.xpose.msra.mxu0 0
        %4698 = vmatprep.subr.bf16.mxu0 0
        %4699 = vmatpush1.bf16.xpose.msra.mxu0 0
        %4700 = vmatprep.subr.bf16.mxu0 0
        %4701 = vmatpush1.bf16.xpose.msra.mxu0 0
        %4702 = vmatprep.subr.bf16.mxu0 0
        %4703 = vmatpush1.bf16.xpose.msra.mxu0 0
        %4704 = vmatprep.subr.bf16.mxu0 0
        %4705 = vmatpush1.bf16.xpose.msra.mxu0 0
        %4706 = vmatprep.subr.bf16.mxu0 0
        %4707 = vmatpush1.bf16.xpose.msra.mxu0 0
        %4708 = vmatprep.subr.bf16.mxu0 0
        %4709 = vmatpush1.bf16.xpose.msra.mxu0 0
        %4710 = vmatprep.subr.bf16.mxu0 0
        %4711 = vmatpush1.bf16.xpose.msra.mxu0 0
        %4712 = vmatprep.mubr.bf16.mxu0 0
        %4713 = vmatmul.mubr.bf16.gmra.mrb[0].mxu0 %v4626
        %v4714 = vpop.f32.mrb[0].mxu0
        %v4715 = vadd.f32 0.0, %v4714
        %v4716 = vpop.f32.mrb[0].mxu0
        %v4717 = vpop.f32.mrb[0].mxu0
        %v4718 = vpop.f32.mrb[0].mxu0
        %4719 = vdwg.mxu0
        %v4721 = vsel %vm1202, %v4595, 0
        %v4724 = vsel %vm1202, %v4596, 0
        %4726 = vmatprep.subr.bf16.mxu0 0
        %4727 = vmatpush1.bf16.xpose.msra.mxu0 %v4721
        %4728 = vmatprep.subr.bf16.mxu0 0
        %4729 = vmatpush1.bf16.xpose.msra.mxu0 %v4724
        %4730 = vmatprep.subr.bf16.mxu0 0
        %4731 = vmatpush1.bf16.xpose.msra.mxu0 0
        %4732 = vmatprep.subr.bf16.mxu0 0
        %4733 = vmatpush1.bf16.xpose.msra.mxu0 0
        %4734 = vmatprep.subr.bf16.mxu0 0
        %4735 = vmatpush1.bf16.xpose.msra.mxu0 0
        %4736 = vmatprep.subr.bf16.mxu0 0
        %4737 = vmatpush1.bf16.xpose.msra.mxu0 0
        %4738 = vmatprep.subr.bf16.mxu0 0
        %4739 = vmatpush1.bf16.xpose.msra.mxu0 0
        %4740 = vmatprep.subr.bf16.mxu0 0
        %4741 = vmatpush1.bf16.xpose.msra.mxu0 0
        %4742 = vmatprep.subr.bf16.mxu0 0
        %4743 = vmatpush1.bf16.xpose.msra.mxu0 0
        %4744 = vmatprep.subr.bf16.mxu0 0
        %4745 = vmatpush1.bf16.xpose.msra.mxu0 0
        %4746 = vmatprep.subr.bf16.mxu0 0
        %4747 = vmatpush1.bf16.xpose.msra.mxu0 0
        %4748 = vmatprep.subr.bf16.mxu0 0
        %4749 = vmatpush1.bf16.xpose.msra.mxu0 0
        %4750 = vmatprep.subr.bf16.mxu0 0
        %4751 = vmatpush1.bf16.xpose.msra.mxu0 0
        %4752 = vmatprep.subr.bf16.mxu0 0
        %4753 = vmatpush1.bf16.xpose.msra.mxu0 0
        %4754 = vmatprep.subr.bf16.mxu0 0
        %4755 = vmatpush1.bf16.xpose.msra.mxu0 0
        %4756 = vmatprep.subr.bf16.mxu0 0
        %4757 = vmatpush1.bf16.xpose.msra.mxu0 0
        %4758 = vmatprep.mubr.bf16.mxu0 0
        %4759 = vmatmul.mubr.bf16.gmra.mrb[0].mxu0 %v4626
        %v4760 = vpop.f32.mrb[0].mxu0
        %v4761 = vadd.f32 0.0, %v4760
        %v4762 = vpop.f32.mrb[0].mxu0
        %v4763 = vpop.f32.mrb[0].mxu0
        %v4764 = vpop.f32.mrb[0].mxu0
        %4765 = vdwg.mxu0
        %v4767 = vsel %vm1202, %v4597, 0
        %v4770 = vsel %vm1202, %v4598, 0
        %4772 = vmatprep.subr.bf16.mxu0 0
        %4773 = vmatpush1.bf16.xpose.msra.mxu0 %v4767
        %4774 = vmatprep.subr.bf16.mxu0 0
        %4775 = vmatpush1.bf16.xpose.msra.mxu0 %v4770
        %4776 = vmatprep.subr.bf16.mxu0 0
        %4777 = vmatpush1.bf16.xpose.msra.mxu0 0
        %4778 = vmatprep.subr.bf16.mxu0 0
        %4779 = vmatpush1.bf16.xpose.msra.mxu0 0
        %4780 = vmatprep.subr.bf16.mxu0 0
        %4781 = vmatpush1.bf16.xpose.msra.mxu0 0
        %4782 = vmatprep.subr.bf16.mxu0 0
        %4783 = vmatpush1.bf16.xpose.msra.mxu0 0
        %4784 = vmatprep.subr.bf16.mxu0 0
        %4785 = vmatpush1.bf16.xpose.msra.mxu0 0
        %4786 = vmatprep.subr.bf16.mxu0 0
        %4787 = vmatpush1.bf16.xpose.msra.mxu0 0
        %4788 = vmatprep.subr.bf16.mxu0 0
        %4789 = vmatpush1.bf16.xpose.msra.mxu0 0
        %4790 = vmatprep.subr.bf16.mxu0 0
        %4791 = vmatpush1.bf16.xpose.msra.mxu0 0
        %4792 = vmatprep.subr.bf16.mxu0 0
        %4793 = vmatpush1.bf16.xpose.msra.mxu0 0
        %4794 = vmatprep.subr.bf16.mxu0 0
        %4795 = vmatpush1.bf16.xpose.msra.mxu0 0
        %4796 = vmatprep.subr.bf16.mxu0 0
        %4797 = vmatpush1.bf16.xpose.msra.mxu0 0
        %4798 = vmatprep.subr.bf16.mxu0 0
        %4799 = vmatpush1.bf16.xpose.msra.mxu0 0
        %4800 = vmatprep.subr.bf16.mxu0 0
        %4801 = vmatpush1.bf16.xpose.msra.mxu0 0
        %4802 = vmatprep.subr.bf16.mxu0 0
        %4803 = vmatpush1.bf16.xpose.msra.mxu0 0
        %4804 = vmatprep.mubr.bf16.mxu0 0
        %4805 = vmatmul.mubr.bf16.gmra.mrb[0].mxu0 %v4626
        %v4806 = vpop.f32.mrb[0].mxu0
        %v4807 = vadd.f32 0.0, %v4806
        %v4808 = vpop.f32.mrb[0].mxu0
        %v4809 = vpop.f32.mrb[0].mxu0
        %v4810 = vpop.f32.mrb[0].mxu0
        %4811 = vdwg.mxu0
        %v4813 = vsel %vm1202, %v4599, 0
        %v4816 = vsel %vm1202, %v4600, 0
        %4818 = vmatprep.subr.bf16.mxu0 0
        %4819 = vmatpush1.bf16.xpose.msra.mxu0 %v4813
        %4820 = vmatprep.subr.bf16.mxu0 0
        %4821 = vmatpush1.bf16.xpose.msra.mxu0 %v4816
        %4822 = vmatprep.subr.bf16.mxu0 0
        %4823 = vmatpush1.bf16.xpose.msra.mxu0 0
        %4824 = vmatprep.subr.bf16.mxu0 0
        %4825 = vmatpush1.bf16.xpose.msra.mxu0 0
        %4826 = vmatprep.subr.bf16.mxu0 0
        %4827 = vmatpush1.bf16.xpose.msra.mxu0 0
        %4828 = vmatprep.subr.bf16.mxu0 0
        %4829 = vmatpush1.bf16.xpose.msra.mxu0 0
        %4830 = vmatprep.subr.bf16.mxu0 0
        %4831 = vmatpush1.bf16.xpose.msra.mxu0 0
        %4832 = vmatprep.subr.bf16.mxu0 0
        %4833 = vmatpush1.bf16.xpose.msra.mxu0 0
        %4834 = vmatprep.subr.bf16.mxu0 0
        %4835 = vmatpush1.bf16.xpose.msra.mxu0 0
        %4836 = vmatprep.subr.bf16.mxu0 0
        %4837 = vmatpush1.bf16.xpose.msra.mxu0 0
        %4838 = vmatprep.subr.bf16.mxu0 0
        %4839 = vmatpush1.bf16.xpose.msra.mxu0 0
        %4840 = vmatprep.subr.bf16.mxu0 0
        %4841 = vmatpush1.bf16.xpose.msra.mxu0 0
        %4842 = vmatprep.subr.bf16.mxu0 0
        %4843 = vmatpush1.bf16.xpose.msra.mxu0 0
        %4844 = vmatprep.subr.bf16.mxu0 0
        %4845 = vmatpush1.bf16.xpose.msra.mxu0 0
        %4846 = vmatprep.subr.bf16.mxu0 0
        %4847 = vmatpush1.bf16.xpose.msra.mxu0 0
        %4848 = vmatprep.subr.bf16.mxu0 0
        %4849 = vmatpush1.bf16.xpose.msra.mxu0 0
        %4850 = vmatprep.mubr.bf16.mxu0 0
        %4851 = vmatmul.mubr.bf16.gmra.mrb[0].mxu0 %v4626
        %v4852 = vpop.f32.mrb[0].mxu0
        %v4853 = vadd.f32 0.0, %v4852
        %v4854 = vpop.f32.mrb[0].mxu0
        %v4855 = vpop.f32.mrb[0].mxu0
        %v4856 = vpop.f32.mrb[0].mxu0
        %4857 = vdwg.mxu0
        %v4859 = vsel %vm1202, %v4601, 0
        %v4862 = vsel %vm1202, %v4602, 0
        %4864 = vmatprep.subr.bf16.mxu0 0
        %4865 = vmatpush1.bf16.xpose.msra.mxu0 %v4859
        %4866 = vmatprep.subr.bf16.mxu0 0
        %4867 = vmatpush1.bf16.xpose.msra.mxu0 %v4862
        %4868 = vmatprep.subr.bf16.mxu0 0
        %4869 = vmatpush1.bf16.xpose.msra.mxu0 0
        %4870 = vmatprep.subr.bf16.mxu0 0
        %4871 = vmatpush1.bf16.xpose.msra.mxu0 0
        %4872 = vmatprep.subr.bf16.mxu0 0
        %4873 = vmatpush1.bf16.xpose.msra.mxu0 0
        %4874 = vmatprep.subr.bf16.mxu0 0
        %4875 = vmatpush1.bf16.xpose.msra.mxu0 0
        %4876 = vmatprep.subr.bf16.mxu0 0
        %4877 = vmatpush1.bf16.xpose.msra.mxu0 0
        %4878 = vmatprep.subr.bf16.mxu0 0
        %4879 = vmatpush1.bf16.xpose.msra.mxu0 0
        %4880 = vmatprep.subr.bf16.mxu0 0
        %4881 = vmatpush1.bf16.xpose.msra.mxu0 0
        %4882 = vmatprep.subr.bf16.mxu0 0
        %4883 = vmatpush1.bf16.xpose.msra.mxu0 0
        %4884 = vmatprep.subr.bf16.mxu0 0
        %4885 = vmatpush1.bf16.xpose.msra.mxu0 0
        %4886 = vmatprep.subr.bf16.mxu0 0
        %4887 = vmatpush1.bf16.xpose.msra.mxu0 0
        %4888 = vmatprep.subr.bf16.mxu0 0
        %4889 = vmatpush1.bf16.xpose.msra.mxu0 0
        %4890 = vmatprep.subr.bf16.mxu0 0
        %4891 = vmatpush1.bf16.xpose.msra.mxu0 0
        %4892 = vmatprep.subr.bf16.mxu0 0
        %4893 = vmatpush1.bf16.xpose.msra.mxu0 0
        %4894 = vmatprep.subr.bf16.mxu0 0
        %4895 = vmatpush1.bf16.xpose.msra.mxu0 0
        %4896 = vmatprep.mubr.bf16.mxu0 0
        %4897 = vmatmul.mubr.bf16.gmra.mrb[0].mxu0 %v4626
        %v4898 = vpop.f32.mrb[0].mxu0
        %v4899 = vadd.f32 0.0, %v4898
        %v4900 = vpop.f32.mrb[0].mxu0
        %v4901 = vpop.f32.mrb[0].mxu0
        %v4902 = vpop.f32.mrb[0].mxu0
        %4903 = vdwg.mxu0
        %v4905 = vsel %vm1202, %v4603, 0
        %v4908 = vsel %vm1202, %v4604, 0
        %4910 = vmatprep.subr.bf16.mxu0 0
        %4911 = vmatpush1.bf16.xpose.msra.mxu0 %v4905
        %4912 = vmatprep.subr.bf16.mxu0 0
        %4913 = vmatpush1.bf16.xpose.msra.mxu0 %v4908
        %4914 = vmatprep.subr.bf16.mxu0 0
        %4915 = vmatpush1.bf16.xpose.msra.mxu0 0
        %4916 = vmatprep.subr.bf16.mxu0 0
        %4917 = vmatpush1.bf16.xpose.msra.mxu0 0
        %4918 = vmatprep.subr.bf16.mxu0 0
        %4919 = vmatpush1.bf16.xpose.msra.mxu0 0
        %4920 = vmatprep.subr.bf16.mxu0 0
        %4921 = vmatpush1.bf16.xpose.msra.mxu0 0
        %4922 = vmatprep.subr.bf16.mxu0 0
        %4923 = vmatpush1.bf16.xpose.msra.mxu0 0
        %4924 = vmatprep.subr.bf16.mxu0 0
        %4925 = vmatpush1.bf16.xpose.msra.mxu0 0
        %4926 = vmatprep.subr.bf16.mxu0 0
        %4927 = vmatpush1.bf16.xpose.msra.mxu0 0
        %4928 = vmatprep.subr.bf16.mxu0 0
        %4929 = vmatpush1.bf16.xpose.msra.mxu0 0
        %4930 = vmatprep.subr.bf16.mxu0 0
        %4931 = vmatpush1.bf16.xpose.msra.mxu0 0
        %4932 = vmatprep.subr.bf16.mxu0 0
        %4933 = vmatpush1.bf16.xpose.msra.mxu0 0
        %4934 = vmatprep.subr.bf16.mxu0 0
        %4935 = vmatpush1.bf16.xpose.msra.mxu0 0
        %4936 = vmatprep.subr.bf16.mxu0 0
        %4937 = vmatpush1.bf16.xpose.msra.mxu0 0
        %4938 = vmatprep.subr.bf16.mxu0 0
        %4939 = vmatpush1.bf16.xpose.msra.mxu0 0
        %4940 = vmatprep.subr.bf16.mxu0 0
        %4941 = vmatpush1.bf16.xpose.msra.mxu0 0
        %4942 = vmatprep.mubr.bf16.mxu0 0
        %4943 = vmatmul.mubr.bf16.gmra.mrb[0].mxu0 %v4626
        %v4944 = vpop.f32.mrb[0].mxu0
        %v4945 = vadd.f32 0.0, %v4944
        %v4946 = vpop.f32.mrb[0].mxu0
        %v4947 = vpop.f32.mrb[0].mxu0
        %v4948 = vpop.f32.mrb[0].mxu0
        %4949 = vdwg.mxu0
        %v4951 = vsel %vm1202, %v4605, 0
        %v4954 = vsel %vm1202, %v4606, 0
        %4956 = vmatprep.subr.bf16.mxu0 0
        %4957 = vmatpush1.bf16.xpose.msra.mxu0 %v4951
        %4958 = vmatprep.subr.bf16.mxu0 0
        %4959 = vmatpush1.bf16.xpose.msra.mxu0 %v4954
        %4960 = vmatprep.subr.bf16.mxu0 0
        %4961 = vmatpush1.bf16.xpose.msra.mxu0 0
        %4962 = vmatprep.subr.bf16.mxu0 0
        %4963 = vmatpush1.bf16.xpose.msra.mxu0 0
        %4964 = vmatprep.subr.bf16.mxu0 0
        %4965 = vmatpush1.bf16.xpose.msra.mxu0 0
        %4966 = vmatprep.subr.bf16.mxu0 0
        %4967 = vmatpush1.bf16.xpose.msra.mxu0 0
        %4968 = vmatprep.subr.bf16.mxu0 0
        %4969 = vmatpush1.bf16.xpose.msra.mxu0 0
        %4970 = vmatprep.subr.bf16.mxu0 0
        %4971 = vmatpush1.bf16.xpose.msra.mxu0 0
        %4972 = vmatprep.subr.bf16.mxu0 0
        %4973 = vmatpush1.bf16.xpose.msra.mxu0 0
        %4974 = vmatprep.subr.bf16.mxu0 0
        %4975 = vmatpush1.bf16.xpose.msra.mxu0 0
        %4976 = vmatprep.subr.bf16.mxu0 0
        %4977 = vmatpush1.bf16.xpose.msra.mxu0 0
        %4978 = vmatprep.subr.bf16.mxu0 0
        %4979 = vmatpush1.bf16.xpose.msra.mxu0 0
        %4980 = vmatprep.subr.bf16.mxu0 0
        %4981 = vmatpush1.bf16.xpose.msra.mxu0 0
        %4982 = vmatprep.subr.bf16.mxu0 0
        %4983 = vmatpush1.bf16.xpose.msra.mxu0 0
        %4984 = vmatprep.subr.bf16.mxu0 0
        %4985 = vmatpush1.bf16.xpose.msra.mxu0 0
        %4986 = vmatprep.subr.bf16.mxu0 0
        %4987 = vmatpush1.bf16.xpose.msra.mxu0 0
        %4988 = vmatprep.mubr.bf16.mxu0 0
        %4989 = vmatmul.mubr.bf16.gmra.mrb[0].mxu0 %v4626
        %v4990 = vpop.f32.mrb[0].mxu0
        %v4991 = vadd.f32 0.0, %v4990
        %v4992 = vpop.f32.mrb[0].mxu0
        %v4993 = vpop.f32.mrb[0].mxu0
        %v4994 = vpop.f32.mrb[0].mxu0
        %4995 = vdwg.mxu0
        %v4997 = vsel %vm1202, %v4607, 0
        %v5000 = vsel %vm1202, %v4608, 0
        %5002 = vmatprep.subr.bf16.mxu0 0
        %5003 = vmatpush1.bf16.xpose.msra.mxu0 %v4997
        %5004 = vmatprep.subr.bf16.mxu0 0
        %5005 = vmatpush1.bf16.xpose.msra.mxu0 %v5000
        %5006 = vmatprep.subr.bf16.mxu0 0
        %5007 = vmatpush1.bf16.xpose.msra.mxu0 0
        %5008 = vmatprep.subr.bf16.mxu0 0
        %5009 = vmatpush1.bf16.xpose.msra.mxu0 0
        %5010 = vmatprep.subr.bf16.mxu0 0
        %5011 = vmatpush1.bf16.xpose.msra.mxu0 0
        %5012 = vmatprep.subr.bf16.mxu0 0
        %5013 = vmatpush1.bf16.xpose.msra.mxu0 0
        %5014 = vmatprep.subr.bf16.mxu0 0
        %5015 = vmatpush1.bf16.xpose.msra.mxu0 0
        %5016 = vmatprep.subr.bf16.mxu0 0
        %5017 = vmatpush1.bf16.xpose.msra.mxu0 0
        %5018 = vmatprep.subr.bf16.mxu0 0
        %5019 = vmatpush1.bf16.xpose.msra.mxu0 0
        %5020 = vmatprep.subr.bf16.mxu0 0
        %5021 = vmatpush1.bf16.xpose.msra.mxu0 0
        %5022 = vmatprep.subr.bf16.mxu0 0
        %5023 = vmatpush1.bf16.xpose.msra.mxu0 0
        %5024 = vmatprep.subr.bf16.mxu0 0
        %5025 = vmatpush1.bf16.xpose.msra.mxu0 0
        %5026 = vmatprep.subr.bf16.mxu0 0
        %5027 = vmatpush1.bf16.xpose.msra.mxu0 0
        %5028 = vmatprep.subr.bf16.mxu0 0
        %5029 = vmatpush1.bf16.xpose.msra.mxu0 0
        %5030 = vmatprep.subr.bf16.mxu0 0
        %5031 = vmatpush1.bf16.xpose.msra.mxu0 0
        %5032 = vmatprep.subr.bf16.mxu0 0
        %5033 = vmatpush1.bf16.xpose.msra.mxu0 0
        %5034 = vmatprep.mubr.bf16.mxu0 0
        %5035 = vmatmul.mubr.bf16.gmra.mrb[0].mxu0 %v4626
        %v5036 = vpop.f32.mrb[0].mxu0
        %v5037 = vadd.f32 0.0, %v5036
        %v5038 = vpop.f32.mrb[0].mxu0
        %v5039 = vpop.f32.mrb[0].mxu0
        %v5040 = vpop.f32.mrb[0].mxu0
        %5041 = vdwg.mxu0
        %v5043 = vsel %vm1202, %v4609, 0
        %v5046 = vsel %vm1202, %v4610, 0
        %5048 = vmatprep.subr.bf16.mxu0 0
        %5049 = vmatpush1.bf16.xpose.msra.mxu0 %v5043
        %5050 = vmatprep.subr.bf16.mxu0 0
        %5051 = vmatpush1.bf16.xpose.msra.mxu0 %v5046
        %5052 = vmatprep.subr.bf16.mxu0 0
        %5053 = vmatpush1.bf16.xpose.msra.mxu0 0
        %5054 = vmatprep.subr.bf16.mxu0 0
        %5055 = vmatpush1.bf16.xpose.msra.mxu0 0
        %5056 = vmatprep.subr.bf16.mxu0 0
        %5057 = vmatpush1.bf16.xpose.msra.mxu0 0
        %5058 = vmatprep.subr.bf16.mxu0 0
        %5059 = vmatpush1.bf16.xpose.msra.mxu0 0
        %5060 = vmatprep.subr.bf16.mxu0 0
        %5061 = vmatpush1.bf16.xpose.msra.mxu0 0
        %5062 = vmatprep.subr.bf16.mxu0 0
        %5063 = vmatpush1.bf16.xpose.msra.mxu0 0
        %5064 = vmatprep.subr.bf16.mxu0 0
        %5065 = vmatpush1.bf16.xpose.msra.mxu0 0
        %5066 = vmatprep.subr.bf16.mxu0 0
        %5067 = vmatpush1.bf16.xpose.msra.mxu0 0
        %5068 = vmatprep.subr.bf16.mxu0 0
        %5069 = vmatpush1.bf16.xpose.msra.mxu0 0
        %5070 = vmatprep.subr.bf16.mxu0 0
        %5071 = vmatpush1.bf16.xpose.msra.mxu0 0
        %5072 = vmatprep.subr.bf16.mxu0 0
        %5073 = vmatpush1.bf16.xpose.msra.mxu0 0
        %5074 = vmatprep.subr.bf16.mxu0 0
        %5075 = vmatpush1.bf16.xpose.msra.mxu0 0
        %5076 = vmatprep.subr.bf16.mxu0 0
        %5077 = vmatpush1.bf16.xpose.msra.mxu0 0
        %5078 = vmatprep.subr.bf16.mxu0 0
        %5079 = vmatpush1.bf16.xpose.msra.mxu0 0
        %5080 = vmatprep.mubr.bf16.mxu0 0
        %5081 = vmatmul.mubr.bf16.gmra.mrb[0].mxu0 %v4626
        %v5082 = vpop.f32.mrb[0].mxu0
        %v5083 = vadd.f32 0.0, %v5082
        %v5084 = vpop.f32.mrb[0].mxu0
        %v5085 = vpop.f32.mrb[0].mxu0
        %v5086 = vpop.f32.mrb[0].mxu0
        %5087 = vdwg.mxu0
        %v5089 = vsel %vm1202, %v4611, 0
        %v5092 = vsel %vm1202, %v4612, 0
        %5094 = vmatprep.subr.bf16.mxu0 0
        %5095 = vmatpush1.bf16.xpose.msra.mxu0 %v5089
        %5096 = vmatprep.subr.bf16.mxu0 0
        %5097 = vmatpush1.bf16.xpose.msra.mxu0 %v5092
        %5098 = vmatprep.subr.bf16.mxu0 0
        %5099 = vmatpush1.bf16.xpose.msra.mxu0 0
        %5100 = vmatprep.subr.bf16.mxu0 0
        %5101 = vmatpush1.bf16.xpose.msra.mxu0 0
        %5102 = vmatprep.subr.bf16.mxu0 0
        %5103 = vmatpush1.bf16.xpose.msra.mxu0 0
        %5104 = vmatprep.subr.bf16.mxu0 0
        %5105 = vmatpush1.bf16.xpose.msra.mxu0 0
        %5106 = vmatprep.subr.bf16.mxu0 0
        %5107 = vmatpush1.bf16.xpose.msra.mxu0 0
        %5108 = vmatprep.subr.bf16.mxu0 0
        %5109 = vmatpush1.bf16.xpose.msra.mxu0 0
        %5110 = vmatprep.subr.bf16.mxu0 0
        %5111 = vmatpush1.bf16.xpose.msra.mxu0 0
        %5112 = vmatprep.subr.bf16.mxu0 0
        %5113 = vmatpush1.bf16.xpose.msra.mxu0 0
        %5114 = vmatprep.subr.bf16.mxu0 0
        %5115 = vmatpush1.bf16.xpose.msra.mxu0 0
        %5116 = vmatprep.subr.bf16.mxu0 0
        %5117 = vmatpush1.bf16.xpose.msra.mxu0 0
        %5118 = vmatprep.subr.bf16.mxu0 0
        %5119 = vmatpush1.bf16.xpose.msra.mxu0 0
        %5120 = vmatprep.subr.bf16.mxu0 0
        %5121 = vmatpush1.bf16.xpose.msra.mxu0 0
        %5122 = vmatprep.subr.bf16.mxu0 0
        %5123 = vmatpush1.bf16.xpose.msra.mxu0 0
        %5124 = vmatprep.subr.bf16.mxu0 0
        %5125 = vmatpush1.bf16.xpose.msra.mxu0 0
        %5126 = vmatprep.mubr.bf16.mxu0 0
        %5127 = vmatmul.mubr.bf16.gmra.mrb[0].mxu0 %v4626
        %v5128 = vpop.f32.mrb[0].mxu0
        %v5129 = vadd.f32 0.0, %v5128
        %v5130 = vpop.f32.mrb[0].mxu0
        %v5131 = vpop.f32.mrb[0].mxu0
        %v5132 = vpop.f32.mrb[0].mxu0
        %5133 = vdwg.mxu0
        %v5135 = vsel %vm1202, %v4613, 0
        %v5138 = vsel %vm1202, %v4614, 0
        %5140 = vmatprep.subr.bf16.mxu0 0
        %5141 = vmatpush1.bf16.xpose.msra.mxu0 %v5135
        %5142 = vmatprep.subr.bf16.mxu0 0
        %5143 = vmatpush1.bf16.xpose.msra.mxu0 %v5138
        %5144 = vmatprep.subr.bf16.mxu0 0
        %5145 = vmatpush1.bf16.xpose.msra.mxu0 0
        %5146 = vmatprep.subr.bf16.mxu0 0
        %5147 = vmatpush1.bf16.xpose.msra.mxu0 0
        %5148 = vmatprep.subr.bf16.mxu0 0
        %5149 = vmatpush1.bf16.xpose.msra.mxu0 0
        %5150 = vmatprep.subr.bf16.mxu0 0
        %5151 = vmatpush1.bf16.xpose.msra.mxu0 0
        %5152 = vmatprep.subr.bf16.mxu0 0
        %5153 = vmatpush1.bf16.xpose.msra.mxu0 0
        %5154 = vmatprep.subr.bf16.mxu0 0
        %5155 = vmatpush1.bf16.xpose.msra.mxu0 0
        %5156 = vmatprep.subr.bf16.mxu0 0
        %5157 = vmatpush1.bf16.xpose.msra.mxu0 0
        %5158 = vmatprep.subr.bf16.mxu0 0
        %5159 = vmatpush1.bf16.xpose.msra.mxu0 0
        %5160 = vmatprep.subr.bf16.mxu0 0
        %5161 = vmatpush1.bf16.xpose.msra.mxu0 0
        %5162 = vmatprep.subr.bf16.mxu0 0
        %5163 = vmatpush1.bf16.xpose.msra.mxu0 0
        %5164 = vmatprep.subr.bf16.mxu0 0
        %5165 = vmatpush1.bf16.xpose.msra.mxu0 0
        %5166 = vmatprep.subr.bf16.mxu0 0
        %5167 = vmatpush1.bf16.xpose.msra.mxu0 0
        %5168 = vmatprep.subr.bf16.mxu0 0
        %5169 = vmatpush1.bf16.xpose.msra.mxu0 0
        %5170 = vmatprep.subr.bf16.mxu0 0
        %5171 = vmatpush1.bf16.xpose.msra.mxu0 0
        %5172 = vmatprep.mubr.bf16.mxu0 0
        %5173 = vmatmul.mubr.bf16.gmra.mrb[0].mxu0 %v4626
        %v5174 = vpop.f32.mrb[0].mxu0
        %v5175 = vadd.f32 0.0, %v5174
        %v5176 = vpop.f32.mrb[0].mxu0
        %v5177 = vpop.f32.mrb[0].mxu0
        %v5178 = vpop.f32.mrb[0].mxu0
        %5179 = vdwg.mxu0
        %v5181 = vsel %vm1202, %v4615, 0
        %v5184 = vsel %vm1202, %v4616, 0
        %5186 = vmatprep.subr.bf16.mxu0 0
        %5187 = vmatpush1.bf16.xpose.msra.mxu0 %v5181
        %5188 = vmatprep.subr.bf16.mxu0 0
        %5189 = vmatpush1.bf16.xpose.msra.mxu0 %v5184
        %5190 = vmatprep.subr.bf16.mxu0 0
        %5191 = vmatpush1.bf16.xpose.msra.mxu0 0
        %5192 = vmatprep.subr.bf16.mxu0 0
        %5193 = vmatpush1.bf16.xpose.msra.mxu0 0
        %5194 = vmatprep.subr.bf16.mxu0 0
        %5195 = vmatpush1.bf16.xpose.msra.mxu0 0
        %5196 = vmatprep.subr.bf16.mxu0 0
        %5197 = vmatpush1.bf16.xpose.msra.mxu0 0
        %5198 = vmatprep.subr.bf16.mxu0 0
        %5199 = vmatpush1.bf16.xpose.msra.mxu0 0
        %5200 = vmatprep.subr.bf16.mxu0 0
        %5201 = vmatpush1.bf16.xpose.msra.mxu0 0
        %5202 = vmatprep.subr.bf16.mxu0 0
        %5203 = vmatpush1.bf16.xpose.msra.mxu0 0
        %5204 = vmatprep.subr.bf16.mxu0 0
        %5205 = vmatpush1.bf16.xpose.msra.mxu0 0
        %5206 = vmatprep.subr.bf16.mxu0 0
        %5207 = vmatpush1.bf16.xpose.msra.mxu0 0
        %5208 = vmatprep.subr.bf16.mxu0 0
        %5209 = vmatpush1.bf16.xpose.msra.mxu0 0
        %5210 = vmatprep.subr.bf16.mxu0 0
        %5211 = vmatpush1.bf16.xpose.msra.mxu0 0
        %5212 = vmatprep.subr.bf16.mxu0 0
        %5213 = vmatpush1.bf16.xpose.msra.mxu0 0
        %5214 = vmatprep.subr.bf16.mxu0 0
        %5215 = vmatpush1.bf16.xpose.msra.mxu0 0
        %5216 = vmatprep.subr.bf16.mxu0 0
        %5217 = vmatpush1.bf16.xpose.msra.mxu0 0
        %5218 = vmatprep.mubr.bf16.mxu0 0
        %5219 = vmatmul.mubr.bf16.gmra.mrb[0].mxu0 %v4626
        %v5220 = vpop.f32.mrb[0].mxu0
        %v5221 = vadd.f32 0.0, %v5220
        %v5222 = vpop.f32.mrb[0].mxu0
        %v5223 = vpop.f32.mrb[0].mxu0
        %v5224 = vpop.f32.mrb[0].mxu0
        %5225 = vdwg.mxu0
        %v5227 = vsel %vm1202, %v4617, 0
        %v5230 = vsel %vm1202, %v4618, 0
        %5232 = vmatprep.subr.bf16.mxu0 0
        %5233 = vmatpush1.bf16.xpose.msra.mxu0 %v5227
        %5234 = vmatprep.subr.bf16.mxu0 0
        %5235 = vmatpush1.bf16.xpose.msra.mxu0 %v5230
        %5236 = vmatprep.subr.bf16.mxu0 0
        %5237 = vmatpush1.bf16.xpose.msra.mxu0 0
        %5238 = vmatprep.subr.bf16.mxu0 0
        %5239 = vmatpush1.bf16.xpose.msra.mxu0 0
        %5240 = vmatprep.subr.bf16.mxu0 0
        %5241 = vmatpush1.bf16.xpose.msra.mxu0 0
        %5242 = vmatprep.subr.bf16.mxu0 0
        %5243 = vmatpush1.bf16.xpose.msra.mxu0 0
        %5244 = vmatprep.subr.bf16.mxu0 0
        %5245 = vmatpush1.bf16.xpose.msra.mxu0 0
        %5246 = vmatprep.subr.bf16.mxu0 0
        %5247 = vmatpush1.bf16.xpose.msra.mxu0 0
        %5248 = vmatprep.subr.bf16.mxu0 0
        %5249 = vmatpush1.bf16.xpose.msra.mxu0 0
        %5250 = vmatprep.subr.bf16.mxu0 0
        %5251 = vmatpush1.bf16.xpose.msra.mxu0 0
        %5252 = vmatprep.subr.bf16.mxu0 0
        %5253 = vmatpush1.bf16.xpose.msra.mxu0 0
        %5254 = vmatprep.subr.bf16.mxu0 0
        %5255 = vmatpush1.bf16.xpose.msra.mxu0 0
        %5256 = vmatprep.subr.bf16.mxu0 0
        %5257 = vmatpush1.bf16.xpose.msra.mxu0 0
        %5258 = vmatprep.subr.bf16.mxu0 0
        %5259 = vmatpush1.bf16.xpose.msra.mxu0 0
        %5260 = vmatprep.subr.bf16.mxu0 0
        %5261 = vmatpush1.bf16.xpose.msra.mxu0 0
        %5262 = vmatprep.subr.bf16.mxu0 0
        %5263 = vmatpush1.bf16.xpose.msra.mxu0 0
        %5264 = vmatprep.mubr.bf16.mxu0 0
        %5265 = vmatmul.mubr.bf16.gmra.mrb[0].mxu0 %v4626
        %v5266 = vpop.f32.mrb[0].mxu0
        %v5267 = vadd.f32 0.0, %v5266
        %v5268 = vpop.f32.mrb[0].mxu0
        %v5269 = vpop.f32.mrb[0].mxu0
        %v5270 = vpop.f32.mrb[0].mxu0
        %5271 = vdwg.mxu0
        %v5273 = vsel %vm1202, %v4619, 0
        %v5276 = vsel %vm1202, %v4620, 0
        %5278 = vmatprep.subr.bf16.mxu0 0
        %5279 = vmatpush1.bf16.xpose.msra.mxu0 %v5273
        %5280 = vmatprep.subr.bf16.mxu0 0
        %5281 = vmatpush1.bf16.xpose.msra.mxu0 %v5276
        %5282 = vmatprep.subr.bf16.mxu0 0
        %5283 = vmatpush1.bf16.xpose.msra.mxu0 0
        %5284 = vmatprep.subr.bf16.mxu0 0
        %5285 = vmatpush1.bf16.xpose.msra.mxu0 0
        %5286 = vmatprep.subr.bf16.mxu0 0
        %5287 = vmatpush1.bf16.xpose.msra.mxu0 0
        %5288 = vmatprep.subr.bf16.mxu0 0
        %5289 = vmatpush1.bf16.xpose.msra.mxu0 0
        %5290 = vmatprep.subr.bf16.mxu0 0
        %5291 = vmatpush1.bf16.xpose.msra.mxu0 0
        %5292 = vmatprep.subr.bf16.mxu0 0
        %5293 = vmatpush1.bf16.xpose.msra.mxu0 0
        %5294 = vmatprep.subr.bf16.mxu0 0
        %5295 = vmatpush1.bf16.xpose.msra.mxu0 0
        %5296 = vmatprep.subr.bf16.mxu0 0
        %5297 = vmatpush1.bf16.xpose.msra.mxu0 0
        %5298 = vmatprep.subr.bf16.mxu0 0
        %5299 = vmatpush1.bf16.xpose.msra.mxu0 0
        %5300 = vmatprep.subr.bf16.mxu0 0
        %5301 = vmatpush1.bf16.xpose.msra.mxu0 0
        %5302 = vmatprep.subr.bf16.mxu0 0
        %5303 = vmatpush1.bf16.xpose.msra.mxu0 0
        %5304 = vmatprep.subr.bf16.mxu0 0
        %5305 = vmatpush1.bf16.xpose.msra.mxu0 0
        %5306 = vmatprep.subr.bf16.mxu0 0
        %5307 = vmatpush1.bf16.xpose.msra.mxu0 0
        %5308 = vmatprep.subr.bf16.mxu0 0
        %5309 = vmatpush1.bf16.xpose.msra.mxu0 0
        %5310 = vmatprep.mubr.bf16.mxu0 0
        %5311 = vmatmul.mubr.bf16.gmra.mrb[0].mxu0 %v4626
        %v5312 = vpop.f32.mrb[0].mxu0
        %v5313 = vadd.f32 0.0, %v5312
        %v5314 = vpop.f32.mrb[0].mxu0
        %v5315 = vpop.f32.mrb[0].mxu0
        %v5316 = vpop.f32.mrb[0].mxu0
        %5317 = vdwg.mxu0
        %v5319 = vsel %vm1202, %v4621, 0
        %v5322 = vsel %vm1202, %v4622, 0
        %5324 = vmatprep.subr.bf16.mxu0 0
        %5325 = vmatpush1.bf16.xpose.msra.mxu0 %v5319
        %5326 = vmatprep.subr.bf16.mxu0 0
        %5327 = vmatpush1.bf16.xpose.msra.mxu0 %v5322
        %5328 = vmatprep.subr.bf16.mxu0 0
        %5329 = vmatpush1.bf16.xpose.msra.mxu0 0
        %5330 = vmatprep.subr.bf16.mxu0 0
        %5331 = vmatpush1.bf16.xpose.msra.mxu0 0
        %5332 = vmatprep.subr.bf16.mxu0 0
        %5333 = vmatpush1.bf16.xpose.msra.mxu0 0
        %5334 = vmatprep.subr.bf16.mxu0 0
        %5335 = vmatpush1.bf16.xpose.msra.mxu0 0
        %5336 = vmatprep.subr.bf16.mxu0 0
        %5337 = vmatpush1.bf16.xpose.msra.mxu0 0
        %5338 = vmatprep.subr.bf16.mxu0 0
        %5339 = vmatpush1.bf16.xpose.msra.mxu0 0
        %5340 = vmatprep.subr.bf16.mxu0 0
        %5341 = vmatpush1.bf16.xpose.msra.mxu0 0
        %5342 = vmatprep.subr.bf16.mxu0 0
        %5343 = vmatpush1.bf16.xpose.msra.mxu0 0
        %5344 = vmatprep.subr.bf16.mxu0 0
        %5345 = vmatpush1.bf16.xpose.msra.mxu0 0
        %5346 = vmatprep.subr.bf16.mxu0 0
        %5347 = vmatpush1.bf16.xpose.msra.mxu0 0
        %5348 = vmatprep.subr.bf16.mxu0 0
        %5349 = vmatpush1.bf16.xpose.msra.mxu0 0
        %5350 = vmatprep.subr.bf16.mxu0 0
        %5351 = vmatpush1.bf16.xpose.msra.mxu0 0
        %5352 = vmatprep.subr.bf16.mxu0 0
        %5353 = vmatpush1.bf16.xpose.msra.mxu0 0
        %5354 = vmatprep.subr.bf16.mxu0 0
        %5355 = vmatpush1.bf16.xpose.msra.mxu0 0
        %5356 = vmatprep.mubr.bf16.mxu0 0
        %5357 = vmatmul.mubr.bf16.gmra.mrb[0].mxu0 %v4626
        %v5358 = vpop.f32.mrb[0].mxu0
        %v5359 = vadd.f32 0.0, %v5358
        %v5360 = vpop.f32.mrb[0].mxu0
        %v5361 = vpop.f32.mrb[0].mxu0
        %v5362 = vpop.f32.mrb[0].mxu0
        %5363 = vdwg.mxu0
        %v5364 = vsel %vm1202, %v4669, -inf
        %5365 = vmax.xlane.f32.xlu0 %v5364
        %v5366 = vpop.xlane.xlu0 %5365
        %v5367 = vsel %vm1202, %v4715, -inf
        %5368 = vmax.xlane.f32.xlu0 %v5367
        %v5369 = vpop.xlane.xlu0 %5368
        %v5370 = vsel %vm1202, %v4761, -inf
        %5371 = vmax.xlane.f32.xlu0 %v5370
        %v5372 = vpop.xlane.xlu0 %5371
        %v5373 = vsel %vm1202, %v4807, -inf
        %5374 = vmax.xlane.f32.xlu0 %v5373
        %v5375 = vpop.xlane.xlu0 %5374
        %v5376 = vsel %vm1202, %v4853, -inf
        %5377 = vmax.xlane.f32.xlu0 %v5376
        %v5378 = vpop.xlane.xlu0 %5377
        %v5379 = vsel %vm1202, %v4899, -inf
        %5380 = vmax.xlane.f32.xlu0 %v5379
        %v5381 = vpop.xlane.xlu0 %5380
        %v5382 = vsel %vm1202, %v4945, -inf
        %5383 = vmax.xlane.f32.xlu0 %v5382
        %v5384 = vpop.xlane.xlu0 %5383
        %v5385 = vsel %vm1202, %v4991, -inf
        %5386 = vmax.xlane.f32.xlu0 %v5385
        %v5387 = vpop.xlane.xlu0 %5386
        %v5388 = vsel %vm1202, %v5037, -inf
        %5389 = vmax.xlane.f32.xlu0 %v5388
        %v5390 = vpop.xlane.xlu0 %5389
        %v5391 = vsel %vm1202, %v5083, -inf
        %5392 = vmax.xlane.f32.xlu0 %v5391
        %v5393 = vpop.xlane.xlu0 %5392
        %v5394 = vsel %vm1202, %v5129, -inf
        %5395 = vmax.xlane.f32.xlu0 %v5394
        %v5396 = vpop.xlane.xlu0 %5395
        %v5397 = vsel %vm1202, %v5175, -inf
        %5398 = vmax.xlane.f32.xlu0 %v5397
        %v5399 = vpop.xlane.xlu0 %5398
        %v5400 = vsel %vm1202, %v5221, -inf
        %5401 = vmax.xlane.f32.xlu0 %v5400
        %v5402 = vpop.xlane.xlu0 %5401
        %v5403 = vsel %vm1202, %v5267, -inf
        %5404 = vmax.xlane.f32.xlu0 %v5403
        %v5405 = vpop.xlane.xlu0 %5404
        %v5406 = vsel %vm1202, %v5313, -inf
        %5407 = vmax.xlane.f32.xlu0 %v5406
        %v5408 = vpop.xlane.xlu0 %5407
        %v5409 = vsel %vm1202, %v5359, -inf
        %5410 = vmax.xlane.f32.xlu0 %v5409
        %v5411 = vpop.xlane.xlu0 %5410
        %v5412 = vsub.f32 %v4669, %v5366
        %v5413 = vsub.f32 %v4715, %v5369
        %v5414 = vsub.f32 %v4761, %v5372
        %v5415 = vsub.f32 %v4807, %v5375
        %v5416 = vsub.f32 %v4853, %v5378
        %v5417 = vsub.f32 %v4899, %v5381
        %v5418 = vsub.f32 %v4945, %v5384
        %v5419 = vsub.f32 %v4991, %v5387
        %v5420 = vsub.f32 %v5037, %v5390
        %v5421 = vsub.f32 %v5083, %v5393
        %v5422 = vsub.f32 %v5129, %v5396
        %v5423 = vsub.f32 %v5175, %v5399
        %v5424 = vsub.f32 %v5221, %v5402
        %v5425 = vsub.f32 %v5267, %v5405
        %v5426 = vsub.f32 %v5313, %v5408
        %v5427 = vsub.f32 %v5359, %v5411
        %v5428 = vmul.f32 %v5412, 1.442695
        %v5429 = vpow.pop %v5428
        %v5430 = vmul.f32 %v5413, 1.442695
        %v5431 = vpow.pop %v5430
        %v5432 = vmul.f32 %v5414, 1.442695
        %v5433 = vpow.pop %v5432
        %v5434 = vmul.f32 %v5415, 1.442695
        %v5435 = vpow.pop %v5434
        %v5436 = vmul.f32 %v5416, 1.442695
        %v5437 = vpow.pop %v5436
        %v5438 = vmul.f32 %v5417, 1.442695
        %v5439 = vpow.pop %v5438
        %v5440 = vmul.f32 %v5418, 1.442695
        %v5441 = vpow.pop %v5440
        %v5442 = vmul.f32 %v5419, 1.442695
        %v5443 = vpow.pop %v5442
        %v5444 = vmul.f32 %v5420, 1.442695
        %v5445 = vpow.pop %v5444
        %v5446 = vmul.f32 %v5421, 1.442695
        %v5447 = vpow.pop %v5446
        %v5448 = vmul.f32 %v5422, 1.442695
        %v5449 = vpow.pop %v5448
        %v5450 = vmul.f32 %v5423, 1.442695
        %v5451 = vpow.pop %v5450
        %v5452 = vmul.f32 %v5424, 1.442695
        %v5453 = vpow.pop %v5452
        %v5454 = vmul.f32 %v5425, 1.442695
        %v5455 = vpow.pop %v5454
        %v5456 = vmul.f32 %v5426, 1.442695
        %v5457 = vpow.pop %v5456
        %v5458 = vmul.f32 %v5427, 1.442695
        %v5459 = vpow.pop %v5458
        %v5460 = vsel %vm1202, %v5429, 0.0
        %5461 = vadd.xlane.f32.xlu0 %v5460
        %v5462 = vpop.xlane.xlu0 %5461
        %v5463 = vsel %vm1202, %v5431, 0.0
        %5464 = vadd.xlane.f32.xlu0 %v5463
        %v5465 = vpop.xlane.xlu0 %5464
        %v5466 = vsel %vm1202, %v5433, 0.0
        %5467 = vadd.xlane.f32.xlu0 %v5466
        %v5468 = vpop.xlane.xlu0 %5467
        %v5469 = vsel %vm1202, %v5435, 0.0
        %5470 = vadd.xlane.f32.xlu0 %v5469
        %v5471 = vpop.xlane.xlu0 %5470
        %v5472 = vsel %vm1202, %v5437, 0.0
        %5473 = vadd.xlane.f32.xlu0 %v5472
        %v5474 = vpop.xlane.xlu0 %5473
        %v5475 = vsel %vm1202, %v5439, 0.0
        %5476 = vadd.xlane.f32.xlu0 %v5475
        %v5477 = vpop.xlane.xlu0 %5476
        %v5478 = vsel %vm1202, %v5441, 0.0
        %5479 = vadd.xlane.f32.xlu0 %v5478
        %v5480 = vpop.xlane.xlu0 %5479
        %v5481 = vsel %vm1202, %v5443, 0.0
        %5482 = vadd.xlane.f32.xlu0 %v5481
        %v5483 = vpop.xlane.xlu0 %5482
        %v5484 = vsel %vm1202, %v5445, 0.0
        %5485 = vadd.xlane.f32.xlu0 %v5484
        %v5486 = vpop.xlane.xlu0 %5485
        %v5487 = vsel %vm1202, %v5447, 0.0
        %5488 = vadd.xlane.f32.xlu0 %v5487
        %v5489 = vpop.xlane.xlu0 %5488
        %v5490 = vsel %vm1202, %v5449, 0.0
        %5491 = vadd.xlane.f32.xlu0 %v5490
        %v5492 = vpop.xlane.xlu0 %5491
        %v5493 = vsel %vm1202, %v5451, 0.0
        %5494 = vadd.xlane.f32.xlu0 %v5493
        %v5495 = vpop.xlane.xlu0 %5494
        %v5496 = vsel %vm1202, %v5453, 0.0
        %5497 = vadd.xlane.f32.xlu0 %v5496
        %v5498 = vpop.xlane.xlu0 %5497
        %v5499 = vsel %vm1202, %v5455, 0.0
        %5500 = vadd.xlane.f32.xlu0 %v5499
        %v5501 = vpop.xlane.xlu0 %5500
        %v5502 = vsel %vm1202, %v5457, 0.0
        %5503 = vadd.xlane.f32.xlu0 %v5502
        %v5504 = vpop.xlane.xlu0 %5503
        %v5505 = vsel %vm1202, %v5459, 0.0
        %5506 = vadd.xlane.f32.xlu0 %v5505
        %v5507 = vpop.xlane.xlu0 %5506
        %v5508 = vrcp.pop %v5462
        %v5509 = vrcp.pop %v5465
        %v5510 = vrcp.pop %v5468
        %v5511 = vrcp.pop %v5471
        %v5512 = vrcp.pop %v5474
        %v5513 = vrcp.pop %v5477
        %v5514 = vrcp.pop %v5480
        %v5515 = vrcp.pop %v5483
        %v5516 = vrcp.pop %v5486
        %v5517 = vrcp.pop %v5489
        %v5518 = vrcp.pop %v5492
        %v5519 = vrcp.pop %v5495
        %v5520 = vrcp.pop %v5498
        %v5521 = vrcp.pop %v5501
        %v5522 = vrcp.pop %v5504
        %v5523 = vrcp.pop %v5507
        %v5524 = vmul.f32 %v5429, %v5508
        %v5525 = vmul.f32 %v5431, %v5509
        %v5526 = vmul.f32 %v5433, %v5510
        %v5527 = vmul.f32 %v5435, %v5511
        %v5528 = vmul.f32 %v5437, %v5512
        %v5529 = vmul.f32 %v5439, %v5513
        %v5530 = vmul.f32 %v5441, %v5514
        %v5531 = vmul.f32 %v5443, %v5515
        %v5532 = vmul.f32 %v5445, %v5516
        %v5533 = vmul.f32 %v5447, %v5517
        %v5534 = vmul.f32 %v5449, %v5518
        %v5535 = vmul.f32 %v5451, %v5519
        %v5536 = vmul.f32 %v5453, %v5520
        %v5537 = vmul.f32 %v5455, %v5521
        %v5538 = vmul.f32 %v5457, %v5522
        %v5539 = vmul.f32 %v5459, %v5523
        %v5540 = vpack.c.bf16 %v5524, %v5524
        %v5541 = vpack.c.bf16 %v5525, %v5525
        %v5542 = vpack.c.bf16 %v5526, %v5526
        %v5543 = vpack.c.bf16 %v5527, %v5527
        %v5544 = vpack.c.bf16 %v5528, %v5528
        %v5545 = vpack.c.bf16 %v5529, %v5529
        %v5546 = vpack.c.bf16 %v5530, %v5530
        %v5547 = vpack.c.bf16 %v5531, %v5531
        %v5548 = vpack.c.bf16 %v5532, %v5532
        %v5549 = vpack.c.bf16 %v5533, %v5533
        %v5550 = vpack.c.bf16 %v5534, %v5534
        %v5551 = vpack.c.bf16 %v5535, %v5535
        %v5552 = vpack.c.bf16 %v5536, %v5536
        %v5553 = vpack.c.bf16 %v5537, %v5537
        %v5554 = vpack.c.bf16 %v5538, %v5538
        %v5555 = vpack.c.bf16 %v5539, %v5539
        %v5557 = vsel %vm1202, %v5540, 0
        %5559 = vmatprep.subr.bf16.mxu0 0
        %5560 = vmatpush1.bf16.msra.mxu0 %v4591
        %5561 = vmatprep.subr.bf16.mxu0 0
        %5562 = vmatpush1.bf16.msra.mxu0 %v4592
        %5563 = vmatprep.subr.bf16.mxu0 0
        %5564 = vmatpush1.bf16.msra.mxu0 0
        %5565 = vmatprep.subr.bf16.mxu0 0
        %5566 = vmatpush1.bf16.msra.mxu0 0
        %5567 = vmatprep.subr.bf16.mxu0 0
        %5568 = vmatpush1.bf16.msra.mxu0 0
        %5569 = vmatprep.subr.bf16.mxu0 0
        %5570 = vmatpush1.bf16.msra.mxu0 0
        %5571 = vmatprep.subr.bf16.mxu0 0
        %5572 = vmatpush1.bf16.msra.mxu0 0
        %5573 = vmatprep.subr.bf16.mxu0 0
        %5574 = vmatpush1.bf16.msra.mxu0 0
        %5575 = vmatprep.subr.bf16.mxu0 0
        %5576 = vmatpush1.bf16.msra.mxu0 0
        %5577 = vmatprep.subr.bf16.mxu0 0
        %5578 = vmatpush1.bf16.msra.mxu0 0
        %5579 = vmatprep.subr.bf16.mxu0 0
        %5580 = vmatpush1.bf16.msra.mxu0 0
        %5581 = vmatprep.subr.bf16.mxu0 0
        %5582 = vmatpush1.bf16.msra.mxu0 0
        %5583 = vmatprep.subr.bf16.mxu0 0
        %5584 = vmatpush1.bf16.msra.mxu0 0
        %5585 = vmatprep.subr.bf16.mxu0 0
        %5586 = vmatpush1.bf16.msra.mxu0 0
        %5587 = vmatprep.subr.bf16.mxu0 0
        %5588 = vmatpush1.bf16.msra.mxu0 0
        %5589 = vmatprep.subr.bf16.mxu0 0
        %5590 = vmatpush1.bf16.msra.mxu0 0
        %5591 = vmatprep.mubr.bf16.mxu0 0
        %5592 = vmatmul.mubr.bf16.gmra.mrb[0].mxu0 %v5557
        %v5593 = vpop.f32.mrb[0].mxu0
        %v5594 = vadd.f32 0.0, %v5593
        %v5595 = vpop.f32.mrb[0].mxu0
        %v5596 = vpop.f32.mrb[0].mxu0
        %v5597 = vpop.f32.mrb[0].mxu0
        %5598 = vdwg.mxu0
        %v5600 = vsel %vm1202, %v5541, 0
        %5602 = vmatprep.subr.bf16.mxu0 0
        %5603 = vmatpush1.bf16.msra.mxu0 %v4593
        %5604 = vmatprep.subr.bf16.mxu0 0
        %5605 = vmatpush1.bf16.msra.mxu0 %v4594
        %5606 = vmatprep.subr.bf16.mxu0 0
        %5607 = vmatpush1.bf16.msra.mxu0 0
        %5608 = vmatprep.subr.bf16.mxu0 0
        %5609 = vmatpush1.bf16.msra.mxu0 0
        %5610 = vmatprep.subr.bf16.mxu0 0
        %5611 = vmatpush1.bf16.msra.mxu0 0
        %5612 = vmatprep.subr.bf16.mxu0 0
        %5613 = vmatpush1.bf16.msra.mxu0 0
        %5614 = vmatprep.subr.bf16.mxu0 0
        %5615 = vmatpush1.bf16.msra.mxu0 0
        %5616 = vmatprep.subr.bf16.mxu0 0
        %5617 = vmatpush1.bf16.msra.mxu0 0
        %5618 = vmatprep.subr.bf16.mxu0 0
        %5619 = vmatpush1.bf16.msra.mxu0 0
        %5620 = vmatprep.subr.bf16.mxu0 0
        %5621 = vmatpush1.bf16.msra.mxu0 0
        %5622 = vmatprep.subr.bf16.mxu0 0
        %5623 = vmatpush1.bf16.msra.mxu0 0
        %5624 = vmatprep.subr.bf16.mxu0 0
        %5625 = vmatpush1.bf16.msra.mxu0 0
        %5626 = vmatprep.subr.bf16.mxu0 0
        %5627 = vmatpush1.bf16.msra.mxu0 0
        %5628 = vmatprep.subr.bf16.mxu0 0
        %5629 = vmatpush1.bf16.msra.mxu0 0
        %5630 = vmatprep.subr.bf16.mxu0 0
        %5631 = vmatpush1.bf16.msra.mxu0 0
        %5632 = vmatprep.subr.bf16.mxu0 0
        %5633 = vmatpush1.bf16.msra.mxu0 0
        %5634 = vmatprep.mubr.bf16.mxu0 0
        %5635 = vmatmul.mubr.bf16.gmra.mrb[0].mxu0 %v5600
        %v5636 = vpop.f32.mrb[0].mxu0
        %v5637 = vadd.f32 0.0, %v5636
        %v5638 = vpop.f32.mrb[0].mxu0
        %v5639 = vpop.f32.mrb[0].mxu0
        %v5640 = vpop.f32.mrb[0].mxu0
        %5641 = vdwg.mxu0
        %v5643 = vsel %vm1202, %v5542, 0
        %5645 = vmatprep.subr.bf16.mxu0 0
        %5646 = vmatpush1.bf16.msra.mxu0 %v4595
        %5647 = vmatprep.subr.bf16.mxu0 0
        %5648 = vmatpush1.bf16.msra.mxu0 %v4596
        %5649 = vmatprep.subr.bf16.mxu0 0
        %5650 = vmatpush1.bf16.msra.mxu0 0
        %5651 = vmatprep.subr.bf16.mxu0 0
        %5652 = vmatpush1.bf16.msra.mxu0 0
        %5653 = vmatprep.subr.bf16.mxu0 0
        %5654 = vmatpush1.bf16.msra.mxu0 0
        %5655 = vmatprep.subr.bf16.mxu0 0
        %5656 = vmatpush1.bf16.msra.mxu0 0
        %5657 = vmatprep.subr.bf16.mxu0 0
        %5658 = vmatpush1.bf16.msra.mxu0 0
        %5659 = vmatprep.subr.bf16.mxu0 0
        %5660 = vmatpush1.bf16.msra.mxu0 0
        %5661 = vmatprep.subr.bf16.mxu0 0
        %5662 = vmatpush1.bf16.msra.mxu0 0
        %5663 = vmatprep.subr.bf16.mxu0 0
        %5664 = vmatpush1.bf16.msra.mxu0 0
        %5665 = vmatprep.subr.bf16.mxu0 0
        %5666 = vmatpush1.bf16.msra.mxu0 0
        %5667 = vmatprep.subr.bf16.mxu0 0
        %5668 = vmatpush1.bf16.msra.mxu0 0
        %5669 = vmatprep.subr.bf16.mxu0 0
        %5670 = vmatpush1.bf16.msra.mxu0 0
        %5671 = vmatprep.subr.bf16.mxu0 0
        %5672 = vmatpush1.bf16.msra.mxu0 0
        %5673 = vmatprep.subr.bf16.mxu0 0
        %5674 = vmatpush1.bf16.msra.mxu0 0
        %5675 = vmatprep.subr.bf16.mxu0 0
        %5676 = vmatpush1.bf16.msra.mxu0 0
        %5677 = vmatprep.mubr.bf16.mxu0 0
        %5678 = vmatmul.mubr.bf16.gmra.mrb[0].mxu0 %v5643
        %v5679 = vpop.f32.mrb[0].mxu0
        %v5680 = vadd.f32 0.0, %v5679
        %v5681 = vpop.f32.mrb[0].mxu0
        %v5682 = vpop.f32.mrb[0].mxu0
        %v5683 = vpop.f32.mrb[0].mxu0
        %5684 = vdwg.mxu0
        %v5686 = vsel %vm1202, %v5543, 0
        %5688 = vmatprep.subr.bf16.mxu0 0
        %5689 = vmatpush1.bf16.msra.mxu0 %v4597
        %5690 = vmatprep.subr.bf16.mxu0 0
        %5691 = vmatpush1.bf16.msra.mxu0 %v4598
        %5692 = vmatprep.subr.bf16.mxu0 0
        %5693 = vmatpush1.bf16.msra.mxu0 0
        %5694 = vmatprep.subr.bf16.mxu0 0
        %5695 = vmatpush1.bf16.msra.mxu0 0
        %5696 = vmatprep.subr.bf16.mxu0 0
        %5697 = vmatpush1.bf16.msra.mxu0 0
        %5698 = vmatprep.subr.bf16.mxu0 0
        %5699 = vmatpush1.bf16.msra.mxu0 0
        %5700 = vmatprep.subr.bf16.mxu0 0
        %5701 = vmatpush1.bf16.msra.mxu0 0
        %5702 = vmatprep.subr.bf16.mxu0 0
        %5703 = vmatpush1.bf16.msra.mxu0 0
        %5704 = vmatprep.subr.bf16.mxu0 0
        %5705 = vmatpush1.bf16.msra.mxu0 0
        %5706 = vmatprep.subr.bf16.mxu0 0
        %5707 = vmatpush1.bf16.msra.mxu0 0
        %5708 = vmatprep.subr.bf16.mxu0 0
        %5709 = vmatpush1.bf16.msra.mxu0 0
        %5710 = vmatprep.subr.bf16.mxu0 0
        %5711 = vmatpush1.bf16.msra.mxu0 0
        %5712 = vmatprep.subr.bf16.mxu0 0
        %5713 = vmatpush1.bf16.msra.mxu0 0
        %5714 = vmatprep.subr.bf16.mxu0 0
        %5715 = vmatpush1.bf16.msra.mxu0 0
        %5716 = vmatprep.subr.bf16.mxu0 0
        %5717 = vmatpush1.bf16.msra.mxu0 0
        %5718 = vmatprep.subr.bf16.mxu0 0
        %5719 = vmatpush1.bf16.msra.mxu0 0
        %5720 = vmatprep.mubr.bf16.mxu0 0
        %5721 = vmatmul.mubr.bf16.gmra.mrb[0].mxu0 %v5686
        %v5722 = vpop.f32.mrb[0].mxu0
        %v5723 = vadd.f32 0.0, %v5722
        %v5724 = vpop.f32.mrb[0].mxu0
        %v5725 = vpop.f32.mrb[0].mxu0
        %v5726 = vpop.f32.mrb[0].mxu0
        %5727 = vdwg.mxu0
        %v5729 = vsel %vm1202, %v5544, 0
        %5731 = vmatprep.subr.bf16.mxu0 0
        %5732 = vmatpush1.bf16.msra.mxu0 %v4599
        %5733 = vmatprep.subr.bf16.mxu0 0
        %5734 = vmatpush1.bf16.msra.mxu0 %v4600
        %5735 = vmatprep.subr.bf16.mxu0 0
        %5736 = vmatpush1.bf16.msra.mxu0 0
        %5737 = vmatprep.subr.bf16.mxu0 0
        %5738 = vmatpush1.bf16.msra.mxu0 0
        %5739 = vmatprep.subr.bf16.mxu0 0
        %5740 = vmatpush1.bf16.msra.mxu0 0
        %5741 = vmatprep.subr.bf16.mxu0 0
        %5742 = vmatpush1.bf16.msra.mxu0 0
        %5743 = vmatprep.subr.bf16.mxu0 0
        %5744 = vmatpush1.bf16.msra.mxu0 0
        %5745 = vmatprep.subr.bf16.mxu0 0
        %5746 = vmatpush1.bf16.msra.mxu0 0
        %5747 = vmatprep.subr.bf16.mxu0 0
        %5748 = vmatpush1.bf16.msra.mxu0 0
        %5749 = vmatprep.subr.bf16.mxu0 0
        %5750 = vmatpush1.bf16.msra.mxu0 0
        %5751 = vmatprep.subr.bf16.mxu0 0
        %5752 = vmatpush1.bf16.msra.mxu0 0
        %5753 = vmatprep.subr.bf16.mxu0 0
        %5754 = vmatpush1.bf16.msra.mxu0 0
        %5755 = vmatprep.subr.bf16.mxu0 0
        %5756 = vmatpush1.bf16.msra.mxu0 0
        %5757 = vmatprep.subr.bf16.mxu0 0
        %5758 = vmatpush1.bf16.msra.mxu0 0
        %5759 = vmatprep.subr.bf16.mxu0 0
        %5760 = vmatpush1.bf16.msra.mxu0 0
        %5761 = vmatprep.subr.bf16.mxu0 0
        %5762 = vmatpush1.bf16.msra.mxu0 0
        %5763 = vmatprep.mubr.bf16.mxu0 0
        %5764 = vmatmul.mubr.bf16.gmra.mrb[0].mxu0 %v5729
        %v5765 = vpop.f32.mrb[0].mxu0
        %v5766 = vadd.f32 0.0, %v5765
        %v5767 = vpop.f32.mrb[0].mxu0
        %v5768 = vpop.f32.mrb[0].mxu0
        %v5769 = vpop.f32.mrb[0].mxu0
        %5770 = vdwg.mxu0
        %v5772 = vsel %vm1202, %v5545, 0
        %5774 = vmatprep.subr.bf16.mxu0 0
        %5775 = vmatpush1.bf16.msra.mxu0 %v4601
        %5776 = vmatprep.subr.bf16.mxu0 0
        %5777 = vmatpush1.bf16.msra.mxu0 %v4602
        %5778 = vmatprep.subr.bf16.mxu0 0
        %5779 = vmatpush1.bf16.msra.mxu0 0
        %5780 = vmatprep.subr.bf16.mxu0 0
        %5781 = vmatpush1.bf16.msra.mxu0 0
        %5782 = vmatprep.subr.bf16.mxu0 0
        %5783 = vmatpush1.bf16.msra.mxu0 0
        %5784 = vmatprep.subr.bf16.mxu0 0
        %5785 = vmatpush1.bf16.msra.mxu0 0
        %5786 = vmatprep.subr.bf16.mxu0 0
        %5787 = vmatpush1.bf16.msra.mxu0 0
        %5788 = vmatprep.subr.bf16.mxu0 0
        %5789 = vmatpush1.bf16.msra.mxu0 0
        %5790 = vmatprep.subr.bf16.mxu0 0
        %5791 = vmatpush1.bf16.msra.mxu0 0
        %5792 = vmatprep.subr.bf16.mxu0 0
        %5793 = vmatpush1.bf16.msra.mxu0 0
        %5794 = vmatprep.subr.bf16.mxu0 0
        %5795 = vmatpush1.bf16.msra.mxu0 0
        %5796 = vmatprep.subr.bf16.mxu0 0
        %5797 = vmatpush1.bf16.msra.mxu0 0
        %5798 = vmatprep.subr.bf16.mxu0 0
        %5799 = vmatpush1.bf16.msra.mxu0 0
        %5800 = vmatprep.subr.bf16.mxu0 0
        %5801 = vmatpush1.bf16.msra.mxu0 0
        %5802 = vmatprep.subr.bf16.mxu0 0
        %5803 = vmatpush1.bf16.msra.mxu0 0
        %5804 = vmatprep.subr.bf16.mxu0 0
        %5805 = vmatpush1.bf16.msra.mxu0 0
        %5806 = vmatprep.mubr.bf16.mxu0 0
        %5807 = vmatmul.mubr.bf16.gmra.mrb[0].mxu0 %v5772
        %v5808 = vpop.f32.mrb[0].mxu0
        %v5809 = vadd.f32 0.0, %v5808
        %v5810 = vpop.f32.mrb[0].mxu0
        %v5811 = vpop.f32.mrb[0].mxu0
        %v5812 = vpop.f32.mrb[0].mxu0
        %5813 = vdwg.mxu0
        %v5815 = vsel %vm1202, %v5546, 0
        %5817 = vmatprep.subr.bf16.mxu0 0
        %5818 = vmatpush1.bf16.msra.mxu0 %v4603
        %5819 = vmatprep.subr.bf16.mxu0 0
        %5820 = vmatpush1.bf16.msra.mxu0 %v4604
        %5821 = vmatprep.subr.bf16.mxu0 0
        %5822 = vmatpush1.bf16.msra.mxu0 0
        %5823 = vmatprep.subr.bf16.mxu0 0
        %5824 = vmatpush1.bf16.msra.mxu0 0
        %5825 = vmatprep.subr.bf16.mxu0 0
        %5826 = vmatpush1.bf16.msra.mxu0 0
        %5827 = vmatprep.subr.bf16.mxu0 0
        %5828 = vmatpush1.bf16.msra.mxu0 0
        %5829 = vmatprep.subr.bf16.mxu0 0
        %5830 = vmatpush1.bf16.msra.mxu0 0
        %5831 = vmatprep.subr.bf16.mxu0 0
        %5832 = vmatpush1.bf16.msra.mxu0 0
        %5833 = vmatprep.subr.bf16.mxu0 0
        %5834 = vmatpush1.bf16.msra.mxu0 0
        %5835 = vmatprep.subr.bf16.mxu0 0
        %5836 = vmatpush1.bf16.msra.mxu0 0
        %5837 = vmatprep.subr.bf16.mxu0 0
        %5838 = vmatpush1.bf16.msra.mxu0 0
        %5839 = vmatprep.subr.bf16.mxu0 0
        %5840 = vmatpush1.bf16.msra.mxu0 0
        %5841 = vmatprep.subr.bf16.mxu0 0
        %5842 = vmatpush1.bf16.msra.mxu0 0
        %5843 = vmatprep.subr.bf16.mxu0 0
        %5844 = vmatpush1.bf16.msra.mxu0 0
        %5845 = vmatprep.subr.bf16.mxu0 0
        %5846 = vmatpush1.bf16.msra.mxu0 0
        %5847 = vmatprep.subr.bf16.mxu0 0
        %5848 = vmatpush1.bf16.msra.mxu0 0
        %5849 = vmatprep.mubr.bf16.mxu0 0
        %5850 = vmatmul.mubr.bf16.gmra.mrb[0].mxu0 %v5815
        %v5851 = vpop.f32.mrb[0].mxu0
        %v5852 = vadd.f32 0.0, %v5851
        %v5853 = vpop.f32.mrb[0].mxu0
        %v5854 = vpop.f32.mrb[0].mxu0
        %v5855 = vpop.f32.mrb[0].mxu0
        %5856 = vdwg.mxu0
        %v5858 = vsel %vm1202, %v5547, 0
        %5860 = vmatprep.subr.bf16.mxu0 0
        %5861 = vmatpush1.bf16.msra.mxu0 %v4605
        %5862 = vmatprep.subr.bf16.mxu0 0
        %5863 = vmatpush1.bf16.msra.mxu0 %v4606
        %5864 = vmatprep.subr.bf16.mxu0 0
        %5865 = vmatpush1.bf16.msra.mxu0 0
        %5866 = vmatprep.subr.bf16.mxu0 0
        %5867 = vmatpush1.bf16.msra.mxu0 0
        %5868 = vmatprep.subr.bf16.mxu0 0
        %5869 = vmatpush1.bf16.msra.mxu0 0
        %5870 = vmatprep.subr.bf16.mxu0 0
        %5871 = vmatpush1.bf16.msra.mxu0 0
        %5872 = vmatprep.subr.bf16.mxu0 0
        %5873 = vmatpush1.bf16.msra.mxu0 0
        %5874 = vmatprep.subr.bf16.mxu0 0
        %5875 = vmatpush1.bf16.msra.mxu0 0
        %5876 = vmatprep.subr.bf16.mxu0 0
        %5877 = vmatpush1.bf16.msra.mxu0 0
        %5878 = vmatprep.subr.bf16.mxu0 0
        %5879 = vmatpush1.bf16.msra.mxu0 0
        %5880 = vmatprep.subr.bf16.mxu0 0
        %5881 = vmatpush1.bf16.msra.mxu0 0
        %5882 = vmatprep.subr.bf16.mxu0 0
        %5883 = vmatpush1.bf16.msra.mxu0 0
        %5884 = vmatprep.subr.bf16.mxu0 0
        %5885 = vmatpush1.bf16.msra.mxu0 0
        %5886 = vmatprep.subr.bf16.mxu0 0
        %5887 = vmatpush1.bf16.msra.mxu0 0
        %5888 = vmatprep.subr.bf16.mxu0 0
        %5889 = vmatpush1.bf16.msra.mxu0 0
        %5890 = vmatprep.subr.bf16.mxu0 0
        %5891 = vmatpush1.bf16.msra.mxu0 0
        %5892 = vmatprep.mubr.bf16.mxu0 0
        %5893 = vmatmul.mubr.bf16.gmra.mrb[0].mxu0 %v5858
        %v5894 = vpop.f32.mrb[0].mxu0
        %v5895 = vadd.f32 0.0, %v5894
        %v5896 = vpop.f32.mrb[0].mxu0
        %v5897 = vpop.f32.mrb[0].mxu0
        %v5898 = vpop.f32.mrb[0].mxu0
        %5899 = vdwg.mxu0
        %v5901 = vsel %vm1202, %v5548, 0
        %5903 = vmatprep.subr.bf16.mxu0 0
        %5904 = vmatpush1.bf16.msra.mxu0 %v4607
        %5905 = vmatprep.subr.bf16.mxu0 0
        %5906 = vmatpush1.bf16.msra.mxu0 %v4608
        %5907 = vmatprep.subr.bf16.mxu0 0
        %5908 = vmatpush1.bf16.msra.mxu0 0
        %5909 = vmatprep.subr.bf16.mxu0 0
        %5910 = vmatpush1.bf16.msra.mxu0 0
        %5911 = vmatprep.subr.bf16.mxu0 0
        %5912 = vmatpush1.bf16.msra.mxu0 0
        %5913 = vmatprep.subr.bf16.mxu0 0
        %5914 = vmatpush1.bf16.msra.mxu0 0
        %5915 = vmatprep.subr.bf16.mxu0 0
        %5916 = vmatpush1.bf16.msra.mxu0 0
        %5917 = vmatprep.subr.bf16.mxu0 0
        %5918 = vmatpush1.bf16.msra.mxu0 0
        %5919 = vmatprep.subr.bf16.mxu0 0
        %5920 = vmatpush1.bf16.msra.mxu0 0
        %5921 = vmatprep.subr.bf16.mxu0 0
        %5922 = vmatpush1.bf16.msra.mxu0 0
        %5923 = vmatprep.subr.bf16.mxu0 0
        %5924 = vmatpush1.bf16.msra.mxu0 0
        %5925 = vmatprep.subr.bf16.mxu0 0
        %5926 = vmatpush1.bf16.msra.mxu0 0
        %5927 = vmatprep.subr.bf16.mxu0 0
        %5928 = vmatpush1.bf16.msra.mxu0 0
        %5929 = vmatprep.subr.bf16.mxu0 0
        %5930 = vmatpush1.bf16.msra.mxu0 0
        %5931 = vmatprep.subr.bf16.mxu0 0
        %5932 = vmatpush1.bf16.msra.mxu0 0
        %5933 = vmatprep.subr.bf16.mxu0 0
        %5934 = vmatpush1.bf16.msra.mxu0 0
        %5935 = vmatprep.mubr.bf16.mxu0 0
        %5936 = vmatmul.mubr.bf16.gmra.mrb[0].mxu0 %v5901
        %v5937 = vpop.f32.mrb[0].mxu0
        %v5938 = vadd.f32 0.0, %v5937
        %v5939 = vpop.f32.mrb[0].mxu0
        %v5940 = vpop.f32.mrb[0].mxu0
        %v5941 = vpop.f32.mrb[0].mxu0
        %5942 = vdwg.mxu0
        %v5944 = vsel %vm1202, %v5549, 0
        %5946 = vmatprep.subr.bf16.mxu0 0
        %5947 = vmatpush1.bf16.msra.mxu0 %v4609
        %5948 = vmatprep.subr.bf16.mxu0 0
        %5949 = vmatpush1.bf16.msra.mxu0 %v4610
        %5950 = vmatprep.subr.bf16.mxu0 0
        %5951 = vmatpush1.bf16.msra.mxu0 0
        %5952 = vmatprep.subr.bf16.mxu0 0
        %5953 = vmatpush1.bf16.msra.mxu0 0
        %5954 = vmatprep.subr.bf16.mxu0 0
        %5955 = vmatpush1.bf16.msra.mxu0 0
        %5956 = vmatprep.subr.bf16.mxu0 0
        %5957 = vmatpush1.bf16.msra.mxu0 0
        %5958 = vmatprep.subr.bf16.mxu0 0
        %5959 = vmatpush1.bf16.msra.mxu0 0
        %5960 = vmatprep.subr.bf16.mxu0 0
        %5961 = vmatpush1.bf16.msra.mxu0 0
        %5962 = vmatprep.subr.bf16.mxu0 0
        %5963 = vmatpush1.bf16.msra.mxu0 0
        %5964 = vmatprep.subr.bf16.mxu0 0
        %5965 = vmatpush1.bf16.msra.mxu0 0
        %5966 = vmatprep.subr.bf16.mxu0 0
        %5967 = vmatpush1.bf16.msra.mxu0 0
        %5968 = vmatprep.subr.bf16.mxu0 0
        %5969 = vmatpush1.bf16.msra.mxu0 0
        %5970 = vmatprep.subr.bf16.mxu0 0
        %5971 = vmatpush1.bf16.msra.mxu0 0
        %5972 = vmatprep.subr.bf16.mxu0 0
        %5973 = vmatpush1.bf16.msra.mxu0 0
        %5974 = vmatprep.subr.bf16.mxu0 0
        %5975 = vmatpush1.bf16.msra.mxu0 0
        %5976 = vmatprep.subr.bf16.mxu0 0
        %5977 = vmatpush1.bf16.msra.mxu0 0
        %5978 = vmatprep.mubr.bf16.mxu0 0
        %5979 = vmatmul.mubr.bf16.gmra.mrb[0].mxu0 %v5944
        %v5980 = vpop.f32.mrb[0].mxu0
        %v5981 = vadd.f32 0.0, %v5980
        %v5982 = vpop.f32.mrb[0].mxu0
        %v5983 = vpop.f32.mrb[0].mxu0
        %v5984 = vpop.f32.mrb[0].mxu0
        %5985 = vdwg.mxu0
        %v5987 = vsel %vm1202, %v5550, 0
        %5989 = vmatprep.subr.bf16.mxu0 0
        %5990 = vmatpush1.bf16.msra.mxu0 %v4611
        %5991 = vmatprep.subr.bf16.mxu0 0
        %5992 = vmatpush1.bf16.msra.mxu0 %v4612
        %5993 = vmatprep.subr.bf16.mxu0 0
        %5994 = vmatpush1.bf16.msra.mxu0 0
        %5995 = vmatprep.subr.bf16.mxu0 0
        %5996 = vmatpush1.bf16.msra.mxu0 0
        %5997 = vmatprep.subr.bf16.mxu0 0
        %5998 = vmatpush1.bf16.msra.mxu0 0
        %5999 = vmatprep.subr.bf16.mxu0 0
        %6000 = vmatpush1.bf16.msra.mxu0 0
        %6001 = vmatprep.subr.bf16.mxu0 0
        %6002 = vmatpush1.bf16.msra.mxu0 0
        %6003 = vmatprep.subr.bf16.mxu0 0
        %6004 = vmatpush1.bf16.msra.mxu0 0
        %6005 = vmatprep.subr.bf16.mxu0 0
        %6006 = vmatpush1.bf16.msra.mxu0 0
        %6007 = vmatprep.subr.bf16.mxu0 0
        %6008 = vmatpush1.bf16.msra.mxu0 0
        %6009 = vmatprep.subr.bf16.mxu0 0
        %6010 = vmatpush1.bf16.msra.mxu0 0
        %6011 = vmatprep.subr.bf16.mxu0 0
        %6012 = vmatpush1.bf16.msra.mxu0 0
        %6013 = vmatprep.subr.bf16.mxu0 0
        %6014 = vmatpush1.bf16.msra.mxu0 0
        %6015 = vmatprep.subr.bf16.mxu0 0
        %6016 = vmatpush1.bf16.msra.mxu0 0
        %6017 = vmatprep.subr.bf16.mxu0 0
        %6018 = vmatpush1.bf16.msra.mxu0 0
        %6019 = vmatprep.subr.bf16.mxu0 0
        %6020 = vmatpush1.bf16.msra.mxu0 0
        %6021 = vmatprep.mubr.bf16.mxu0 0
        %6022 = vmatmul.mubr.bf16.gmra.mrb[0].mxu0 %v5987
        %v6023 = vpop.f32.mrb[0].mxu0
        %v6024 = vadd.f32 0.0, %v6023
        %v6025 = vpop.f32.mrb[0].mxu0
        %v6026 = vpop.f32.mrb[0].mxu0
        %v6027 = vpop.f32.mrb[0].mxu0
        %6028 = vdwg.mxu0
        %v6030 = vsel %vm1202, %v5551, 0
        %6032 = vmatprep.subr.bf16.mxu0 0
        %6033 = vmatpush1.bf16.msra.mxu0 %v4613
        %6034 = vmatprep.subr.bf16.mxu0 0
        %6035 = vmatpush1.bf16.msra.mxu0 %v4614
        %6036 = vmatprep.subr.bf16.mxu0 0
        %6037 = vmatpush1.bf16.msra.mxu0 0
        %6038 = vmatprep.subr.bf16.mxu0 0
        %6039 = vmatpush1.bf16.msra.mxu0 0
        %6040 = vmatprep.subr.bf16.mxu0 0
        %6041 = vmatpush1.bf16.msra.mxu0 0
        %6042 = vmatprep.subr.bf16.mxu0 0
        %6043 = vmatpush1.bf16.msra.mxu0 0
        %6044 = vmatprep.subr.bf16.mxu0 0
        %6045 = vmatpush1.bf16.msra.mxu0 0
        %6046 = vmatprep.subr.bf16.mxu0 0
        %6047 = vmatpush1.bf16.msra.mxu0 0
        %6048 = vmatprep.subr.bf16.mxu0 0
        %6049 = vmatpush1.bf16.msra.mxu0 0
        %6050 = vmatprep.subr.bf16.mxu0 0
        %6051 = vmatpush1.bf16.msra.mxu0 0
        %6052 = vmatprep.subr.bf16.mxu0 0
        %6053 = vmatpush1.bf16.msra.mxu0 0
        %6054 = vmatprep.subr.bf16.mxu0 0
        %6055 = vmatpush1.bf16.msra.mxu0 0
        %6056 = vmatprep.subr.bf16.mxu0 0
        %6057 = vmatpush1.bf16.msra.mxu0 0
        %6058 = vmatprep.subr.bf16.mxu0 0
        %6059 = vmatpush1.bf16.msra.mxu0 0
        %6060 = vmatprep.subr.bf16.mxu0 0
        %6061 = vmatpush1.bf16.msra.mxu0 0
        %6062 = vmatprep.subr.bf16.mxu0 0
        %6063 = vmatpush1.bf16.msra.mxu0 0
        %6064 = vmatprep.mubr.bf16.mxu0 0
        %6065 = vmatmul.mubr.bf16.gmra.mrb[0].mxu0 %v6030
        %v6066 = vpop.f32.mrb[0].mxu0
        %v6067 = vadd.f32 0.0, %v6066
        %v6068 = vpop.f32.mrb[0].mxu0
        %v6069 = vpop.f32.mrb[0].mxu0
        %v6070 = vpop.f32.mrb[0].mxu0
        %6071 = vdwg.mxu0
        %v6073 = vsel %vm1202, %v5552, 0
        %6075 = vmatprep.subr.bf16.mxu0 0
        %6076 = vmatpush1.bf16.msra.mxu0 %v4615
        %6077 = vmatprep.subr.bf16.mxu0 0
        %6078 = vmatpush1.bf16.msra.mxu0 %v4616
        %6079 = vmatprep.subr.bf16.mxu0 0
        %6080 = vmatpush1.bf16.msra.mxu0 0
        %6081 = vmatprep.subr.bf16.mxu0 0
        %6082 = vmatpush1.bf16.msra.mxu0 0
        %6083 = vmatprep.subr.bf16.mxu0 0
        %6084 = vmatpush1.bf16.msra.mxu0 0
        %6085 = vmatprep.subr.bf16.mxu0 0
        %6086 = vmatpush1.bf16.msra.mxu0 0
        %6087 = vmatprep.subr.bf16.mxu0 0
        %6088 = vmatpush1.bf16.msra.mxu0 0
        %6089 = vmatprep.subr.bf16.mxu0 0
        %6090 = vmatpush1.bf16.msra.mxu0 0
        %6091 = vmatprep.subr.bf16.mxu0 0
        %6092 = vmatpush1.bf16.msra.mxu0 0
        %6093 = vmatprep.subr.bf16.mxu0 0
        %6094 = vmatpush1.bf16.msra.mxu0 0
        %6095 = vmatprep.subr.bf16.mxu0 0
        %6096 = vmatpush1.bf16.msra.mxu0 0
        %6097 = vmatprep.subr.bf16.mxu0 0
        %6098 = vmatpush1.bf16.msra.mxu0 0
        %6099 = vmatprep.subr.bf16.mxu0 0
        %6100 = vmatpush1.bf16.msra.mxu0 0
        %6101 = vmatprep.subr.bf16.mxu0 0
        %6102 = vmatpush1.bf16.msra.mxu0 0
        %6103 = vmatprep.subr.bf16.mxu0 0
        %6104 = vmatpush1.bf16.msra.mxu0 0
        %6105 = vmatprep.subr.bf16.mxu0 0
        %6106 = vmatpush1.bf16.msra.mxu0 0
        %6107 = vmatprep.mubr.bf16.mxu0 0
        %6108 = vmatmul.mubr.bf16.gmra.mrb[0].mxu0 %v6073
        %v6109 = vpop.f32.mrb[0].mxu0
        %v6110 = vadd.f32 0.0, %v6109
        %v6111 = vpop.f32.mrb[0].mxu0
        %v6112 = vpop.f32.mrb[0].mxu0
        %v6113 = vpop.f32.mrb[0].mxu0
        %6114 = vdwg.mxu0
        %v6116 = vsel %vm1202, %v5553, 0
        %6118 = vmatprep.subr.bf16.mxu0 0
        %6119 = vmatpush1.bf16.msra.mxu0 %v4617
        %6120 = vmatprep.subr.bf16.mxu0 0
        %6121 = vmatpush1.bf16.msra.mxu0 %v4618
        %6122 = vmatprep.subr.bf16.mxu0 0
        %6123 = vmatpush1.bf16.msra.mxu0 0
        %6124 = vmatprep.subr.bf16.mxu0 0
        %6125 = vmatpush1.bf16.msra.mxu0 0
        %6126 = vmatprep.subr.bf16.mxu0 0
        %6127 = vmatpush1.bf16.msra.mxu0 0
        %6128 = vmatprep.subr.bf16.mxu0 0
        %6129 = vmatpush1.bf16.msra.mxu0 0
        %6130 = vmatprep.subr.bf16.mxu0 0
        %6131 = vmatpush1.bf16.msra.mxu0 0
        %6132 = vmatprep.subr.bf16.mxu0 0
        %6133 = vmatpush1.bf16.msra.mxu0 0
        %6134 = vmatprep.subr.bf16.mxu0 0
        %6135 = vmatpush1.bf16.msra.mxu0 0
        %6136 = vmatprep.subr.bf16.mxu0 0
        %6137 = vmatpush1.bf16.msra.mxu0 0
        %6138 = vmatprep.subr.bf16.mxu0 0
        %6139 = vmatpush1.bf16.msra.mxu0 0
        %6140 = vmatprep.subr.bf16.mxu0 0
        %6141 = vmatpush1.bf16.msra.mxu0 0
        %6142 = vmatprep.subr.bf16.mxu0 0
        %6143 = vmatpush1.bf16.msra.mxu0 0
        %6144 = vmatprep.subr.bf16.mxu0 0
        %6145 = vmatpush1.bf16.msra.mxu0 0
        %6146 = vmatprep.subr.bf16.mxu0 0
        %6147 = vmatpush1.bf16.msra.mxu0 0
        %6148 = vmatprep.subr.bf16.mxu0 0
        %6149 = vmatpush1.bf16.msra.mxu0 0
        %6150 = vmatprep.mubr.bf16.mxu0 0
        %6151 = vmatmul.mubr.bf16.gmra.mrb[0].mxu0 %v6116
        %v6152 = vpop.f32.mrb[0].mxu0
        %v6153 = vadd.f32 0.0, %v6152
        %v6154 = vpop.f32.mrb[0].mxu0
        %v6155 = vpop.f32.mrb[0].mxu0
        %v6156 = vpop.f32.mrb[0].mxu0
        %6157 = vdwg.mxu0
        %v6159 = vsel %vm1202, %v5554, 0
        %6161 = vmatprep.subr.bf16.mxu0 0
        %6162 = vmatpush1.bf16.msra.mxu0 %v4619
        %6163 = vmatprep.subr.bf16.mxu0 0
        %6164 = vmatpush1.bf16.msra.mxu0 %v4620
        %6165 = vmatprep.subr.bf16.mxu0 0
        %6166 = vmatpush1.bf16.msra.mxu0 0
        %6167 = vmatprep.subr.bf16.mxu0 0
        %6168 = vmatpush1.bf16.msra.mxu0 0
        %6169 = vmatprep.subr.bf16.mxu0 0
        %6170 = vmatpush1.bf16.msra.mxu0 0
        %6171 = vmatprep.subr.bf16.mxu0 0
        %6172 = vmatpush1.bf16.msra.mxu0 0
        %6173 = vmatprep.subr.bf16.mxu0 0
        %6174 = vmatpush1.bf16.msra.mxu0 0
        %6175 = vmatprep.subr.bf16.mxu0 0
        %6176 = vmatpush1.bf16.msra.mxu0 0
        %6177 = vmatprep.subr.bf16.mxu0 0
        %6178 = vmatpush1.bf16.msra.mxu0 0
        %6179 = vmatprep.subr.bf16.mxu0 0
        %6180 = vmatpush1.bf16.msra.mxu0 0
        %6181 = vmatprep.subr.bf16.mxu0 0
        %6182 = vmatpush1.bf16.msra.mxu0 0
        %6183 = vmatprep.subr.bf16.mxu0 0
        %6184 = vmatpush1.bf16.msra.mxu0 0
        %6185 = vmatprep.subr.bf16.mxu0 0
        %6186 = vmatpush1.bf16.msra.mxu0 0
        %6187 = vmatprep.subr.bf16.mxu0 0
        %6188 = vmatpush1.bf16.msra.mxu0 0
        %6189 = vmatprep.subr.bf16.mxu0 0
        %6190 = vmatpush1.bf16.msra.mxu0 0
        %6191 = vmatprep.subr.bf16.mxu0 0
        %6192 = vmatpush1.bf16.msra.mxu0 0
        %6193 = vmatprep.mubr.bf16.mxu0 0
        %6194 = vmatmul.mubr.bf16.gmra.mrb[0].mxu0 %v6159
        %v6195 = vpop.f32.mrb[0].mxu0
        %v6196 = vadd.f32 0.0, %v6195
        %v6197 = vpop.f32.mrb[0].mxu0
        %v6198 = vpop.f32.mrb[0].mxu0
        %v6199 = vpop.f32.mrb[0].mxu0
        %6200 = vdwg.mxu0
        %v6202 = vsel %vm1202, %v5555, 0
        %6204 = vmatprep.subr.bf16.mxu0 0
        %6205 = vmatpush1.bf16.msra.mxu0 %v4621
        %6206 = vmatprep.subr.bf16.mxu0 0
        %6207 = vmatpush1.bf16.msra.mxu0 %v4622
        %6208 = vmatprep.subr.bf16.mxu0 0
        %6209 = vmatpush1.bf16.msra.mxu0 0
        %6210 = vmatprep.subr.bf16.mxu0 0
        %6211 = vmatpush1.bf16.msra.mxu0 0
        %6212 = vmatprep.subr.bf16.mxu0 0
        %6213 = vmatpush1.bf16.msra.mxu0 0
        %6214 = vmatprep.subr.bf16.mxu0 0
        %6215 = vmatpush1.bf16.msra.mxu0 0
        %6216 = vmatprep.subr.bf16.mxu0 0
        %6217 = vmatpush1.bf16.msra.mxu0 0
        %6218 = vmatprep.subr.bf16.mxu0 0
        %6219 = vmatpush1.bf16.msra.mxu0 0
        %6220 = vmatprep.subr.bf16.mxu0 0
        %6221 = vmatpush1.bf16.msra.mxu0 0
        %6222 = vmatprep.subr.bf16.mxu0 0
        %6223 = vmatpush1.bf16.msra.mxu0 0
        %6224 = vmatprep.subr.bf16.mxu0 0
        %6225 = vmatpush1.bf16.msra.mxu0 0
        %6226 = vmatprep.subr.bf16.mxu0 0
        %6227 = vmatpush1.bf16.msra.mxu0 0
        %6228 = vmatprep.subr.bf16.mxu0 0
        %6229 = vmatpush1.bf16.msra.mxu0 0
        %6230 = vmatprep.subr.bf16.mxu0 0
        %6231 = vmatpush1.bf16.msra.mxu0 0
        %6232 = vmatprep.subr.bf16.mxu0 0
        %6233 = vmatpush1.bf16.msra.mxu0 0
        %6234 = vmatprep.subr.bf16.mxu0 0
        %6235 = vmatpush1.bf16.msra.mxu0 0
        %6236 = vmatprep.mubr.bf16.mxu0 0
        %6237 = vmatmul.mubr.bf16.gmra.mrb[0].mxu0 %v6202
        %v6238 = vpop.f32.mrb[0].mxu0
        %v6239 = vadd.f32 0.0, %v6238
        %v6240 = vpop.f32.mrb[0].mxu0
        %v6241 = vpop.f32.mrb[0].mxu0
        %v6242 = vpop.f32.mrb[0].mxu0
        %6243 = vdwg.mxu0
        %v6244 = vpack.c.bf16 %v5637, %v5594
        %v6245 = vpack.c.bf16 %v5723, %v5680
        %v6246 = vpack.c.bf16 %v5809, %v5766
        %v6247 = vpack.c.bf16 %v5895, %v5852
        %v6248 = vpack.c.bf16 %v5981, %v5938
        %v6249 = vpack.c.bf16 %v6067, %v6024
        %v6250 = vpack.c.bf16 %v6153, %v6110
        %v6251 = vpack.c.bf16 %v6239, %v6196
        %s6252 = scalar_lea.vmem %s4, 16
        %v6253 = vld [vmem:[%s6252] sm:$0xf]
        %v6254 = vld [vmem:[%s6252 + $0x4] sm:$0xf]
        %v6255 = vld [vmem:[%s6252 + $0x8] sm:$0xf]
        %v6256 = vld [vmem:[%s6252 + $0xc] sm:$0xf]
        %s6257 = scalar_lea.vmem %s5, 1
        %v6258 = vld [vmem:[%s6257] sm:$0x1]
        %v6260 = vlaneseq
        %v6261 = vshrl.u32 %v6260, 7
        %v6262 = vsub.s32 0, %v6261
        %v6263 = vrot.slane %v6258, %v6262
        %v6269 = vunpack.c.l.b16 %v6253
        %v6270 = vunpack.c.l.b16 %v6254
        %v6271 = vunpack.c.l.b16 %v6255
        %v6272 = vunpack.c.l.b16 %v6256
        %v6273 = vpack.c.b16 %v6270, %v6269
        %v6274 = vpack.c.b16 %v6272, %v6271
        %v6278 = vsel %vm1202, %v6244, 0
        %v6281 = vsel %vm1202, %v6245, 0
        %v6284 = vsel %vm1202, %v6246, 0
        %v6287 = vsel %vm1202, %v6247, 0
        %v6290 = vsel %vm1202, %v6248, 0
        %v6293 = vsel %vm1202, %v6249, 0
        %v6296 = vsel %vm1202, %v6250, 0
        %v6299 = vsel %vm1202, %v6251, 0
        %6301 = vmatprep.subr.bf16.mxu0 0
        %6302 = vmatpush1.bf16.msra.mxu0 %v6273
        %6303 = vmatprep.subr.bf16.mxu0 0
        %6304 = vmatpush1.bf16.msra.mxu0 %v6274
        %6305 = vmatprep.subr.bf16.mxu0 0
        %6306 = vmatpush1.bf16.msra.mxu0 0
        %6307 = vmatprep.subr.bf16.mxu0 0
        %6308 = vmatpush1.bf16.msra.mxu0 0
        %6309 = vmatprep.subr.bf16.mxu0 0
        %6310 = vmatpush1.bf16.msra.mxu0 0
        %6311 = vmatprep.subr.bf16.mxu0 0
        %6312 = vmatpush1.bf16.msra.mxu0 0
        %6313 = vmatprep.subr.bf16.mxu0 0
        %6314 = vmatpush1.bf16.msra.mxu0 0
        %6315 = vmatprep.subr.bf16.mxu0 0
        %6316 = vmatpush1.bf16.msra.mxu0 0
        %6317 = vmatprep.subr.bf16.mxu0 0
        %6318 = vmatpush1.bf16.msra.mxu0 0
        %6319 = vmatprep.subr.bf16.mxu0 0
        %6320 = vmatpush1.bf16.msra.mxu0 0
        %6321 = vmatprep.subr.bf16.mxu0 0
        %6322 = vmatpush1.bf16.msra.mxu0 0
        %6323 = vmatprep.subr.bf16.mxu0 0
        %6324 = vmatpush1.bf16.msra.mxu0 0
        %6325 = vmatprep.subr.bf16.mxu0 0
        %6326 = vmatpush1.bf16.msra.mxu0 0
        %6327 = vmatprep.subr.bf16.mxu0 0
        %6328 = vmatpush1.bf16.msra.mxu0 0
        %6329 = vmatprep.subr.bf16.mxu0 0
        %6330 = vmatpush1.bf16.msra.mxu0 0
        %6331 = vmatprep.subr.bf16.mxu0 0
        %6332 = vmatpush1.bf16.msra.mxu0 0
        %6333 = vmatprep.mubr.bf16.mxu0 0
        %6334 = vmatmul.mubr.bf16.gmra.mrb[0].mxu0 %v6278
        %v6335 = vpop.f32.mrb[0].mxu0
        %v6336 = vadd.f32 %v6263, %v6335
        %v6337 = vpop.f32.mrb[0].mxu0
        %v6338 = vpop.f32.mrb[0].mxu0
        %v6339 = vadd.f32 %v6263, %v6338
        %v6340 = vpop.f32.mrb[0].mxu0
        %6341 = vmatprep.mubr.bf16.mxu0 0
        %6342 = vmatmul.mubr.bf16.gmra.mrb[0].mxu0 %v6281
        %v6343 = vpop.f32.mrb[0].mxu0
        %v6344 = vadd.f32 %v6263, %v6343
        %v6345 = vpop.f32.mrb[0].mxu0
        %v6346 = vpop.f32.mrb[0].mxu0
        %v6347 = vadd.f32 %v6263, %v6346
        %v6348 = vpop.f32.mrb[0].mxu0
        %6349 = vmatprep.mubr.bf16.mxu0 0
        %6350 = vmatmul.mubr.bf16.gmra.mrb[0].mxu0 %v6284
        %v6351 = vpop.f32.mrb[0].mxu0
        %v6352 = vadd.f32 %v6263, %v6351
        %v6353 = vpop.f32.mrb[0].mxu0
        %v6354 = vpop.f32.mrb[0].mxu0
        %v6355 = vadd.f32 %v6263, %v6354
        %v6356 = vpop.f32.mrb[0].mxu0
        %6357 = vmatprep.mubr.bf16.mxu0 0
        %6358 = vmatmul.mubr.bf16.gmra.mrb[0].mxu0 %v6287
        %v6359 = vpop.f32.mrb[0].mxu0
        %v6360 = vadd.f32 %v6263, %v6359
        %v6361 = vpop.f32.mrb[0].mxu0
        %v6362 = vpop.f32.mrb[0].mxu0
        %v6363 = vadd.f32 %v6263, %v6362
        %v6364 = vpop.f32.mrb[0].mxu0
        %6365 = vmatprep.mubr.bf16.mxu0 0
        %6366 = vmatmul.mubr.bf16.gmra.mrb[0].mxu0 %v6290
        %v6367 = vpop.f32.mrb[0].mxu0
        %v6368 = vadd.f32 %v6263, %v6367
        %v6369 = vpop.f32.mrb[0].mxu0
        %v6370 = vpop.f32.mrb[0].mxu0
        %v6371 = vadd.f32 %v6263, %v6370
        %v6372 = vpop.f32.mrb[0].mxu0
        %6373 = vmatprep.mubr.bf16.mxu0 0
        %6374 = vmatmul.mubr.bf16.gmra.mrb[0].mxu0 %v6293
        %v6375 = vpop.f32.mrb[0].mxu0
        %v6376 = vadd.f32 %v6263, %v6375
        %v6377 = vpop.f32.mrb[0].mxu0
        %v6378 = vpop.f32.mrb[0].mxu0
        %v6379 = vadd.f32 %v6263, %v6378
        %v6380 = vpop.f32.mrb[0].mxu0
        %6381 = vmatprep.mubr.bf16.mxu0 0
        %6382 = vmatmul.mubr.bf16.gmra.mrb[0].mxu0 %v6296
        %v6383 = vpop.f32.mrb[0].mxu0
        %v6384 = vadd.f32 %v6263, %v6383
        %v6385 = vpop.f32.mrb[0].mxu0
        %v6386 = vpop.f32.mrb[0].mxu0
        %v6387 = vadd.f32 %v6263, %v6386
        %v6388 = vpop.f32.mrb[0].mxu0
        %6389 = vmatprep.mubr.bf16.mxu0 0
        %6390 = vmatmul.mubr.bf16.gmra.mrb[0].mxu0 %v6299
        %v6391 = vpop.f32.mrb[0].mxu0
        %v6392 = vadd.f32 %v6263, %v6391
        %v6393 = vpop.f32.mrb[0].mxu0
        %v6394 = vpop.f32.mrb[0].mxu0
        %v6395 = vadd.f32 %v6263, %v6394
        %v6396 = vpop.f32.mrb[0].mxu0
        %6397 = vdwg.mxu0
        %s6398 = scalar_lea.vmem %s351, 128 [#allocation2]
        %6399 = vst [vmem:[%s6398] sm:$0xff] %v6336
        %6400 = vst [vmem:[%s6398 + $0x8] sm:$0xff] %v6339
        %6401 = vst [vmem:[%s6398 + $0x10] sm:$0xff] %v6344
        %6402 = vst [vmem:[%s6398 + $0x18] sm:$0xff] %v6347
        %6403 = vst [vmem:[%s6398 + $0x20] sm:$0xff] %v6352
        %6404 = vst [vmem:[%s6398 + $0x28] sm:$0xff] %v6355
        %6405 = vst [vmem:[%s6398 + $0x30] sm:$0xff] %v6360
        %6406 = vst [vmem:[%s6398 + $0x38] sm:$0xff] %v6363
        %6407 = vst [vmem:[%s6398 + $0x40] sm:$0xff] %v6368
        %6408 = vst [vmem:[%s6398 + $0x48] sm:$0xff] %v6371
        %6409 = vst [vmem:[%s6398 + $0x50] sm:$0xff] %v6376
        %6410 = vst [vmem:[%s6398 + $0x58] sm:$0xff] %v6379
        %6411 = vst [vmem:[%s6398 + $0x60] sm:$0xff] %v6384
        %6412 = vst [vmem:[%s6398 + $0x68] sm:$0xff] %v6387
        %6413 = vst [vmem:[%s6398 + $0x70] sm:$0xff] %v6392
        %6414 = vst [vmem:[%s6398 + $0x78] sm:$0xff] %v6395
        %s6415 = scalar_lea.vmem %s6, 16
        %v6416 = vld [vmem:[%s6415] sm:$0xf]
        %v6417 = vld [vmem:[%s6415 + $0x4] sm:$0xf]
        %v6418 = vld [vmem:[%s6415 + $0x8] sm:$0xf]
        %v6419 = vld [vmem:[%s6415 + $0xc] sm:$0xf]
        %s6420 = scalar_lea.vmem %s7, 1
        %v6421 = vld [vmem:[%s6420] sm:$0x1]
        %v6423 = vlaneseq
        %v6424 = vshrl.u32 %v6423, 7
        %v6425 = vsub.s32 0, %v6424
        %v6426 = vrot.slane %v6421, %v6425
        %v6432 = vunpack.c.l.b16 %v6416
        %v6433 = vunpack.c.l.b16 %v6417
        %v6434 = vunpack.c.l.b16 %v6418
        %v6435 = vunpack.c.l.b16 %v6419
        %v6436 = vpack.c.b16 %v6433, %v6432
        %v6437 = vpack.c.b16 %v6435, %v6434
        %6440 = vmatprep.subr.bf16.mxu0 0
        %6441 = vmatpush1.bf16.msra.mxu0 %v6436
        %6442 = vmatprep.subr.bf16.mxu0 0
        %6443 = vmatpush1.bf16.msra.mxu0 %v6437
        %6444 = vmatprep.subr.bf16.mxu0 0
        %6445 = vmatpush1.bf16.msra.mxu0 0
        %6446 = vmatprep.subr.bf16.mxu0 0
        %6447 = vmatpush1.bf16.msra.mxu0 0
        %6448 = vmatprep.subr.bf16.mxu0 0
        %6449 = vmatpush1.bf16.msra.mxu0 0
        %6450 = vmatprep.subr.bf16.mxu0 0
        %6451 = vmatpush1.bf16.msra.mxu0 0
        %6452 = vmatprep.subr.bf16.mxu0 0
        %6453 = vmatpush1.bf16.msra.mxu0 0
        %6454 = vmatprep.subr.bf16.mxu0 0
        %6455 = vmatpush1.bf16.msra.mxu0 0
        %6456 = vmatprep.subr.bf16.mxu0 0
        %6457 = vmatpush1.bf16.msra.mxu0 0
        %6458 = vmatprep.subr.bf16.mxu0 0
        %6459 = vmatpush1.bf16.msra.mxu0 0
        %6460 = vmatprep.subr.bf16.mxu0 0
        %6461 = vmatpush1.bf16.msra.mxu0 0
        %6462 = vmatprep.subr.bf16.mxu0 0
        %6463 = vmatpush1.bf16.msra.mxu0 0
        %6464 = vmatprep.subr.bf16.mxu0 0
        %6465 = vmatpush1.bf16.msra.mxu0 0
        %6466 = vmatprep.subr.bf16.mxu0 0
        %6467 = vmatpush1.bf16.msra.mxu0 0
        %6468 = vmatprep.subr.bf16.mxu0 0
        %6469 = vmatpush1.bf16.msra.mxu0 0
        %6470 = vmatprep.subr.bf16.mxu0 0
        %6471 = vmatpush1.bf16.msra.mxu0 0
        %6472 = vmatprep.mubr.bf16.mxu0 0
        %6473 = vmatmul.mubr.bf16.gmra.mrb[0].mxu0 %v4629
        %v6474 = vpop.f32.mrb[0].mxu0
        %v6475 = vadd.f32 %v6426, %v6474
        %v6476 = vpop.f32.mrb[0].mxu0
        %v6477 = vpop.f32.mrb[0].mxu0
        %v6478 = vadd.f32 %v6426, %v6477
        %v6479 = vpop.f32.mrb[0].mxu0
        %6480 = vmatprep.mubr.bf16.mxu0 0
        %6481 = vmatmul.mubr.bf16.gmra.mrb[0].mxu0 %v4632
        %v6482 = vpop.f32.mrb[0].mxu0
        %v6483 = vadd.f32 %v6426, %v6482
        %v6484 = vpop.f32.mrb[0].mxu0
        %v6485 = vpop.f32.mrb[0].mxu0
        %v6486 = vadd.f32 %v6426, %v6485
        %v6487 = vpop.f32.mrb[0].mxu0
        %6488 = vmatprep.mubr.bf16.mxu0 0
        %6489 = vmatmul.mubr.bf16.gmra.mrb[0].mxu0 %v4675
        %v6490 = vpop.f32.mrb[0].mxu0
        %v6491 = vadd.f32 %v6426, %v6490
        %v6492 = vpop.f32.mrb[0].mxu0
        %v6493 = vpop.f32.mrb[0].mxu0
        %v6494 = vadd.f32 %v6426, %v6493
        %v6495 = vpop.f32.mrb[0].mxu0
        %6496 = vmatprep.mubr.bf16.mxu0 0
        %6497 = vmatmul.mubr.bf16.gmra.mrb[0].mxu0 %v4678
        %v6498 = vpop.f32.mrb[0].mxu0
        %v6499 = vadd.f32 %v6426, %v6498
        %v6500 = vpop.f32.mrb[0].mxu0
        %v6501 = vpop.f32.mrb[0].mxu0
        %v6502 = vadd.f32 %v6426, %v6501
        %v6503 = vpop.f32.mrb[0].mxu0
        %6504 = vmatprep.mubr.bf16.mxu0 0
        %6505 = vmatmul.mubr.bf16.gmra.mrb[0].mxu0 %v4721
        %v6506 = vpop.f32.mrb[0].mxu0
        %v6507 = vadd.f32 %v6426, %v6506
        %v6508 = vpop.f32.mrb[0].mxu0
        %v6509 = vpop.f32.mrb[0].mxu0
        %v6510 = vadd.f32 %v6426, %v6509
        %v6511 = vpop.f32.mrb[0].mxu0
        %6512 = vmatprep.mubr.bf16.mxu0 0
        %6513 = vmatmul.mubr.bf16.gmra.mrb[0].mxu0 %v4724
        %v6514 = vpop.f32.mrb[0].mxu0
        %v6515 = vadd.f32 %v6426, %v6514
        %v6516 = vpop.f32.mrb[0].mxu0
        %v6517 = vpop.f32.mrb[0].mxu0
        %v6518 = vadd.f32 %v6426, %v6517
        %v6519 = vpop.f32.mrb[0].mxu0
        %6520 = vmatprep.mubr.bf16.mxu0 0
        %6521 = vmatmul.mubr.bf16.gmra.mrb[0].mxu0 %v4767
        %v6522 = vpop.f32.mrb[0].mxu0
        %v6523 = vadd.f32 %v6426, %v6522
        %v6524 = vpop.f32.mrb[0].mxu0
        %v6525 = vpop.f32.mrb[0].mxu0
        %v6526 = vadd.f32 %v6426, %v6525
        %v6527 = vpop.f32.mrb[0].mxu0
        %6528 = vmatprep.mubr.bf16.mxu0 0
        %6529 = vmatmul.mubr.bf16.gmra.mrb[0].mxu0 %v4770
        %v6530 = vpop.f32.mrb[0].mxu0
        %v6531 = vadd.f32 %v6426, %v6530
        %v6532 = vpop.f32.mrb[0].mxu0
        %v6533 = vpop.f32.mrb[0].mxu0
        %v6534 = vadd.f32 %v6426, %v6533
        %v6535 = vpop.f32.mrb[0].mxu0
        %6536 = vmatprep.mubr.bf16.mxu0 0
        %6537 = vmatmul.mubr.bf16.gmra.mrb[0].mxu0 %v4813
        %v6538 = vpop.f32.mrb[0].mxu0
        %v6539 = vadd.f32 %v6426, %v6538
        %v6540 = vpop.f32.mrb[0].mxu0
        %v6541 = vpop.f32.mrb[0].mxu0
        %v6542 = vadd.f32 %v6426, %v6541
        %v6543 = vpop.f32.mrb[0].mxu0
        %6544 = vmatprep.mubr.bf16.mxu0 0
        %6545 = vmatmul.mubr.bf16.gmra.mrb[0].mxu0 %v4816
        %v6546 = vpop.f32.mrb[0].mxu0
        %v6547 = vadd.f32 %v6426, %v6546
        %v6548 = vpop.f32.mrb[0].mxu0
        %v6549 = vpop.f32.mrb[0].mxu0
        %v6550 = vadd.f32 %v6426, %v6549
        %v6551 = vpop.f32.mrb[0].mxu0
        %6552 = vmatprep.mubr.bf16.mxu0 0
        %6553 = vmatmul.mubr.bf16.gmra.mrb[0].mxu0 %v4859
        %v6554 = vpop.f32.mrb[0].mxu0
        %v6555 = vadd.f32 %v6426, %v6554
        %v6556 = vpop.f32.mrb[0].mxu0
        %v6557 = vpop.f32.mrb[0].mxu0
        %v6558 = vadd.f32 %v6426, %v6557
        %v6559 = vpop.f32.mrb[0].mxu0
        %6560 = vmatprep.mubr.bf16.mxu0 0
        %6561 = vmatmul.mubr.bf16.gmra.mrb[0].mxu0 %v4862
        %v6562 = vpop.f32.mrb[0].mxu0
        %v6563 = vadd.f32 %v6426, %v6562
        %v6564 = vpop.f32.mrb[0].mxu0
        %v6565 = vpop.f32.mrb[0].mxu0
        %v6566 = vadd.f32 %v6426, %v6565
        %v6567 = vpop.f32.mrb[0].mxu0
        %6568 = vmatprep.mubr.bf16.mxu0 0
        %6569 = vmatmul.mubr.bf16.gmra.mrb[0].mxu0 %v4905
        %v6570 = vpop.f32.mrb[0].mxu0
        %v6571 = vadd.f32 %v6426, %v6570
        %v6572 = vpop.f32.mrb[0].mxu0
        %v6573 = vpop.f32.mrb[0].mxu0
        %v6574 = vadd.f32 %v6426, %v6573
        %v6575 = vpop.f32.mrb[0].mxu0
        %6576 = vmatprep.mubr.bf16.mxu0 0
        %6577 = vmatmul.mubr.bf16.gmra.mrb[0].mxu0 %v4908
        %v6578 = vpop.f32.mrb[0].mxu0
        %v6579 = vadd.f32 %v6426, %v6578
        %v6580 = vpop.f32.mrb[0].mxu0
        %v6581 = vpop.f32.mrb[0].mxu0
        %v6582 = vadd.f32 %v6426, %v6581
        %v6583 = vpop.f32.mrb[0].mxu0
        %6584 = vmatprep.mubr.bf16.mxu0 0
        %6585 = vmatmul.mubr.bf16.gmra.mrb[0].mxu0 %v4951
        %v6586 = vpop.f32.mrb[0].mxu0
        %v6587 = vadd.f32 %v6426, %v6586
        %v6588 = vpop.f32.mrb[0].mxu0
        %v6589 = vpop.f32.mrb[0].mxu0
        %v6590 = vadd.f32 %v6426, %v6589
        %v6591 = vpop.f32.mrb[0].mxu0
        %6592 = vmatprep.mubr.bf16.mxu0 0
        %6593 = vmatmul.mubr.bf16.gmra.mrb[0].mxu0 %v4954
        %v6594 = vpop.f32.mrb[0].mxu0
        %v6595 = vadd.f32 %v6426, %v6594
        %v6596 = vpop.f32.mrb[0].mxu0
        %v6597 = vpop.f32.mrb[0].mxu0
        %v6598 = vadd.f32 %v6426, %v6597
        %v6599 = vpop.f32.mrb[0].mxu0
        %6600 = vmatprep.mubr.bf16.mxu0 0
        %6601 = vmatmul.mubr.bf16.gmra.mrb[0].mxu0 %v4997
        %v6602 = vpop.f32.mrb[0].mxu0
        %v6603 = vadd.f32 %v6426, %v6602
        %v6604 = vpop.f32.mrb[0].mxu0
        %v6605 = vpop.f32.mrb[0].mxu0
        %v6606 = vadd.f32 %v6426, %v6605
        %v6607 = vpop.f32.mrb[0].mxu0
        %6608 = vmatprep.mubr.bf16.mxu0 0
        %6609 = vmatmul.mubr.bf16.gmra.mrb[0].mxu0 %v5000
        %v6610 = vpop.f32.mrb[0].mxu0
        %v6611 = vadd.f32 %v6426, %v6610
        %v6612 = vpop.f32.mrb[0].mxu0
        %v6613 = vpop.f32.mrb[0].mxu0
        %v6614 = vadd.f32 %v6426, %v6613
        %v6615 = vpop.f32.mrb[0].mxu0
        %6616 = vmatprep.mubr.bf16.mxu0 0
        %6617 = vmatmul.mubr.bf16.gmra.mrb[0].mxu0 %v5043
        %v6618 = vpop.f32.mrb[0].mxu0
        %v6619 = vadd.f32 %v6426, %v6618
        %v6620 = vpop.f32.mrb[0].mxu0
        %v6621 = vpop.f32.mrb[0].mxu0
        %v6622 = vadd.f32 %v6426, %v6621
        %v6623 = vpop.f32.mrb[0].mxu0
        %6624 = vmatprep.mubr.bf16.mxu0 0
        %6625 = vmatmul.mubr.bf16.gmra.mrb[0].mxu0 %v5046
        %v6626 = vpop.f32.mrb[0].mxu0
        %v6627 = vadd.f32 %v6426, %v6626
        %v6628 = vpop.f32.mrb[0].mxu0
        %v6629 = vpop.f32.mrb[0].mxu0
        %v6630 = vadd.f32 %v6426, %v6629
        %v6631 = vpop.f32.mrb[0].mxu0
        %6632 = vmatprep.mubr.bf16.mxu0 0
        %6633 = vmatmul.mubr.bf16.gmra.mrb[0].mxu0 %v5089
        %v6634 = vpop.f32.mrb[0].mxu0
        %v6635 = vadd.f32 %v6426, %v6634
        %v6636 = vpop.f32.mrb[0].mxu0
        %v6637 = vpop.f32.mrb[0].mxu0
        %v6638 = vadd.f32 %v6426, %v6637
        %v6639 = vpop.f32.mrb[0].mxu0
        %6640 = vmatprep.mubr.bf16.mxu0 0
        %6641 = vmatmul.mubr.bf16.gmra.mrb[0].mxu0 %v5092
        %v6642 = vpop.f32.mrb[0].mxu0
        %v6643 = vadd.f32 %v6426, %v6642
        %v6644 = vpop.f32.mrb[0].mxu0
        %v6645 = vpop.f32.mrb[0].mxu0
        %v6646 = vadd.f32 %v6426, %v6645
        %v6647 = vpop.f32.mrb[0].mxu0
        %6648 = vmatprep.mubr.bf16.mxu0 0
        %6649 = vmatmul.mubr.bf16.gmra.mrb[0].mxu0 %v5135
        %v6650 = vpop.f32.mrb[0].mxu0
        %v6651 = vadd.f32 %v6426, %v6650
        %v6652 = vpop.f32.mrb[0].mxu0
        %v6653 = vpop.f32.mrb[0].mxu0
        %v6654 = vadd.f32 %v6426, %v6653
        %v6655 = vpop.f32.mrb[0].mxu0
        %6656 = vmatprep.mubr.bf16.mxu0 0
        %6657 = vmatmul.mubr.bf16.gmra.mrb[0].mxu0 %v5138
        %v6658 = vpop.f32.mrb[0].mxu0
        %v6659 = vadd.f32 %v6426, %v6658
        %v6660 = vpop.f32.mrb[0].mxu0
        %v6661 = vpop.f32.mrb[0].mxu0
        %v6662 = vadd.f32 %v6426, %v6661
        %v6663 = vpop.f32.mrb[0].mxu0
        %6664 = vmatprep.mubr.bf16.mxu0 0
        %6665 = vmatmul.mubr.bf16.gmra.mrb[0].mxu0 %v5181
        %v6666 = vpop.f32.mrb[0].mxu0
        %v6667 = vadd.f32 %v6426, %v6666
        %v6668 = vpop.f32.mrb[0].mxu0
        %v6669 = vpop.f32.mrb[0].mxu0
        %v6670 = vadd.f32 %v6426, %v6669
        %v6671 = vpop.f32.mrb[0].mxu0
        %6672 = vmatprep.mubr.bf16.mxu0 0
        %6673 = vmatmul.mubr.bf16.gmra.mrb[0].mxu0 %v5184
        %v6674 = vpop.f32.mrb[0].mxu0
        %v6675 = vadd.f32 %v6426, %v6674
        %v6676 = vpop.f32.mrb[0].mxu0
        %v6677 = vpop.f32.mrb[0].mxu0
        %v6678 = vadd.f32 %v6426, %v6677
        %v6679 = vpop.f32.mrb[0].mxu0
        %6680 = vmatprep.mubr.bf16.mxu0 0
        %6681 = vmatmul.mubr.bf16.gmra.mrb[0].mxu0 %v5227
        %v6682 = vpop.f32.mrb[0].mxu0
        %v6683 = vadd.f32 %v6426, %v6682
        %v6684 = vpop.f32.mrb[0].mxu0
        %v6685 = vpop.f32.mrb[0].mxu0
        %v6686 = vadd.f32 %v6426, %v6685
        %v6687 = vpop.f32.mrb[0].mxu0
        %6688 = vmatprep.mubr.bf16.mxu0 0
        %6689 = vmatmul.mubr.bf16.gmra.mrb[0].mxu0 %v5230
        %v6690 = vpop.f32.mrb[0].mxu0
        %v6691 = vadd.f32 %v6426, %v6690
        %v6692 = vpop.f32.mrb[0].mxu0
        %v6693 = vpop.f32.mrb[0].mxu0
        %v6694 = vadd.f32 %v6426, %v6693
        %v6695 = vpop.f32.mrb[0].mxu0
        %6696 = vmatprep.mubr.bf16.mxu0 0
        %6697 = vmatmul.mubr.bf16.gmra.mrb[0].mxu0 %v5273
        %v6698 = vpop.f32.mrb[0].mxu0
        %v6699 = vadd.f32 %v6426, %v6698
        %v6700 = vpop.f32.mrb[0].mxu0
        %v6701 = vpop.f32.mrb[0].mxu0
        %v6702 = vadd.f32 %v6426, %v6701
        %v6703 = vpop.f32.mrb[0].mxu0
        %6704 = vmatprep.mubr.bf16.mxu0 0
        %6705 = vmatmul.mubr.bf16.gmra.mrb[0].mxu0 %v5276
        %v6706 = vpop.f32.mrb[0].mxu0
        %v6707 = vadd.f32 %v6426, %v6706
        %v6708 = vpop.f32.mrb[0].mxu0
        %v6709 = vpop.f32.mrb[0].mxu0
        %v6710 = vadd.f32 %v6426, %v6709
        %v6711 = vpop.f32.mrb[0].mxu0
        %6712 = vmatprep.mubr.bf16.mxu0 0
        %6713 = vmatmul.mubr.bf16.gmra.mrb[0].mxu0 %v5319
        %v6714 = vpop.f32.mrb[0].mxu0
        %v6715 = vadd.f32 %v6426, %v6714
        %v6716 = vpop.f32.mrb[0].mxu0
        %v6717 = vpop.f32.mrb[0].mxu0
        %v6718 = vadd.f32 %v6426, %v6717
        %v6719 = vpop.f32.mrb[0].mxu0
        %6720 = vmatprep.mubr.bf16.mxu0 0
        %6721 = vmatmul.mubr.bf16.gmra.mrb[0].mxu0 %v5322
        %v6722 = vpop.f32.mrb[0].mxu0
        %v6723 = vadd.f32 %v6426, %v6722
        %v6724 = vpop.f32.mrb[0].mxu0
        %v6725 = vpop.f32.mrb[0].mxu0
        %v6726 = vadd.f32 %v6426, %v6725
        %v6727 = vpop.f32.mrb[0].mxu0
        %6728 = vdwg.mxu0
        %v6729 = vmax.f32 %v6475, 0.0
        %v6730 = vmax.f32 %v6478, 0.0
        %v6731 = vmax.f32 %v6483, 0.0
        %v6732 = vmax.f32 %v6486, 0.0
        %v6733 = vmax.f32 %v6491, 0.0
        %v6734 = vmax.f32 %v6494, 0.0
        %v6735 = vmax.f32 %v6499, 0.0
        %v6736 = vmax.f32 %v6502, 0.0
        %v6737 = vmax.f32 %v6507, 0.0
        %v6738 = vmax.f32 %v6510, 0.0
        %v6739 = vmax.f32 %v6515, 0.0
        %v6740 = vmax.f32 %v6518, 0.0
        %v6741 = vmax.f32 %v6523, 0.0
        %v6742 = vmax.f32 %v6526, 0.0
        %v6743 = vmax.f32 %v6531, 0.0
        %v6744 = vmax.f32 %v6534, 0.0
        %v6745 = vmax.f32 %v6539, 0.0
        %v6746 = vmax.f32 %v6542, 0.0
        %v6747 = vmax.f32 %v6547, 0.0
        %v6748 = vmax.f32 %v6550, 0.0
        %v6749 = vmax.f32 %v6555, 0.0
        %v6750 = vmax.f32 %v6558, 0.0
        %v6751 = vmax.f32 %v6563, 0.0
        %v6752 = vmax.f32 %v6566, 0.0
        %v6753 = vmax.f32 %v6571, 0.0
        %v6754 = vmax.f32 %v6574, 0.0
        %v6755 = vmax.f32 %v6579, 0.0
        %v6756 = vmax.f32 %v6582, 0.0
        %v6757 = vmax.f32 %v6587, 0.0
        %v6758 = vmax.f32 %v6590, 0.0
        %v6759 = vmax.f32 %v6595, 0.0
        %v6760 = vmax.f32 %v6598, 0.0
        %v6761 = vmax.f32 %v6603, 0.0
        %v6762 = vmax.f32 %v6606, 0.0
        %v6763 = vmax.f32 %v6611, 0.0
        %v6764 = vmax.f32 %v6614, 0.0
        %v6765 = vmax.f32 %v6619, 0.0
        %v6766 = vmax.f32 %v6622, 0.0
        %v6767 = vmax.f32 %v6627, 0.0
        %v6768 = vmax.f32 %v6630, 0.0
        %v6769 = vmax.f32 %v6635, 0.0
        %v6770 = vmax.f32 %v6638, 0.0
        %v6771 = vmax.f32 %v6643, 0.0
        %v6772 = vmax.f32 %v6646, 0.0
        %v6773 = vmax.f32 %v6651, 0.0
        %v6774 = vmax.f32 %v6654, 0.0
        %v6775 = vmax.f32 %v6659, 0.0
        %v6776 = vmax.f32 %v6662, 0.0
        %v6777 = vmax.f32 %v6667, 0.0
        %v6778 = vmax.f32 %v6670, 0.0
        %v6779 = vmax.f32 %v6675, 0.0
        %v6780 = vmax.f32 %v6678, 0.0
        %v6781 = vmax.f32 %v6683, 0.0
        %v6782 = vmax.f32 %v6686, 0.0
        %v6783 = vmax.f32 %v6691, 0.0
        %v6784 = vmax.f32 %v6694, 0.0
        %v6785 = vmax.f32 %v6699, 0.0
        %v6786 = vmax.f32 %v6702, 0.0
        %v6787 = vmax.f32 %v6707, 0.0
        %v6788 = vmax.f32 %v6710, 0.0
        %v6789 = vmax.f32 %v6715, 0.0
        %v6790 = vmax.f32 %v6718, 0.0
        %v6791 = vmax.f32 %v6723, 0.0
        %v6792 = vmax.f32 %v6726, 0.0
        %v6793 = vpack.c.bf16 %v6730, %v6729
        %v6794 = vpack.c.bf16 %v6732, %v6731
        %v6795 = vpack.c.bf16 %v6734, %v6733
        %v6796 = vpack.c.bf16 %v6736, %v6735
        %v6797 = vpack.c.bf16 %v6738, %v6737
        %v6798 = vpack.c.bf16 %v6740, %v6739
        %v6799 = vpack.c.bf16 %v6742, %v6741
        %v6800 = vpack.c.bf16 %v6744, %v6743
        %v6801 = vpack.c.bf16 %v6746, %v6745
        %v6802 = vpack.c.bf16 %v6748, %v6747
        %v6803 = vpack.c.bf16 %v6750, %v6749
        %v6804 = vpack.c.bf16 %v6752, %v6751
        %v6805 = vpack.c.bf16 %v6754, %v6753
        %v6806 = vpack.c.bf16 %v6756, %v6755
        %v6807 = vpack.c.bf16 %v6758, %v6757
        %v6808 = vpack.c.bf16 %v6760, %v6759
        %v6809 = vpack.c.bf16 %v6762, %v6761
        %v6810 = vpack.c.bf16 %v6764, %v6763
        %v6811 = vpack.c.bf16 %v6766, %v6765
        %v6812 = vpack.c.bf16 %v6768, %v6767
        %v6813 = vpack.c.bf16 %v6770, %v6769
        %v6814 = vpack.c.bf16 %v6772, %v6771
        %v6815 = vpack.c.bf16 %v6774, %v6773
        %v6816 = vpack.c.bf16 %v6776, %v6775
        %v6817 = vpack.c.bf16 %v6778, %v6777
        %v6818 = vpack.c.bf16 %v6780, %v6779
        %v6819 = vpack.c.bf16 %v6782, %v6781
        %v6820 = vpack.c.bf16 %v6784, %v6783
        %v6821 = vpack.c.bf16 %v6786, %v6785
        %v6822 = vpack.c.bf16 %v6788, %v6787
        %v6823 = vpack.c.bf16 %v6790, %v6789
        %v6824 = vpack.c.bf16 %v6792, %v6791
        %s6825 = scalar_lea.vmem %s8, 64
        %v6826 = vld [vmem:[%s6825] sm:$0xf]
        %v6827 = vld [vmem:[%s6825 + $0x4] sm:$0xf]
        %v6828 = vld [vmem:[%s6825 + $0x8] sm:$0xf]
        %v6829 = vld [vmem:[%s6825 + $0xc] sm:$0xf]
        %v6830 = vld [vmem:[%s6825 + $0x10] sm:$0xf]
        %v6831 = vld [vmem:[%s6825 + $0x14] sm:$0xf]
        %v6832 = vld [vmem:[%s6825 + $0x18] sm:$0xf]
        %v6833 = vld [vmem:[%s6825 + $0x1c] sm:$0xf]
        %v6834 = vld [vmem:[%s6825 + $0x20] sm:$0xf]
        %v6835 = vld [vmem:[%s6825 + $0x24] sm:$0xf]
        %v6836 = vld [vmem:[%s6825 + $0x28] sm:$0xf]
        %v6837 = vld [vmem:[%s6825 + $0x2c] sm:$0xf]
        %v6838 = vld [vmem:[%s6825 + $0x30] sm:$0xf]
        %v6839 = vld [vmem:[%s6825 + $0x34] sm:$0xf]
        %v6840 = vld [vmem:[%s6825 + $0x38] sm:$0xf]
        %v6841 = vld [vmem:[%s6825 + $0x3c] sm:$0xf]
        %s6842 = scalar_lea.vmem %s9, 1
        %v6843 = vld [vmem:[%s6842] sm:$0x1]
        %v6845 = vlaneseq
        %v6846 = vshrl.u32 %v6845, 7
        %v6847 = vsub.s32 0, %v6846
        %v6848 = vrot.slane %v6843, %v6847
        %v6866 = vunpack.c.l.b16 %v6826
        %v6867 = vunpack.c.l.b16 %v6827
        %v6868 = vunpack.c.l.b16 %v6828
        %v6869 = vunpack.c.l.b16 %v6829
        %v6870 = vunpack.c.l.b16 %v6830
        %v6871 = vunpack.c.l.b16 %v6831
        %v6872 = vunpack.c.l.b16 %v6832
        %v6873 = vunpack.c.l.b16 %v6833
        %v6874 = vunpack.c.l.b16 %v6834
        %v6875 = vunpack.c.l.b16 %v6835
        %v6876 = vunpack.c.l.b16 %v6836
        %v6877 = vunpack.c.l.b16 %v6837
        %v6878 = vunpack.c.l.b16 %v6838
        %v6879 = vunpack.c.l.b16 %v6839
        %v6880 = vunpack.c.l.b16 %v6840
        %v6881 = vunpack.c.l.b16 %v6841
        %v6882 = vpack.c.b16 %v6867, %v6866
        %v6883 = vpack.c.b16 %v6869, %v6868
        %v6884 = vpack.c.b16 %v6871, %v6870
        %v6885 = vpack.c.b16 %v6873, %v6872
        %v6886 = vpack.c.b16 %v6875, %v6874
        %v6887 = vpack.c.b16 %v6877, %v6876
        %v6888 = vpack.c.b16 %v6879, %v6878
        %v6889 = vpack.c.b16 %v6881, %v6880
        %6898 = vmatprep.subr.bf16.mxu0 0
        %6899 = vmatpush1.bf16.msra.mxu0 %v6882
        %6900 = vmatprep.subr.bf16.mxu0 0
        %6901 = vmatpush1.bf16.msra.mxu0 %v6883
        %6902 = vmatprep.subr.bf16.mxu0 0
        %6903 = vmatpush1.bf16.msra.mxu0 %v6884
        %6904 = vmatprep.subr.bf16.mxu0 0
        %6905 = vmatpush1.bf16.msra.mxu0 %v6885
        %6906 = vmatprep.subr.bf16.mxu0 0
        %6907 = vmatpush1.bf16.msra.mxu0 %v6886
        %6908 = vmatprep.subr.bf16.mxu0 0
        %6909 = vmatpush1.bf16.msra.mxu0 %v6887
        %6910 = vmatprep.subr.bf16.mxu0 0
        %6911 = vmatpush1.bf16.msra.mxu0 %v6888
        %6912 = vmatprep.subr.bf16.mxu0 0
        %6913 = vmatpush1.bf16.msra.mxu0 %v6889
        %6914 = vmatprep.subr.bf16.mxu0 0
        %6915 = vmatpush1.bf16.msra.mxu0 0
        %6916 = vmatprep.subr.bf16.mxu0 0
        %6917 = vmatpush1.bf16.msra.mxu0 0
        %6918 = vmatprep.subr.bf16.mxu0 0
        %6919 = vmatpush1.bf16.msra.mxu0 0
        %6920 = vmatprep.subr.bf16.mxu0 0
        %6921 = vmatpush1.bf16.msra.mxu0 0
        %6922 = vmatprep.subr.bf16.mxu0 0
        %6923 = vmatpush1.bf16.msra.mxu0 0
        %6924 = vmatprep.subr.bf16.mxu0 0
        %6925 = vmatpush1.bf16.msra.mxu0 0
        %6926 = vmatprep.subr.bf16.mxu0 0
        %6927 = vmatpush1.bf16.msra.mxu0 0
        %6928 = vmatprep.subr.bf16.mxu0 0
        %6929 = vmatpush1.bf16.msra.mxu0 0
        %6930 = vmatprep.mubr.bf16.mxu0 0
        %6931 = vmatmul.mubr.bf16.gmra.mrb[0].mxu0 %v6793
        %v6932 = vpop.f32.mrb[0].mxu0
        %v6933 = vadd.f32 %v6848, %v6932
        %v6934 = vpop.f32.mrb[0].mxu0
        %v6935 = vpop.f32.mrb[0].mxu0
        %v6936 = vadd.f32 %v6848, %v6935
        %v6937 = vpop.f32.mrb[0].mxu0
        %6938 = vmatprep.mubr.bf16.mxu0 0
        %6939 = vmatmul.mubr.bf16.gmra.mrb[0].mxu0 %v6794
        %v6940 = vpop.f32.mrb[0].mxu0
        %v6941 = vadd.f32 %v6848, %v6940
        %v6942 = vpop.f32.mrb[0].mxu0
        %v6943 = vpop.f32.mrb[0].mxu0
        %v6944 = vadd.f32 %v6848, %v6943
        %v6945 = vpop.f32.mrb[0].mxu0
        %6946 = vmatprep.mubr.bf16.mxu0 0
        %6947 = vmatmul.mubr.bf16.gmra.mrb[0].mxu0 %v6795
        %v6948 = vpop.f32.mrb[0].mxu0
        %v6949 = vadd.f32 %v6848, %v6948
        %v6950 = vpop.f32.mrb[0].mxu0
        %v6951 = vpop.f32.mrb[0].mxu0
        %v6952 = vadd.f32 %v6848, %v6951
        %v6953 = vpop.f32.mrb[0].mxu0
        %6954 = vmatprep.mubr.bf16.mxu0 0
        %6955 = vmatmul.mubr.bf16.gmra.mrb[0].mxu0 %v6796
        %v6956 = vpop.f32.mrb[0].mxu0
        %v6957 = vadd.f32 %v6848, %v6956
        %v6958 = vpop.f32.mrb[0].mxu0
        %v6959 = vpop.f32.mrb[0].mxu0
        %v6960 = vadd.f32 %v6848, %v6959
        %v6961 = vpop.f32.mrb[0].mxu0
        %6962 = vmatprep.mubr.bf16.mxu0 0
        %6963 = vmatmul.mubr.bf16.gmra.mrb[0].mxu0 %v6797
        %v6964 = vpop.f32.mrb[0].mxu0
        %v6965 = vadd.f32 %v6848, %v6964
        %v6966 = vpop.f32.mrb[0].mxu0
        %v6967 = vpop.f32.mrb[0].mxu0
        %v6968 = vadd.f32 %v6848, %v6967
        %v6969 = vpop.f32.mrb[0].mxu0
        %6970 = vmatprep.mubr.bf16.mxu0 0
        %6971 = vmatmul.mubr.bf16.gmra.mrb[0].mxu0 %v6798
        %v6972 = vpop.f32.mrb[0].mxu0
        %v6973 = vadd.f32 %v6848, %v6972
        %v6974 = vpop.f32.mrb[0].mxu0
        %v6975 = vpop.f32.mrb[0].mxu0
        %v6976 = vadd.f32 %v6848, %v6975
        %v6977 = vpop.f32.mrb[0].mxu0
        %6978 = vmatprep.mubr.bf16.mxu0 0
        %6979 = vmatmul.mubr.bf16.gmra.mrb[0].mxu0 %v6799
        %v6980 = vpop.f32.mrb[0].mxu0
        %v6981 = vadd.f32 %v6848, %v6980
        %v6982 = vpop.f32.mrb[0].mxu0
        %v6983 = vpop.f32.mrb[0].mxu0
        %v6984 = vadd.f32 %v6848, %v6983
        %v6985 = vpop.f32.mrb[0].mxu0
        %6986 = vmatprep.mubr.bf16.mxu0 0
        %6987 = vmatmul.mubr.bf16.gmra.mrb[0].mxu0 %v6800
        %v6988 = vpop.f32.mrb[0].mxu0
        %v6989 = vadd.f32 %v6848, %v6988
        %v6990 = vpop.f32.mrb[0].mxu0
        %v6991 = vpop.f32.mrb[0].mxu0
        %v6992 = vadd.f32 %v6848, %v6991
        %v6993 = vpop.f32.mrb[0].mxu0
        %6994 = vmatprep.mubr.bf16.mxu0 0
        %6995 = vmatmul.mubr.bf16.gmra.mrb[0].mxu0 %v6801
        %v6996 = vpop.f32.mrb[0].mxu0
        %v6997 = vadd.f32 %v6848, %v6996
        %v6998 = vpop.f32.mrb[0].mxu0
        %v6999 = vpop.f32.mrb[0].mxu0
        %v7000 = vadd.f32 %v6848, %v6999
        %v7001 = vpop.f32.mrb[0].mxu0
        %7002 = vmatprep.mubr.bf16.mxu0 0
        %7003 = vmatmul.mubr.bf16.gmra.mrb[0].mxu0 %v6802
        %v7004 = vpop.f32.mrb[0].mxu0
        %v7005 = vadd.f32 %v6848, %v7004
        %v7006 = vpop.f32.mrb[0].mxu0
        %v7007 = vpop.f32.mrb[0].mxu0
        %v7008 = vadd.f32 %v6848, %v7007
        %v7009 = vpop.f32.mrb[0].mxu0
        %7010 = vmatprep.mubr.bf16.mxu0 0
        %7011 = vmatmul.mubr.bf16.gmra.mrb[0].mxu0 %v6803
        %v7012 = vpop.f32.mrb[0].mxu0
        %v7013 = vadd.f32 %v6848, %v7012
        %v7014 = vpop.f32.mrb[0].mxu0
        %v7015 = vpop.f32.mrb[0].mxu0
        %v7016 = vadd.f32 %v6848, %v7015
        %v7017 = vpop.f32.mrb[0].mxu0
        %7018 = vmatprep.mubr.bf16.mxu0 0
        %7019 = vmatmul.mubr.bf16.gmra.mrb[0].mxu0 %v6804
        %v7020 = vpop.f32.mrb[0].mxu0
        %v7021 = vadd.f32 %v6848, %v7020
        %v7022 = vpop.f32.mrb[0].mxu0
        %v7023 = vpop.f32.mrb[0].mxu0
        %v7024 = vadd.f32 %v6848, %v7023
        %v7025 = vpop.f32.mrb[0].mxu0
        %7026 = vmatprep.mubr.bf16.mxu0 0
        %7027 = vmatmul.mubr.bf16.gmra.mrb[0].mxu0 %v6805
        %v7028 = vpop.f32.mrb[0].mxu0
        %v7029 = vadd.f32 %v6848, %v7028
        %v7030 = vpop.f32.mrb[0].mxu0
        %v7031 = vpop.f32.mrb[0].mxu0
        %v7032 = vadd.f32 %v6848, %v7031
        %v7033 = vpop.f32.mrb[0].mxu0
        %7034 = vmatprep.mubr.bf16.mxu0 0
        %7035 = vmatmul.mubr.bf16.gmra.mrb[0].mxu0 %v6806
        %v7036 = vpop.f32.mrb[0].mxu0
        %v7037 = vadd.f32 %v6848, %v7036
        %v7038 = vpop.f32.mrb[0].mxu0
        %v7039 = vpop.f32.mrb[0].mxu0
        %v7040 = vadd.f32 %v6848, %v7039
        %v7041 = vpop.f32.mrb[0].mxu0
        %7042 = vmatprep.mubr.bf16.mxu0 0
        %7043 = vmatmul.mubr.bf16.gmra.mrb[0].mxu0 %v6807
        %v7044 = vpop.f32.mrb[0].mxu0
        %v7045 = vadd.f32 %v6848, %v7044
        %v7046 = vpop.f32.mrb[0].mxu0
        %v7047 = vpop.f32.mrb[0].mxu0
        %v7048 = vadd.f32 %v6848, %v7047
        %v7049 = vpop.f32.mrb[0].mxu0
        %7050 = vmatprep.mubr.bf16.mxu0 0
        %7051 = vmatmul.mubr.bf16.gmra.mrb[0].mxu0 %v6808
        %v7052 = vpop.f32.mrb[0].mxu0
        %v7053 = vadd.f32 %v6848, %v7052
        %v7054 = vpop.f32.mrb[0].mxu0
        %v7055 = vpop.f32.mrb[0].mxu0
        %v7056 = vadd.f32 %v6848, %v7055
        %v7057 = vpop.f32.mrb[0].mxu0
        %7058 = vmatprep.mubr.bf16.mxu0 0
        %7059 = vmatmul.mubr.bf16.gmra.mrb[0].mxu0 %v6809
        %v7060 = vpop.f32.mrb[0].mxu0
        %v7061 = vadd.f32 %v6848, %v7060
        %v7062 = vpop.f32.mrb[0].mxu0
        %v7063 = vpop.f32.mrb[0].mxu0
        %v7064 = vadd.f32 %v6848, %v7063
        %v7065 = vpop.f32.mrb[0].mxu0
        %7066 = vmatprep.mubr.bf16.mxu0 0
        %7067 = vmatmul.mubr.bf16.gmra.mrb[0].mxu0 %v6810
        %v7068 = vpop.f32.mrb[0].mxu0
        %v7069 = vadd.f32 %v6848, %v7068
        %v7070 = vpop.f32.mrb[0].mxu0
        %v7071 = vpop.f32.mrb[0].mxu0
        %v7072 = vadd.f32 %v6848, %v7071
        %v7073 = vpop.f32.mrb[0].mxu0
        %7074 = vmatprep.mubr.bf16.mxu0 0
        %7075 = vmatmul.mubr.bf16.gmra.mrb[0].mxu0 %v6811
        %v7076 = vpop.f32.mrb[0].mxu0
        %v7077 = vadd.f32 %v6848, %v7076
        %v7078 = vpop.f32.mrb[0].mxu0
        %v7079 = vpop.f32.mrb[0].mxu0
        %v7080 = vadd.f32 %v6848, %v7079
        %v7081 = vpop.f32.mrb[0].mxu0
        %7082 = vmatprep.mubr.bf16.mxu0 0
        %7083 = vmatmul.mubr.bf16.gmra.mrb[0].mxu0 %v6812
        %v7084 = vpop.f32.mrb[0].mxu0
        %v7085 = vadd.f32 %v6848, %v7084
        %v7086 = vpop.f32.mrb[0].mxu0
        %v7087 = vpop.f32.mrb[0].mxu0
        %v7088 = vadd.f32 %v6848, %v7087
        %v7089 = vpop.f32.mrb[0].mxu0
        %7090 = vmatprep.mubr.bf16.mxu0 0
        %7091 = vmatmul.mubr.bf16.gmra.mrb[0].mxu0 %v6813
        %v7092 = vpop.f32.mrb[0].mxu0
        %v7093 = vadd.f32 %v6848, %v7092
        %v7094 = vpop.f32.mrb[0].mxu0
        %v7095 = vpop.f32.mrb[0].mxu0
        %v7096 = vadd.f32 %v6848, %v7095
        %v7097 = vpop.f32.mrb[0].mxu0
        %7098 = vmatprep.mubr.bf16.mxu0 0
        %7099 = vmatmul.mubr.bf16.gmra.mrb[0].mxu0 %v6814
        %v7100 = vpop.f32.mrb[0].mxu0
        %v7101 = vadd.f32 %v6848, %v7100
        %v7102 = vpop.f32.mrb[0].mxu0
        %v7103 = vpop.f32.mrb[0].mxu0
        %v7104 = vadd.f32 %v6848, %v7103
        %v7105 = vpop.f32.mrb[0].mxu0
        %7106 = vmatprep.mubr.bf16.mxu0 0
        %7107 = vmatmul.mubr.bf16.gmra.mrb[0].mxu0 %v6815
        %v7108 = vpop.f32.mrb[0].mxu0
        %v7109 = vadd.f32 %v6848, %v7108
        %v7110 = vpop.f32.mrb[0].mxu0
        %v7111 = vpop.f32.mrb[0].mxu0
        %v7112 = vadd.f32 %v6848, %v7111
        %v7113 = vpop.f32.mrb[0].mxu0
        %7114 = vmatprep.mubr.bf16.mxu0 0
        %7115 = vmatmul.mubr.bf16.gmra.mrb[0].mxu0 %v6816
        %v7116 = vpop.f32.mrb[0].mxu0
        %v7117 = vadd.f32 %v6848, %v7116
        %v7118 = vpop.f32.mrb[0].mxu0
        %v7119 = vpop.f32.mrb[0].mxu0
        %v7120 = vadd.f32 %v6848, %v7119
        %v7121 = vpop.f32.mrb[0].mxu0
        %7122 = vmatprep.mubr.bf16.mxu0 0
        %7123 = vmatmul.mubr.bf16.gmra.mrb[0].mxu0 %v6817
        %v7124 = vpop.f32.mrb[0].mxu0
        %v7125 = vadd.f32 %v6848, %v7124
        %v7126 = vpop.f32.mrb[0].mxu0
        %v7127 = vpop.f32.mrb[0].mxu0
        %v7128 = vadd.f32 %v6848, %v7127
        %v7129 = vpop.f32.mrb[0].mxu0
        %7130 = vmatprep.mubr.bf16.mxu0 0
        %7131 = vmatmul.mubr.bf16.gmra.mrb[0].mxu0 %v6818
        %v7132 = vpop.f32.mrb[0].mxu0
        %v7133 = vadd.f32 %v6848, %v7132
        %v7134 = vpop.f32.mrb[0].mxu0
        %v7135 = vpop.f32.mrb[0].mxu0
        %v7136 = vadd.f32 %v6848, %v7135
        %v7137 = vpop.f32.mrb[0].mxu0
        %7138 = vmatprep.mubr.bf16.mxu0 0
        %7139 = vmatmul.mubr.bf16.gmra.mrb[0].mxu0 %v6819
        %v7140 = vpop.f32.mrb[0].mxu0
        %v7141 = vadd.f32 %v6848, %v7140
        %v7142 = vpop.f32.mrb[0].mxu0
        %v7143 = vpop.f32.mrb[0].mxu0
        %v7144 = vadd.f32 %v6848, %v7143
        %v7145 = vpop.f32.mrb[0].mxu0
        %7146 = vmatprep.mubr.bf16.mxu0 0
        %7147 = vmatmul.mubr.bf16.gmra.mrb[0].mxu0 %v6820
        %v7148 = vpop.f32.mrb[0].mxu0
        %v7149 = vadd.f32 %v6848, %v7148
        %v7150 = vpop.f32.mrb[0].mxu0
        %v7151 = vpop.f32.mrb[0].mxu0
        %v7152 = vadd.f32 %v6848, %v7151
        %v7153 = vpop.f32.mrb[0].mxu0
        %7154 = vmatprep.mubr.bf16.mxu0 0
        %7155 = vmatmul.mubr.bf16.gmra.mrb[0].mxu0 %v6821
        %v7156 = vpop.f32.mrb[0].mxu0
        %v7157 = vadd.f32 %v6848, %v7156
        %v7158 = vpop.f32.mrb[0].mxu0
        %v7159 = vpop.f32.mrb[0].mxu0
        %v7160 = vadd.f32 %v6848, %v7159
        %v7161 = vpop.f32.mrb[0].mxu0
        %7162 = vmatprep.mubr.bf16.mxu0 0
        %7163 = vmatmul.mubr.bf16.gmra.mrb[0].mxu0 %v6822
        %v7164 = vpop.f32.mrb[0].mxu0
        %v7165 = vadd.f32 %v6848, %v7164
        %v7166 = vpop.f32.mrb[0].mxu0
        %v7167 = vpop.f32.mrb[0].mxu0
        %v7168 = vadd.f32 %v6848, %v7167
        %v7169 = vpop.f32.mrb[0].mxu0
        %7170 = vmatprep.mubr.bf16.mxu0 0
        %7171 = vmatmul.mubr.bf16.gmra.mrb[0].mxu0 %v6823
        %v7172 = vpop.f32.mrb[0].mxu0
        %v7173 = vadd.f32 %v6848, %v7172
        %v7174 = vpop.f32.mrb[0].mxu0
        %v7175 = vpop.f32.mrb[0].mxu0
        %v7176 = vadd.f32 %v6848, %v7175
        %v7177 = vpop.f32.mrb[0].mxu0
        %7178 = vmatprep.mubr.bf16.mxu0 0
        %7179 = vmatmul.mubr.bf16.gmra.mrb[0].mxu0 %v6824
        %v7180 = vpop.f32.mrb[0].mxu0
        %v7181 = vadd.f32 %v6848, %v7180
        %v7182 = vpop.f32.mrb[0].mxu0
        %v7183 = vpop.f32.mrb[0].mxu0
        %v7184 = vadd.f32 %v6848, %v7183
        %v7185 = vpop.f32.mrb[0].mxu0
        %7186 = vdwg.mxu0
        %7187 = vxpose.xlu0.b32.start [1/16] %v5524, 128
        %7188 = vxpose.xlu0.b32.cont [2/16] 0.0, 128
        %7189 = vxpose.xlu0.b32.cont [3/16] 0.0, 128
        %7190 = vxpose.xlu0.b32.cont [4/16] 0.0, 128
        %7191 = vxpose.xlu0.b32.cont [5/16] 0.0, 128
        %7192 = vxpose.xlu0.b32.cont [6/16] 0.0, 128
        %7193 = vxpose.xlu0.b32.cont [7/16] 0.0, 128
        %7194 = vxpose.xlu0.b32.cont [8/16] 0.0, 128
        %7195 = vxpose.xlu0.b32.cont [9/16] 0.0, 128
        %7196 = vxpose.xlu0.b32.cont [10/16] 0.0, 128
        %7197 = vxpose.xlu0.b32.cont [11/16] 0.0, 128
        %7198 = vxpose.xlu0.b32.cont [12/16] 0.0, 128
        %7199 = vxpose.xlu0.b32.cont [13/16] 0.0, 128
        %7200 = vxpose.xlu0.b32.cont [14/16] 0.0, 128
        %7201 = vxpose.xlu0.b32.cont [15/16] 0.0, 128
        %7202 = vxpose.xlu0.b32.end [16/16] 0.0, 128
        %v7203 = vpop.trf.xlu0
        %v7204 = vpop.trf.xlu0
        %v7205 = vpop.trf.xlu0
        %v7206 = vpop.trf.xlu0
        %v7207 = vpop.trf.xlu0
        %v7208 = vpop.trf.xlu0
        %v7209 = vpop.trf.xlu0
        %v7210 = vpop.trf.xlu0
        %v7211 = vpop.trf.xlu0
        %v7212 = vpop.trf.xlu0
        %v7213 = vpop.trf.xlu0
        %v7214 = vpop.trf.xlu0
        %v7215 = vpop.trf.xlu0
        %v7216 = vpop.trf.xlu0
        %v7217 = vpop.trf.xlu0
        %v7218 = vpop.trf.xlu0
        %7219 = vxpose.xlu0.b32.start [1/16] %v5525, 128
        %7220 = vxpose.xlu0.b32.cont [2/16] 0.0, 128
        %7221 = vxpose.xlu0.b32.cont [3/16] 0.0, 128
        %7222 = vxpose.xlu0.b32.cont [4/16] 0.0, 128
        %7223 = vxpose.xlu0.b32.cont [5/16] 0.0, 128
        %7224 = vxpose.xlu0.b32.cont [6/16] 0.0, 128
        %7225 = vxpose.xlu0.b32.cont [7/16] 0.0, 128
        %7226 = vxpose.xlu0.b32.cont [8/16] 0.0, 128
        %7227 = vxpose.xlu0.b32.cont [9/16] 0.0, 128
        %7228 = vxpose.xlu0.b32.cont [10/16] 0.0, 128
        %7229 = vxpose.xlu0.b32.cont [11/16] 0.0, 128
        %7230 = vxpose.xlu0.b32.cont [12/16] 0.0, 128
        %7231 = vxpose.xlu0.b32.cont [13/16] 0.0, 128
        %7232 = vxpose.xlu0.b32.cont [14/16] 0.0, 128
        %7233 = vxpose.xlu0.b32.cont [15/16] 0.0, 128
        %7234 = vxpose.xlu0.b32.end [16/16] 0.0, 128
        %v7235 = vpop.trf.xlu0
        %v7236 = vpop.trf.xlu0
        %v7237 = vpop.trf.xlu0
        %v7238 = vpop.trf.xlu0
        %v7239 = vpop.trf.xlu0
        %v7240 = vpop.trf.xlu0
        %v7241 = vpop.trf.xlu0
        %v7242 = vpop.trf.xlu0
        %v7243 = vpop.trf.xlu0
        %v7244 = vpop.trf.xlu0
        %v7245 = vpop.trf.xlu0
        %v7246 = vpop.trf.xlu0
        %v7247 = vpop.trf.xlu0
        %v7248 = vpop.trf.xlu0
        %v7249 = vpop.trf.xlu0
        %v7250 = vpop.trf.xlu0
        %7251 = vxpose.xlu0.b32.start [1/16] %v5526, 128
        %7252 = vxpose.xlu0.b32.cont [2/16] 0.0, 128
        %7253 = vxpose.xlu0.b32.cont [3/16] 0.0, 128
        %7254 = vxpose.xlu0.b32.cont [4/16] 0.0, 128
        %7255 = vxpose.xlu0.b32.cont [5/16] 0.0, 128
        %7256 = vxpose.xlu0.b32.cont [6/16] 0.0, 128
        %7257 = vxpose.xlu0.b32.cont [7/16] 0.0, 128
        %7258 = vxpose.xlu0.b32.cont [8/16] 0.0, 128
        %7259 = vxpose.xlu0.b32.cont [9/16] 0.0, 128
        %7260 = vxpose.xlu0.b32.cont [10/16] 0.0, 128
        %7261 = vxpose.xlu0.b32.cont [11/16] 0.0, 128
        %7262 = vxpose.xlu0.b32.cont [12/16] 0.0, 128
        %7263 = vxpose.xlu0.b32.cont [13/16] 0.0, 128
        %7264 = vxpose.xlu0.b32.cont [14/16] 0.0, 128
        %7265 = vxpose.xlu0.b32.cont [15/16] 0.0, 128
        %7266 = vxpose.xlu0.b32.end [16/16] 0.0, 128
        %v7267 = vpop.trf.xlu0
        %v7268 = vpop.trf.xlu0
        %v7269 = vpop.trf.xlu0
        %v7270 = vpop.trf.xlu0
        %v7271 = vpop.trf.xlu0
        %v7272 = vpop.trf.xlu0
        %v7273 = vpop.trf.xlu0
        %v7274 = vpop.trf.xlu0
        %v7275 = vpop.trf.xlu0
        %v7276 = vpop.trf.xlu0
        %v7277 = vpop.trf.xlu0
        %v7278 = vpop.trf.xlu0
        %v7279 = vpop.trf.xlu0
        %v7280 = vpop.trf.xlu0
        %v7281 = vpop.trf.xlu0
        %v7282 = vpop.trf.xlu0
        %7283 = vxpose.xlu0.b32.start [1/16] %v5527, 128
        %7284 = vxpose.xlu0.b32.cont [2/16] 0.0, 128
        %7285 = vxpose.xlu0.b32.cont [3/16] 0.0, 128
        %7286 = vxpose.xlu0.b32.cont [4/16] 0.0, 128
        %7287 = vxpose.xlu0.b32.cont [5/16] 0.0, 128
        %7288 = vxpose.xlu0.b32.cont [6/16] 0.0, 128
        %7289 = vxpose.xlu0.b32.cont [7/16] 0.0, 128
        %7290 = vxpose.xlu0.b32.cont [8/16] 0.0, 128
        %7291 = vxpose.xlu0.b32.cont [9/16] 0.0, 128
        %7292 = vxpose.xlu0.b32.cont [10/16] 0.0, 128
        %7293 = vxpose.xlu0.b32.cont [11/16] 0.0, 128
        %7294 = vxpose.xlu0.b32.cont [12/16] 0.0, 128
        %7295 = vxpose.xlu0.b32.cont [13/16] 0.0, 128
        %7296 = vxpose.xlu0.b32.cont [14/16] 0.0, 128
        %7297 = vxpose.xlu0.b32.cont [15/16] 0.0, 128
        %7298 = vxpose.xlu0.b32.end [16/16] 0.0, 128
        %v7299 = vpop.trf.xlu0
        %v7300 = vpop.trf.xlu0
        %v7301 = vpop.trf.xlu0
        %v7302 = vpop.trf.xlu0
        %v7303 = vpop.trf.xlu0
        %v7304 = vpop.trf.xlu0
        %v7305 = vpop.trf.xlu0
        %v7306 = vpop.trf.xlu0
        %v7307 = vpop.trf.xlu0
        %v7308 = vpop.trf.xlu0
        %v7309 = vpop.trf.xlu0
        %v7310 = vpop.trf.xlu0
        %v7311 = vpop.trf.xlu0
        %v7312 = vpop.trf.xlu0
        %v7313 = vpop.trf.xlu0
        %v7314 = vpop.trf.xlu0
        %7315 = vxpose.xlu0.b32.start [1/16] %v5528, 128
        %7316 = vxpose.xlu0.b32.cont [2/16] 0.0, 128
        %7317 = vxpose.xlu0.b32.cont [3/16] 0.0, 128
        %7318 = vxpose.xlu0.b32.cont [4/16] 0.0, 128
        %7319 = vxpose.xlu0.b32.cont [5/16] 0.0, 128
        %7320 = vxpose.xlu0.b32.cont [6/16] 0.0, 128
        %7321 = vxpose.xlu0.b32.cont [7/16] 0.0, 128
        %7322 = vxpose.xlu0.b32.cont [8/16] 0.0, 128
        %7323 = vxpose.xlu0.b32.cont [9/16] 0.0, 128
        %7324 = vxpose.xlu0.b32.cont [10/16] 0.0, 128
        %7325 = vxpose.xlu0.b32.cont [11/16] 0.0, 128
        %7326 = vxpose.xlu0.b32.cont [12/16] 0.0, 128
        %7327 = vxpose.xlu0.b32.cont [13/16] 0.0, 128
        %7328 = vxpose.xlu0.b32.cont [14/16] 0.0, 128
        %7329 = vxpose.xlu0.b32.cont [15/16] 0.0, 128
        %7330 = vxpose.xlu0.b32.end [16/16] 0.0, 128
        %v7331 = vpop.trf.xlu0
        %v7332 = vpop.trf.xlu0
        %v7333 = vpop.trf.xlu0
        %v7334 = vpop.trf.xlu0
        %v7335 = vpop.trf.xlu0
        %v7336 = vpop.trf.xlu0
        %v7337 = vpop.trf.xlu0
        %v7338 = vpop.trf.xlu0
        %v7339 = vpop.trf.xlu0
        %v7340 = vpop.trf.xlu0
        %v7341 = vpop.trf.xlu0
        %v7342 = vpop.trf.xlu0
        %v7343 = vpop.trf.xlu0
        %v7344 = vpop.trf.xlu0
        %v7345 = vpop.trf.xlu0
        %v7346 = vpop.trf.xlu0
        %7347 = vxpose.xlu0.b32.start [1/16] %v5529, 128
        %7348 = vxpose.xlu0.b32.cont [2/16] 0.0, 128
        %7349 = vxpose.xlu0.b32.cont [3/16] 0.0, 128
        %7350 = vxpose.xlu0.b32.cont [4/16] 0.0, 128
        %7351 = vxpose.xlu0.b32.cont [5/16] 0.0, 128
        %7352 = vxpose.xlu0.b32.cont [6/16] 0.0, 128
        %7353 = vxpose.xlu0.b32.cont [7/16] 0.0, 128
        %7354 = vxpose.xlu0.b32.cont [8/16] 0.0, 128
        %7355 = vxpose.xlu0.b32.cont [9/16] 0.0, 128
        %7356 = vxpose.xlu0.b32.cont [10/16] 0.0, 128
        %7357 = vxpose.xlu0.b32.cont [11/16] 0.0, 128
        %7358 = vxpose.xlu0.b32.cont [12/16] 0.0, 128
        %7359 = vxpose.xlu0.b32.cont [13/16] 0.0, 128
        %7360 = vxpose.xlu0.b32.cont [14/16] 0.0, 128
        %7361 = vxpose.xlu0.b32.cont [15/16] 0.0, 128
        %7362 = vxpose.xlu0.b32.end [16/16] 0.0, 128
        %v7363 = vpop.trf.xlu0
        %v7364 = vpop.trf.xlu0
        %v7365 = vpop.trf.xlu0
        %v7366 = vpop.trf.xlu0
        %v7367 = vpop.trf.xlu0
        %v7368 = vpop.trf.xlu0
        %v7369 = vpop.trf.xlu0
        %v7370 = vpop.trf.xlu0
        %v7371 = vpop.trf.xlu0
        %v7372 = vpop.trf.xlu0
        %v7373 = vpop.trf.xlu0
        %v7374 = vpop.trf.xlu0
        %v7375 = vpop.trf.xlu0
        %v7376 = vpop.trf.xlu0
        %v7377 = vpop.trf.xlu0
        %v7378 = vpop.trf.xlu0
        %7379 = vxpose.xlu0.b32.start [1/16] %v5530, 128
        %7380 = vxpose.xlu0.b32.cont [2/16] 0.0, 128
        %7381 = vxpose.xlu0.b32.cont [3/16] 0.0, 128
        %7382 = vxpose.xlu0.b32.cont [4/16] 0.0, 128
        %7383 = vxpose.xlu0.b32.cont [5/16] 0.0, 128
        %7384 = vxpose.xlu0.b32.cont [6/16] 0.0, 128
        %7385 = vxpose.xlu0.b32.cont [7/16] 0.0, 128
        %7386 = vxpose.xlu0.b32.cont [8/16] 0.0, 128
        %7387 = vxpose.xlu0.b32.cont [9/16] 0.0, 128
        %7388 = vxpose.xlu0.b32.cont [10/16] 0.0, 128
        %7389 = vxpose.xlu0.b32.cont [11/16] 0.0, 128
        %7390 = vxpose.xlu0.b32.cont [12/16] 0.0, 128
        %7391 = vxpose.xlu0.b32.cont [13/16] 0.0, 128
        %7392 = vxpose.xlu0.b32.cont [14/16] 0.0, 128
        %7393 = vxpose.xlu0.b32.cont [15/16] 0.0, 128
        %7394 = vxpose.xlu0.b32.end [16/16] 0.0, 128
        %v7395 = vpop.trf.xlu0
        %v7396 = vpop.trf.xlu0
        %v7397 = vpop.trf.xlu0
        %v7398 = vpop.trf.xlu0
        %v7399 = vpop.trf.xlu0
        %v7400 = vpop.trf.xlu0
        %v7401 = vpop.trf.xlu0
        %v7402 = vpop.trf.xlu0
        %v7403 = vpop.trf.xlu0
        %v7404 = vpop.trf.xlu0
        %v7405 = vpop.trf.xlu0
        %v7406 = vpop.trf.xlu0
        %v7407 = vpop.trf.xlu0
        %v7408 = vpop.trf.xlu0
        %v7409 = vpop.trf.xlu0
        %v7410 = vpop.trf.xlu0
        %7411 = vxpose.xlu0.b32.start [1/16] %v5531, 128
        %7412 = vxpose.xlu0.b32.cont [2/16] 0.0, 128
        %7413 = vxpose.xlu0.b32.cont [3/16] 0.0, 128
        %7414 = vxpose.xlu0.b32.cont [4/16] 0.0, 128
        %7415 = vxpose.xlu0.b32.cont [5/16] 0.0, 128
        %7416 = vxpose.xlu0.b32.cont [6/16] 0.0, 128
        %7417 = vxpose.xlu0.b32.cont [7/16] 0.0, 128
        %7418 = vxpose.xlu0.b32.cont [8/16] 0.0, 128
        %7419 = vxpose.xlu0.b32.cont [9/16] 0.0, 128
        %7420 = vxpose.xlu0.b32.cont [10/16] 0.0, 128
        %7421 = vxpose.xlu0.b32.cont [11/16] 0.0, 128
        %7422 = vxpose.xlu0.b32.cont [12/16] 0.0, 128
        %7423 = vxpose.xlu0.b32.cont [13/16] 0.0, 128
        %7424 = vxpose.xlu0.b32.cont [14/16] 0.0, 128
        %7425 = vxpose.xlu0.b32.cont [15/16] 0.0, 128
        %7426 = vxpose.xlu0.b32.end [16/16] 0.0, 128
        %v7427 = vpop.trf.xlu0
        %v7428 = vpop.trf.xlu0
        %v7429 = vpop.trf.xlu0
        %v7430 = vpop.trf.xlu0
        %v7431 = vpop.trf.xlu0
        %v7432 = vpop.trf.xlu0
        %v7433 = vpop.trf.xlu0
        %v7434 = vpop.trf.xlu0
        %v7435 = vpop.trf.xlu0
        %v7436 = vpop.trf.xlu0
        %v7437 = vpop.trf.xlu0
        %v7438 = vpop.trf.xlu0
        %v7439 = vpop.trf.xlu0
        %v7440 = vpop.trf.xlu0
        %v7441 = vpop.trf.xlu0
        %v7442 = vpop.trf.xlu0
        %7443 = vxpose.xlu0.b32.start [1/16] %v5532, 128
        %7444 = vxpose.xlu0.b32.cont [2/16] 0.0, 128
        %7445 = vxpose.xlu0.b32.cont [3/16] 0.0, 128
        %7446 = vxpose.xlu0.b32.cont [4/16] 0.0, 128
        %7447 = vxpose.xlu0.b32.cont [5/16] 0.0, 128
        %7448 = vxpose.xlu0.b32.cont [6/16] 0.0, 128
        %7449 = vxpose.xlu0.b32.cont [7/16] 0.0, 128
        %7450 = vxpose.xlu0.b32.cont [8/16] 0.0, 128
        %7451 = vxpose.xlu0.b32.cont [9/16] 0.0, 128
        %7452 = vxpose.xlu0.b32.cont [10/16] 0.0, 128
        %7453 = vxpose.xlu0.b32.cont [11/16] 0.0, 128
        %7454 = vxpose.xlu0.b32.cont [12/16] 0.0, 128
        %7455 = vxpose.xlu0.b32.cont [13/16] 0.0, 128
        %7456 = vxpose.xlu0.b32.cont [14/16] 0.0, 128
        %7457 = vxpose.xlu0.b32.cont [15/16] 0.0, 128
        %7458 = vxpose.xlu0.b32.end [16/16] 0.0, 128
        %v7459 = vpop.trf.xlu0
        %v7460 = vpop.trf.xlu0
        %v7461 = vpop.trf.xlu0
        %v7462 = vpop.trf.xlu0
        %v7463 = vpop.trf.xlu0
        %v7464 = vpop.trf.xlu0
        %v7465 = vpop.trf.xlu0
        %v7466 = vpop.trf.xlu0
        %v7467 = vpop.trf.xlu0
        %v7468 = vpop.trf.xlu0
        %v7469 = vpop.trf.xlu0
        %v7470 = vpop.trf.xlu0
        %v7471 = vpop.trf.xlu0
        %v7472 = vpop.trf.xlu0
        %v7473 = vpop.trf.xlu0
        %v7474 = vpop.trf.xlu0
        %7475 = vxpose.xlu0.b32.start [1/16] %v5533, 128
        %7476 = vxpose.xlu0.b32.cont [2/16] 0.0, 128
        %7477 = vxpose.xlu0.b32.cont [3/16] 0.0, 128
        %7478 = vxpose.xlu0.b32.cont [4/16] 0.0, 128
        %7479 = vxpose.xlu0.b32.cont [5/16] 0.0, 128
        %7480 = vxpose.xlu0.b32.cont [6/16] 0.0, 128
        %7481 = vxpose.xlu0.b32.cont [7/16] 0.0, 128
        %7482 = vxpose.xlu0.b32.cont [8/16] 0.0, 128
        %7483 = vxpose.xlu0.b32.cont [9/16] 0.0, 128
        %7484 = vxpose.xlu0.b32.cont [10/16] 0.0, 128
        %7485 = vxpose.xlu0.b32.cont [11/16] 0.0, 128
        %7486 = vxpose.xlu0.b32.cont [12/16] 0.0, 128
        %7487 = vxpose.xlu0.b32.cont [13/16] 0.0, 128
        %7488 = vxpose.xlu0.b32.cont [14/16] 0.0, 128
        %7489 = vxpose.xlu0.b32.cont [15/16] 0.0, 128
        %7490 = vxpose.xlu0.b32.end [16/16] 0.0, 128
        %v7491 = vpop.trf.xlu0
        %v7492 = vpop.trf.xlu0
        %v7493 = vpop.trf.xlu0
        %v7494 = vpop.trf.xlu0
        %v7495 = vpop.trf.xlu0
        %v7496 = vpop.trf.xlu0
        %v7497 = vpop.trf.xlu0
        %v7498 = vpop.trf.xlu0
        %v7499 = vpop.trf.xlu0
        %v7500 = vpop.trf.xlu0
        %v7501 = vpop.trf.xlu0
        %v7502 = vpop.trf.xlu0
        %v7503 = vpop.trf.xlu0
        %v7504 = vpop.trf.xlu0
        %v7505 = vpop.trf.xlu0
        %v7506 = vpop.trf.xlu0
        %7507 = vxpose.xlu0.b32.start [1/16] %v5534, 128
        %7508 = vxpose.xlu0.b32.cont [2/16] 0.0, 128
        %7509 = vxpose.xlu0.b32.cont [3/16] 0.0, 128
        %7510 = vxpose.xlu0.b32.cont [4/16] 0.0, 128
        %7511 = vxpose.xlu0.b32.cont [5/16] 0.0, 128
        %7512 = vxpose.xlu0.b32.cont [6/16] 0.0, 128
        %7513 = vxpose.xlu0.b32.cont [7/16] 0.0, 128
        %7514 = vxpose.xlu0.b32.cont [8/16] 0.0, 128
        %7515 = vxpose.xlu0.b32.cont [9/16] 0.0, 128
        %7516 = vxpose.xlu0.b32.cont [10/16] 0.0, 128
        %7517 = vxpose.xlu0.b32.cont [11/16] 0.0, 128
        %7518 = vxpose.xlu0.b32.cont [12/16] 0.0, 128
        %7519 = vxpose.xlu0.b32.cont [13/16] 0.0, 128
        %7520 = vxpose.xlu0.b32.cont [14/16] 0.0, 128
        %7521 = vxpose.xlu0.b32.cont [15/16] 0.0, 128
        %7522 = vxpose.xlu0.b32.end [16/16] 0.0, 128
        %v7523 = vpop.trf.xlu0
        %v7524 = vpop.trf.xlu0
        %v7525 = vpop.trf.xlu0
        %v7526 = vpop.trf.xlu0
        %v7527 = vpop.trf.xlu0
        %v7528 = vpop.trf.xlu0
        %v7529 = vpop.trf.xlu0
        %v7530 = vpop.trf.xlu0
        %v7531 = vpop.trf.xlu0
        %v7532 = vpop.trf.xlu0
        %v7533 = vpop.trf.xlu0
        %v7534 = vpop.trf.xlu0
        %v7535 = vpop.trf.xlu0
        %v7536 = vpop.trf.xlu0
        %v7537 = vpop.trf.xlu0
        %v7538 = vpop.trf.xlu0
        %7539 = vxpose.xlu0.b32.start [1/16] %v5535, 128
        %7540 = vxpose.xlu0.b32.cont [2/16] 0.0, 128
        %7541 = vxpose.xlu0.b32.cont [3/16] 0.0, 128
        %7542 = vxpose.xlu0.b32.cont [4/16] 0.0, 128
        %7543 = vxpose.xlu0.b32.cont [5/16] 0.0, 128
        %7544 = vxpose.xlu0.b32.cont [6/16] 0.0, 128
        %7545 = vxpose.xlu0.b32.cont [7/16] 0.0, 128
        %7546 = vxpose.xlu0.b32.cont [8/16] 0.0, 128
        %7547 = vxpose.xlu0.b32.cont [9/16] 0.0, 128
        %7548 = vxpose.xlu0.b32.cont [10/16] 0.0, 128
        %7549 = vxpose.xlu0.b32.cont [11/16] 0.0, 128
        %7550 = vxpose.xlu0.b32.cont [12/16] 0.0, 128
        %7551 = vxpose.xlu0.b32.cont [13/16] 0.0, 128
        %7552 = vxpose.xlu0.b32.cont [14/16] 0.0, 128
        %7553 = vxpose.xlu0.b32.cont [15/16] 0.0, 128
        %7554 = vxpose.xlu0.b32.end [16/16] 0.0, 128
        %v7555 = vpop.trf.xlu0
        %v7556 = vpop.trf.xlu0
        %v7557 = vpop.trf.xlu0
        %v7558 = vpop.trf.xlu0
        %v7559 = vpop.trf.xlu0
        %v7560 = vpop.trf.xlu0
        %v7561 = vpop.trf.xlu0
        %v7562 = vpop.trf.xlu0
        %v7563 = vpop.trf.xlu0
        %v7564 = vpop.trf.xlu0
        %v7565 = vpop.trf.xlu0
        %v7566 = vpop.trf.xlu0
        %v7567 = vpop.trf.xlu0
        %v7568 = vpop.trf.xlu0
        %v7569 = vpop.trf.xlu0
        %v7570 = vpop.trf.xlu0
        %7571 = vxpose.xlu0.b32.start [1/16] %v5536, 128
        %7572 = vxpose.xlu0.b32.cont [2/16] 0.0, 128
        %7573 = vxpose.xlu0.b32.cont [3/16] 0.0, 128
        %7574 = vxpose.xlu0.b32.cont [4/16] 0.0, 128
        %7575 = vxpose.xlu0.b32.cont [5/16] 0.0, 128
        %7576 = vxpose.xlu0.b32.cont [6/16] 0.0, 128
        %7577 = vxpose.xlu0.b32.cont [7/16] 0.0, 128
        %7578 = vxpose.xlu0.b32.cont [8/16] 0.0, 128
        %7579 = vxpose.xlu0.b32.cont [9/16] 0.0, 128
        %7580 = vxpose.xlu0.b32.cont [10/16] 0.0, 128
        %7581 = vxpose.xlu0.b32.cont [11/16] 0.0, 128
        %7582 = vxpose.xlu0.b32.cont [12/16] 0.0, 128
        %7583 = vxpose.xlu0.b32.cont [13/16] 0.0, 128
        %7584 = vxpose.xlu0.b32.cont [14/16] 0.0, 128
        %7585 = vxpose.xlu0.b32.cont [15/16] 0.0, 128
        %7586 = vxpose.xlu0.b32.end [16/16] 0.0, 128
        %v7587 = vpop.trf.xlu0
        %v7588 = vpop.trf.xlu0
        %v7589 = vpop.trf.xlu0
        %v7590 = vpop.trf.xlu0
        %v7591 = vpop.trf.xlu0
        %v7592 = vpop.trf.xlu0
        %v7593 = vpop.trf.xlu0
        %v7594 = vpop.trf.xlu0
        %v7595 = vpop.trf.xlu0
        %v7596 = vpop.trf.xlu0
        %v7597 = vpop.trf.xlu0
        %v7598 = vpop.trf.xlu0
        %v7599 = vpop.trf.xlu0
        %v7600 = vpop.trf.xlu0
        %v7601 = vpop.trf.xlu0
        %v7602 = vpop.trf.xlu0
        %7603 = vxpose.xlu0.b32.start [1/16] %v5537, 128
        %7604 = vxpose.xlu0.b32.cont [2/16] 0.0, 128
        %7605 = vxpose.xlu0.b32.cont [3/16] 0.0, 128
        %7606 = vxpose.xlu0.b32.cont [4/16] 0.0, 128
        %7607 = vxpose.xlu0.b32.cont [5/16] 0.0, 128
        %7608 = vxpose.xlu0.b32.cont [6/16] 0.0, 128
        %7609 = vxpose.xlu0.b32.cont [7/16] 0.0, 128
        %7610 = vxpose.xlu0.b32.cont [8/16] 0.0, 128
        %7611 = vxpose.xlu0.b32.cont [9/16] 0.0, 128
        %7612 = vxpose.xlu0.b32.cont [10/16] 0.0, 128
        %7613 = vxpose.xlu0.b32.cont [11/16] 0.0, 128
        %7614 = vxpose.xlu0.b32.cont [12/16] 0.0, 128
        %7615 = vxpose.xlu0.b32.cont [13/16] 0.0, 128
        %7616 = vxpose.xlu0.b32.cont [14/16] 0.0, 128
        %7617 = vxpose.xlu0.b32.cont [15/16] 0.0, 128
        %7618 = vxpose.xlu0.b32.end [16/16] 0.0, 128
        %v7619 = vpop.trf.xlu0
        %v7620 = vpop.trf.xlu0
        %v7621 = vpop.trf.xlu0
        %v7622 = vpop.trf.xlu0
        %v7623 = vpop.trf.xlu0
        %v7624 = vpop.trf.xlu0
        %v7625 = vpop.trf.xlu0
        %v7626 = vpop.trf.xlu0
        %v7627 = vpop.trf.xlu0
        %v7628 = vpop.trf.xlu0
        %v7629 = vpop.trf.xlu0
        %v7630 = vpop.trf.xlu0
        %v7631 = vpop.trf.xlu0
        %v7632 = vpop.trf.xlu0
        %v7633 = vpop.trf.xlu0
        %v7634 = vpop.trf.xlu0
        %7635 = vxpose.xlu0.b32.start [1/16] %v5538, 128
        %7636 = vxpose.xlu0.b32.cont [2/16] 0.0, 128
        %7637 = vxpose.xlu0.b32.cont [3/16] 0.0, 128
        %7638 = vxpose.xlu0.b32.cont [4/16] 0.0, 128
        %7639 = vxpose.xlu0.b32.cont [5/16] 0.0, 128
        %7640 = vxpose.xlu0.b32.cont [6/16] 0.0, 128
        %7641 = vxpose.xlu0.b32.cont [7/16] 0.0, 128
        %7642 = vxpose.xlu0.b32.cont [8/16] 0.0, 128
        %7643 = vxpose.xlu0.b32.cont [9/16] 0.0, 128
        %7644 = vxpose.xlu0.b32.cont [10/16] 0.0, 128
        %7645 = vxpose.xlu0.b32.cont [11/16] 0.0, 128
        %7646 = vxpose.xlu0.b32.cont [12/16] 0.0, 128
        %7647 = vxpose.xlu0.b32.cont [13/16] 0.0, 128
        %7648 = vxpose.xlu0.b32.cont [14/16] 0.0, 128
        %7649 = vxpose.xlu0.b32.cont [15/16] 0.0, 128
        %7650 = vxpose.xlu0.b32.end [16/16] 0.0, 128
        %v7651 = vpop.trf.xlu0
        %v7652 = vpop.trf.xlu0
        %v7653 = vpop.trf.xlu0
        %v7654 = vpop.trf.xlu0
        %v7655 = vpop.trf.xlu0
        %v7656 = vpop.trf.xlu0
        %v7657 = vpop.trf.xlu0
        %v7658 = vpop.trf.xlu0
        %v7659 = vpop.trf.xlu0
        %v7660 = vpop.trf.xlu0
        %v7661 = vpop.trf.xlu0
        %v7662 = vpop.trf.xlu0
        %v7663 = vpop.trf.xlu0
        %v7664 = vpop.trf.xlu0
        %v7665 = vpop.trf.xlu0
        %v7666 = vpop.trf.xlu0
        %7667 = vxpose.xlu0.b32.start [1/16] %v5539, 128
        %7668 = vxpose.xlu0.b32.cont [2/16] 0.0, 128
        %7669 = vxpose.xlu0.b32.cont [3/16] 0.0, 128
        %7670 = vxpose.xlu0.b32.cont [4/16] 0.0, 128
        %7671 = vxpose.xlu0.b32.cont [5/16] 0.0, 128
        %7672 = vxpose.xlu0.b32.cont [6/16] 0.0, 128
        %7673 = vxpose.xlu0.b32.cont [7/16] 0.0, 128
        %7674 = vxpose.xlu0.b32.cont [8/16] 0.0, 128
        %7675 = vxpose.xlu0.b32.cont [9/16] 0.0, 128
        %7676 = vxpose.xlu0.b32.cont [10/16] 0.0, 128
        %7677 = vxpose.xlu0.b32.cont [11/16] 0.0, 128
        %7678 = vxpose.xlu0.b32.cont [12/16] 0.0, 128
        %7679 = vxpose.xlu0.b32.cont [13/16] 0.0, 128
        %7680 = vxpose.xlu0.b32.cont [14/16] 0.0, 128
        %7681 = vxpose.xlu0.b32.cont [15/16] 0.0, 128
        %7682 = vxpose.xlu0.b32.end [16/16] 0.0, 128
        %v7683 = vpop.trf.xlu0
        %v7684 = vpop.trf.xlu0
        %v7685 = vpop.trf.xlu0
        %v7686 = vpop.trf.xlu0
        %v7687 = vpop.trf.xlu0
        %v7688 = vpop.trf.xlu0
        %v7689 = vpop.trf.xlu0
        %v7690 = vpop.trf.xlu0
        %v7691 = vpop.trf.xlu0
        %v7692 = vpop.trf.xlu0
        %v7693 = vpop.trf.xlu0
        %v7694 = vpop.trf.xlu0
        %v7695 = vpop.trf.xlu0
        %v7696 = vpop.trf.xlu0
        %v7697 = vpop.trf.xlu0
        %v7698 = vpop.trf.xlu0
        %v7699 = vsel %vm4270, %v7203, 0.0
        %7700 = vadd.xlane.f32.xlu0 %v7699
        %v7701 = vpop.xlane.xlu0 %7700
        %v7702 = vsel %vm4270, %v7204, 0.0
        %7703 = vadd.xlane.f32.xlu0 %v7702
        %v7704 = vpop.xlane.xlu0 %7703
        %v7705 = vsel %vm4270, %v7205, 0.0
        %7706 = vadd.xlane.f32.xlu0 %v7705
        %v7707 = vpop.xlane.xlu0 %7706
        %v7708 = vsel %vm4270, %v7206, 0.0
        %7709 = vadd.xlane.f32.xlu0 %v7708
        %v7710 = vpop.xlane.xlu0 %7709
        %v7711 = vsel %vm4270, %v7235, 0.0
        %7712 = vadd.xlane.f32.xlu0 %v7711
        %v7713 = vpop.xlane.xlu0 %7712
        %v7714 = vsel %vm4270, %v7236, 0.0
        %7715 = vadd.xlane.f32.xlu0 %v7714
        %v7716 = vpop.xlane.xlu0 %7715
        %v7717 = vsel %vm4270, %v7237, 0.0
        %7718 = vadd.xlane.f32.xlu0 %v7717
        %v7719 = vpop.xlane.xlu0 %7718
        %v7720 = vsel %vm4270, %v7238, 0.0
        %7721 = vadd.xlane.f32.xlu0 %v7720
        %v7722 = vpop.xlane.xlu0 %7721
        %v7723 = vsel %vm4270, %v7267, 0.0
        %7724 = vadd.xlane.f32.xlu0 %v7723
        %v7725 = vpop.xlane.xlu0 %7724
        %v7726 = vsel %vm4270, %v7268, 0.0
        %7727 = vadd.xlane.f32.xlu0 %v7726
        %v7728 = vpop.xlane.xlu0 %7727
        %v7729 = vsel %vm4270, %v7269, 0.0
        %7730 = vadd.xlane.f32.xlu0 %v7729
        %v7731 = vpop.xlane.xlu0 %7730
        %v7732 = vsel %vm4270, %v7270, 0.0
        %7733 = vadd.xlane.f32.xlu0 %v7732
        %v7734 = vpop.xlane.xlu0 %7733
        %v7735 = vsel %vm4270, %v7299, 0.0
        %7736 = vadd.xlane.f32.xlu0 %v7735
        %v7737 = vpop.xlane.xlu0 %7736
        %v7738 = vsel %vm4270, %v7300, 0.0
        %7739 = vadd.xlane.f32.xlu0 %v7738
        %v7740 = vpop.xlane.xlu0 %7739
        %v7741 = vsel %vm4270, %v7301, 0.0
        %7742 = vadd.xlane.f32.xlu0 %v7741
        %v7743 = vpop.xlane.xlu0 %7742
        %v7744 = vsel %vm4270, %v7302, 0.0
        %7745 = vadd.xlane.f32.xlu0 %v7744
        %v7746 = vpop.xlane.xlu0 %7745
        %v7747 = vsel %vm4270, %v7331, 0.0
        %7748 = vadd.xlane.f32.xlu0 %v7747
        %v7749 = vpop.xlane.xlu0 %7748
        %v7750 = vsel %vm4270, %v7332, 0.0
        %7751 = vadd.xlane.f32.xlu0 %v7750
        %v7752 = vpop.xlane.xlu0 %7751
        %v7753 = vsel %vm4270, %v7333, 0.0
        %7754 = vadd.xlane.f32.xlu0 %v7753
        %v7755 = vpop.xlane.xlu0 %7754
        %v7756 = vsel %vm4270, %v7334, 0.0
        %7757 = vadd.xlane.f32.xlu0 %v7756
        %v7758 = vpop.xlane.xlu0 %7757
        %v7759 = vsel %vm4270, %v7363, 0.0
        %7760 = vadd.xlane.f32.xlu0 %v7759
        %v7761 = vpop.xlane.xlu0 %7760
        %v7762 = vsel %vm4270, %v7364, 0.0
        %7763 = vadd.xlane.f32.xlu0 %v7762
        %v7764 = vpop.xlane.xlu0 %7763
        %v7765 = vsel %vm4270, %v7365, 0.0
        %7766 = vadd.xlane.f32.xlu0 %v7765
        %v7767 = vpop.xlane.xlu0 %7766
        %v7768 = vsel %vm4270, %v7366, 0.0
        %7769 = vadd.xlane.f32.xlu0 %v7768
        %v7770 = vpop.xlane.xlu0 %7769
        %v7771 = vsel %vm4270, %v7395, 0.0
        %7772 = vadd.xlane.f32.xlu0 %v7771
        %v7773 = vpop.xlane.xlu0 %7772
        %v7774 = vsel %vm4270, %v7396, 0.0
        %7775 = vadd.xlane.f32.xlu0 %v7774
        %v7776 = vpop.xlane.xlu0 %7775
        %v7777 = vsel %vm4270, %v7397, 0.0
        %7778 = vadd.xlane.f32.xlu0 %v7777
        %v7779 = vpop.xlane.xlu0 %7778
        %v7780 = vsel %vm4270, %v7398, 0.0
        %7781 = vadd.xlane.f32.xlu0 %v7780
        %v7782 = vpop.xlane.xlu0 %7781
        %v7783 = vsel %vm4270, %v7427, 0.0
        %7784 = vadd.xlane.f32.xlu0 %v7783
        %v7785 = vpop.xlane.xlu0 %7784
        %v7786 = vsel %vm4270, %v7428, 0.0
        %7787 = vadd.xlane.f32.xlu0 %v7786
        %v7788 = vpop.xlane.xlu0 %7787
        %v7789 = vsel %vm4270, %v7429, 0.0
        %7790 = vadd.xlane.f32.xlu0 %v7789
        %v7791 = vpop.xlane.xlu0 %7790
        %v7792 = vsel %vm4270, %v7430, 0.0
        %7793 = vadd.xlane.f32.xlu0 %v7792
        %v7794 = vpop.xlane.xlu0 %7793
        %v7795 = vsel %vm4270, %v7459, 0.0
        %7796 = vadd.xlane.f32.xlu0 %v7795
        %v7797 = vpop.xlane.xlu0 %7796
        %v7798 = vsel %vm4270, %v7460, 0.0
        %7799 = vadd.xlane.f32.xlu0 %v7798
        %v7800 = vpop.xlane.xlu0 %7799
        %v7801 = vsel %vm4270, %v7461, 0.0
        %7802 = vadd.xlane.f32.xlu0 %v7801
        %v7803 = vpop.xlane.xlu0 %7802
        %v7804 = vsel %vm4270, %v7462, 0.0
        %7805 = vadd.xlane.f32.xlu0 %v7804
        %v7806 = vpop.xlane.xlu0 %7805
        %v7807 = vsel %vm4270, %v7491, 0.0
        %7808 = vadd.xlane.f32.xlu0 %v7807
        %v7809 = vpop.xlane.xlu0 %7808
        %v7810 = vsel %vm4270, %v7492, 0.0
        %7811 = vadd.xlane.f32.xlu0 %v7810
        %v7812 = vpop.xlane.xlu0 %7811
        %v7813 = vsel %vm4270, %v7493, 0.0
        %7814 = vadd.xlane.f32.xlu0 %v7813
        %v7815 = vpop.xlane.xlu0 %7814
        %v7816 = vsel %vm4270, %v7494, 0.0
        %7817 = vadd.xlane.f32.xlu0 %v7816
        %v7818 = vpop.xlane.xlu0 %7817
        %v7819 = vsel %vm4270, %v7523, 0.0
        %7820 = vadd.xlane.f32.xlu0 %v7819
        %v7821 = vpop.xlane.xlu0 %7820
        %v7822 = vsel %vm4270, %v7524, 0.0
        %7823 = vadd.xlane.f32.xlu0 %v7822
        %v7824 = vpop.xlane.xlu0 %7823
        %v7825 = vsel %vm4270, %v7525, 0.0
        %7826 = vadd.xlane.f32.xlu0 %v7825
        %v7827 = vpop.xlane.xlu0 %7826
        %v7828 = vsel %vm4270, %v7526, 0.0
        %7829 = vadd.xlane.f32.xlu0 %v7828
        %v7830 = vpop.xlane.xlu0 %7829
        %v7831 = vsel %vm4270, %v7555, 0.0
        %7832 = vadd.xlane.f32.xlu0 %v7831
        %v7833 = vpop.xlane.xlu0 %7832
        %v7834 = vsel %vm4270, %v7556, 0.0
        %7835 = vadd.xlane.f32.xlu0 %v7834
        %v7836 = vpop.xlane.xlu0 %7835
        %v7837 = vsel %vm4270, %v7557, 0.0
        %7838 = vadd.xlane.f32.xlu0 %v7837
        %v7839 = vpop.xlane.xlu0 %7838
        %v7840 = vsel %vm4270, %v7558, 0.0
        %7841 = vadd.xlane.f32.xlu0 %v7840
        %v7842 = vpop.xlane.xlu0 %7841
        %v7843 = vsel %vm4270, %v7587, 0.0
        %7844 = vadd.xlane.f32.xlu0 %v7843
        %v7845 = vpop.xlane.xlu0 %7844
        %v7846 = vsel %vm4270, %v7588, 0.0
        %7847 = vadd.xlane.f32.xlu0 %v7846
        %v7848 = vpop.xlane.xlu0 %7847
        %v7849 = vsel %vm4270, %v7589, 0.0
        %7850 = vadd.xlane.f32.xlu0 %v7849
        %v7851 = vpop.xlane.xlu0 %7850
        %v7852 = vsel %vm4270, %v7590, 0.0
        %7853 = vadd.xlane.f32.xlu0 %v7852
        %v7854 = vpop.xlane.xlu0 %7853
        %v7855 = vsel %vm4270, %v7619, 0.0
        %7856 = vadd.xlane.f32.xlu0 %v7855
        %v7857 = vpop.xlane.xlu0 %7856
        %v7858 = vsel %vm4270, %v7620, 0.0
        %7859 = vadd.xlane.f32.xlu0 %v7858
        %v7860 = vpop.xlane.xlu0 %7859
        %v7861 = vsel %vm4270, %v7621, 0.0
        %7862 = vadd.xlane.f32.xlu0 %v7861
        %v7863 = vpop.xlane.xlu0 %7862
        %v7864 = vsel %vm4270, %v7622, 0.0
        %7865 = vadd.xlane.f32.xlu0 %v7864
        %v7866 = vpop.xlane.xlu0 %7865
        %v7867 = vsel %vm4270, %v7651, 0.0
        %7868 = vadd.xlane.f32.xlu0 %v7867
        %v7869 = vpop.xlane.xlu0 %7868
        %v7870 = vsel %vm4270, %v7652, 0.0
        %7871 = vadd.xlane.f32.xlu0 %v7870
        %v7872 = vpop.xlane.xlu0 %7871
        %v7873 = vsel %vm4270, %v7653, 0.0
        %7874 = vadd.xlane.f32.xlu0 %v7873
        %v7875 = vpop.xlane.xlu0 %7874
        %v7876 = vsel %vm4270, %v7654, 0.0
        %7877 = vadd.xlane.f32.xlu0 %v7876
        %v7878 = vpop.xlane.xlu0 %7877
        %v7879 = vsel %vm4270, %v7683, 0.0
        %7880 = vadd.xlane.f32.xlu0 %v7879
        %v7881 = vpop.xlane.xlu0 %7880
        %v7882 = vsel %vm4270, %v7684, 0.0
        %7883 = vadd.xlane.f32.xlu0 %v7882
        %v7884 = vpop.xlane.xlu0 %7883
        %v7885 = vsel %vm4270, %v7685, 0.0
        %7886 = vadd.xlane.f32.xlu0 %v7885
        %v7887 = vpop.xlane.xlu0 %7886
        %v7888 = vsel %vm4270, %v7686, 0.0
        %7889 = vadd.xlane.f32.xlu0 %v7888
        %v7890 = vpop.xlane.xlu0 %7889
        %v7891 = vmul.f32 %v7701, %v6933
        %v7892 = vmul.f32 %v7704, %v6936
        %v7893 = vmul.f32 %v7707, %v6941
        %v7894 = vmul.f32 %v7710, %v6944
        %v7895 = vmul.f32 %v7713, %v6949
        %v7896 = vmul.f32 %v7716, %v6952
        %v7897 = vmul.f32 %v7719, %v6957
        %v7898 = vmul.f32 %v7722, %v6960
        %v7899 = vmul.f32 %v7725, %v6965
        %v7900 = vmul.f32 %v7728, %v6968
        %v7901 = vmul.f32 %v7731, %v6973
        %v7902 = vmul.f32 %v7734, %v6976
        %v7903 = vmul.f32 %v7737, %v6981
        %v7904 = vmul.f32 %v7740, %v6984
        %v7905 = vmul.f32 %v7743, %v6989
        %v7906 = vmul.f32 %v7746, %v6992
        %v7907 = vmul.f32 %v7749, %v6997
        %v7908 = vmul.f32 %v7752, %v7000
        %v7909 = vmul.f32 %v7755, %v7005
        %v7910 = vmul.f32 %v7758, %v7008
        %v7911 = vmul.f32 %v7761, %v7013
        %v7912 = vmul.f32 %v7764, %v7016
        %v7913 = vmul.f32 %v7767, %v7021
        %v7914 = vmul.f32 %v7770, %v7024
        %v7915 = vmul.f32 %v7773, %v7029
        %v7916 = vmul.f32 %v7776, %v7032
        %v7917 = vmul.f32 %v7779, %v7037
        %v7918 = vmul.f32 %v7782, %v7040
        %v7919 = vmul.f32 %v7785, %v7045
        %v7920 = vmul.f32 %v7788, %v7048
        %v7921 = vmul.f32 %v7791, %v7053
        %v7922 = vmul.f32 %v7794, %v7056
        %v7923 = vmul.f32 %v7797, %v7061
        %v7924 = vmul.f32 %v7800, %v7064
        %v7925 = vmul.f32 %v7803, %v7069
        %v7926 = vmul.f32 %v7806, %v7072
        %v7927 = vmul.f32 %v7809, %v7077
        %v7928 = vmul.f32 %v7812, %v7080
        %v7929 = vmul.f32 %v7815, %v7085
        %v7930 = vmul.f32 %v7818, %v7088
        %v7931 = vmul.f32 %v7821, %v7093
        %v7932 = vmul.f32 %v7824, %v7096
        %v7933 = vmul.f32 %v7827, %v7101
        %v7934 = vmul.f32 %v7830, %v7104
        %v7935 = vmul.f32 %v7833, %v7109
        %v7936 = vmul.f32 %v7836, %v7112
        %v7937 = vmul.f32 %v7839, %v7117
        %v7938 = vmul.f32 %v7842, %v7120
        %v7939 = vmul.f32 %v7845, %v7125
        %v7940 = vmul.f32 %v7848, %v7128
        %v7941 = vmul.f32 %v7851, %v7133
        %v7942 = vmul.f32 %v7854, %v7136
        %v7943 = vmul.f32 %v7857, %v7141
        %v7944 = vmul.f32 %v7860, %v7144
        %v7945 = vmul.f32 %v7863, %v7149
        %v7946 = vmul.f32 %v7866, %v7152
        %v7947 = vmul.f32 %v7869, %v7157
        %v7948 = vmul.f32 %v7872, %v7160
        %v7949 = vmul.f32 %v7875, %v7165
        %v7950 = vmul.f32 %v7878, %v7168
        %v7951 = vmul.f32 %v7881, %v7173
        %v7952 = vmul.f32 %v7884, %v7176
        %v7953 = vmul.f32 %v7887, %v7181
        %v7954 = vmul.f32 %v7890, %v7184
        %v7955 = vadd.f32 %v4527, %v7891
        %v7956 = vadd.f32 %v4528, %v7892
        %v7957 = vadd.f32 %v4529, %v7893
        %v7958 = vadd.f32 %v4530, %v7894
        %v7959 = vadd.f32 %v4531, %v7895
        %v7960 = vadd.f32 %v4532, %v7896
        %v7961 = vadd.f32 %v4533, %v7897
        %v7962 = vadd.f32 %v4534, %v7898
        %v7963 = vadd.f32 %v4535, %v7899
        %v7964 = vadd.f32 %v4536, %v7900
        %v7965 = vadd.f32 %v4537, %v7901
        %v7966 = vadd.f32 %v4538, %v7902
        %v7967 = vadd.f32 %v4539, %v7903
        %v7968 = vadd.f32 %v4540, %v7904
        %v7969 = vadd.f32 %v4541, %v7905
        %v7970 = vadd.f32 %v4542, %v7906
        %v7971 = vadd.f32 %v4543, %v7907
        %v7972 = vadd.f32 %v4544, %v7908
        %v7973 = vadd.f32 %v4545, %v7909
        %v7974 = vadd.f32 %v4546, %v7910
        %v7975 = vadd.f32 %v4547, %v7911
        %v7976 = vadd.f32 %v4548, %v7912
        %v7977 = vadd.f32 %v4549, %v7913
        %v7978 = vadd.f32 %v4550, %v7914
        %v7979 = vadd.f32 %v4551, %v7915
        %v7980 = vadd.f32 %v4552, %v7916
        %v7981 = vadd.f32 %v4553, %v7917
        %v7982 = vadd.f32 %v4554, %v7918
        %v7983 = vadd.f32 %v4555, %v7919
        %v7984 = vadd.f32 %v4556, %v7920
        %v7985 = vadd.f32 %v4557, %v7921
        %v7986 = vadd.f32 %v4558, %v7922
        %v7987 = vadd.f32 %v4559, %v7923
        %v7988 = vadd.f32 %v4560, %v7924
        %v7989 = vadd.f32 %v4561, %v7925
        %v7990 = vadd.f32 %v4562, %v7926
        %v7991 = vadd.f32 %v4563, %v7927
        %v7992 = vadd.f32 %v4564, %v7928
        %v7993 = vadd.f32 %v4565, %v7929
        %v7994 = vadd.f32 %v4566, %v7930
        %v7995 = vadd.f32 %v4567, %v7931
        %v7996 = vadd.f32 %v4568, %v7932
        %v7997 = vadd.f32 %v4569, %v7933
        %v7998 = vadd.f32 %v4570, %v7934
        %v7999 = vadd.f32 %v4571, %v7935
        %v8000 = vadd.f32 %v4572, %v7936
        %v8001 = vadd.f32 %v4573, %v7937
        %v8002 = vadd.f32 %v4574, %v7938
        %v8003 = vadd.f32 %v4575, %v7939
        %v8004 = vadd.f32 %v4576, %v7940
        %v8005 = vadd.f32 %v4577, %v7941
        %v8006 = vadd.f32 %v4578, %v7942
        %v8007 = vadd.f32 %v4579, %v7943
        %v8008 = vadd.f32 %v4580, %v7944
        %v8009 = vadd.f32 %v4581, %v7945
        %v8010 = vadd.f32 %v4582, %v7946
        %v8011 = vadd.f32 %v4583, %v7947
        %v8012 = vadd.f32 %v4584, %v7948
        %v8013 = vadd.f32 %v4585, %v7949
        %v8014 = vadd.f32 %v4586, %v7950
        %v8015 = vadd.f32 %v4587, %v7951
        %v8016 = vadd.f32 %v4588, %v7952
        %v8017 = vadd.f32 %v4589, %v7953
        %v8018 = vadd.f32 %v4590, %v7954
        %v8019 = vpack.c.bf16 %v7956, %v7955
        %v8020 = vpack.c.bf16 %v7958, %v7957
        %v8021 = vpack.c.bf16 %v7960, %v7959
        %v8022 = vpack.c.bf16 %v7962, %v7961
        %v8023 = vpack.c.bf16 %v7964, %v7963
        %v8024 = vpack.c.bf16 %v7966, %v7965
        %v8025 = vpack.c.bf16 %v7968, %v7967
        %v8026 = vpack.c.bf16 %v7970, %v7969
        %v8027 = vpack.c.bf16 %v7972, %v7971
        %v8028 = vpack.c.bf16 %v7974, %v7973
        %v8029 = vpack.c.bf16 %v7976, %v7975
        %v8030 = vpack.c.bf16 %v7978, %v7977
        %v8031 = vpack.c.bf16 %v7980, %v7979
        %v8032 = vpack.c.bf16 %v7982, %v7981
        %v8033 = vpack.c.bf16 %v7984, %v7983
        %v8034 = vpack.c.bf16 %v7986, %v7985
        %v8035 = vpack.c.bf16 %v7988, %v7987
        %v8036 = vpack.c.bf16 %v7990, %v7989
        %v8037 = vpack.c.bf16 %v7992, %v7991
        %v8038 = vpack.c.bf16 %v7994, %v7993
        %v8039 = vpack.c.bf16 %v7996, %v7995
        %v8040 = vpack.c.bf16 %v7998, %v7997
        %v8041 = vpack.c.bf16 %v8000, %v7999
        %v8042 = vpack.c.bf16 %v8002, %v8001
        %v8043 = vpack.c.bf16 %v8004, %v8003
        %v8044 = vpack.c.bf16 %v8006, %v8005
        %v8045 = vpack.c.bf16 %v8008, %v8007
        %v8046 = vpack.c.bf16 %v8010, %v8009
        %v8047 = vpack.c.bf16 %v8012, %v8011
        %v8048 = vpack.c.bf16 %v8014, %v8013
        %v8049 = vpack.c.bf16 %v8016, %v8015
        %v8050 = vpack.c.bf16 %v8018, %v8017
        %s8051 = scalar_lea.vmem %s3, 8
        %v8052 = vld [vmem:[%s8051] sm:$0xf]
        %v8054 = vsel %vm1202, %v8052, 0
        %v8057 = vsel %vm1202, %v8019, 0
        %v8060 = vsel %vm1202, %v8020, 0
        %8062 = vmatprep.subr.bf16.mxu0 0
        %8063 = vmatpush1.bf16.xpose.msra.mxu0 %v8057
        %8064 = vmatprep.subr.bf16.mxu0 0
        %8065 = vmatpush1.bf16.xpose.msra.mxu0 %v8060
        %8066 = vmatprep.subr.bf16.mxu0 0
        %8067 = vmatpush1.bf16.xpose.msra.mxu0 0
        %8068 = vmatprep.subr.bf16.mxu0 0
        %8069 = vmatpush1.bf16.xpose.msra.mxu0 0
        %8070 = vmatprep.subr.bf16.mxu0 0
        %8071 = vmatpush1.bf16.xpose.msra.mxu0 0
        %8072 = vmatprep.subr.bf16.mxu0 0
        %8073 = vmatpush1.bf16.xpose.msra.mxu0 0
        %8074 = vmatprep.subr.bf16.mxu0 0
        %8075 = vmatpush1.bf16.xpose.msra.mxu0 0
        %8076 = vmatprep.subr.bf16.mxu0 0
        %8077 = vmatpush1.bf16.xpose.msra.mxu0 0
        %8078 = vmatprep.subr.bf16.mxu0 0
        %8079 = vmatpush1.bf16.xpose.msra.mxu0 0
        %8080 = vmatprep.subr.bf16.mxu0 0
        %8081 = vmatpush1.bf16.xpose.msra.mxu0 0
        %8082 = vmatprep.subr.bf16.mxu0 0
        %8083 = vmatpush1.bf16.xpose.msra.mxu0 0
        %8084 = vmatprep.subr.bf16.mxu0 0
        %8085 = vmatpush1.bf16.xpose.msra.mxu0 0
        %8086 = vmatprep.subr.bf16.mxu0 0
        %8087 = vmatpush1.bf16.xpose.msra.mxu0 0
        %8088 = vmatprep.subr.bf16.mxu0 0
        %8089 = vmatpush1.bf16.xpose.msra.mxu0 0
        %8090 = vmatprep.subr.bf16.mxu0 0
        %8091 = vmatpush1.bf16.xpose.msra.mxu0 0
        %8092 = vmatprep.subr.bf16.mxu0 0
        %8093 = vmatpush1.bf16.xpose.msra.mxu0 0
        %8094 = vmatprep.mubr.bf16.mxu0 0
        %8095 = vmatmul.mubr.bf16.gmra.mrb[0].mxu0 %v8054
        %v8096 = vpop.f32.mrb[0].mxu0
        %v8097 = vadd.f32 0.0, %v8096
        %v8098 = vpop.f32.mrb[0].mxu0
        %v8099 = vpop.f32.mrb[0].mxu0
        %v8100 = vpop.f32.mrb[0].mxu0
        %8101 = vdwg.mxu0
        %v8103 = vsel %vm1202, %v8021, 0
        %v8106 = vsel %vm1202, %v8022, 0
        %8108 = vmatprep.subr.bf16.mxu0 0
        %8109 = vmatpush1.bf16.xpose.msra.mxu0 %v8103
        %8110 = vmatprep.subr.bf16.mxu0 0
        %8111 = vmatpush1.bf16.xpose.msra.mxu0 %v8106
        %8112 = vmatprep.subr.bf16.mxu0 0
        %8113 = vmatpush1.bf16.xpose.msra.mxu0 0
        %8114 = vmatprep.subr.bf16.mxu0 0
        %8115 = vmatpush1.bf16.xpose.msra.mxu0 0
        %8116 = vmatprep.subr.bf16.mxu0 0
        %8117 = vmatpush1.bf16.xpose.msra.mxu0 0
        %8118 = vmatprep.subr.bf16.mxu0 0
        %8119 = vmatpush1.bf16.xpose.msra.mxu0 0
        %8120 = vmatprep.subr.bf16.mxu0 0
        %8121 = vmatpush1.bf16.xpose.msra.mxu0 0
        %8122 = vmatprep.subr.bf16.mxu0 0
        %8123 = vmatpush1.bf16.xpose.msra.mxu0 0
        %8124 = vmatprep.subr.bf16.mxu0 0
        %8125 = vmatpush1.bf16.xpose.msra.mxu0 0
        %8126 = vmatprep.subr.bf16.mxu0 0
        %8127 = vmatpush1.bf16.xpose.msra.mxu0 0
        %8128 = vmatprep.subr.bf16.mxu0 0
        %8129 = vmatpush1.bf16.xpose.msra.mxu0 0
        %8130 = vmatprep.subr.bf16.mxu0 0
        %8131 = vmatpush1.bf16.xpose.msra.mxu0 0
        %8132 = vmatprep.subr.bf16.mxu0 0
        %8133 = vmatpush1.bf16.xpose.msra.mxu0 0
        %8134 = vmatprep.subr.bf16.mxu0 0
        %8135 = vmatpush1.bf16.xpose.msra.mxu0 0
        %8136 = vmatprep.subr.bf16.mxu0 0
        %8137 = vmatpush1.bf16.xpose.msra.mxu0 0
        %8138 = vmatprep.subr.bf16.mxu0 0
        %8139 = vmatpush1.bf16.xpose.msra.mxu0 0
        %8140 = vmatprep.mubr.bf16.mxu0 0
        %8141 = vmatmul.mubr.bf16.gmra.mrb[0].mxu0 %v8054
        %v8142 = vpop.f32.mrb[0].mxu0
        %v8143 = vadd.f32 0.0, %v8142
        %v8144 = vpop.f32.mrb[0].mxu0
        %v8145 = vpop.f32.mrb[0].mxu0
        %v8146 = vpop.f32.mrb[0].mxu0
        %8147 = vdwg.mxu0
        %v8149 = vsel %vm1202, %v8023, 0
        %v8152 = vsel %vm1202, %v8024, 0
        %8154 = vmatprep.subr.bf16.mxu0 0
        %8155 = vmatpush1.bf16.xpose.msra.mxu0 %v8149
        %8156 = vmatprep.subr.bf16.mxu0 0
        %8157 = vmatpush1.bf16.xpose.msra.mxu0 %v8152
        %8158 = vmatprep.subr.bf16.mxu0 0
        %8159 = vmatpush1.bf16.xpose.msra.mxu0 0
        %8160 = vmatprep.subr.bf16.mxu0 0
        %8161 = vmatpush1.bf16.xpose.msra.mxu0 0
        %8162 = vmatprep.subr.bf16.mxu0 0
        %8163 = vmatpush1.bf16.xpose.msra.mxu0 0
        %8164 = vmatprep.subr.bf16.mxu0 0
        %8165 = vmatpush1.bf16.xpose.msra.mxu0 0
        %8166 = vmatprep.subr.bf16.mxu0 0
        %8167 = vmatpush1.bf16.xpose.msra.mxu0 0
        %8168 = vmatprep.subr.bf16.mxu0 0
        %8169 = vmatpush1.bf16.xpose.msra.mxu0 0
        %8170 = vmatprep.subr.bf16.mxu0 0
        %8171 = vmatpush1.bf16.xpose.msra.mxu0 0
        %8172 = vmatprep.subr.bf16.mxu0 0
        %8173 = vmatpush1.bf16.xpose.msra.mxu0 0
        %8174 = vmatprep.subr.bf16.mxu0 0
        %8175 = vmatpush1.bf16.xpose.msra.mxu0 0
        %8176 = vmatprep.subr.bf16.mxu0 0
        %8177 = vmatpush1.bf16.xpose.msra.mxu0 0
        %8178 = vmatprep.subr.bf16.mxu0 0
        %8179 = vmatpush1.bf16.xpose.msra.mxu0 0
        %8180 = vmatprep.subr.bf16.mxu0 0
        %8181 = vmatpush1.bf16.xpose.msra.mxu0 0
        %8182 = vmatprep.subr.bf16.mxu0 0
        %8183 = vmatpush1.bf16.xpose.msra.mxu0 0
        %8184 = vmatprep.subr.bf16.mxu0 0
        %8185 = vmatpush1.bf16.xpose.msra.mxu0 0
        %8186 = vmatprep.mubr.bf16.mxu0 0
        %8187 = vmatmul.mubr.bf16.gmra.mrb[0].mxu0 %v8054
        %v8188 = vpop.f32.mrb[0].mxu0
        %v8189 = vadd.f32 0.0, %v8188
        %v8190 = vpop.f32.mrb[0].mxu0
        %v8191 = vpop.f32.mrb[0].mxu0
        %v8192 = vpop.f32.mrb[0].mxu0
        %8193 = vdwg.mxu0
        %v8195 = vsel %vm1202, %v8025, 0
        %v8198 = vsel %vm1202, %v8026, 0
        %8200 = vmatprep.subr.bf16.mxu0 0
        %8201 = vmatpush1.bf16.xpose.msra.mxu0 %v8195
        %8202 = vmatprep.subr.bf16.mxu0 0
        %8203 = vmatpush1.bf16.xpose.msra.mxu0 %v8198
        %8204 = vmatprep.subr.bf16.mxu0 0
        %8205 = vmatpush1.bf16.xpose.msra.mxu0 0
        %8206 = vmatprep.subr.bf16.mxu0 0
        %8207 = vmatpush1.bf16.xpose.msra.mxu0 0
        %8208 = vmatprep.subr.bf16.mxu0 0
        %8209 = vmatpush1.bf16.xpose.msra.mxu0 0
        %8210 = vmatprep.subr.bf16.mxu0 0
        %8211 = vmatpush1.bf16.xpose.msra.mxu0 0
        %8212 = vmatprep.subr.bf16.mxu0 0
        %8213 = vmatpush1.bf16.xpose.msra.mxu0 0
        %8214 = vmatprep.subr.bf16.mxu0 0
        %8215 = vmatpush1.bf16.xpose.msra.mxu0 0
        %8216 = vmatprep.subr.bf16.mxu0 0
        %8217 = vmatpush1.bf16.xpose.msra.mxu0 0
        %8218 = vmatprep.subr.bf16.mxu0 0
        %8219 = vmatpush1.bf16.xpose.msra.mxu0 0
        %8220 = vmatprep.subr.bf16.mxu0 0
        %8221 = vmatpush1.bf16.xpose.msra.mxu0 0
        %8222 = vmatprep.subr.bf16.mxu0 0
        %8223 = vmatpush1.bf16.xpose.msra.mxu0 0
        %8224 = vmatprep.subr.bf16.mxu0 0
        %8225 = vmatpush1.bf16.xpose.msra.mxu0 0
        %8226 = vmatprep.subr.bf16.mxu0 0
        %8227 = vmatpush1.bf16.xpose.msra.mxu0 0
        %8228 = vmatprep.subr.bf16.mxu0 0
        %8229 = vmatpush1.bf16.xpose.msra.mxu0 0
        %8230 = vmatprep.subr.bf16.mxu0 0
        %8231 = vmatpush1.bf16.xpose.msra.mxu0 0
        %8232 = vmatprep.mubr.bf16.mxu0 0
        %8233 = vmatmul.mubr.bf16.gmra.mrb[0].mxu0 %v8054
        %v8234 = vpop.f32.mrb[0].mxu0
        %v8235 = vadd.f32 0.0, %v8234
        %v8236 = vpop.f32.mrb[0].mxu0
        %v8237 = vpop.f32.mrb[0].mxu0
        %v8238 = vpop.f32.mrb[0].mxu0
        %8239 = vdwg.mxu0
        %v8241 = vsel %vm1202, %v8027, 0
        %v8244 = vsel %vm1202, %v8028, 0
        %8246 = vmatprep.subr.bf16.mxu0 0
        %8247 = vmatpush1.bf16.xpose.msra.mxu0 %v8241
        %8248 = vmatprep.subr.bf16.mxu0 0
        %8249 = vmatpush1.bf16.xpose.msra.mxu0 %v8244
        %8250 = vmatprep.subr.bf16.mxu0 0
        %8251 = vmatpush1.bf16.xpose.msra.mxu0 0
        %8252 = vmatprep.subr.bf16.mxu0 0
        %8253 = vmatpush1.bf16.xpose.msra.mxu0 0
        %8254 = vmatprep.subr.bf16.mxu0 0
        %8255 = vmatpush1.bf16.xpose.msra.mxu0 0
        %8256 = vmatprep.subr.bf16.mxu0 0
        %8257 = vmatpush1.bf16.xpose.msra.mxu0 0
        %8258 = vmatprep.subr.bf16.mxu0 0
        %8259 = vmatpush1.bf16.xpose.msra.mxu0 0
        %8260 = vmatprep.subr.bf16.mxu0 0
        %8261 = vmatpush1.bf16.xpose.msra.mxu0 0
        %8262 = vmatprep.subr.bf16.mxu0 0
        %8263 = vmatpush1.bf16.xpose.msra.mxu0 0
        %8264 = vmatprep.subr.bf16.mxu0 0
        %8265 = vmatpush1.bf16.xpose.msra.mxu0 0
        %8266 = vmatprep.subr.bf16.mxu0 0
        %8267 = vmatpush1.bf16.xpose.msra.mxu0 0
        %8268 = vmatprep.subr.bf16.mxu0 0
        %8269 = vmatpush1.bf16.xpose.msra.mxu0 0
        %8270 = vmatprep.subr.bf16.mxu0 0
        %8271 = vmatpush1.bf16.xpose.msra.mxu0 0
        %8272 = vmatprep.subr.bf16.mxu0 0
        %8273 = vmatpush1.bf16.xpose.msra.mxu0 0
        %8274 = vmatprep.subr.bf16.mxu0 0
        %8275 = vmatpush1.bf16.xpose.msra.mxu0 0
        %8276 = vmatprep.subr.bf16.mxu0 0
        %8277 = vmatpush1.bf16.xpose.msra.mxu0 0
        %8278 = vmatprep.mubr.bf16.mxu0 0
        %8279 = vmatmul.mubr.bf16.gmra.mrb[0].mxu0 %v8054
        %v8280 = vpop.f32.mrb[0].mxu0
        %v8281 = vadd.f32 0.0, %v8280
        %v8282 = vpop.f32.mrb[0].mxu0
        %v8283 = vpop.f32.mrb[0].mxu0
        %v8284 = vpop.f32.mrb[0].mxu0
        %8285 = vdwg.mxu0
        %v8287 = vsel %vm1202, %v8029, 0
        %v8290 = vsel %vm1202, %v8030, 0
        %8292 = vmatprep.subr.bf16.mxu0 0
        %8293 = vmatpush1.bf16.xpose.msra.mxu0 %v8287
        %8294 = vmatprep.subr.bf16.mxu0 0
        %8295 = vmatpush1.bf16.xpose.msra.mxu0 %v8290
        %8296 = vmatprep.subr.bf16.mxu0 0
        %8297 = vmatpush1.bf16.xpose.msra.mxu0 0
        %8298 = vmatprep.subr.bf16.mxu0 0
        %8299 = vmatpush1.bf16.xpose.msra.mxu0 0
        %8300 = vmatprep.subr.bf16.mxu0 0
        %8301 = vmatpush1.bf16.xpose.msra.mxu0 0
        %8302 = vmatprep.subr.bf16.mxu0 0
        %8303 = vmatpush1.bf16.xpose.msra.mxu0 0
        %8304 = vmatprep.subr.bf16.mxu0 0
        %8305 = vmatpush1.bf16.xpose.msra.mxu0 0
        %8306 = vmatprep.subr.bf16.mxu0 0
        %8307 = vmatpush1.bf16.xpose.msra.mxu0 0
        %8308 = vmatprep.subr.bf16.mxu0 0
        %8309 = vmatpush1.bf16.xpose.msra.mxu0 0
        %8310 = vmatprep.subr.bf16.mxu0 0
        %8311 = vmatpush1.bf16.xpose.msra.mxu0 0
        %8312 = vmatprep.subr.bf16.mxu0 0
        %8313 = vmatpush1.bf16.xpose.msra.mxu0 0
        %8314 = vmatprep.subr.bf16.mxu0 0
        %8315 = vmatpush1.bf16.xpose.msra.mxu0 0
        %8316 = vmatprep.subr.bf16.mxu0 0
        %8317 = vmatpush1.bf16.xpose.msra.mxu0 0
        %8318 = vmatprep.subr.bf16.mxu0 0
        %8319 = vmatpush1.bf16.xpose.msra.mxu0 0
        %8320 = vmatprep.subr.bf16.mxu0 0
        %8321 = vmatpush1.bf16.xpose.msra.mxu0 0
        %8322 = vmatprep.subr.bf16.mxu0 0
        %8323 = vmatpush1.bf16.xpose.msra.mxu0 0
        %8324 = vmatprep.mubr.bf16.mxu0 0
        %8325 = vmatmul.mubr.bf16.gmra.mrb[0].mxu0 %v8054
        %v8326 = vpop.f32.mrb[0].mxu0
        %v8327 = vadd.f32 0.0, %v8326
        %v8328 = vpop.f32.mrb[0].mxu0
        %v8329 = vpop.f32.mrb[0].mxu0
        %v8330 = vpop.f32.mrb[0].mxu0
        %8331 = vdwg.mxu0
        %v8333 = vsel %vm1202, %v8031, 0
        %v8336 = vsel %vm1202, %v8032, 0
        %8338 = vmatprep.subr.bf16.mxu0 0
        %8339 = vmatpush1.bf16.xpose.msra.mxu0 %v8333
        %8340 = vmatprep.subr.bf16.mxu0 0
        %8341 = vmatpush1.bf16.xpose.msra.mxu0 %v8336
        %8342 = vmatprep.subr.bf16.mxu0 0
        %8343 = vmatpush1.bf16.xpose.msra.mxu0 0
        %8344 = vmatprep.subr.bf16.mxu0 0
        %8345 = vmatpush1.bf16.xpose.msra.mxu0 0
        %8346 = vmatprep.subr.bf16.mxu0 0
        %8347 = vmatpush1.bf16.xpose.msra.mxu0 0
        %8348 = vmatprep.subr.bf16.mxu0 0
        %8349 = vmatpush1.bf16.xpose.msra.mxu0 0
        %8350 = vmatprep.subr.bf16.mxu0 0
        %8351 = vmatpush1.bf16.xpose.msra.mxu0 0
        %8352 = vmatprep.subr.bf16.mxu0 0
        %8353 = vmatpush1.bf16.xpose.msra.mxu0 0
        %8354 = vmatprep.subr.bf16.mxu0 0
        %8355 = vmatpush1.bf16.xpose.msra.mxu0 0
        %8356 = vmatprep.subr.bf16.mxu0 0
        %8357 = vmatpush1.bf16.xpose.msra.mxu0 0
        %8358 = vmatprep.subr.bf16.mxu0 0
        %8359 = vmatpush1.bf16.xpose.msra.mxu0 0
        %8360 = vmatprep.subr.bf16.mxu0 0
        %8361 = vmatpush1.bf16.xpose.msra.mxu0 0
        %8362 = vmatprep.subr.bf16.mxu0 0
        %8363 = vmatpush1.bf16.xpose.msra.mxu0 0
        %8364 = vmatprep.subr.bf16.mxu0 0
        %8365 = vmatpush1.bf16.xpose.msra.mxu0 0
        %8366 = vmatprep.subr.bf16.mxu0 0
        %8367 = vmatpush1.bf16.xpose.msra.mxu0 0
        %8368 = vmatprep.subr.bf16.mxu0 0
        %8369 = vmatpush1.bf16.xpose.msra.mxu0 0
        %8370 = vmatprep.mubr.bf16.mxu0 0
        %8371 = vmatmul.mubr.bf16.gmra.mrb[0].mxu0 %v8054
        %v8372 = vpop.f32.mrb[0].mxu0
        %v8373 = vadd.f32 0.0, %v8372
        %v8374 = vpop.f32.mrb[0].mxu0
        %v8375 = vpop.f32.mrb[0].mxu0
        %v8376 = vpop.f32.mrb[0].mxu0
        %8377 = vdwg.mxu0
        %v8379 = vsel %vm1202, %v8033, 0
        %v8382 = vsel %vm1202, %v8034, 0
        %8384 = vmatprep.subr.bf16.mxu0 0
        %8385 = vmatpush1.bf16.xpose.msra.mxu0 %v8379
        %8386 = vmatprep.subr.bf16.mxu0 0
        %8387 = vmatpush1.bf16.xpose.msra.mxu0 %v8382
        %8388 = vmatprep.subr.bf16.mxu0 0
        %8389 = vmatpush1.bf16.xpose.msra.mxu0 0
        %8390 = vmatprep.subr.bf16.mxu0 0
        %8391 = vmatpush1.bf16.xpose.msra.mxu0 0
        %8392 = vmatprep.subr.bf16.mxu0 0
        %8393 = vmatpush1.bf16.xpose.msra.mxu0 0
        %8394 = vmatprep.subr.bf16.mxu0 0
        %8395 = vmatpush1.bf16.xpose.msra.mxu0 0
        %8396 = vmatprep.subr.bf16.mxu0 0
        %8397 = vmatpush1.bf16.xpose.msra.mxu0 0
        %8398 = vmatprep.subr.bf16.mxu0 0
        %8399 = vmatpush1.bf16.xpose.msra.mxu0 0
        %8400 = vmatprep.subr.bf16.mxu0 0
        %8401 = vmatpush1.bf16.xpose.msra.mxu0 0
        %8402 = vmatprep.subr.bf16.mxu0 0
        %8403 = vmatpush1.bf16.xpose.msra.mxu0 0
        %8404 = vmatprep.subr.bf16.mxu0 0
        %8405 = vmatpush1.bf16.xpose.msra.mxu0 0
        %8406 = vmatprep.subr.bf16.mxu0 0
        %8407 = vmatpush1.bf16.xpose.msra.mxu0 0
        %8408 = vmatprep.subr.bf16.mxu0 0
        %8409 = vmatpush1.bf16.xpose.msra.mxu0 0
        %8410 = vmatprep.subr.bf16.mxu0 0
        %8411 = vmatpush1.bf16.xpose.msra.mxu0 0
        %8412 = vmatprep.subr.bf16.mxu0 0
        %8413 = vmatpush1.bf16.xpose.msra.mxu0 0
        %8414 = vmatprep.subr.bf16.mxu0 0
        %8415 = vmatpush1.bf16.xpose.msra.mxu0 0
        %8416 = vmatprep.mubr.bf16.mxu0 0
        %8417 = vmatmul.mubr.bf16.gmra.mrb[0].mxu0 %v8054
        %v8418 = vpop.f32.mrb[0].mxu0
        %v8419 = vadd.f32 0.0, %v8418
        %v8420 = vpop.f32.mrb[0].mxu0
        %v8421 = vpop.f32.mrb[0].mxu0
        %v8422 = vpop.f32.mrb[0].mxu0
        %8423 = vdwg.mxu0
        %v8425 = vsel %vm1202, %v8035, 0
        %v8428 = vsel %vm1202, %v8036, 0
        %8430 = vmatprep.subr.bf16.mxu0 0
        %8431 = vmatpush1.bf16.xpose.msra.mxu0 %v8425
        %8432 = vmatprep.subr.bf16.mxu0 0
        %8433 = vmatpush1.bf16.xpose.msra.mxu0 %v8428
        %8434 = vmatprep.subr.bf16.mxu0 0
        %8435 = vmatpush1.bf16.xpose.msra.mxu0 0
        %8436 = vmatprep.subr.bf16.mxu0 0
        %8437 = vmatpush1.bf16.xpose.msra.mxu0 0
        %8438 = vmatprep.subr.bf16.mxu0 0
        %8439 = vmatpush1.bf16.xpose.msra.mxu0 0
        %8440 = vmatprep.subr.bf16.mxu0 0
        %8441 = vmatpush1.bf16.xpose.msra.mxu0 0
        %8442 = vmatprep.subr.bf16.mxu0 0
        %8443 = vmatpush1.bf16.xpose.msra.mxu0 0
        %8444 = vmatprep.subr.bf16.mxu0 0
        %8445 = vmatpush1.bf16.xpose.msra.mxu0 0
        %8446 = vmatprep.subr.bf16.mxu0 0
        %8447 = vmatpush1.bf16.xpose.msra.mxu0 0
        %8448 = vmatprep.subr.bf16.mxu0 0
        %8449 = vmatpush1.bf16.xpose.msra.mxu0 0
        %8450 = vmatprep.subr.bf16.mxu0 0
        %8451 = vmatpush1.bf16.xpose.msra.mxu0 0
        %8452 = vmatprep.subr.bf16.mxu0 0
        %8453 = vmatpush1.bf16.xpose.msra.mxu0 0
        %8454 = vmatprep.subr.bf16.mxu0 0
        %8455 = vmatpush1.bf16.xpose.msra.mxu0 0
        %8456 = vmatprep.subr.bf16.mxu0 0
        %8457 = vmatpush1.bf16.xpose.msra.mxu0 0
        %8458 = vmatprep.subr.bf16.mxu0 0
        %8459 = vmatpush1.bf16.xpose.msra.mxu0 0
        %8460 = vmatprep.subr.bf16.mxu0 0
        %8461 = vmatpush1.bf16.xpose.msra.mxu0 0
        %8462 = vmatprep.mubr.bf16.mxu0 0
        %8463 = vmatmul.mubr.bf16.gmra.mrb[0].mxu0 %v8054
        %v8464 = vpop.f32.mrb[0].mxu0
        %v8465 = vadd.f32 0.0, %v8464
        %v8466 = vpop.f32.mrb[0].mxu0
        %v8467 = vpop.f32.mrb[0].mxu0
        %v8468 = vpop.f32.mrb[0].mxu0
        %8469 = vdwg.mxu0
        %v8471 = vsel %vm1202, %v8037, 0
        %v8474 = vsel %vm1202, %v8038, 0
        %8476 = vmatprep.subr.bf16.mxu0 0
        %8477 = vmatpush1.bf16.xpose.msra.mxu0 %v8471
        %8478 = vmatprep.subr.bf16.mxu0 0
        %8479 = vmatpush1.bf16.xpose.msra.mxu0 %v8474
        %8480 = vmatprep.subr.bf16.mxu0 0
        %8481 = vmatpush1.bf16.xpose.msra.mxu0 0
        %8482 = vmatprep.subr.bf16.mxu0 0
        %8483 = vmatpush1.bf16.xpose.msra.mxu0 0
        %8484 = vmatprep.subr.bf16.mxu0 0
        %8485 = vmatpush1.bf16.xpose.msra.mxu0 0
        %8486 = vmatprep.subr.bf16.mxu0 0
        %8487 = vmatpush1.bf16.xpose.msra.mxu0 0
        %8488 = vmatprep.subr.bf16.mxu0 0
        %8489 = vmatpush1.bf16.xpose.msra.mxu0 0
        %8490 = vmatprep.subr.bf16.mxu0 0
        %8491 = vmatpush1.bf16.xpose.msra.mxu0 0
        %8492 = vmatprep.subr.bf16.mxu0 0
        %8493 = vmatpush1.bf16.xpose.msra.mxu0 0
        %8494 = vmatprep.subr.bf16.mxu0 0
        %8495 = vmatpush1.bf16.xpose.msra.mxu0 0
        %8496 = vmatprep.subr.bf16.mxu0 0
        %8497 = vmatpush1.bf16.xpose.msra.mxu0 0
        %8498 = vmatprep.subr.bf16.mxu0 0
        %8499 = vmatpush1.bf16.xpose.msra.mxu0 0
        %8500 = vmatprep.subr.bf16.mxu0 0
        %8501 = vmatpush1.bf16.xpose.msra.mxu0 0
        %8502 = vmatprep.subr.bf16.mxu0 0
        %8503 = vmatpush1.bf16.xpose.msra.mxu0 0
        %8504 = vmatprep.subr.bf16.mxu0 0
        %8505 = vmatpush1.bf16.xpose.msra.mxu0 0
        %8506 = vmatprep.subr.bf16.mxu0 0
        %8507 = vmatpush1.bf16.xpose.msra.mxu0 0
        %8508 = vmatprep.mubr.bf16.mxu0 0
        %8509 = vmatmul.mubr.bf16.gmra.mrb[0].mxu0 %v8054
        %v8510 = vpop.f32.mrb[0].mxu0
        %v8511 = vadd.f32 0.0, %v8510
        %v8512 = vpop.f32.mrb[0].mxu0
        %v8513 = vpop.f32.mrb[0].mxu0
        %v8514 = vpop.f32.mrb[0].mxu0
        %8515 = vdwg.mxu0
        %v8517 = vsel %vm1202, %v8039, 0
        %v8520 = vsel %vm1202, %v8040, 0
        %8522 = vmatprep.subr.bf16.mxu0 0
        %8523 = vmatpush1.bf16.xpose.msra.mxu0 %v8517
        %8524 = vmatprep.subr.bf16.mxu0 0
        %8525 = vmatpush1.bf16.xpose.msra.mxu0 %v8520
        %8526 = vmatprep.subr.bf16.mxu0 0
        %8527 = vmatpush1.bf16.xpose.msra.mxu0 0
        %8528 = vmatprep.subr.bf16.mxu0 0
        %8529 = vmatpush1.bf16.xpose.msra.mxu0 0
        %8530 = vmatprep.subr.bf16.mxu0 0
        %8531 = vmatpush1.bf16.xpose.msra.mxu0 0
        %8532 = vmatprep.subr.bf16.mxu0 0
        %8533 = vmatpush1.bf16.xpose.msra.mxu0 0
        %8534 = vmatprep.subr.bf16.mxu0 0
        %8535 = vmatpush1.bf16.xpose.msra.mxu0 0
        %8536 = vmatprep.subr.bf16.mxu0 0
        %8537 = vmatpush1.bf16.xpose.msra.mxu0 0
        %8538 = vmatprep.subr.bf16.mxu0 0
        %8539 = vmatpush1.bf16.xpose.msra.mxu0 0
        %8540 = vmatprep.subr.bf16.mxu0 0
        %8541 = vmatpush1.bf16.xpose.msra.mxu0 0
        %8542 = vmatprep.subr.bf16.mxu0 0
        %8543 = vmatpush1.bf16.xpose.msra.mxu0 0
        %8544 = vmatprep.subr.bf16.mxu0 0
        %8545 = vmatpush1.bf16.xpose.msra.mxu0 0
        %8546 = vmatprep.subr.bf16.mxu0 0
        %8547 = vmatpush1.bf16.xpose.msra.mxu0 0
        %8548 = vmatprep.subr.bf16.mxu0 0
        %8549 = vmatpush1.bf16.xpose.msra.mxu0 0
        %8550 = vmatprep.subr.bf16.mxu0 0
        %8551 = vmatpush1.bf16.xpose.msra.mxu0 0
        %8552 = vmatprep.subr.bf16.mxu0 0
        %8553 = vmatpush1.bf16.xpose.msra.mxu0 0
        %8554 = vmatprep.mubr.bf16.mxu0 0
        %8555 = vmatmul.mubr.bf16.gmra.mrb[0].mxu0 %v8054
        %v8556 = vpop.f32.mrb[0].mxu0
        %v8557 = vadd.f32 0.0, %v8556
        %v8558 = vpop.f32.mrb[0].mxu0
        %v8559 = vpop.f32.mrb[0].mxu0
        %v8560 = vpop.f32.mrb[0].mxu0
        %8561 = vdwg.mxu0
        %v8563 = vsel %vm1202, %v8041, 0
        %v8566 = vsel %vm1202, %v8042, 0
        %8568 = vmatprep.subr.bf16.mxu0 0
        %8569 = vmatpush1.bf16.xpose.msra.mxu0 %v8563
        %8570 = vmatprep.subr.bf16.mxu0 0
        %8571 = vmatpush1.bf16.xpose.msra.mxu0 %v8566
        %8572 = vmatprep.subr.bf16.mxu0 0
        %8573 = vmatpush1.bf16.xpose.msra.mxu0 0
        %8574 = vmatprep.subr.bf16.mxu0 0
        %8575 = vmatpush1.bf16.xpose.msra.mxu0 0
        %8576 = vmatprep.subr.bf16.mxu0 0
        %8577 = vmatpush1.bf16.xpose.msra.mxu0 0
        %8578 = vmatprep.subr.bf16.mxu0 0
        %8579 = vmatpush1.bf16.xpose.msra.mxu0 0
        %8580 = vmatprep.subr.bf16.mxu0 0
        %8581 = vmatpush1.bf16.xpose.msra.mxu0 0
        %8582 = vmatprep.subr.bf16.mxu0 0
        %8583 = vmatpush1.bf16.xpose.msra.mxu0 0
        %8584 = vmatprep.subr.bf16.mxu0 0
        %8585 = vmatpush1.bf16.xpose.msra.mxu0 0
        %8586 = vmatprep.subr.bf16.mxu0 0
        %8587 = vmatpush1.bf16.xpose.msra.mxu0 0
        %8588 = vmatprep.subr.bf16.mxu0 0
        %8589 = vmatpush1.bf16.xpose.msra.mxu0 0
        %8590 = vmatprep.subr.bf16.mxu0 0
        %8591 = vmatpush1.bf16.xpose.msra.mxu0 0
        %8592 = vmatprep.subr.bf16.mxu0 0
        %8593 = vmatpush1.bf16.xpose.msra.mxu0 0
        %8594 = vmatprep.subr.bf16.mxu0 0
        %8595 = vmatpush1.bf16.xpose.msra.mxu0 0
        %8596 = vmatprep.subr.bf16.mxu0 0
        %8597 = vmatpush1.bf16.xpose.msra.mxu0 0
        %8598 = vmatprep.subr.bf16.mxu0 0
        %8599 = vmatpush1.bf16.xpose.msra.mxu0 0
        %8600 = vmatprep.mubr.bf16.mxu0 0
        %8601 = vmatmul.mubr.bf16.gmra.mrb[0].mxu0 %v8054
        %v8602 = vpop.f32.mrb[0].mxu0
        %v8603 = vadd.f32 0.0, %v8602
        %v8604 = vpop.f32.mrb[0].mxu0
        %v8605 = vpop.f32.mrb[0].mxu0
        %v8606 = vpop.f32.mrb[0].mxu0
        %8607 = vdwg.mxu0
        %v8609 = vsel %vm1202, %v8043, 0
        %v8612 = vsel %vm1202, %v8044, 0
        %8614 = vmatprep.subr.bf16.mxu0 0
        %8615 = vmatpush1.bf16.xpose.msra.mxu0 %v8609
        %8616 = vmatprep.subr.bf16.mxu0 0
        %8617 = vmatpush1.bf16.xpose.msra.mxu0 %v8612
        %8618 = vmatprep.subr.bf16.mxu0 0
        %8619 = vmatpush1.bf16.xpose.msra.mxu0 0
        %8620 = vmatprep.subr.bf16.mxu0 0
        %8621 = vmatpush1.bf16.xpose.msra.mxu0 0
        %8622 = vmatprep.subr.bf16.mxu0 0
        %8623 = vmatpush1.bf16.xpose.msra.mxu0 0
        %8624 = vmatprep.subr.bf16.mxu0 0
        %8625 = vmatpush1.bf16.xpose.msra.mxu0 0
        %8626 = vmatprep.subr.bf16.mxu0 0
        %8627 = vmatpush1.bf16.xpose.msra.mxu0 0
        %8628 = vmatprep.subr.bf16.mxu0 0
        %8629 = vmatpush1.bf16.xpose.msra.mxu0 0
        %8630 = vmatprep.subr.bf16.mxu0 0
        %8631 = vmatpush1.bf16.xpose.msra.mxu0 0
        %8632 = vmatprep.subr.bf16.mxu0 0
        %8633 = vmatpush1.bf16.xpose.msra.mxu0 0
        %8634 = vmatprep.subr.bf16.mxu0 0
        %8635 = vmatpush1.bf16.xpose.msra.mxu0 0
        %8636 = vmatprep.subr.bf16.mxu0 0
        %8637 = vmatpush1.bf16.xpose.msra.mxu0 0
        %8638 = vmatprep.subr.bf16.mxu0 0
        %8639 = vmatpush1.bf16.xpose.msra.mxu0 0
        %8640 = vmatprep.subr.bf16.mxu0 0
        %8641 = vmatpush1.bf16.xpose.msra.mxu0 0
        %8642 = vmatprep.subr.bf16.mxu0 0
        %8643 = vmatpush1.bf16.xpose.msra.mxu0 0
        %8644 = vmatprep.subr.bf16.mxu0 0
        %8645 = vmatpush1.bf16.xpose.msra.mxu0 0
        %8646 = vmatprep.mubr.bf16.mxu0 0
        %8647 = vmatmul.mubr.bf16.gmra.mrb[0].mxu0 %v8054
        %v8648 = vpop.f32.mrb[0].mxu0
        %v8649 = vadd.f32 0.0, %v8648
        %v8650 = vpop.f32.mrb[0].mxu0
        %v8651 = vpop.f32.mrb[0].mxu0
        %v8652 = vpop.f32.mrb[0].mxu0
        %8653 = vdwg.mxu0
        %v8655 = vsel %vm1202, %v8045, 0
        %v8658 = vsel %vm1202, %v8046, 0
        %8660 = vmatprep.subr.bf16.mxu0 0
        %8661 = vmatpush1.bf16.xpose.msra.mxu0 %v8655
        %8662 = vmatprep.subr.bf16.mxu0 0
        %8663 = vmatpush1.bf16.xpose.msra.mxu0 %v8658
        %8664 = vmatprep.subr.bf16.mxu0 0
        %8665 = vmatpush1.bf16.xpose.msra.mxu0 0
        %8666 = vmatprep.subr.bf16.mxu0 0
        %8667 = vmatpush1.bf16.xpose.msra.mxu0 0
        %8668 = vmatprep.subr.bf16.mxu0 0
        %8669 = vmatpush1.bf16.xpose.msra.mxu0 0
        %8670 = vmatprep.subr.bf16.mxu0 0
        %8671 = vmatpush1.bf16.xpose.msra.mxu0 0
        %8672 = vmatprep.subr.bf16.mxu0 0
        %8673 = vmatpush1.bf16.xpose.msra.mxu0 0
        %8674 = vmatprep.subr.bf16.mxu0 0
        %8675 = vmatpush1.bf16.xpose.msra.mxu0 0
        %8676 = vmatprep.subr.bf16.mxu0 0
        %8677 = vmatpush1.bf16.xpose.msra.mxu0 0
        %8678 = vmatprep.subr.bf16.mxu0 0
        %8679 = vmatpush1.bf16.xpose.msra.mxu0 0
        %8680 = vmatprep.subr.bf16.mxu0 0
        %8681 = vmatpush1.bf16.xpose.msra.mxu0 0
        %8682 = vmatprep.subr.bf16.mxu0 0
        %8683 = vmatpush1.bf16.xpose.msra.mxu0 0
        %8684 = vmatprep.subr.bf16.mxu0 0
        %8685 = vmatpush1.bf16.xpose.msra.mxu0 0
        %8686 = vmatprep.subr.bf16.mxu0 0
        %8687 = vmatpush1.bf16.xpose.msra.mxu0 0
        %8688 = vmatprep.subr.bf16.mxu0 0
        %8689 = vmatpush1.bf16.xpose.msra.mxu0 0
        %8690 = vmatprep.subr.bf16.mxu0 0
        %8691 = vmatpush1.bf16.xpose.msra.mxu0 0
        %8692 = vmatprep.mubr.bf16.mxu0 0
        %8693 = vmatmul.mubr.bf16.gmra.mrb[0].mxu0 %v8054
        %v8694 = vpop.f32.mrb[0].mxu0
        %v8695 = vadd.f32 0.0, %v8694
        %v8696 = vpop.f32.mrb[0].mxu0
        %v8697 = vpop.f32.mrb[0].mxu0
        %v8698 = vpop.f32.mrb[0].mxu0
        %8699 = vdwg.mxu0
        %v8701 = vsel %vm1202, %v8047, 0
        %v8704 = vsel %vm1202, %v8048, 0
        %8706 = vmatprep.subr.bf16.mxu0 0
        %8707 = vmatpush1.bf16.xpose.msra.mxu0 %v8701
        %8708 = vmatprep.subr.bf16.mxu0 0
        %8709 = vmatpush1.bf16.xpose.msra.mxu0 %v8704
        %8710 = vmatprep.subr.bf16.mxu0 0
        %8711 = vmatpush1.bf16.xpose.msra.mxu0 0
        %8712 = vmatprep.subr.bf16.mxu0 0
        %8713 = vmatpush1.bf16.xpose.msra.mxu0 0
        %8714 = vmatprep.subr.bf16.mxu0 0
        %8715 = vmatpush1.bf16.xpose.msra.mxu0 0
        %8716 = vmatprep.subr.bf16.mxu0 0
        %8717 = vmatpush1.bf16.xpose.msra.mxu0 0
        %8718 = vmatprep.subr.bf16.mxu0 0
        %8719 = vmatpush1.bf16.xpose.msra.mxu0 0
        %8720 = vmatprep.subr.bf16.mxu0 0
        %8721 = vmatpush1.bf16.xpose.msra.mxu0 0
        %8722 = vmatprep.subr.bf16.mxu0 0
        %8723 = vmatpush1.bf16.xpose.msra.mxu0 0
        %8724 = vmatprep.subr.bf16.mxu0 0
        %8725 = vmatpush1.bf16.xpose.msra.mxu0 0
        %8726 = vmatprep.subr.bf16.mxu0 0
        %8727 = vmatpush1.bf16.xpose.msra.mxu0 0
        %8728 = vmatprep.subr.bf16.mxu0 0
        %8729 = vmatpush1.bf16.xpose.msra.mxu0 0
        %8730 = vmatprep.subr.bf16.mxu0 0
        %8731 = vmatpush1.bf16.xpose.msra.mxu0 0
        %8732 = vmatprep.subr.bf16.mxu0 0
        %8733 = vmatpush1.bf16.xpose.msra.mxu0 0
        %8734 = vmatprep.subr.bf16.mxu0 0
        %8735 = vmatpush1.bf16.xpose.msra.mxu0 0
        %8736 = vmatprep.subr.bf16.mxu0 0
        %8737 = vmatpush1.bf16.xpose.msra.mxu0 0
        %8738 = vmatprep.mubr.bf16.mxu0 0
        %8739 = vmatmul.mubr.bf16.gmra.mrb[0].mxu0 %v8054
        %v8740 = vpop.f32.mrb[0].mxu0
        %v8741 = vadd.f32 0.0, %v8740
        %v8742 = vpop.f32.mrb[0].mxu0
        %v8743 = vpop.f32.mrb[0].mxu0
        %v8744 = vpop.f32.mrb[0].mxu0
        %8745 = vdwg.mxu0
        %v8747 = vsel %vm1202, %v8049, 0
        %v8750 = vsel %vm1202, %v8050, 0
        %8752 = vmatprep.subr.bf16.mxu0 0
        %8753 = vmatpush1.bf16.xpose.msra.mxu0 %v8747
        %8754 = vmatprep.subr.bf16.mxu0 0
        %8755 = vmatpush1.bf16.xpose.msra.mxu0 %v8750
        %8756 = vmatprep.subr.bf16.mxu0 0
        %8757 = vmatpush1.bf16.xpose.msra.mxu0 0
        %8758 = vmatprep.subr.bf16.mxu0 0
        %8759 = vmatpush1.bf16.xpose.msra.mxu0 0
        %8760 = vmatprep.subr.bf16.mxu0 0
        %8761 = vmatpush1.bf16.xpose.msra.mxu0 0
        %8762 = vmatprep.subr.bf16.mxu0 0
        %8763 = vmatpush1.bf16.xpose.msra.mxu0 0
        %8764 = vmatprep.subr.bf16.mxu0 0
        %8765 = vmatpush1.bf16.xpose.msra.mxu0 0
        %8766 = vmatprep.subr.bf16.mxu0 0
        %8767 = vmatpush1.bf16.xpose.msra.mxu0 0
        %8768 = vmatprep.subr.bf16.mxu0 0
        %8769 = vmatpush1.bf16.xpose.msra.mxu0 0
        %8770 = vmatprep.subr.bf16.mxu0 0
        %8771 = vmatpush1.bf16.xpose.msra.mxu0 0
        %8772 = vmatprep.subr.bf16.mxu0 0
        %8773 = vmatpush1.bf16.xpose.msra.mxu0 0
        %8774 = vmatprep.subr.bf16.mxu0 0
        %8775 = vmatpush1.bf16.xpose.msra.mxu0 0
        %8776 = vmatprep.subr.bf16.mxu0 0
        %8777 = vmatpush1.bf16.xpose.msra.mxu0 0
        %8778 = vmatprep.subr.bf16.mxu0 0
        %8779 = vmatpush1.bf16.xpose.msra.mxu0 0
        %8780 = vmatprep.subr.bf16.mxu0 0
        %8781 = vmatpush1.bf16.xpose.msra.mxu0 0
        %8782 = vmatprep.subr.bf16.mxu0 0
        %8783 = vmatpush1.bf16.xpose.msra.mxu0 0
        %8784 = vmatprep.mubr.bf16.mxu0 0
        %8785 = vmatmul.mubr.bf16.gmra.mrb[0].mxu0 %v8054
        %v8786 = vpop.f32.mrb[0].mxu0
        %v8787 = vadd.f32 0.0, %v8786
        %v8788 = vpop.f32.mrb[0].mxu0
        %v8789 = vpop.f32.mrb[0].mxu0
        %v8790 = vpop.f32.mrb[0].mxu0
        %8791 = vdwg.mxu0
        %v8792 = vsel %vm1202, %v8097, -inf
        %8793 = vmax.xlane.f32.xlu0 %v8792
        %v8794 = vpop.xlane.xlu0 %8793
        %v8795 = vsel %vm1202, %v8143, -inf
        %8796 = vmax.xlane.f32.xlu0 %v8795
        %v8797 = vpop.xlane.xlu0 %8796
        %v8798 = vsel %vm1202, %v8189, -inf
        %8799 = vmax.xlane.f32.xlu0 %v8798
        %v8800 = vpop.xlane.xlu0 %8799
        %v8801 = vsel %vm1202, %v8235, -inf
        %8802 = vmax.xlane.f32.xlu0 %v8801
        %v8803 = vpop.xlane.xlu0 %8802
        %v8804 = vsel %vm1202, %v8281, -inf
        %8805 = vmax.xlane.f32.xlu0 %v8804
        %v8806 = vpop.xlane.xlu0 %8805
        %v8807 = vsel %vm1202, %v8327, -inf
        %8808 = vmax.xlane.f32.xlu0 %v8807
        %v8809 = vpop.xlane.xlu0 %8808
        %v8810 = vsel %vm1202, %v8373, -inf
        %8811 = vmax.xlane.f32.xlu0 %v8810
        %v8812 = vpop.xlane.xlu0 %8811
        %v8813 = vsel %vm1202, %v8419, -inf
        %8814 = vmax.xlane.f32.xlu0 %v8813
        %v8815 = vpop.xlane.xlu0 %8814
        %v8816 = vsel %vm1202, %v8465, -inf
        %8817 = vmax.xlane.f32.xlu0 %v8816
        %v8818 = vpop.xlane.xlu0 %8817
        %v8819 = vsel %vm1202, %v8511, -inf
        %8820 = vmax.xlane.f32.xlu0 %v8819
        %v8821 = vpop.xlane.xlu0 %8820
        %v8822 = vsel %vm1202, %v8557, -inf
        %8823 = vmax.xlane.f32.xlu0 %v8822
        %v8824 = vpop.xlane.xlu0 %8823
        %v8825 = vsel %vm1202, %v8603, -inf
        %8826 = vmax.xlane.f32.xlu0 %v8825
        %v8827 = vpop.xlane.xlu0 %8826
        %v8828 = vsel %vm1202, %v8649, -inf
        %8829 = vmax.xlane.f32.xlu0 %v8828
        %v8830 = vpop.xlane.xlu0 %8829
        %v8831 = vsel %vm1202, %v8695, -inf
        %8832 = vmax.xlane.f32.xlu0 %v8831
        %v8833 = vpop.xlane.xlu0 %8832
        %v8834 = vsel %vm1202, %v8741, -inf
        %8835 = vmax.xlane.f32.xlu0 %v8834
        %v8836 = vpop.xlane.xlu0 %8835
        %v8837 = vsel %vm1202, %v8787, -inf
        %8838 = vmax.xlane.f32.xlu0 %v8837
        %v8839 = vpop.xlane.xlu0 %8838
        %v8840 = vsub.f32 %v8097, %v8794
        %v8841 = vsub.f32 %v8143, %v8797
        %v8842 = vsub.f32 %v8189, %v8800
        %v8843 = vsub.f32 %v8235, %v8803
        %v8844 = vsub.f32 %v8281, %v8806
        %v8845 = vsub.f32 %v8327, %v8809
        %v8846 = vsub.f32 %v8373, %v8812
        %v8847 = vsub.f32 %v8419, %v8815
        %v8848 = vsub.f32 %v8465, %v8818
        %v8849 = vsub.f32 %v8511, %v8821
        %v8850 = vsub.f32 %v8557, %v8824
        %v8851 = vsub.f32 %v8603, %v8827
        %v8852 = vsub.f32 %v8649, %v8830
        %v8853 = vsub.f32 %v8695, %v8833
        %v8854 = vsub.f32 %v8741, %v8836
        %v8855 = vsub.f32 %v8787, %v8839
        %v8856 = vmul.f32 %v8840, 1.442695
        %v8857 = vpow.pop %v8856
        %v8858 = vmul.f32 %v8841, 1.442695
        %v8859 = vpow.pop %v8858
        %v8860 = vmul.f32 %v8842, 1.442695
        %v8861 = vpow.pop %v8860
        %v8862 = vmul.f32 %v8843, 1.442695
        %v8863 = vpow.pop %v8862
        %v8864 = vmul.f32 %v8844, 1.442695
        %v8865 = vpow.pop %v8864
        %v8866 = vmul.f32 %v8845, 1.442695
        %v8867 = vpow.pop %v8866
        %v8868 = vmul.f32 %v8846, 1.442695
        %v8869 = vpow.pop %v8868
        %v8870 = vmul.f32 %v8847, 1.442695
        %v8871 = vpow.pop %v8870
        %v8872 = vmul.f32 %v8848, 1.442695
        %v8873 = vpow.pop %v8872
        %v8874 = vmul.f32 %v8849, 1.442695
        %v8875 = vpow.pop %v8874
        %v8876 = vmul.f32 %v8850, 1.442695
        %v8877 = vpow.pop %v8876
        %v8878 = vmul.f32 %v8851, 1.442695
        %v8879 = vpow.pop %v8878
        %v8880 = vmul.f32 %v8852, 1.442695
        %v8881 = vpow.pop %v8880
        %v8882 = vmul.f32 %v8853, 1.442695
        %v8883 = vpow.pop %v8882
        %v8884 = vmul.f32 %v8854, 1.442695
        %v8885 = vpow.pop %v8884
        %v8886 = vmul.f32 %v8855, 1.442695
        %v8887 = vpow.pop %v8886
        %v8888 = vsel %vm1202, %v8857, 0.0
        %8889 = vadd.xlane.f32.xlu0 %v8888
        %v8890 = vpop.xlane.xlu0 %8889
        %v8891 = vsel %vm1202, %v8859, 0.0
        %8892 = vadd.xlane.f32.xlu0 %v8891
        %v8893 = vpop.xlane.xlu0 %8892
        %v8894 = vsel %vm1202, %v8861, 0.0
        %8895 = vadd.xlane.f32.xlu0 %v8894
        %v8896 = vpop.xlane.xlu0 %8895
        %v8897 = vsel %vm1202, %v8863, 0.0
        %8898 = vadd.xlane.f32.xlu0 %v8897
        %v8899 = vpop.xlane.xlu0 %8898
        %v8900 = vsel %vm1202, %v8865, 0.0
        %8901 = vadd.xlane.f32.xlu0 %v8900
        %v8902 = vpop.xlane.xlu0 %8901
        %v8903 = vsel %vm1202, %v8867, 0.0
        %8904 = vadd.xlane.f32.xlu0 %v8903
        %v8905 = vpop.xlane.xlu0 %8904
        %v8906 = vsel %vm1202, %v8869, 0.0
        %8907 = vadd.xlane.f32.xlu0 %v8906
        %v8908 = vpop.xlane.xlu0 %8907
        %v8909 = vsel %vm1202, %v8871, 0.0
        %8910 = vadd.xlane.f32.xlu0 %v8909
        %v8911 = vpop.xlane.xlu0 %8910
        %v8912 = vsel %vm1202, %v8873, 0.0
        %8913 = vadd.xlane.f32.xlu0 %v8912
        %v8914 = vpop.xlane.xlu0 %8913
        %v8915 = vsel %vm1202, %v8875, 0.0
        %8916 = vadd.xlane.f32.xlu0 %v8915
        %v8917 = vpop.xlane.xlu0 %8916
        %v8918 = vsel %vm1202, %v8877, 0.0
        %8919 = vadd.xlane.f32.xlu0 %v8918
        %v8920 = vpop.xlane.xlu0 %8919
        %v8921 = vsel %vm1202, %v8879, 0.0
        %8922 = vadd.xlane.f32.xlu0 %v8921
        %v8923 = vpop.xlane.xlu0 %8922
        %v8924 = vsel %vm1202, %v8881, 0.0
        %8925 = vadd.xlane.f32.xlu0 %v8924
        %v8926 = vpop.xlane.xlu0 %8925
        %v8927 = vsel %vm1202, %v8883, 0.0
        %8928 = vadd.xlane.f32.xlu0 %v8927
        %v8929 = vpop.xlane.xlu0 %8928
        %v8930 = vsel %vm1202, %v8885, 0.0
        %8931 = vadd.xlane.f32.xlu0 %v8930
        %v8932 = vpop.xlane.xlu0 %8931
        %v8933 = vsel %vm1202, %v8887, 0.0
        %8934 = vadd.xlane.f32.xlu0 %v8933
        %v8935 = vpop.xlane.xlu0 %8934
        %v8936 = vrcp.pop %v8890
        %v8937 = vrcp.pop %v8893
        %v8938 = vrcp.pop %v8896
        %v8939 = vrcp.pop %v8899
        %v8940 = vrcp.pop %v8902
        %v8941 = vrcp.pop %v8905
        %v8942 = vrcp.pop %v8908
        %v8943 = vrcp.pop %v8911
        %v8944 = vrcp.pop %v8914
        %v8945 = vrcp.pop %v8917
        %v8946 = vrcp.pop %v8920
        %v8947 = vrcp.pop %v8923
        %v8948 = vrcp.pop %v8926
        %v8949 = vrcp.pop %v8929
        %v8950 = vrcp.pop %v8932
        %v8951 = vrcp.pop %v8935
        %v8952 = vmul.f32 %v8857, %v8936
        %v8953 = vmul.f32 %v8859, %v8937
        %v8954 = vmul.f32 %v8861, %v8938
        %v8955 = vmul.f32 %v8863, %v8939
        %v8956 = vmul.f32 %v8865, %v8940
        %v8957 = vmul.f32 %v8867, %v8941
        %v8958 = vmul.f32 %v8869, %v8942
        %v8959 = vmul.f32 %v8871, %v8943
        %v8960 = vmul.f32 %v8873, %v8944
        %v8961 = vmul.f32 %v8875, %v8945
        %v8962 = vmul.f32 %v8877, %v8946
        %v8963 = vmul.f32 %v8879, %v8947
        %v8964 = vmul.f32 %v8881, %v8948
        %v8965 = vmul.f32 %v8883, %v8949
        %v8966 = vmul.f32 %v8885, %v8950
        %v8967 = vmul.f32 %v8887, %v8951
        %v8968 = vpack.c.bf16 %v8952, %v8952
        %v8969 = vpack.c.bf16 %v8953, %v8953
        %v8970 = vpack.c.bf16 %v8954, %v8954
        %v8971 = vpack.c.bf16 %v8955, %v8955
        %v8972 = vpack.c.bf16 %v8956, %v8956
        %v8973 = vpack.c.bf16 %v8957, %v8957
        %v8974 = vpack.c.bf16 %v8958, %v8958
        %v8975 = vpack.c.bf16 %v8959, %v8959
        %v8976 = vpack.c.bf16 %v8960, %v8960
        %v8977 = vpack.c.bf16 %v8961, %v8961
        %v8978 = vpack.c.bf16 %v8962, %v8962
        %v8979 = vpack.c.bf16 %v8963, %v8963
        %v8980 = vpack.c.bf16 %v8964, %v8964
        %v8981 = vpack.c.bf16 %v8965, %v8965
        %v8982 = vpack.c.bf16 %v8966, %v8966
        %v8983 = vpack.c.bf16 %v8967, %v8967
        %v8985 = vsel %vm1202, %v8968, 0
        %8987 = vmatprep.subr.bf16.mxu0 0
        %8988 = vmatpush1.bf16.msra.mxu0 %v8019
        %8989 = vmatprep.subr.bf16.mxu0 0
        %8990 = vmatpush1.bf16.msra.mxu0 %v8020
        %8991 = vmatprep.subr.bf16.mxu0 0
        %8992 = vmatpush1.bf16.msra.mxu0 0
        %8993 = vmatprep.subr.bf16.mxu0 0
        %8994 = vmatpush1.bf16.msra.mxu0 0
        %8995 = vmatprep.subr.bf16.mxu0 0
        %8996 = vmatpush1.bf16.msra.mxu0 0
        %8997 = vmatprep.subr.bf16.mxu0 0
        %8998 = vmatpush1.bf16.msra.mxu0 0
        %8999 = vmatprep.subr.bf16.mxu0 0
        %9000 = vmatpush1.bf16.msra.mxu0 0
        %9001 = vmatprep.subr.bf16.mxu0 0
        %9002 = vmatpush1.bf16.msra.mxu0 0
        %9003 = vmatprep.subr.bf16.mxu0 0
        %9004 = vmatpush1.bf16.msra.mxu0 0
        %9005 = vmatprep.subr.bf16.mxu0 0
        %9006 = vmatpush1.bf16.msra.mxu0 0
        %9007 = vmatprep.subr.bf16.mxu0 0
        %9008 = vmatpush1.bf16.msra.mxu0 0
        %9009 = vmatprep.subr.bf16.mxu0 0
        %9010 = vmatpush1.bf16.msra.mxu0 0
        %9011 = vmatprep.subr.bf16.mxu0 0
        %9012 = vmatpush1.bf16.msra.mxu0 0
        %9013 = vmatprep.subr.bf16.mxu0 0
        %9014 = vmatpush1.bf16.msra.mxu0 0
        %9015 = vmatprep.subr.bf16.mxu0 0
        %9016 = vmatpush1.bf16.msra.mxu0 0
        %9017 = vmatprep.subr.bf16.mxu0 0
        %9018 = vmatpush1.bf16.msra.mxu0 0
        %9019 = vmatprep.mubr.bf16.mxu0 0
        %9020 = vmatmul.mubr.bf16.gmra.mrb[0].mxu0 %v8985
        %v9021 = vpop.f32.mrb[0].mxu0
        %v9022 = vadd.f32 0.0, %v9021
        %v9023 = vpop.f32.mrb[0].mxu0
        %v9024 = vpop.f32.mrb[0].mxu0
        %v9025 = vpop.f32.mrb[0].mxu0
        %9026 = vdwg.mxu0
        %v9028 = vsel %vm1202, %v8969, 0
        %9030 = vmatprep.subr.bf16.mxu0 0
        %9031 = vmatpush1.bf16.msra.mxu0 %v8021
        %9032 = vmatprep.subr.bf16.mxu0 0
        %9033 = vmatpush1.bf16.msra.mxu0 %v8022
        %9034 = vmatprep.subr.bf16.mxu0 0
        %9035 = vmatpush1.bf16.msra.mxu0 0
        %9036 = vmatprep.subr.bf16.mxu0 0
        %9037 = vmatpush1.bf16.msra.mxu0 0
        %9038 = vmatprep.subr.bf16.mxu0 0
        %9039 = vmatpush1.bf16.msra.mxu0 0
        %9040 = vmatprep.subr.bf16.mxu0 0
        %9041 = vmatpush1.bf16.msra.mxu0 0
        %9042 = vmatprep.subr.bf16.mxu0 0
        %9043 = vmatpush1.bf16.msra.mxu0 0
        %9044 = vmatprep.subr.bf16.mxu0 0
        %9045 = vmatpush1.bf16.msra.mxu0 0
        %9046 = vmatprep.subr.bf16.mxu0 0
        %9047 = vmatpush1.bf16.msra.mxu0 0
        %9048 = vmatprep.subr.bf16.mxu0 0
        %9049 = vmatpush1.bf16.msra.mxu0 0
        %9050 = vmatprep.subr.bf16.mxu0 0
        %9051 = vmatpush1.bf16.msra.mxu0 0
        %9052 = vmatprep.subr.bf16.mxu0 0
        %9053 = vmatpush1.bf16.msra.mxu0 0
        %9054 = vmatprep.subr.bf16.mxu0 0
        %9055 = vmatpush1.bf16.msra.mxu0 0
        %9056 = vmatprep.subr.bf16.mxu0 0
        %9057 = vmatpush1.bf16.msra.mxu0 0
        %9058 = vmatprep.subr.bf16.mxu0 0
        %9059 = vmatpush1.bf16.msra.mxu0 0
        %9060 = vmatprep.subr.bf16.mxu0 0
        %9061 = vmatpush1.bf16.msra.mxu0 0
        %9062 = vmatprep.mubr.bf16.mxu0 0
        %9063 = vmatmul.mubr.bf16.gmra.mrb[0].mxu0 %v9028
        %v9064 = vpop.f32.mrb[0].mxu0
        %v9065 = vadd.f32 0.0, %v9064
        %v9066 = vpop.f32.mrb[0].mxu0
        %v9067 = vpop.f32.mrb[0].mxu0
        %v9068 = vpop.f32.mrb[0].mxu0
        %9069 = vdwg.mxu0
        %v9071 = vsel %vm1202, %v8970, 0
        %9073 = vmatprep.subr.bf16.mxu0 0
        %9074 = vmatpush1.bf16.msra.mxu0 %v8023
        %9075 = vmatprep.subr.bf16.mxu0 0
        %9076 = vmatpush1.bf16.msra.mxu0 %v8024
        %9077 = vmatprep.subr.bf16.mxu0 0
        %9078 = vmatpush1.bf16.msra.mxu0 0
        %9079 = vmatprep.subr.bf16.mxu0 0
        %9080 = vmatpush1.bf16.msra.mxu0 0
        %9081 = vmatprep.subr.bf16.mxu0 0
        %9082 = vmatpush1.bf16.msra.mxu0 0
        %9083 = vmatprep.subr.bf16.mxu0 0
        %9084 = vmatpush1.bf16.msra.mxu0 0
        %9085 = vmatprep.subr.bf16.mxu0 0
        %9086 = vmatpush1.bf16.msra.mxu0 0
        %9087 = vmatprep.subr.bf16.mxu0 0
        %9088 = vmatpush1.bf16.msra.mxu0 0
        %9089 = vmatprep.subr.bf16.mxu0 0
        %9090 = vmatpush1.bf16.msra.mxu0 0
        %9091 = vmatprep.subr.bf16.mxu0 0
        %9092 = vmatpush1.bf16.msra.mxu0 0
        %9093 = vmatprep.subr.bf16.mxu0 0
        %9094 = vmatpush1.bf16.msra.mxu0 0
        %9095 = vmatprep.subr.bf16.mxu0 0
        %9096 = vmatpush1.bf16.msra.mxu0 0
        %9097 = vmatprep.subr.bf16.mxu0 0
        %9098 = vmatpush1.bf16.msra.mxu0 0
        %9099 = vmatprep.subr.bf16.mxu0 0
        %9100 = vmatpush1.bf16.msra.mxu0 0
        %9101 = vmatprep.subr.bf16.mxu0 0
        %9102 = vmatpush1.bf16.msra.mxu0 0
        %9103 = vmatprep.subr.bf16.mxu0 0
        %9104 = vmatpush1.bf16.msra.mxu0 0
        %9105 = vmatprep.mubr.bf16.mxu0 0
        %9106 = vmatmul.mubr.bf16.gmra.mrb[0].mxu0 %v9071
        %v9107 = vpop.f32.mrb[0].mxu0
        %v9108 = vadd.f32 0.0, %v9107
        %v9109 = vpop.f32.mrb[0].mxu0
        %v9110 = vpop.f32.mrb[0].mxu0
        %v9111 = vpop.f32.mrb[0].mxu0
        %9112 = vdwg.mxu0
        %v9114 = vsel %vm1202, %v8971, 0
        %9116 = vmatprep.subr.bf16.mxu0 0
        %9117 = vmatpush1.bf16.msra.mxu0 %v8025
        %9118 = vmatprep.subr.bf16.mxu0 0
        %9119 = vmatpush1.bf16.msra.mxu0 %v8026
        %9120 = vmatprep.subr.bf16.mxu0 0
        %9121 = vmatpush1.bf16.msra.mxu0 0
        %9122 = vmatprep.subr.bf16.mxu0 0
        %9123 = vmatpush1.bf16.msra.mxu0 0
        %9124 = vmatprep.subr.bf16.mxu0 0
        %9125 = vmatpush1.bf16.msra.mxu0 0
        %9126 = vmatprep.subr.bf16.mxu0 0
        %9127 = vmatpush1.bf16.msra.mxu0 0
        %9128 = vmatprep.subr.bf16.mxu0 0
        %9129 = vmatpush1.bf16.msra.mxu0 0
        %9130 = vmatprep.subr.bf16.mxu0 0
        %9131 = vmatpush1.bf16.msra.mxu0 0
        %9132 = vmatprep.subr.bf16.mxu0 0
        %9133 = vmatpush1.bf16.msra.mxu0 0
        %9134 = vmatprep.subr.bf16.mxu0 0
        %9135 = vmatpush1.bf16.msra.mxu0 0
        %9136 = vmatprep.subr.bf16.mxu0 0
        %9137 = vmatpush1.bf16.msra.mxu0 0
        %9138 = vmatprep.subr.bf16.mxu0 0
        %9139 = vmatpush1.bf16.msra.mxu0 0
        %9140 = vmatprep.subr.bf16.mxu0 0
        %9141 = vmatpush1.bf16.msra.mxu0 0
        %9142 = vmatprep.subr.bf16.mxu0 0
        %9143 = vmatpush1.bf16.msra.mxu0 0
        %9144 = vmatprep.subr.bf16.mxu0 0
        %9145 = vmatpush1.bf16.msra.mxu0 0
        %9146 = vmatprep.subr.bf16.mxu0 0
        %9147 = vmatpush1.bf16.msra.mxu0 0
        %9148 = vmatprep.mubr.bf16.mxu0 0
        %9149 = vmatmul.mubr.bf16.gmra.mrb[0].mxu0 %v9114
        %v9150 = vpop.f32.mrb[0].mxu0
        %v9151 = vadd.f32 0.0, %v9150
        %v9152 = vpop.f32.mrb[0].mxu0
        %v9153 = vpop.f32.mrb[0].mxu0
        %v9154 = vpop.f32.mrb[0].mxu0
        %9155 = vdwg.mxu0
        %v9157 = vsel %vm1202, %v8972, 0
        %9159 = vmatprep.subr.bf16.mxu0 0
        %9160 = vmatpush1.bf16.msra.mxu0 %v8027
        %9161 = vmatprep.subr.bf16.mxu0 0
        %9162 = vmatpush1.bf16.msra.mxu0 %v8028
        %9163 = vmatprep.subr.bf16.mxu0 0
        %9164 = vmatpush1.bf16.msra.mxu0 0
        %9165 = vmatprep.subr.bf16.mxu0 0
        %9166 = vmatpush1.bf16.msra.mxu0 0
        %9167 = vmatprep.subr.bf16.mxu0 0
        %9168 = vmatpush1.bf16.msra.mxu0 0
        %9169 = vmatprep.subr.bf16.mxu0 0
        %9170 = vmatpush1.bf16.msra.mxu0 0
        %9171 = vmatprep.subr.bf16.mxu0 0
        %9172 = vmatpush1.bf16.msra.mxu0 0
        %9173 = vmatprep.subr.bf16.mxu0 0
        %9174 = vmatpush1.bf16.msra.mxu0 0
        %9175 = vmatprep.subr.bf16.mxu0 0
        %9176 = vmatpush1.bf16.msra.mxu0 0
        %9177 = vmatprep.subr.bf16.mxu0 0
        %9178 = vmatpush1.bf16.msra.mxu0 0
        %9179 = vmatprep.subr.bf16.mxu0 0
        %9180 = vmatpush1.bf16.msra.mxu0 0
        %9181 = vmatprep.subr.bf16.mxu0 0
        %9182 = vmatpush1.bf16.msra.mxu0 0
        %9183 = vmatprep.subr.bf16.mxu0 0
        %9184 = vmatpush1.bf16.msra.mxu0 0
        %9185 = vmatprep.subr.bf16.mxu0 0
        %9186 = vmatpush1.bf16.msra.mxu0 0
        %9187 = vmatprep.subr.bf16.mxu0 0
        %9188 = vmatpush1.bf16.msra.mxu0 0
        %9189 = vmatprep.subr.bf16.mxu0 0
        %9190 = vmatpush1.bf16.msra.mxu0 0
        %9191 = vmatprep.mubr.bf16.mxu0 0
        %9192 = vmatmul.mubr.bf16.gmra.mrb[0].mxu0 %v9157
        %v9193 = vpop.f32.mrb[0].mxu0
        %v9194 = vadd.f32 0.0, %v9193
        %v9195 = vpop.f32.mrb[0].mxu0
        %v9196 = vpop.f32.mrb[0].mxu0
        %v9197 = vpop.f32.mrb[0].mxu0
        %9198 = vdwg.mxu0
        %v9200 = vsel %vm1202, %v8973, 0
        %9202 = vmatprep.subr.bf16.mxu0 0
        %9203 = vmatpush1.bf16.msra.mxu0 %v8029
        %9204 = vmatprep.subr.bf16.mxu0 0
        %9205 = vmatpush1.bf16.msra.mxu0 %v8030
        %9206 = vmatprep.subr.bf16.mxu0 0
        %9207 = vmatpush1.bf16.msra.mxu0 0
        %9208 = vmatprep.subr.bf16.mxu0 0
        %9209 = vmatpush1.bf16.msra.mxu0 0
        %9210 = vmatprep.subr.bf16.mxu0 0
        %9211 = vmatpush1.bf16.msra.mxu0 0
        %9212 = vmatprep.subr.bf16.mxu0 0
        %9213 = vmatpush1.bf16.msra.mxu0 0
        %9214 = vmatprep.subr.bf16.mxu0 0
        %9215 = vmatpush1.bf16.msra.mxu0 0
        %9216 = vmatprep.subr.bf16.mxu0 0
        %9217 = vmatpush1.bf16.msra.mxu0 0
        %9218 = vmatprep.subr.bf16.mxu0 0
        %9219 = vmatpush1.bf16.msra.mxu0 0
        %9220 = vmatprep.subr.bf16.mxu0 0
        %9221 = vmatpush1.bf16.msra.mxu0 0
        %9222 = vmatprep.subr.bf16.mxu0 0
        %9223 = vmatpush1.bf16.msra.mxu0 0
        %9224 = vmatprep.subr.bf16.mxu0 0
        %9225 = vmatpush1.bf16.msra.mxu0 0
        %9226 = vmatprep.subr.bf16.mxu0 0
        %9227 = vmatpush1.bf16.msra.mxu0 0
        %9228 = vmatprep.subr.bf16.mxu0 0
        %9229 = vmatpush1.bf16.msra.mxu0 0
        %9230 = vmatprep.subr.bf16.mxu0 0
        %9231 = vmatpush1.bf16.msra.mxu0 0
        %9232 = vmatprep.subr.bf16.mxu0 0
        %9233 = vmatpush1.bf16.msra.mxu0 0
        %9234 = vmatprep.mubr.bf16.mxu0 0
        %9235 = vmatmul.mubr.bf16.gmra.mrb[0].mxu0 %v9200
        %v9236 = vpop.f32.mrb[0].mxu0
        %v9237 = vadd.f32 0.0, %v9236
        %v9238 = vpop.f32.mrb[0].mxu0
        %v9239 = vpop.f32.mrb[0].mxu0
        %v9240 = vpop.f32.mrb[0].mxu0
        %9241 = vdwg.mxu0
        %v9243 = vsel %vm1202, %v8974, 0
        %9245 = vmatprep.subr.bf16.mxu0 0
        %9246 = vmatpush1.bf16.msra.mxu0 %v8031
        %9247 = vmatprep.subr.bf16.mxu0 0
        %9248 = vmatpush1.bf16.msra.mxu0 %v8032
        %9249 = vmatprep.subr.bf16.mxu0 0
        %9250 = vmatpush1.bf16.msra.mxu0 0
        %9251 = vmatprep.subr.bf16.mxu0 0
        %9252 = vmatpush1.bf16.msra.mxu0 0
        %9253 = vmatprep.subr.bf16.mxu0 0
        %9254 = vmatpush1.bf16.msra.mxu0 0
        %9255 = vmatprep.subr.bf16.mxu0 0
        %9256 = vmatpush1.bf16.msra.mxu0 0
        %9257 = vmatprep.subr.bf16.mxu0 0
        %9258 = vmatpush1.bf16.msra.mxu0 0
        %9259 = vmatprep.subr.bf16.mxu0 0
        %9260 = vmatpush1.bf16.msra.mxu0 0
        %9261 = vmatprep.subr.bf16.mxu0 0
        %9262 = vmatpush1.bf16.msra.mxu0 0
        %9263 = vmatprep.subr.bf16.mxu0 0
        %9264 = vmatpush1.bf16.msra.mxu0 0
        %9265 = vmatprep.subr.bf16.mxu0 0
        %9266 = vmatpush1.bf16.msra.mxu0 0
        %9267 = vmatprep.subr.bf16.mxu0 0
        %9268 = vmatpush1.bf16.msra.mxu0 0
        %9269 = vmatprep.subr.bf16.mxu0 0
        %9270 = vmatpush1.bf16.msra.mxu0 0
        %9271 = vmatprep.subr.bf16.mxu0 0
        %9272 = vmatpush1.bf16.msra.mxu0 0
        %9273 = vmatprep.subr.bf16.mxu0 0
        %9274 = vmatpush1.bf16.msra.mxu0 0
        %9275 = vmatprep.subr.bf16.mxu0 0
        %9276 = vmatpush1.bf16.msra.mxu0 0
        %9277 = vmatprep.mubr.bf16.mxu0 0
        %9278 = vmatmul.mubr.bf16.gmra.mrb[0].mxu0 %v9243
        %v9279 = vpop.f32.mrb[0].mxu0
        %v9280 = vadd.f32 0.0, %v9279
        %v9281 = vpop.f32.mrb[0].mxu0
        %v9282 = vpop.f32.mrb[0].mxu0
        %v9283 = vpop.f32.mrb[0].mxu0
        %9284 = vdwg.mxu0
        %v9286 = vsel %vm1202, %v8975, 0
        %9288 = vmatprep.subr.bf16.mxu0 0
        %9289 = vmatpush1.bf16.msra.mxu0 %v8033
        %9290 = vmatprep.subr.bf16.mxu0 0
        %9291 = vmatpush1.bf16.msra.mxu0 %v8034
        %9292 = vmatprep.subr.bf16.mxu0 0
        %9293 = vmatpush1.bf16.msra.mxu0 0
        %9294 = vmatprep.subr.bf16.mxu0 0
        %9295 = vmatpush1.bf16.msra.mxu0 0
        %9296 = vmatprep.subr.bf16.mxu0 0
        %9297 = vmatpush1.bf16.msra.mxu0 0
        %9298 = vmatprep.subr.bf16.mxu0 0
        %9299 = vmatpush1.bf16.msra.mxu0 0
        %9300 = vmatprep.subr.bf16.mxu0 0
        %9301 = vmatpush1.bf16.msra.mxu0 0
        %9302 = vmatprep.subr.bf16.mxu0 0
        %9303 = vmatpush1.bf16.msra.mxu0 0
        %9304 = vmatprep.subr.bf16.mxu0 0
        %9305 = vmatpush1.bf16.msra.mxu0 0
        %9306 = vmatprep.subr.bf16.mxu0 0
        %9307 = vmatpush1.bf16.msra.mxu0 0
        %9308 = vmatprep.subr.bf16.mxu0 0
        %9309 = vmatpush1.bf16.msra.mxu0 0
        %9310 = vmatprep.subr.bf16.mxu0 0
        %9311 = vmatpush1.bf16.msra.mxu0 0
        %9312 = vmatprep.subr.bf16.mxu0 0
        %9313 = vmatpush1.bf16.msra.mxu0 0
        %9314 = vmatprep.subr.bf16.mxu0 0
        %9315 = vmatpush1.bf16.msra.mxu0 0
        %9316 = vmatprep.subr.bf16.mxu0 0
        %9317 = vmatpush1.bf16.msra.mxu0 0
        %9318 = vmatprep.subr.bf16.mxu0 0
        %9319 = vmatpush1.bf16.msra.mxu0 0
        %9320 = vmatprep.mubr.bf16.mxu0 0
        %9321 = vmatmul.mubr.bf16.gmra.mrb[0].mxu0 %v9286
        %v9322 = vpop.f32.mrb[0].mxu0
        %v9323 = vadd.f32 0.0, %v9322
        %v9324 = vpop.f32.mrb[0].mxu0
        %v9325 = vpop.f32.mrb[0].mxu0
        %v9326 = vpop.f32.mrb[0].mxu0
        %9327 = vdwg.mxu0
        %v9329 = vsel %vm1202, %v8976, 0
        %9331 = vmatprep.subr.bf16.mxu0 0
        %9332 = vmatpush1.bf16.msra.mxu0 %v8035
        %9333 = vmatprep.subr.bf16.mxu0 0
        %9334 = vmatpush1.bf16.msra.mxu0 %v8036
        %9335 = vmatprep.subr.bf16.mxu0 0
        %9336 = vmatpush1.bf16.msra.mxu0 0
        %9337 = vmatprep.subr.bf16.mxu0 0
        %9338 = vmatpush1.bf16.msra.mxu0 0
        %9339 = vmatprep.subr.bf16.mxu0 0
        %9340 = vmatpush1.bf16.msra.mxu0 0
        %9341 = vmatprep.subr.bf16.mxu0 0
        %9342 = vmatpush1.bf16.msra.mxu0 0
        %9343 = vmatprep.subr.bf16.mxu0 0
        %9344 = vmatpush1.bf16.msra.mxu0 0
        %9345 = vmatprep.subr.bf16.mxu0 0
        %9346 = vmatpush1.bf16.msra.mxu0 0
        %9347 = vmatprep.subr.bf16.mxu0 0
        %9348 = vmatpush1.bf16.msra.mxu0 0
        %9349 = vmatprep.subr.bf16.mxu0 0
        %9350 = vmatpush1.bf16.msra.mxu0 0
        %9351 = vmatprep.subr.bf16.mxu0 0
        %9352 = vmatpush1.bf16.msra.mxu0 0
        %9353 = vmatprep.subr.bf16.mxu0 0
        %9354 = vmatpush1.bf16.msra.mxu0 0
        %9355 = vmatprep.subr.bf16.mxu0 0
        %9356 = vmatpush1.bf16.msra.mxu0 0
        %9357 = vmatprep.subr.bf16.mxu0 0
        %9358 = vmatpush1.bf16.msra.mxu0 0
        %9359 = vmatprep.subr.bf16.mxu0 0
        %9360 = vmatpush1.bf16.msra.mxu0 0
        %9361 = vmatprep.subr.bf16.mxu0 0
        %9362 = vmatpush1.bf16.msra.mxu0 0
        %9363 = vmatprep.mubr.bf16.mxu0 0
        %9364 = vmatmul.mubr.bf16.gmra.mrb[0].mxu0 %v9329
        %v9365 = vpop.f32.mrb[0].mxu0
        %v9366 = vadd.f32 0.0, %v9365
        %v9367 = vpop.f32.mrb[0].mxu0
        %v9368 = vpop.f32.mrb[0].mxu0
        %v9369 = vpop.f32.mrb[0].mxu0
        %9370 = vdwg.mxu0
        %v9372 = vsel %vm1202, %v8977, 0
        %9374 = vmatprep.subr.bf16.mxu0 0
        %9375 = vmatpush1.bf16.msra.mxu0 %v8037
        %9376 = vmatprep.subr.bf16.mxu0 0
        %9377 = vmatpush1.bf16.msra.mxu0 %v8038
        %9378 = vmatprep.subr.bf16.mxu0 0
        %9379 = vmatpush1.bf16.msra.mxu0 0
        %9380 = vmatprep.subr.bf16.mxu0 0
        %9381 = vmatpush1.bf16.msra.mxu0 0
        %9382 = vmatprep.subr.bf16.mxu0 0
        %9383 = vmatpush1.bf16.msra.mxu0 0
        %9384 = vmatprep.subr.bf16.mxu0 0
        %9385 = vmatpush1.bf16.msra.mxu0 0
        %9386 = vmatprep.subr.bf16.mxu0 0
        %9387 = vmatpush1.bf16.msra.mxu0 0
        %9388 = vmatprep.subr.bf16.mxu0 0
        %9389 = vmatpush1.bf16.msra.mxu0 0
        %9390 = vmatprep.subr.bf16.mxu0 0
        %9391 = vmatpush1.bf16.msra.mxu0 0
        %9392 = vmatprep.subr.bf16.mxu0 0
        %9393 = vmatpush1.bf16.msra.mxu0 0
        %9394 = vmatprep.subr.bf16.mxu0 0
        %9395 = vmatpush1.bf16.msra.mxu0 0
        %9396 = vmatprep.subr.bf16.mxu0 0
        %9397 = vmatpush1.bf16.msra.mxu0 0
        %9398 = vmatprep.subr.bf16.mxu0 0
        %9399 = vmatpush1.bf16.msra.mxu0 0
        %9400 = vmatprep.subr.bf16.mxu0 0
        %9401 = vmatpush1.bf16.msra.mxu0 0
        %9402 = vmatprep.subr.bf16.mxu0 0
        %9403 = vmatpush1.bf16.msra.mxu0 0
        %9404 = vmatprep.subr.bf16.mxu0 0
        %9405 = vmatpush1.bf16.msra.mxu0 0
        %9406 = vmatprep.mubr.bf16.mxu0 0
        %9407 = vmatmul.mubr.bf16.gmra.mrb[0].mxu0 %v9372
        %v9408 = vpop.f32.mrb[0].mxu0
        %v9409 = vadd.f32 0.0, %v9408
        %v9410 = vpop.f32.mrb[0].mxu0
        %v9411 = vpop.f32.mrb[0].mxu0
        %v9412 = vpop.f32.mrb[0].mxu0
        %9413 = vdwg.mxu0
        %v9415 = vsel %vm1202, %v8978, 0
        %9417 = vmatprep.subr.bf16.mxu0 0
        %9418 = vmatpush1.bf16.msra.mxu0 %v8039
        %9419 = vmatprep.subr.bf16.mxu0 0
        %9420 = vmatpush1.bf16.msra.mxu0 %v8040
        %9421 = vmatprep.subr.bf16.mxu0 0
        %9422 = vmatpush1.bf16.msra.mxu0 0
        %9423 = vmatprep.subr.bf16.mxu0 0
        %9424 = vmatpush1.bf16.msra.mxu0 0
        %9425 = vmatprep.subr.bf16.mxu0 0
        %9426 = vmatpush1.bf16.msra.mxu0 0
        %9427 = vmatprep.subr.bf16.mxu0 0
        %9428 = vmatpush1.bf16.msra.mxu0 0
        %9429 = vmatprep.subr.bf16.mxu0 0
        %9430 = vmatpush1.bf16.msra.mxu0 0
        %9431 = vmatprep.subr.bf16.mxu0 0
        %9432 = vmatpush1.bf16.msra.mxu0 0
        %9433 = vmatprep.subr.bf16.mxu0 0
        %9434 = vmatpush1.bf16.msra.mxu0 0
        %9435 = vmatprep.subr.bf16.mxu0 0
        %9436 = vmatpush1.bf16.msra.mxu0 0
        %9437 = vmatprep.subr.bf16.mxu0 0
        %9438 = vmatpush1.bf16.msra.mxu0 0
        %9439 = vmatprep.subr.bf16.mxu0 0
        %9440 = vmatpush1.bf16.msra.mxu0 0
        %9441 = vmatprep.subr.bf16.mxu0 0
        %9442 = vmatpush1.bf16.msra.mxu0 0
        %9443 = vmatprep.subr.bf16.mxu0 0
        %9444 = vmatpush1.bf16.msra.mxu0 0
        %9445 = vmatprep.subr.bf16.mxu0 0
        %9446 = vmatpush1.bf16.msra.mxu0 0
        %9447 = vmatprep.subr.bf16.mxu0 0
        %9448 = vmatpush1.bf16.msra.mxu0 0
        %9449 = vmatprep.mubr.bf16.mxu0 0
        %9450 = vmatmul.mubr.bf16.gmra.mrb[0].mxu0 %v9415
        %v9451 = vpop.f32.mrb[0].mxu0
        %v9452 = vadd.f32 0.0, %v9451
        %v9453 = vpop.f32.mrb[0].mxu0
        %v9454 = vpop.f32.mrb[0].mxu0
        %v9455 = vpop.f32.mrb[0].mxu0
        %9456 = vdwg.mxu0
        %v9458 = vsel %vm1202, %v8979, 0
        %9460 = vmatprep.subr.bf16.mxu0 0
        %9461 = vmatpush1.bf16.msra.mxu0 %v8041
        %9462 = vmatprep.subr.bf16.mxu0 0
        %9463 = vmatpush1.bf16.msra.mxu0 %v8042
        %9464 = vmatprep.subr.bf16.mxu0 0
        %9465 = vmatpush1.bf16.msra.mxu0 0
        %9466 = vmatprep.subr.bf16.mxu0 0
        %9467 = vmatpush1.bf16.msra.mxu0 0
        %9468 = vmatprep.subr.bf16.mxu0 0
        %9469 = vmatpush1.bf16.msra.mxu0 0
        %9470 = vmatprep.subr.bf16.mxu0 0
        %9471 = vmatpush1.bf16.msra.mxu0 0
        %9472 = vmatprep.subr.bf16.mxu0 0
        %9473 = vmatpush1.bf16.msra.mxu0 0
        %9474 = vmatprep.subr.bf16.mxu0 0
        %9475 = vmatpush1.bf16.msra.mxu0 0
        %9476 = vmatprep.subr.bf16.mxu0 0
        %9477 = vmatpush1.bf16.msra.mxu0 0
        %9478 = vmatprep.subr.bf16.mxu0 0
        %9479 = vmatpush1.bf16.msra.mxu0 0
        %9480 = vmatprep.subr.bf16.mxu0 0
        %9481 = vmatpush1.bf16.msra.mxu0 0
        %9482 = vmatprep.subr.bf16.mxu0 0
        %9483 = vmatpush1.bf16.msra.mxu0 0
        %9484 = vmatprep.subr.bf16.mxu0 0
        %9485 = vmatpush1.bf16.msra.mxu0 0
        %9486 = vmatprep.subr.bf16.mxu0 0
        %9487 = vmatpush1.bf16.msra.mxu0 0
        %9488 = vmatprep.subr.bf16.mxu0 0
        %9489 = vmatpush1.bf16.msra.mxu0 0
        %9490 = vmatprep.subr.bf16.mxu0 0
        %9491 = vmatpush1.bf16.msra.mxu0 0
        %9492 = vmatprep.mubr.bf16.mxu0 0
        %9493 = vmatmul.mubr.bf16.gmra.mrb[0].mxu0 %v9458
        %v9494 = vpop.f32.mrb[0].mxu0
        %v9495 = vadd.f32 0.0, %v9494
        %v9496 = vpop.f32.mrb[0].mxu0
        %v9497 = vpop.f32.mrb[0].mxu0
        %v9498 = vpop.f32.mrb[0].mxu0
        %9499 = vdwg.mxu0
        %v9501 = vsel %vm1202, %v8980, 0
        %9503 = vmatprep.subr.bf16.mxu0 0
        %9504 = vmatpush1.bf16.msra.mxu0 %v8043
        %9505 = vmatprep.subr.bf16.mxu0 0
        %9506 = vmatpush1.bf16.msra.mxu0 %v8044
        %9507 = vmatprep.subr.bf16.mxu0 0
        %9508 = vmatpush1.bf16.msra.mxu0 0
        %9509 = vmatprep.subr.bf16.mxu0 0
        %9510 = vmatpush1.bf16.msra.mxu0 0
        %9511 = vmatprep.subr.bf16.mxu0 0
        %9512 = vmatpush1.bf16.msra.mxu0 0
        %9513 = vmatprep.subr.bf16.mxu0 0
        %9514 = vmatpush1.bf16.msra.mxu0 0
        %9515 = vmatprep.subr.bf16.mxu0 0
        %9516 = vmatpush1.bf16.msra.mxu0 0
        %9517 = vmatprep.subr.bf16.mxu0 0
        %9518 = vmatpush1.bf16.msra.mxu0 0
        %9519 = vmatprep.subr.bf16.mxu0 0
        %9520 = vmatpush1.bf16.msra.mxu0 0
        %9521 = vmatprep.subr.bf16.mxu0 0
        %9522 = vmatpush1.bf16.msra.mxu0 0
        %9523 = vmatprep.subr.bf16.mxu0 0
        %9524 = vmatpush1.bf16.msra.mxu0 0
        %9525 = vmatprep.subr.bf16.mxu0 0
        %9526 = vmatpush1.bf16.msra.mxu0 0
        %9527 = vmatprep.subr.bf16.mxu0 0
        %9528 = vmatpush1.bf16.msra.mxu0 0
        %9529 = vmatprep.subr.bf16.mxu0 0
        %9530 = vmatpush1.bf16.msra.mxu0 0
        %9531 = vmatprep.subr.bf16.mxu0 0
        %9532 = vmatpush1.bf16.msra.mxu0 0
        %9533 = vmatprep.subr.bf16.mxu0 0
        %9534 = vmatpush1.bf16.msra.mxu0 0
        %9535 = vmatprep.mubr.bf16.mxu0 0
        %9536 = vmatmul.mubr.bf16.gmra.mrb[0].mxu0 %v9501
        %v9537 = vpop.f32.mrb[0].mxu0
        %v9538 = vadd.f32 0.0, %v9537
        %v9539 = vpop.f32.mrb[0].mxu0
        %v9540 = vpop.f32.mrb[0].mxu0
        %v9541 = vpop.f32.mrb[0].mxu0
        %9542 = vdwg.mxu0
        %v9544 = vsel %vm1202, %v8981, 0
        %9546 = vmatprep.subr.bf16.mxu0 0
        %9547 = vmatpush1.bf16.msra.mxu0 %v8045
        %9548 = vmatprep.subr.bf16.mxu0 0
        %9549 = vmatpush1.bf16.msra.mxu0 %v8046
        %9550 = vmatprep.subr.bf16.mxu0 0
        %9551 = vmatpush1.bf16.msra.mxu0 0
        %9552 = vmatprep.subr.bf16.mxu0 0
        %9553 = vmatpush1.bf16.msra.mxu0 0
        %9554 = vmatprep.subr.bf16.mxu0 0
        %9555 = vmatpush1.bf16.msra.mxu0 0
        %9556 = vmatprep.subr.bf16.mxu0 0
        %9557 = vmatpush1.bf16.msra.mxu0 0
        %9558 = vmatprep.subr.bf16.mxu0 0
        %9559 = vmatpush1.bf16.msra.mxu0 0
        %9560 = vmatprep.subr.bf16.mxu0 0
        %9561 = vmatpush1.bf16.msra.mxu0 0
        %9562 = vmatprep.subr.bf16.mxu0 0
        %9563 = vmatpush1.bf16.msra.mxu0 0
        %9564 = vmatprep.subr.bf16.mxu0 0
        %9565 = vmatpush1.bf16.msra.mxu0 0
        %9566 = vmatprep.subr.bf16.mxu0 0
        %9567 = vmatpush1.bf16.msra.mxu0 0
        %9568 = vmatprep.subr.bf16.mxu0 0
        %9569 = vmatpush1.bf16.msra.mxu0 0
        %9570 = vmatprep.subr.bf16.mxu0 0
        %9571 = vmatpush1.bf16.msra.mxu0 0
        %9572 = vmatprep.subr.bf16.mxu0 0
        %9573 = vmatpush1.bf16.msra.mxu0 0
        %9574 = vmatprep.subr.bf16.mxu0 0
        %9575 = vmatpush1.bf16.msra.mxu0 0
        %9576 = vmatprep.subr.bf16.mxu0 0
        %9577 = vmatpush1.bf16.msra.mxu0 0
        %9578 = vmatprep.mubr.bf16.mxu0 0
        %9579 = vmatmul.mubr.bf16.gmra.mrb[0].mxu0 %v9544
        %v9580 = vpop.f32.mrb[0].mxu0
        %v9581 = vadd.f32 0.0, %v9580
        %v9582 = vpop.f32.mrb[0].mxu0
        %v9583 = vpop.f32.mrb[0].mxu0
        %v9584 = vpop.f32.mrb[0].mxu0
        %9585 = vdwg.mxu0
        %v9587 = vsel %vm1202, %v8982, 0
        %9589 = vmatprep.subr.bf16.mxu0 0
        %9590 = vmatpush1.bf16.msra.mxu0 %v8047
        %9591 = vmatprep.subr.bf16.mxu0 0
        %9592 = vmatpush1.bf16.msra.mxu0 %v8048
        %9593 = vmatprep.subr.bf16.mxu0 0
        %9594 = vmatpush1.bf16.msra.mxu0 0
        %9595 = vmatprep.subr.bf16.mxu0 0
        %9596 = vmatpush1.bf16.msra.mxu0 0
        %9597 = vmatprep.subr.bf16.mxu0 0
        %9598 = vmatpush1.bf16.msra.mxu0 0
        %9599 = vmatprep.subr.bf16.mxu0 0
        %9600 = vmatpush1.bf16.msra.mxu0 0
        %9601 = vmatprep.subr.bf16.mxu0 0
        %9602 = vmatpush1.bf16.msra.mxu0 0
        %9603 = vmatprep.subr.bf16.mxu0 0
        %9604 = vmatpush1.bf16.msra.mxu0 0
        %9605 = vmatprep.subr.bf16.mxu0 0
        %9606 = vmatpush1.bf16.msra.mxu0 0
        %9607 = vmatprep.subr.bf16.mxu0 0
        %9608 = vmatpush1.bf16.msra.mxu0 0
        %9609 = vmatprep.subr.bf16.mxu0 0
        %9610 = vmatpush1.bf16.msra.mxu0 0
        %9611 = vmatprep.subr.bf16.mxu0 0
        %9612 = vmatpush1.bf16.msra.mxu0 0
        %9613 = vmatprep.subr.bf16.mxu0 0
        %9614 = vmatpush1.bf16.msra.mxu0 0
        %9615 = vmatprep.subr.bf16.mxu0 0
        %9616 = vmatpush1.bf16.msra.mxu0 0
        %9617 = vmatprep.subr.bf16.mxu0 0
        %9618 = vmatpush1.bf16.msra.mxu0 0
        %9619 = vmatprep.subr.bf16.mxu0 0
        %9620 = vmatpush1.bf16.msra.mxu0 0
        %9621 = vmatprep.mubr.bf16.mxu0 0
        %9622 = vmatmul.mubr.bf16.gmra.mrb[0].mxu0 %v9587
        %v9623 = vpop.f32.mrb[0].mxu0
        %v9624 = vadd.f32 0.0, %v9623
        %v9625 = vpop.f32.mrb[0].mxu0
        %v9626 = vpop.f32.mrb[0].mxu0
        %v9627 = vpop.f32.mrb[0].mxu0
        %9628 = vdwg.mxu0
        %v9630 = vsel %vm1202, %v8983, 0
        %9632 = vmatprep.subr.bf16.mxu0 0
        %9633 = vmatpush1.bf16.msra.mxu0 %v8049
        %9634 = vmatprep.subr.bf16.mxu0 0
        %9635 = vmatpush1.bf16.msra.mxu0 %v8050
        %9636 = vmatprep.subr.bf16.mxu0 0
        %9637 = vmatpush1.bf16.msra.mxu0 0
        %9638 = vmatprep.subr.bf16.mxu0 0
        %9639 = vmatpush1.bf16.msra.mxu0 0
        %9640 = vmatprep.subr.bf16.mxu0 0
        %9641 = vmatpush1.bf16.msra.mxu0 0
        %9642 = vmatprep.subr.bf16.mxu0 0
        %9643 = vmatpush1.bf16.msra.mxu0 0
        %9644 = vmatprep.subr.bf16.mxu0 0
        %9645 = vmatpush1.bf16.msra.mxu0 0
        %9646 = vmatprep.subr.bf16.mxu0 0
        %9647 = vmatpush1.bf16.msra.mxu0 0
        %9648 = vmatprep.subr.bf16.mxu0 0
        %9649 = vmatpush1.bf16.msra.mxu0 0
        %9650 = vmatprep.subr.bf16.mxu0 0
        %9651 = vmatpush1.bf16.msra.mxu0 0
        %9652 = vmatprep.subr.bf16.mxu0 0
        %9653 = vmatpush1.bf16.msra.mxu0 0
        %9654 = vmatprep.subr.bf16.mxu0 0
        %9655 = vmatpush1.bf16.msra.mxu0 0
        %9656 = vmatprep.subr.bf16.mxu0 0
        %9657 = vmatpush1.bf16.msra.mxu0 0
        %9658 = vmatprep.subr.bf16.mxu0 0
        %9659 = vmatpush1.bf16.msra.mxu0 0
        %9660 = vmatprep.subr.bf16.mxu0 0
        %9661 = vmatpush1.bf16.msra.mxu0 0
        %9662 = vmatprep.subr.bf16.mxu0 0
        %9663 = vmatpush1.bf16.msra.mxu0 0
        %9664 = vmatprep.mubr.bf16.mxu0 0
        %9665 = vmatmul.mubr.bf16.gmra.mrb[0].mxu0 %v9630
        %v9666 = vpop.f32.mrb[0].mxu0
        %v9667 = vadd.f32 0.0, %v9666
        %v9668 = vpop.f32.mrb[0].mxu0
        %v9669 = vpop.f32.mrb[0].mxu0
        %v9670 = vpop.f32.mrb[0].mxu0
        %9671 = vdwg.mxu0
        %v9672 = vpack.c.bf16 %v9065, %v9022
        %v9673 = vpack.c.bf16 %v9151, %v9108
        %v9674 = vpack.c.bf16 %v9237, %v9194
        %v9675 = vpack.c.bf16 %v9323, %v9280
        %v9676 = vpack.c.bf16 %v9409, %v9366
        %v9677 = vpack.c.bf16 %v9495, %v9452
        %v9678 = vpack.c.bf16 %v9581, %v9538
        %v9679 = vpack.c.bf16 %v9667, %v9624
        %s9680 = scalar_lea.vmem %s4, 32
        %v9681 = vld [vmem:[%s9680] sm:$0xf]
        %v9682 = vld [vmem:[%s9680 + $0x4] sm:$0xf]
        %v9683 = vld [vmem:[%s9680 + $0x8] sm:$0xf]
        %v9684 = vld [vmem:[%s9680 + $0xc] sm:$0xf]
        %s9685 = scalar_lea.vmem %s5, 2
        %v9686 = vld [vmem:[%s9685] sm:$0x1]
        %v9688 = vlaneseq
        %v9689 = vshrl.u32 %v9688, 7
        %v9690 = vsub.s32 0, %v9689
        %v9691 = vrot.slane %v9686, %v9690
        %v9697 = vunpack.c.l.b16 %v9681
        %v9698 = vunpack.c.l.b16 %v9682
        %v9699 = vunpack.c.l.b16 %v9683
        %v9700 = vunpack.c.l.b16 %v9684
        %v9701 = vpack.c.b16 %v9698, %v9697
        %v9702 = vpack.c.b16 %v9700, %v9699
        %v9706 = vsel %vm1202, %v9672, 0
        %v9709 = vsel %vm1202, %v9673, 0
        %v9712 = vsel %vm1202, %v9674, 0
        %v9715 = vsel %vm1202, %v9675, 0
        %v9718 = vsel %vm1202, %v9676, 0
        %v9721 = vsel %vm1202, %v9677, 0
        %v9724 = vsel %vm1202, %v9678, 0
        %v9727 = vsel %vm1202, %v9679, 0
        %9729 = vmatprep.subr.bf16.mxu0 0
        %9730 = vmatpush1.bf16.msra.mxu0 %v9701
        %9731 = vmatprep.subr.bf16.mxu0 0
        %9732 = vmatpush1.bf16.msra.mxu0 %v9702
        %9733 = vmatprep.subr.bf16.mxu0 0
        %9734 = vmatpush1.bf16.msra.mxu0 0
        %9735 = vmatprep.subr.bf16.mxu0 0
        %9736 = vmatpush1.bf16.msra.mxu0 0
        %9737 = vmatprep.subr.bf16.mxu0 0
        %9738 = vmatpush1.bf16.msra.mxu0 0
        %9739 = vmatprep.subr.bf16.mxu0 0
        %9740 = vmatpush1.bf16.msra.mxu0 0
        %9741 = vmatprep.subr.bf16.mxu0 0
        %9742 = vmatpush1.bf16.msra.mxu0 0
        %9743 = vmatprep.subr.bf16.mxu0 0
        %9744 = vmatpush1.bf16.msra.mxu0 0
        %9745 = vmatprep.subr.bf16.mxu0 0
        %9746 = vmatpush1.bf16.msra.mxu0 0
        %9747 = vmatprep.subr.bf16.mxu0 0
        %9748 = vmatpush1.bf16.msra.mxu0 0
        %9749 = vmatprep.subr.bf16.mxu0 0
        %9750 = vmatpush1.bf16.msra.mxu0 0
        %9751 = vmatprep.subr.bf16.mxu0 0
        %9752 = vmatpush1.bf16.msra.mxu0 0
        %9753 = vmatprep.subr.bf16.mxu0 0
        %9754 = vmatpush1.bf16.msra.mxu0 0
        %9755 = vmatprep.subr.bf16.mxu0 0
        %9756 = vmatpush1.bf16.msra.mxu0 0
        %9757 = vmatprep.subr.bf16.mxu0 0
        %9758 = vmatpush1.bf16.msra.mxu0 0
        %9759 = vmatprep.subr.bf16.mxu0 0
        %9760 = vmatpush1.bf16.msra.mxu0 0
        %9761 = vmatprep.mubr.bf16.mxu0 0
        %9762 = vmatmul.mubr.bf16.gmra.mrb[0].mxu0 %v9706
        %v9763 = vpop.f32.mrb[0].mxu0
        %v9764 = vadd.f32 %v9691, %v9763
        %v9765 = vpop.f32.mrb[0].mxu0
        %v9766 = vpop.f32.mrb[0].mxu0
        %v9767 = vadd.f32 %v9691, %v9766
        %v9768 = vpop.f32.mrb[0].mxu0
        %9769 = vmatprep.mubr.bf16.mxu0 0
        %9770 = vmatmul.mubr.bf16.gmra.mrb[0].mxu0 %v9709
        %v9771 = vpop.f32.mrb[0].mxu0
        %v9772 = vadd.f32 %v9691, %v9771
        %v9773 = vpop.f32.mrb[0].mxu0
        %v9774 = vpop.f32.mrb[0].mxu0
        %v9775 = vadd.f32 %v9691, %v9774
        %v9776 = vpop.f32.mrb[0].mxu0
        %9777 = vmatprep.mubr.bf16.mxu0 0
        %9778 = vmatmul.mubr.bf16.gmra.mrb[0].mxu0 %v9712
        %v9779 = vpop.f32.mrb[0].mxu0
        %v9780 = vadd.f32 %v9691, %v9779
        %v9781 = vpop.f32.mrb[0].mxu0
        %v9782 = vpop.f32.mrb[0].mxu0
        %v9783 = vadd.f32 %v9691, %v9782
        %v9784 = vpop.f32.mrb[0].mxu0
        %9785 = vmatprep.mubr.bf16.mxu0 0
        %9786 = vmatmul.mubr.bf16.gmra.mrb[0].mxu0 %v9715
        %v9787 = vpop.f32.mrb[0].mxu0
        %v9788 = vadd.f32 %v9691, %v9787
        %v9789 = vpop.f32.mrb[0].mxu0
        %v9790 = vpop.f32.mrb[0].mxu0
        %v9791 = vadd.f32 %v9691, %v9790
        %v9792 = vpop.f32.mrb[0].mxu0
        %9793 = vmatprep.mubr.bf16.mxu0 0
        %9794 = vmatmul.mubr.bf16.gmra.mrb[0].mxu0 %v9718
        %v9795 = vpop.f32.mrb[0].mxu0
        %v9796 = vadd.f32 %v9691, %v9795
        %v9797 = vpop.f32.mrb[0].mxu0
        %v9798 = vpop.f32.mrb[0].mxu0
        %v9799 = vadd.f32 %v9691, %v9798
        %v9800 = vpop.f32.mrb[0].mxu0
        %9801 = vmatprep.mubr.bf16.mxu0 0
        %9802 = vmatmul.mubr.bf16.gmra.mrb[0].mxu0 %v9721
        %v9803 = vpop.f32.mrb[0].mxu0
        %v9804 = vadd.f32 %v9691, %v9803
        %v9805 = vpop.f32.mrb[0].mxu0
        %v9806 = vpop.f32.mrb[0].mxu0
        %v9807 = vadd.f32 %v9691, %v9806
        %v9808 = vpop.f32.mrb[0].mxu0
        %9809 = vmatprep.mubr.bf16.mxu0 0
        %9810 = vmatmul.mubr.bf16.gmra.mrb[0].mxu0 %v9724
        %v9811 = vpop.f32.mrb[0].mxu0
        %v9812 = vadd.f32 %v9691, %v9811
        %v9813 = vpop.f32.mrb[0].mxu0
        %v9814 = vpop.f32.mrb[0].mxu0
        %v9815 = vadd.f32 %v9691, %v9814
        %v9816 = vpop.f32.mrb[0].mxu0
        %9817 = vmatprep.mubr.bf16.mxu0 0
        %9818 = vmatmul.mubr.bf16.gmra.mrb[0].mxu0 %v9727
        %v9819 = vpop.f32.mrb[0].mxu0
        %v9820 = vadd.f32 %v9691, %v9819
        %v9821 = vpop.f32.mrb[0].mxu0
        %v9822 = vpop.f32.mrb[0].mxu0
        %v9823 = vadd.f32 %v9691, %v9822
        %v9824 = vpop.f32.mrb[0].mxu0
        %9825 = vdwg.mxu0
        %s9826 = scalar_lea.vmem %s351, 256 [#allocation2]
        %9827 = vst [vmem:[%s9826] sm:$0xff] %v9764
        %9828 = vst [vmem:[%s9826 + $0x8] sm:$0xff] %v9767
        %9829 = vst [vmem:[%s9826 + $0x10] sm:$0xff] %v9772
        %9830 = vst [vmem:[%s9826 + $0x18] sm:$0xff] %v9775
        %9831 = vst [vmem:[%s9826 + $0x20] sm:$0xff] %v9780
        %9832 = vst [vmem:[%s9826 + $0x28] sm:$0xff] %v9783
        %9833 = vst [vmem:[%s9826 + $0x30] sm:$0xff] %v9788
        %9834 = vst [vmem:[%s9826 + $0x38] sm:$0xff] %v9791
        %9835 = vst [vmem:[%s9826 + $0x40] sm:$0xff] %v9796
        %9836 = vst [vmem:[%s9826 + $0x48] sm:$0xff] %v9799
        %9837 = vst [vmem:[%s9826 + $0x50] sm:$0xff] %v9804
        %9838 = vst [vmem:[%s9826 + $0x58] sm:$0xff] %v9807
        %9839 = vst [vmem:[%s9826 + $0x60] sm:$0xff] %v9812
        %9840 = vst [vmem:[%s9826 + $0x68] sm:$0xff] %v9815
        %9841 = vst [vmem:[%s9826 + $0x70] sm:$0xff] %v9820
        %9842 = vst [vmem:[%s9826 + $0x78] sm:$0xff] %v9823
        %s9843 = sand.u32 %s244, 1
        %s9844 = sand.u32 %s244, 1
        %s9845 = smul.addr %s9844, 384
        %s9846 = scalar_lea.vmem [#allocation2], %s9845
        // Predicated region
        $region61: #{base_model_forward.1} parent=59 // pred_check
          %p9847 = pneg %p254
        $region62: #{base_model_forward.1} parent=59 // pred_check_branch
          %9849 = sbr.rel (%p9847) target = $region64
        $region63: #{base_model_forward.1} parent=59 // pred_region
          %s9850 = smul.u32 16, %s21
          %s9851 = smul.addr %s9850, 8
          %s9852 = scalar_lea.vmem %s10, %s9851
          // Predicated region
          $region65: #{base_model_forward.1} parent=63 // pred_check
            _
          $region66: #{base_model_forward.1} parent=63 // pred_check_branch
            %9854 = sbr.rel (0) target = $region68
          $region67: #{base_model_forward.1} parent=63 // pred_region
            // Predicated region
            $region69: #{base_model_forward.1} parent=67 // pred_check
              _
            $region70: #{base_model_forward.1} parent=67 // pred_check_branch
              %9856 = sbr.rel (0) target = $region72
            $region71: #{base_model_forward.1} parent=67 // pred_region
              // Predicated region
              $region84: #{base_model_forward.1} parent=71 // pred_check
                _
              $region85: #{base_model_forward.1} parent=71 // pred_check_branch
                %9965 = sbr.rel (0) target = $region87
              $region86: #{base_model_forward.1} parent=71 // pred_region
                loop: start=0, step=1, limit=1
                $region88: #{base_model_forward.1} parent=86 // loop_pre_header
                  _
                $region89: #{base_model_forward.1} parent=86 // loop_header
                  %s9967 = sphi 0, %s9971
                  %p9968 = scmp.ge.s32.totalorder %s9967, 1
                  %s9972 = sphi %s9846, %s9846
                  %s9973 = sphi %s9852, %s9852
                $region90: #{base_model_forward.1} parent=86 // loop_header_branch
                  %9970 = sbr.rel (%p9968) target = $region94
                $region91: #{base_model_forward.1} parent=86 // loop_body
                  %v9974 = vld [vmem:[%s9972] sm:$0xff]
                  %9975 = vst [vmem:[%s9973] sm:$0xff] %v9974
                  %v9976 = vld [vmem:[%s9972 + $0x8] sm:$0xff]
                  %9977 = vst [vmem:[%s9973 + $0x8] sm:$0xff] %v9976
                  %v9978 = vld [vmem:[%s9972 + $0x10] sm:$0xff]
                  %9979 = vst [vmem:[%s9973 + $0x10] sm:$0xff] %v9978
                  %v9980 = vld [vmem:[%s9972 + $0x18] sm:$0xff]
                  %9981 = vst [vmem:[%s9973 + $0x18] sm:$0xff] %v9980
                  %v9982 = vld [vmem:[%s9972 + $0x20] sm:$0xff]
                  %9983 = vst [vmem:[%s9973 + $0x20] sm:$0xff] %v9982
                  %v9984 = vld [vmem:[%s9972 + $0x28] sm:$0xff]
                  %9985 = vst [vmem:[%s9973 + $0x28] sm:$0xff] %v9984
                  %v9986 = vld [vmem:[%s9972 + $0x30] sm:$0xff]
                  %9987 = vst [vmem:[%s9973 + $0x30] sm:$0xff] %v9986
                  %v9988 = vld [vmem:[%s9972 + $0x38] sm:$0xff]
                  %9989 = vst [vmem:[%s9973 + $0x38] sm:$0xff] %v9988
                  %v9990 = vld [vmem:[%s9972 + $0x40] sm:$0xff]
                  %9991 = vst [vmem:[%s9973 + $0x40] sm:$0xff] %v9990
                  %v9992 = vld [vmem:[%s9972 + $0x48] sm:$0xff]
                  %9993 = vst [vmem:[%s9973 + $0x48] sm:$0xff] %v9992
                  %v9994 = vld [vmem:[%s9972 + $0x50] sm:$0xff]
                  %9995 = vst [vmem:[%s9973 + $0x50] sm:$0xff] %v9994
                  %v9996 = vld [vmem:[%s9972 + $0x58] sm:$0xff]
                  %9997 = vst [vmem:[%s9973 + $0x58] sm:$0xff] %v9996
                  %v9998 = vld [vmem:[%s9972 + $0x60] sm:$0xff]
                  %9999 = vst [vmem:[%s9973 + $0x60] sm:$0xff] %v9998
                  %v10000 = vld [vmem:[%s9972 + $0x68] sm:$0xff]
                  %10001 = vst [vmem:[%s9973 + $0x68] sm:$0xff] %v10000
                  %v10002 = vld [vmem:[%s9972 + $0x70] sm:$0xff]
                  %10003 = vst [vmem:[%s9973 + $0x70] sm:$0xff] %v10002
                  %v10004 = vld [vmem:[%s9972 + $0x78] sm:$0xff]
                  %10005 = vst [vmem:[%s9973 + $0x78] sm:$0xff] %v10004
                  %v10006 = vld [vmem:[%s9972 + $0x80] sm:$0xff]
                  %10007 = vst [vmem:[%s9973 + $0x100] sm:$0xff] %v10006
                  %v10008 = vld [vmem:[%s9972 + $0x88] sm:$0xff]
                  %10009 = vst [vmem:[%s9973 + $0x108] sm:$0xff] %v10008
                  %v10010 = vld [vmem:[%s9972 + $0x90] sm:$0xff]
                  %10011 = vst [vmem:[%s9973 + $0x110] sm:$0xff] %v10010
                  %v10012 = vld [vmem:[%s9972 + $0x98] sm:$0xff]
                  %10013 = vst [vmem:[%s9973 + $0x118] sm:$0xff] %v10012
                  %v10014 = vld [vmem:[%s9972 + $0xa0] sm:$0xff]
                  %10015 = vst [vmem:[%s9973 + $0x120] sm:$0xff] %v10014
                  %v10016 = vld [vmem:[%s9972 + $0xa8] sm:$0xff]
                  %10017 = vst [vmem:[%s9973 + $0x128] sm:$0xff] %v10016
                  %v10018 = vld [vmem:[%s9972 + $0xb0] sm:$0xff]
                  %10019 = vst [vmem:[%s9973 + $0x130] sm:$0xff] %v10018
                  %v10020 = vld [vmem:[%s9972 + $0xb8] sm:$0xff]
                  %10021 = vst [vmem:[%s9973 + $0x138] sm:$0xff] %v10020
                  %v10022 = vld [vmem:[%s9972 + $0xc0] sm:$0xff]
                  %10023 = vst [vmem:[%s9973 + $0x140] sm:$0xff] %v10022
                  %v10024 = vld [vmem:[%s9972 + $0xc8] sm:$0xff]
                  %10025 = vst [vmem:[%s9973 + $0x148] sm:$0xff] %v10024
                  %v10026 = vld [vmem:[%s9972 + $0xd0] sm:$0xff]
                  %10027 = vst [vmem:[%s9973 + $0x150] sm:$0xff] %v10026
                  %v10028 = vld [vmem:[%s9972 + $0xd8] sm:$0xff]
                  %10029 = vst [vmem:[%s9973 + $0x158] sm:$0xff] %v10028
                  %v10030 = vld [vmem:[%s9972 + $0xe0] sm:$0xff]
                  %10031 = vst [vmem:[%s9973 + $0x160] sm:$0xff] %v10030
                  %v10032 = vld [vmem:[%s9972 + $0xe8] sm:$0xff]
                  %10033 = vst [vmem:[%s9973 + $0x168] sm:$0xff] %v10032
                  %v10034 = vld [vmem:[%s9972 + $0xf0] sm:$0xff]
                  %10035 = vst [vmem:[%s9973 + $0x170] sm:$0xff] %v10034
                  %v10036 = vld [vmem:[%s9972 + $0xf8] sm:$0xff]
                  %10037 = vst [vmem:[%s9973 + $0x178] sm:$0xff] %v10036
                  %v10038 = vld [vmem:[%s9972 + $0x100] sm:$0xff]
                  %10039 = vst [vmem:[%s9973 + $0x200] sm:$0xff] %v10038
                  %v10040 = vld [vmem:[%s9972 + $0x108] sm:$0xff]
                  %10041 = vst [vmem:[%s9973 + $0x208] sm:$0xff] %v10040
                  %v10042 = vld [vmem:[%s9972 + $0x110] sm:$0xff]
                  %10043 = vst [vmem:[%s9973 + $0x210] sm:$0xff] %v10042
                  %v10044 = vld [vmem:[%s9972 + $0x118] sm:$0xff]
                  %10045 = vst [vmem:[%s9973 + $0x218] sm:$0xff] %v10044
                  %v10046 = vld [vmem:[%s9972 + $0x120] sm:$0xff]
                  %10047 = vst [vmem:[%s9973 + $0x220] sm:$0xff] %v10046
                  %v10048 = vld [vmem:[%s9972 + $0x128] sm:$0xff]
                  %10049 = vst [vmem:[%s9973 + $0x228] sm:$0xff] %v10048
                  %v10050 = vld [vmem:[%s9972 + $0x130] sm:$0xff]
                  %10051 = vst [vmem:[%s9973 + $0x230] sm:$0xff] %v10050
                  %v10052 = vld [vmem:[%s9972 + $0x138] sm:$0xff]
                  %10053 = vst [vmem:[%s9973 + $0x238] sm:$0xff] %v10052
                  %v10054 = vld [vmem:[%s9972 + $0x140] sm:$0xff]
                  %10055 = vst [vmem:[%s9973 + $0x240] sm:$0xff] %v10054
                  %v10056 = vld [vmem:[%s9972 + $0x148] sm:$0xff]
                  %10057 = vst [vmem:[%s9973 + $0x248] sm:$0xff] %v10056
                  %v10058 = vld [vmem:[%s9972 + $0x150] sm:$0xff]
                  %10059 = vst [vmem:[%s9973 + $0x250] sm:$0xff] %v10058
                  %v10060 = vld [vmem:[%s9972 + $0x158] sm:$0xff]
                  %10061 = vst [vmem:[%s9973 + $0x258] sm:$0xff] %v10060
                  %v10062 = vld [vmem:[%s9972 + $0x160] sm:$0xff]
                  %10063 = vst [vmem:[%s9973 + $0x260] sm:$0xff] %v10062
                  %v10064 = vld [vmem:[%s9972 + $0x168] sm:$0xff]
                  %10065 = vst [vmem:[%s9973 + $0x268] sm:$0xff] %v10064
                  %v10066 = vld [vmem:[%s9972 + $0x170] sm:$0xff]
                  %10067 = vst [vmem:[%s9973 + $0x270] sm:$0xff] %v10066
                  %v10068 = vld [vmem:[%s9972 + $0x178] sm:$0xff]
                  %10069 = vst [vmem:[%s9973 + $0x278] sm:$0xff] %v10068
                $region92: #{base_model_forward.1} parent=86 // loop_footer
                  %s9971 = sadd.s32 1, %s9967
                $region93: #{base_model_forward.1} parent=86 // loop_footer_branch
                  %9966 = sbr.rel target = $region89
                $region94: #{base_model_forward.1} parent=86 // loop_exit
                  _
              $region87: #{base_model_forward.1} parent=71 // pred_fallthru
                _
              // Predicated region
              $region95: #{base_model_forward.1} parent=71 // pred_check
                _
              $region96: #{base_model_forward.1} parent=71 // pred_check_branch
                %10071 = sbr.rel target = $region98
              $region97: #{base_model_forward.1} parent=71 // pred_region
                _
              $region98: #{base_model_forward.1} parent=71 // pred_fallthru
                _
            $region72: #{base_model_forward.1} parent=67 // pred_fallthru
              _
            // Predicated region
            $region73: #{base_model_forward.1} parent=67 // pred_check
              _
            $region74: #{base_model_forward.1} parent=67 // pred_check_branch
              %9858 = sbr.rel target = $region76
            $region75: #{base_model_forward.1} parent=67 // pred_region
              loop: start=0, step=1, limit=1
              $region77: #{base_model_forward.1} parent=75 // loop_pre_header
                _
              $region78: #{base_model_forward.1} parent=75 // loop_header
                %s9861 = sphi 0, %s9865
                %p9862 = scmp.ge.s32.totalorder %s9861, 1
                %s9866 = sphi %s9846, %s9846
                %s9867 = sphi %s9852, %s9852
              $region79: #{base_model_forward.1} parent=75 // loop_header_branch
                %9864 = sbr.rel (%p9862) target = $region83
              $region80: #{base_model_forward.1} parent=75 // loop_body
                %v9868 = vld [vmem:[%s9866] sm:$0xff]
                %9869 = vst [vmem:[%s9867] sm:$0xff] %v9868
                %v9870 = vld [vmem:[%s9866 + $0x8] sm:$0xff]
                %9871 = vst [vmem:[%s9867 + $0x8] sm:$0xff] %v9870
                %v9872 = vld [vmem:[%s9866 + $0x10] sm:$0xff]
                %9873 = vst [vmem:[%s9867 + $0x10] sm:$0xff] %v9872
                %v9874 = vld [vmem:[%s9866 + $0x18] sm:$0xff]
                %9875 = vst [vmem:[%s9867 + $0x18] sm:$0xff] %v9874
                %v9876 = vld [vmem:[%s9866 + $0x20] sm:$0xff]
                %9877 = vst [vmem:[%s9867 + $0x20] sm:$0xff] %v9876
                %v9878 = vld [vmem:[%s9866 + $0x28] sm:$0xff]
                %9879 = vst [vmem:[%s9867 + $0x28] sm:$0xff] %v9878
                %v9880 = vld [vmem:[%s9866 + $0x30] sm:$0xff]
                %9881 = vst [vmem:[%s9867 + $0x30] sm:$0xff] %v9880
                %v9882 = vld [vmem:[%s9866 + $0x38] sm:$0xff]
                %9883 = vst [vmem:[%s9867 + $0x38] sm:$0xff] %v9882
                %v9884 = vld [vmem:[%s9866 + $0x40] sm:$0xff]
                %9885 = vst [vmem:[%s9867 + $0x40] sm:$0xff] %v9884
                %v9886 = vld [vmem:[%s9866 + $0x48] sm:$0xff]
                %9887 = vst [vmem:[%s9867 + $0x48] sm:$0xff] %v9886
                %v9888 = vld [vmem:[%s9866 + $0x50] sm:$0xff]
                %9889 = vst [vmem:[%s9867 + $0x50] sm:$0xff] %v9888
                %v9890 = vld [vmem:[%s9866 + $0x58] sm:$0xff]
                %9891 = vst [vmem:[%s9867 + $0x58] sm:$0xff] %v9890
                %v9892 = vld [vmem:[%s9866 + $0x60] sm:$0xff]
                %9893 = vst [vmem:[%s9867 + $0x60] sm:$0xff] %v9892
                %v9894 = vld [vmem:[%s9866 + $0x68] sm:$0xff]
                %9895 = vst [vmem:[%s9867 + $0x68] sm:$0xff] %v9894
                %v9896 = vld [vmem:[%s9866 + $0x70] sm:$0xff]
                %9897 = vst [vmem:[%s9867 + $0x70] sm:$0xff] %v9896
                %v9898 = vld [vmem:[%s9866 + $0x78] sm:$0xff]
                %9899 = vst [vmem:[%s9867 + $0x78] sm:$0xff] %v9898
                %v9900 = vld [vmem:[%s9866 + $0x80] sm:$0xff]
                %9901 = vst [vmem:[%s9867 + $0x100] sm:$0xff] %v9900
                %v9902 = vld [vmem:[%s9866 + $0x88] sm:$0xff]
                %9903 = vst [vmem:[%s9867 + $0x108] sm:$0xff] %v9902
                %v9904 = vld [vmem:[%s9866 + $0x90] sm:$0xff]
                %9905 = vst [vmem:[%s9867 + $0x110] sm:$0xff] %v9904
                %v9906 = vld [vmem:[%s9866 + $0x98] sm:$0xff]
                %9907 = vst [vmem:[%s9867 + $0x118] sm:$0xff] %v9906
                %v9908 = vld [vmem:[%s9866 + $0xa0] sm:$0xff]
                %9909 = vst [vmem:[%s9867 + $0x120] sm:$0xff] %v9908
                %v9910 = vld [vmem:[%s9866 + $0xa8] sm:$0xff]
                %9911 = vst [vmem:[%s9867 + $0x128] sm:$0xff] %v9910
                %v9912 = vld [vmem:[%s9866 + $0xb0] sm:$0xff]
                %9913 = vst [vmem:[%s9867 + $0x130] sm:$0xff] %v9912
                %v9914 = vld [vmem:[%s9866 + $0xb8] sm:$0xff]
                %9915 = vst [vmem:[%s9867 + $0x138] sm:$0xff] %v9914
                %v9916 = vld [vmem:[%s9866 + $0xc0] sm:$0xff]
                %9917 = vst [vmem:[%s9867 + $0x140] sm:$0xff] %v9916
                %v9918 = vld [vmem:[%s9866 + $0xc8] sm:$0xff]
                %9919 = vst [vmem:[%s9867 + $0x148] sm:$0xff] %v9918
                %v9920 = vld [vmem:[%s9866 + $0xd0] sm:$0xff]
                %9921 = vst [vmem:[%s9867 + $0x150] sm:$0xff] %v9920
                %v9922 = vld [vmem:[%s9866 + $0xd8] sm:$0xff]
                %9923 = vst [vmem:[%s9867 + $0x158] sm:$0xff] %v9922
                %v9924 = vld [vmem:[%s9866 + $0xe0] sm:$0xff]
                %9925 = vst [vmem:[%s9867 + $0x160] sm:$0xff] %v9924
                %v9926 = vld [vmem:[%s9866 + $0xe8] sm:$0xff]
                %9927 = vst [vmem:[%s9867 + $0x168] sm:$0xff] %v9926
                %v9928 = vld [vmem:[%s9866 + $0xf0] sm:$0xff]
                %9929 = vst [vmem:[%s9867 + $0x170] sm:$0xff] %v9928
                %v9930 = vld [vmem:[%s9866 + $0xf8] sm:$0xff]
                %9931 = vst [vmem:[%s9867 + $0x178] sm:$0xff] %v9930
                %v9932 = vld [vmem:[%s9866 + $0x100] sm:$0xff]
                %9933 = vst [vmem:[%s9867 + $0x200] sm:$0xff] %v9932
                %v9934 = vld [vmem:[%s9866 + $0x108] sm:$0xff]
                %9935 = vst [vmem:[%s9867 + $0x208] sm:$0xff] %v9934
                %v9936 = vld [vmem:[%s9866 + $0x110] sm:$0xff]
                %9937 = vst [vmem:[%s9867 + $0x210] sm:$0xff] %v9936
                %v9938 = vld [vmem:[%s9866 + $0x118] sm:$0xff]
                %9939 = vst [vmem:[%s9867 + $0x218] sm:$0xff] %v9938
                %v9940 = vld [vmem:[%s9866 + $0x120] sm:$0xff]
                %9941 = vst [vmem:[%s9867 + $0x220] sm:$0xff] %v9940
                %v9942 = vld [vmem:[%s9866 + $0x128] sm:$0xff]
                %9943 = vst [vmem:[%s9867 + $0x228] sm:$0xff] %v9942
                %v9944 = vld [vmem:[%s9866 + $0x130] sm:$0xff]
                %9945 = vst [vmem:[%s9867 + $0x230] sm:$0xff] %v9944
                %v9946 = vld [vmem:[%s9866 + $0x138] sm:$0xff]
                %9947 = vst [vmem:[%s9867 + $0x238] sm:$0xff] %v9946
                %v9948 = vld [vmem:[%s9866 + $0x140] sm:$0xff]
                %9949 = vst [vmem:[%s9867 + $0x240] sm:$0xff] %v9948
                %v9950 = vld [vmem:[%s9866 + $0x148] sm:$0xff]
                %9951 = vst [vmem:[%s9867 + $0x248] sm:$0xff] %v9950
                %v9952 = vld [vmem:[%s9866 + $0x150] sm:$0xff]
                %9953 = vst [vmem:[%s9867 + $0x250] sm:$0xff] %v9952
                %v9954 = vld [vmem:[%s9866 + $0x158] sm:$0xff]
                %9955 = vst [vmem:[%s9867 + $0x258] sm:$0xff] %v9954
                %v9956 = vld [vmem:[%s9866 + $0x160] sm:$0xff]
                %9957 = vst [vmem:[%s9867 + $0x260] sm:$0xff] %v9956
                %v9958 = vld [vmem:[%s9866 + $0x168] sm:$0xff]
                %9959 = vst [vmem:[%s9867 + $0x268] sm:$0xff] %v9958
                %v9960 = vld [vmem:[%s9866 + $0x170] sm:$0xff]
                %9961 = vst [vmem:[%s9867 + $0x270] sm:$0xff] %v9960
                %v9962 = vld [vmem:[%s9866 + $0x178] sm:$0xff]
                %9963 = vst [vmem:[%s9867 + $0x278] sm:$0xff] %v9962
              $region81: #{base_model_forward.1} parent=75 // loop_footer
                %s9865 = sadd.s32 1, %s9861
              $region82: #{base_model_forward.1} parent=75 // loop_footer_branch
                %9860 = sbr.rel target = $region78
              $region83: #{base_model_forward.1} parent=75 // loop_exit
                _
            $region76: #{base_model_forward.1} parent=67 // pred_fallthru
              _
          $region68: #{base_model_forward.1} parent=63 // pred_fallthru
            _
          %10072 = vnop
        $region64: #{base_model_forward.1} parent=59 // pred_fallthru
          _
      $region60: #{base_model_forward.1} parent=5 // pred_fallthru
        _
      %p10073 = scmp.le.s32.totalorder 2, %s16
      // Predicated region
      $region99: #{base_model_forward.1} parent=5 // pred_check
        %p10074 = pneg %p10073
      $region100: #{base_model_forward.1} parent=5 // pred_check_branch
        %10076 = sbr.rel (%p10074) target = $region102
      $region101: #{base_model_forward.1} parent=5 // pred_region
        %s10077 = ssub.s32 %s16, 2
        // Predicated region
        $region103: #{base_model_forward.1} parent=101 // pred_check
          %p10078 = pneg %p260
        $region104: #{base_model_forward.1} parent=101 // pred_check_branch
          %10080 = sbr.rel (%p10078) target = $region106
        $region105: #{base_model_forward.1} parent=101 // pred_region
          %s10081 = sand.u32 %s245, 1
          %s10082 = sand.u32 %s245, 1
          %s10083 = smul.addr %s10082, 384
          %s10084 = scalar_lea.vmem [#allocation2], %s10083
        $region106: #{base_model_forward.1} parent=101 // pred_fallthru
          _
      $region102: #{base_model_forward.1} parent=5 // pred_fallthru
        _
    $region6: #{base_model_forward.1} parent=1 // loop_footer
      %s20 = sadd.s32 1, %s16
    $region7: #{base_model_forward.1} parent=1 // loop_footer_branch
      %15 = sbr.rel target = $region3
    $region8: #{base_model_forward.1} parent=1 // loop_exit
      _

</llo_original>
